<compile_context>
chip_gen: v6e
topology: v6e:2x2x1
jax: 0.10.0
libtpu: 0.0.40
codegen_flags: <defaults>
</compile_context>

<pallas_src>
import jax
import jax.numpy as jnp
import numpy as np
from jax import lax
from jax.experimental import pallas as pl
from jax.experimental.pallas import tpu as pltpu

HIDDEN = 128
INPUT = 3
IN_PAD = 16         # layer-0 feature dim padded to one bf16 sublane tile
LAYERS = 4
OUTPUT = 3
OUT_PAD = 128       # lane-dense fc output (wrapper slices back to OUTPUT)


def lstm_kernel(x_ref, wih0_ref, whh0_ref, wcat_ref, b_ref, wfc_ref, bfc_ref,
                out_ref, gates_ref):
    """Whole forward pass in one kernel invocation (no grid).

    x_ref    : (T*Bp, IN_PAD)   bf16  time-major, batch- & feature-padded input
    wih0_ref : (IN_PAD, 4H)     bf16  layer-0 input->gates weight (transposed)
    whh0_ref : (H, 4H)          bf16  layer-0 hidden->gates weight (transposed)
    wcat_ref : (L-1, 2H, 4H)    bf16  layers 1..3 fused [W_ih ; W_hh] (transposed)
    b_ref    : (L, 1, 4H)       f32   combined bias b_ih + b_hh
    wfc_ref  : (H, OUT_PAD)     bf16  fc weight (transposed, lane-padded)
    bfc_ref  : (1, OUT_PAD)     f32   fc bias (lane-padded)
    out_ref  : (Bp, OUT_PAD)    f32
    gates_ref: (T*Bp, 4H)       f32   scratch: hoisted layer-0 pre-gates
    """
    Bp = out_ref.shape[0]                 # padded batch (multiple of 8)
    TB = gates_ref.shape[0]               # T * Bp
    T = TB // Bp
    H = HIDDEN

    # ---- hoisted layer-0 input->gates (+ bias): one bulk bf16 MXU matmul,
    #      off the recurrent critical path.  Gate order: i, f, g, o.
    gates_ref[...] = (
        jnp.dot(x_ref[...], wih0_ref[...], preferred_element_type=jnp.float32)
        + b_ref[0])

    # ---- layer/time wavefront: step s runs cell (l, t=s-l) for every layer
    #      with 0 <= t < T; the up-to-4 active cells per step are mutually
    #      independent (each depends only on the *previous* step's carries).
    zero = jnp.zeros((Bp, H), jnp.float32)
    h = [zero] * LAYERS
    c = [zero] * LAYERS

    for s in range(T + LAYERS - 1):       # static full unroll
        # One bf16 cast per carry per step; each cast is reused by two cells
        # (own recurrence + the layer above).  Unused casts are DCE'd.
        h_bf = [hl.astype(jnp.bfloat16) for hl in h]
        new_h = list(h)
        new_c = list(c)
        for l in range(LAYERS):
            t = s - l
            if t < 0 or t >= T:
                continue                  # statically skip inactive cells
            if l == 0:
                # Static slice (t, Bp are Python ints) -> aligned (8,128)-tile
                # load; add kept adjacent to the dot (v7x MRB accumulate).
                g_all = gates_ref[t * Bp:(t + 1) * Bp, :] + jnp.dot(
                    h_bf[0], whh0_ref[...], preferred_element_type=jnp.float32)
            else:
                # Fused input+recurrent matmul, K = 2H = 256.
                cat = jnp.concatenate([h_bf[l - 1], h_bf[l]], axis=-1)
                g_all = b_ref[l] + jnp.dot(
                    cat, wcat_ref[l - 1], preferred_element_type=jnp.float32)
            i_g = jax.nn.sigmoid(g_all[:, 0 * H:1 * H])
            f_g = jax.nn.sigmoid(g_all[:, 1 * H:2 * H])
            g_g = jnp.tanh(g_all[:, 2 * H:3 * H])
            o_g = jax.nn.sigmoid(g_all[:, 3 * H:4 * H])
            c_new = f_g * c[l] + i_g * g_g       # f32 gate math (v5e-friendly)
            new_c[l] = c_new
            new_h[l] = o_g * jnp.tanh(c_new)
        h, c = new_h, new_c

    # ---- fc on the top layer's last-timestep hidden state; lane-dense out.
    out_ref[...] = (jnp.dot(h[LAYERS - 1].astype(jnp.bfloat16), wfc_ref[...],
                            preferred_element_type=jnp.float32)
                    + bfc_ref[...]).astype(out_ref.dtype)


def _bf16_round(a):
    return a.astype(jnp.bfloat16).astype(jnp.float32)


def init_params(key):
    """Deterministic init matching the PyTorch module's parameter shapes."""
    ks = jax.random.split(key, 4 * LAYERS + 2)
    kscale = 1.0 / np.sqrt(HIDDEN)
    raw_lstm = []
    idx = 0
    for l in range(LAYERS):
        in_dim = INPUT if l == 0 else HIDDEN
        w_ih = jax.random.uniform(ks[idx], (4 * HIDDEN, in_dim), jnp.float32, -kscale, kscale); idx += 1
        w_hh = jax.random.uniform(ks[idx], (4 * HIDDEN, HIDDEN), jnp.float32, -kscale, kscale); idx += 1
        b_ih = jax.random.uniform(ks[idx], (4 * HIDDEN,), jnp.float32, -kscale, kscale); idx += 1
        b_hh = jax.random.uniform(ks[idx], (4 * HIDDEN,), jnp.float32, -kscale, kscale); idx += 1
        # All weights the kernel consumes as bf16 MXU operands are stored
        # bf16-rounded, so the f32 reference uses identical values.
        w_ih = _bf16_round(w_ih)
        w_hh = _bf16_round(w_hh)
        raw_lstm.append((w_ih, w_hh, b_ih, b_hh))
    w_fc = _bf16_round(jax.random.uniform(ks[idx], (OUTPUT, HIDDEN), jnp.float32, -kscale, kscale)); idx += 1
    b_fc = jax.random.uniform(ks[idx], (OUTPUT,), jnp.float32, -kscale, kscale)

    # ---- pack for the kernel ----
    wih0 = (jnp.zeros((IN_PAD, 4 * HIDDEN), jnp.float32)
            .at[:INPUT, :].set(raw_lstm[0][0].T).astype(jnp.bfloat16))          # (16, 4H)
    whh0 = raw_lstm[0][1].T.astype(jnp.bfloat16)                                # (H, 4H)
    wcat = jnp.stack(
        [jnp.concatenate([raw_lstm[l][0].T, raw_lstm[l][1].T], axis=0)
         for l in range(1, LAYERS)], axis=0).astype(jnp.bfloat16)               # (L-1, 2H, 4H)
    b = jnp.stack([(raw_lstm[l][2] + raw_lstm[l][3]).reshape(1, 4 * HIDDEN)
                   for l in range(LAYERS)], 0)                                  # (L, 1, 4H)
    wfc = (jnp.zeros((HIDDEN, OUT_PAD), jnp.float32)
           .at[:, :OUTPUT].set(w_fc.T).astype(jnp.bfloat16))                    # (H, 128)
    bfc = jnp.zeros((1, OUT_PAD), jnp.float32).at[0, :OUTPUT].set(b_fc)         # (1, 128)

    packed = dict(wih0=wih0, whh0=whh0, wcat=wcat, b=b, wfc=wfc, bfc=bfc)
    raw = dict(lstm=raw_lstm, w_fc=w_fc, b_fc=b_fc)
    return packed, raw


@jax.jit
def stock_lstm_forward(x, packed):
    """x: (B, T, input_size) float32  ->  (B, output_size) float32"""
    B, T, _ = x.shape
    Bp = max(8, ((B + 7) // 8) * 8)          # sublane-aligned batch

    # time-major, batch padded to Bp, features zero-padded to IN_PAD, bf16.
    x_tm = jnp.transpose(x, (1, 0, 2))                       # (T, B, 3)
    x_pad = jnp.zeros((T, Bp, IN_PAD), jnp.float32).at[:, :B, :INPUT].set(x_tm)
    x_flat = x_pad.reshape(T * Bp, IN_PAD).astype(jnp.bfloat16)

    vmem = pl.BlockSpec(memory_space=pltpu.MemorySpace.VMEM)
    out = pl.pallas_call(
        lstm_kernel,
        out_shape=jax.ShapeDtypeStruct((Bp, OUT_PAD), jnp.float32),
        in_specs=[vmem] * 7,
        out_specs=vmem,
        scratch_shapes=[
            pltpu.VMEM((T * Bp, 4 * HIDDEN), jnp.float32),   # hoisted layer-0 pre-gates
        ],
    )(x_flat, packed["wih0"], packed["whh0"], packed["wcat"], packed["b"],
      packed["wfc"], packed["bfc"])
    return out[:B, :OUTPUT]


def reference_forward(x, raw):
    """Pure-JAX f32 re-implementation of the PyTorch forward (HIGHEST precision)."""
    B, T, _ = x.shape
    hp = lax.Precision.HIGHEST
    layer_in = x
    for (w_ih, w_hh, b_ih, b_hh) in raw["lstm"]:
        h = jnp.zeros((B, HIDDEN), jnp.float32)
        c = jnp.zeros((B, HIDDEN), jnp.float32)
        outs = []
        for t in range(T):
            xt = layer_in[:, t, :]
            gates = (jnp.dot(xt, w_ih.T, precision=hp) + b_ih
                     + jnp.dot(h, w_hh.T, precision=hp) + b_hh)
            i = jax.nn.sigmoid(gates[:, 0 * HIDDEN:1 * HIDDEN])
            f = jax.nn.sigmoid(gates[:, 1 * HIDDEN:2 * HIDDEN])
            g = jnp.tanh(gates[:, 2 * HIDDEN:3 * HIDDEN])
            o = jax.nn.sigmoid(gates[:, 3 * HIDDEN:4 * HIDDEN])
            c = f * c + i * g
            h = o * jnp.tanh(c)
            outs.append(h)
        layer_in = jnp.stack(outs, axis=1)
    return jnp.dot(layer_in[:, -1, :], raw["w_fc"].T, precision=hp) + raw["b_fc"]


if __name__ == "__main__":
    key = jax.random.PRNGKey(0)
    k_param, k_x = jax.random.split(key)
    packed, raw = init_params(k_param)

    B, T = 2, 8
    x = jax.random.normal(k_x, (B, T, INPUT), jnp.float32)

    out = jax.block_until_ready(stock_lstm_forward(x, packed))
    ref = jax.block_until_ready(reference_forward(x, raw))

    # Kernel and reference share identical (bf16-rounded) weights; the only
    # difference is bf16 rounding of activations at MXU inputs, compounded
    # over 4 layers x 8 timesteps.  A gate-order / slicing bug would blow
    # well past this tolerance.
    np.testing.assert_allclose(np.asarray(out), np.asarray(ref),
                               rtol=2e-2, atol=2e-2)

    print("KERNEL_OK")
</pallas_src>

<mosaic_0001>
module attributes {stable_mosaic.version = 11 : i64} {
  func.func @lstm_kernel(%arg0: memref<64x16xbf16, #tpu.memory_space<vmem>>, %arg1: memref<16x512xbf16, #tpu.memory_space<vmem>>, %arg2: memref<128x512xbf16, #tpu.memory_space<vmem>>, %arg3: memref<3x256x512xbf16, #tpu.memory_space<vmem>>, %arg4: memref<4x1x512xf32, #tpu.memory_space<vmem>>, %arg5: memref<128x128xbf16, #tpu.memory_space<vmem>>, %arg6: memref<1x128xf32, #tpu.memory_space<vmem>>, %arg7: memref<8x128xf32, #tpu.memory_space<vmem>>, %arg8: memref<64x512xf32, #tpu.memory_space<vmem>>) attributes {dimension_semantics = [], scalar_prefetch = 0 : i64, scratch_operands = 1 : i64, tpu.core_type = #tpu.core_type<tc>} {
    %c0 = arith.constant 0 : index
    %c0_0 = arith.constant 0 : index
    %0 = vector.load %arg0[%c0, %c0_0] : memref<64x16xbf16, #tpu.memory_space<vmem>>, vector<64x16xbf16>
    %c0_1 = arith.constant 0 : index
    %c0_2 = arith.constant 0 : index
    %1 = vector.load %arg1[%c0_1, %c0_2] : memref<16x512xbf16, #tpu.memory_space<vmem>>, vector<16x512xbf16>
    %cst = arith.constant dense<0.000000e+00> : vector<64x512xf32>
    %2 = tpu.matmul %0, %1, %cst {dimension_numbers = #tpu.dot_dimension_numbers<[1], [0], [0], [1], [0, 0, 1, 1], [], []>} : vector<64x16xbf16>, vector<16x512xbf16>, vector<64x512xf32> -> vector<64x512xf32>
    %c0_3 = arith.constant 0 : index
    %c0_4 = arith.constant 0 : index
    %c0_5 = arith.constant 0 : index
    %3 = vector.load %arg4[%c0_3, %c0_4, %c0_5] : memref<4x1x512xf32, #tpu.memory_space<vmem>>, vector<1x1x512xf32>
    %4 = vector.shape_cast %3 : vector<1x1x512xf32> to vector<1x512xf32>
    %5 = vector.broadcast %4 : vector<1x512xf32> to vector<64x512xf32>
    %6 = arith.addf %2, %5 : vector<64x512xf32>
    %c0_6 = arith.constant 0 : index
    %c0_7 = arith.constant 0 : index
    %7 = vector.load %arg8[%c0_6, %c0_7] : memref<64x512xf32, #tpu.memory_space<vmem>>, vector<64x512xf32>
    tpu.vector_store %arg8[%c0_6, %c0_7], %6 {strides = array<i32>} : memref<64x512xf32, #tpu.memory_space<vmem>>, vector<64x512xf32>,
    %cst_8 = arith.constant 0.000000e+00 : f32
    %8 = vector.broadcast %cst_8 : f32 to vector<8x128xf32>
    %9 = arith.truncf %8 : vector<8x128xf32> to vector<8x128xbf16>
    %c0_9 = arith.constant 0 : index
    %c0_10 = arith.constant 0 : index
    %10 = vector.load %arg8[%c0_9, %c0_10] : memref<64x512xf32, #tpu.memory_space<vmem>>, vector<8x512xf32>
    %c0_11 = arith.constant 0 : index
    %c0_12 = arith.constant 0 : index
    %11 = vector.load %arg2[%c0_11, %c0_12] : memref<128x512xbf16, #tpu.memory_space<vmem>>, vector<128x512xbf16>
    %cst_13 = arith.constant dense<0.000000e+00> : vector<8x512xf32>
    %12 = tpu.matmul %9, %11, %cst_13 {dimension_numbers = #tpu.dot_dimension_numbers<[1], [0], [0], [1], [0, 0, 1, 1], [], []>} : vector<8x128xbf16>, vector<128x512xbf16>, vector<8x512xf32> -> vector<8x512xf32>
    %13 = arith.addf %10, %12 : vector<8x512xf32>
    %14 = vector.extract_strided_slice %13 {offsets = [0, 0], sizes = [8, 128], strides = [1, 1]} : vector<8x512xf32> to vector<8x128xf32>
    %15 = arith.negf %14 : vector<8x128xf32>
    %16 = math.exp %15 : vector<8x128xf32>
    %cst_14 = arith.constant 1.000000e+00 : f32
    %17 = vector.broadcast %cst_14 : f32 to vector<8x128xf32>
    %18 = arith.addf %17, %16 : vector<8x128xf32>
    %19 = arith.divf %17, %18 : vector<8x128xf32>
    %20 = vector.extract_strided_slice %13 {offsets = [0, 128], sizes = [8, 128], strides = [1, 1]} : vector<8x512xf32> to vector<8x128xf32>
    %21 = arith.negf %20 : vector<8x128xf32>
    %22 = math.exp %21 : vector<8x128xf32>
    %cst_15 = arith.constant 1.000000e+00 : f32
    %23 = vector.broadcast %cst_15 : f32 to vector<8x128xf32>
    %24 = arith.addf %23, %22 : vector<8x128xf32>
    %25 = arith.divf %23, %24 : vector<8x128xf32>
    %26 = vector.extract_strided_slice %13 {offsets = [0, 256], sizes = [8, 128], strides = [1, 1]} : vector<8x512xf32> to vector<8x128xf32>
    %27 = math.tanh %26 : vector<8x128xf32>
    %28 = vector.extract_strided_slice %13 {offsets = [0, 384], sizes = [8, 128], strides = [1, 1]} : vector<8x512xf32> to vector<8x128xf32>
    %29 = arith.negf %28 : vector<8x128xf32>
    %30 = math.exp %29 : vector<8x128xf32>
    %cst_16 = arith.constant 1.000000e+00 : f32
    %31 = vector.broadcast %cst_16 : f32 to vector<8x128xf32>
    %32 = arith.addf %31, %30 : vector<8x128xf32>
    %33 = arith.divf %31, %32 : vector<8x128xf32>
    %34 = arith.mulf %25, %8 : vector<8x128xf32>
    %35 = arith.mulf %19, %27 : vector<8x128xf32>
    %36 = arith.addf %34, %35 : vector<8x128xf32>
    %37 = math.tanh %36 : vector<8x128xf32>
    %38 = arith.mulf %33, %37 : vector<8x128xf32>
    %39 = arith.truncf %38 : vector<8x128xf32> to vector<8x128xbf16>
    %40 = arith.truncf %8 : vector<8x128xf32> to vector<8x128xbf16>
    %c8 = arith.constant 8 : index
    %c0_17 = arith.constant 0 : index
    %41 = vector.load %arg8[%c8, %c0_17] : memref<64x512xf32, #tpu.memory_space<vmem>>, vector<8x512xf32>
    %c0_18 = arith.constant 0 : index
    %c0_19 = arith.constant 0 : index
    %42 = vector.load %arg2[%c0_18, %c0_19] : memref<128x512xbf16, #tpu.memory_space<vmem>>, vector<128x512xbf16>
    %cst_20 = arith.constant dense<0.000000e+00> : vector<8x512xf32>
    %43 = tpu.matmul %39, %42, %cst_20 {dimension_numbers = #tpu.dot_dimension_numbers<[1], [0], [0], [1], [0, 0, 1, 1], [], []>} : vector<8x128xbf16>, vector<128x512xbf16>, vector<8x512xf32> -> vector<8x512xf32>
    %44 = arith.addf %41, %43 : vector<8x512xf32>
    %45 = vector.extract_strided_slice %44 {offsets = [0, 0], sizes = [8, 128], strides = [1, 1]} : vector<8x512xf32> to vector<8x128xf32>
    %46 = arith.negf %45 : vector<8x128xf32>
    %47 = math.exp %46 : vector<8x128xf32>
    %cst_21 = arith.constant 1.000000e+00 : f32
    %48 = vector.broadcast %cst_21 : f32 to vector<8x128xf32>
    %49 = arith.addf %48, %47 : vector<8x128xf32>
    %50 = arith.divf %48, %49 : vector<8x128xf32>
    %51 = vector.extract_strided_slice %44 {offsets = [0, 128], sizes = [8, 128], strides = [1, 1]} : vector<8x512xf32> to vector<8x128xf32>
    %52 = arith.negf %51 : vector<8x128xf32>
    %53 = math.exp %52 : vector<8x128xf32>
    %cst_22 = arith.constant 1.000000e+00 : f32
    %54 = vector.broadcast %cst_22 : f32 to vector<8x128xf32>
    %55 = arith.addf %54, %53 : vector<8x128xf32>
    %56 = arith.divf %54, %55 : vector<8x128xf32>
    %57 = vector.extract_strided_slice %44 {offsets = [0, 256], sizes = [8, 128], strides = [1, 1]} : vector<8x512xf32> to vector<8x128xf32>
    %58 = math.tanh %57 : vector<8x128xf32>
    %59 = vector.extract_strided_slice %44 {offsets = [0, 384], sizes = [8, 128], strides = [1, 1]} : vector<8x512xf32> to vector<8x128xf32>
    %60 = arith.negf %59 : vector<8x128xf32>
    %61 = math.exp %60 : vector<8x128xf32>
    %cst_23 = arith.constant 1.000000e+00 : f32
    %62 = vector.broadcast %cst_23 : f32 to vector<8x128xf32>
    %63 = arith.addf %62, %61 : vector<8x128xf32>
    %64 = arith.divf %62, %63 : vector<8x128xf32>
    %65 = arith.mulf %56, %36 : vector<8x128xf32>
    %66 = arith.mulf %50, %58 : vector<8x128xf32>
    %67 = arith.addf %65, %66 : vector<8x128xf32>
    %68 = math.tanh %67 : vector<8x128xf32>
    %69 = arith.mulf %64, %68 : vector<8x128xf32>
    %70 = tpu.concatenate %39, %40 in 1 : vector<8x128xbf16>, vector<8x128xbf16> -> vector<8x256xbf16>
    %c1 = arith.constant 1 : index
    %c0_24 = arith.constant 0 : index
    %c0_25 = arith.constant 0 : index
    %71 = vector.load %arg4[%c1, %c0_24, %c0_25] : memref<4x1x512xf32, #tpu.memory_space<vmem>>, vector<1x1x512xf32>
    %72 = vector.shape_cast %71 : vector<1x1x512xf32> to vector<1x512xf32>
    %c0_26 = arith.constant 0 : index
    %c0_27 = arith.constant 0 : index
    %c0_28 = arith.constant 0 : index
    %73 = vector.load %arg3[%c0_26, %c0_27, %c0_28] : memref<3x256x512xbf16, #tpu.memory_space<vmem>>, vector<1x256x512xbf16>
    %74 = vector.shape_cast %73 : vector<1x256x512xbf16> to vector<256x512xbf16>
    %cst_29 = arith.constant dense<0.000000e+00> : vector<8x512xf32>
    %75 = tpu.matmul %70, %74, %cst_29 {dimension_numbers = #tpu.dot_dimension_numbers<[1], [0], [0], [1], [0, 0, 1, 1], [], []>} : vector<8x256xbf16>, vector<256x512xbf16>, vector<8x512xf32> -> vector<8x512xf32>
    %76 = vector.broadcast %72 : vector<1x512xf32> to vector<8x512xf32>
    %77 = arith.addf %76, %75 : vector<8x512xf32>
    %78 = vector.extract_strided_slice %77 {offsets = [0, 0], sizes = [8, 128], strides = [1, 1]} : vector<8x512xf32> to vector<8x128xf32>
    %79 = arith.negf %78 : vector<8x128xf32>
    %80 = math.exp %79 : vector<8x128xf32>
    %cst_30 = arith.constant 1.000000e+00 : f32
    %81 = vector.broadcast %cst_30 : f32 to vector<8x128xf32>
    %82 = arith.addf %81, %80 : vector<8x128xf32>
    %83 = arith.divf %81, %82 : vector<8x128xf32>
    %84 = vector.extract_strided_slice %77 {offsets = [0, 128], sizes = [8, 128], strides = [1, 1]} : vector<8x512xf32> to vector<8x128xf32>
    %85 = arith.negf %84 : vector<8x128xf32>
    %86 = math.exp %85 : vector<8x128xf32>
    %cst_31 = arith.constant 1.000000e+00 : f32
    %87 = vector.broadcast %cst_31 : f32 to vector<8x128xf32>
    %88 = arith.addf %87, %86 : vector<8x128xf32>
    %89 = arith.divf %87, %88 : vector<8x128xf32>
    %90 = vector.extract_strided_slice %77 {offsets = [0, 256], sizes = [8, 128], strides = [1, 1]} : vector<8x512xf32> to vector<8x128xf32>
    %91 = math.tanh %90 : vector<8x128xf32>
    %92 = vector.extract_strided_slice %77 {offsets = [0, 384], sizes = [8, 128], strides = [1, 1]} : vector<8x512xf32> to vector<8x128xf32>
    %93 = arith.negf %92 : vector<8x128xf32>
    %94 = math.exp %93 : vector<8x128xf32>
    %cst_32 = arith.constant 1.000000e+00 : f32
    %95 = vector.broadcast %cst_32 : f32 to vector<8x128xf32>
    %96 = arith.addf %95, %94 : vector<8x128xf32>
    %97 = arith.divf %95, %96 : vector<8x128xf32>
    %98 = arith.mulf %89, %8 : vector<8x128xf32>
    %99 = arith.mulf %83, %91 : vector<8x128xf32>
    %100 = arith.addf %98, %99 : vector<8x128xf32>
    %101 = math.tanh %100 : vector<8x128xf32>
    %102 = arith.mulf %97, %101 : vector<8x128xf32>
    %103 = arith.truncf %69 : vector<8x128xf32> to vector<8x128xbf16>
    %104 = arith.truncf %102 : vector<8x128xf32> to vector<8x128xbf16>
    %105 = arith.truncf %8 : vector<8x128xf32> to vector<8x128xbf16>
    %c16 = arith.constant 16 : index
    %c0_33 = arith.constant 0 : index
    %106 = vector.load %arg8[%c16, %c0_33] : memref<64x512xf32, #tpu.memory_space<vmem>>, vector<8x512xf32>
    %c0_34 = arith.constant 0 : index
    %c0_35 = arith.constant 0 : index
    %107 = vector.load %arg2[%c0_34, %c0_35] : memref<128x512xbf16, #tpu.memory_space<vmem>>, vector<128x512xbf16>
    %cst_36 = arith.constant dense<0.000000e+00> : vector<8x512xf32>
    %108 = tpu.matmul %103, %107, %cst_36 {dimension_numbers = #tpu.dot_dimension_numbers<[1], [0], [0], [1], [0, 0, 1, 1], [], []>} : vector<8x128xbf16>, vector<128x512xbf16>, vector<8x512xf32> -> vector<8x512xf32>
    %109 = arith.addf %106, %108 : vector<8x512xf32>
    %110 = vector.extract_strided_slice %109 {offsets = [0, 0], sizes = [8, 128], strides = [1, 1]} : vector<8x512xf32> to vector<8x128xf32>
    %111 = arith.negf %110 : vector<8x128xf32>
    %112 = math.exp %111 : vector<8x128xf32>
    %cst_37 = arith.constant 1.000000e+00 : f32
    %113 = vector.broadcast %cst_37 : f32 to vector<8x128xf32>
    %114 = arith.addf %113, %112 : vector<8x128xf32>
    %115 = arith.divf %113, %114 : vector<8x128xf32>
    %116 = vector.extract_strided_slice %109 {offsets = [0, 128], sizes = [8, 128], strides = [1, 1]} : vector<8x512xf32> to vector<8x128xf32>
    %117 = arith.negf %116 : vector<8x128xf32>
    %118 = math.exp %117 : vector<8x128xf32>
    %cst_38 = arith.constant 1.000000e+00 : f32
    %119 = vector.broadcast %cst_38 : f32 to vector<8x128xf32>
    %120 = arith.addf %119, %118 : vector<8x128xf32>
    %121 = arith.divf %119, %120 : vector<8x128xf32>
    %122 = vector.extract_strided_slice %109 {offsets = [0, 256], sizes = [8, 128], strides = [1, 1]} : vector<8x512xf32> to vector<8x128xf32>
    %123 = math.tanh %122 : vector<8x128xf32>
    %124 = vector.extract_strided_slice %109 {offsets = [0, 384], sizes = [8, 128], strides = [1, 1]} : vector<8x512xf32> to vector<8x128xf32>
    %125 = arith.negf %124 : vector<8x128xf32>
    %126 = math.exp %125 : vector<8x128xf32>
    %cst_39 = arith.constant 1.000000e+00 : f32
    %127 = vector.broadcast %cst_39 : f32 to vector<8x128xf32>
    %128 = arith.addf %127, %126 : vector<8x128xf32>
    %129 = arith.divf %127, %128 : vector<8x128xf32>
    %130 = arith.mulf %121, %67 : vector<8x128xf32>
    %131 = arith.mulf %115, %123 : vector<8x128xf32>
    %132 = arith.addf %130, %131 : vector<8x128xf32>
    %133 = math.tanh %132 : vector<8x128xf32>
    %134 = arith.mulf %129, %133 : vector<8x128xf32>
    %135 = tpu.concatenate %103, %104 in 1 : vector<8x128xbf16>, vector<8x128xbf16> -> vector<8x256xbf16>
    %c1_40 = arith.constant 1 : index
    %c0_41 = arith.constant 0 : index
    %c0_42 = arith.constant 0 : index
    %136 = vector.load %arg4[%c1_40, %c0_41, %c0_42] : memref<4x1x512xf32, #tpu.memory_space<vmem>>, vector<1x1x512xf32>
    %137 = vector.shape_cast %136 : vector<1x1x512xf32> to vector<1x512xf32>
    %c0_43 = arith.constant 0 : index
    %c0_44 = arith.constant 0 : index
    %c0_45 = arith.constant 0 : index
    %138 = vector.load %arg3[%c0_43, %c0_44, %c0_45] : memref<3x256x512xbf16, #tpu.memory_space<vmem>>, vector<1x256x512xbf16>
    %139 = vector.shape_cast %138 : vector<1x256x512xbf16> to vector<256x512xbf16>
    %cst_46 = arith.constant dense<0.000000e+00> : vector<8x512xf32>
    %140 = tpu.matmul %135, %139, %cst_46 {dimension_numbers = #tpu.dot_dimension_numbers<[1], [0], [0], [1], [0, 0, 1, 1], [], []>} : vector<8x256xbf16>, vector<256x512xbf16>, vector<8x512xf32> -> vector<8x512xf32>
    %141 = vector.broadcast %137 : vector<1x512xf32> to vector<8x512xf32>
    %142 = arith.addf %141, %140 : vector<8x512xf32>
    %143 = vector.extract_strided_slice %142 {offsets = [0, 0], sizes = [8, 128], strides = [1, 1]} : vector<8x512xf32> to vector<8x128xf32>
    %144 = arith.negf %143 : vector<8x128xf32>
    %145 = math.exp %144 : vector<8x128xf32>
    %cst_47 = arith.constant 1.000000e+00 : f32
    %146 = vector.broadcast %cst_47 : f32 to vector<8x128xf32>
    %147 = arith.addf %146, %145 : vector<8x128xf32>
    %148 = arith.divf %146, %147 : vector<8x128xf32>
    %149 = vector.extract_strided_slice %142 {offsets = [0, 128], sizes = [8, 128], strides = [1, 1]} : vector<8x512xf32> to vector<8x128xf32>
    %150 = arith.negf %149 : vector<8x128xf32>
    %151 = math.exp %150 : vector<8x128xf32>
    %cst_48 = arith.constant 1.000000e+00 : f32
    %152 = vector.broadcast %cst_48 : f32 to vector<8x128xf32>
    %153 = arith.addf %152, %151 : vector<8x128xf32>
    %154 = arith.divf %152, %153 : vector<8x128xf32>
    %155 = vector.extract_strided_slice %142 {offsets = [0, 256], sizes = [8, 128], strides = [1, 1]} : vector<8x512xf32> to vector<8x128xf32>
    %156 = math.tanh %155 : vector<8x128xf32>
    %157 = vector.extract_strided_slice %142 {offsets = [0, 384], sizes = [8, 128], strides = [1, 1]} : vector<8x512xf32> to vector<8x128xf32>
    %158 = arith.negf %157 : vector<8x128xf32>
    %159 = math.exp %158 : vector<8x128xf32>
    %cst_49 = arith.constant 1.000000e+00 : f32
    %160 = vector.broadcast %cst_49 : f32 to vector<8x128xf32>
    %161 = arith.addf %160, %159 : vector<8x128xf32>
    %162 = arith.divf %160, %161 : vector<8x128xf32>
    %163 = arith.mulf %154, %100 : vector<8x128xf32>
    %164 = arith.mulf %148, %156 : vector<8x128xf32>
    %165 = arith.addf %163, %164 : vector<8x128xf32>
    %166 = math.tanh %165 : vector<8x128xf32>
    %167 = arith.mulf %162, %166 : vector<8x128xf32>
    %168 = tpu.concatenate %104, %105 in 1 : vector<8x128xbf16>, vector<8x128xbf16> -> vector<8x256xbf16>
    %c2 = arith.constant 2 : index
    %c0_50 = arith.constant 0 : index
    %c0_51 = arith.constant 0 : index
    %169 = vector.load %arg4[%c2, %c0_50, %c0_51] : memref<4x1x512xf32, #tpu.memory_space<vmem>>, vector<1x1x512xf32>
    %170 = vector.shape_cast %169 : vector<1x1x512xf32> to vector<1x512xf32>
    %c1_52 = arith.constant 1 : index
    %c0_53 = arith.constant 0 : index
    %c0_54 = arith.constant 0 : index
    %171 = vector.load %arg3[%c1_52, %c0_53, %c0_54] : memref<3x256x512xbf16, #tpu.memory_space<vmem>>, vector<1x256x512xbf16>
    %172 = vector.shape_cast %171 : vector<1x256x512xbf16> to vector<256x512xbf16>
    %cst_55 = arith.constant dense<0.000000e+00> : vector<8x512xf32>
    %173 = tpu.matmul %168, %172, %cst_55 {dimension_numbers = #tpu.dot_dimension_numbers<[1], [0], [0], [1], [0, 0, 1, 1], [], []>} : vector<8x256xbf16>, vector<256x512xbf16>, vector<8x512xf32> -> vector<8x512xf32>
    %174 = vector.broadcast %170 : vector<1x512xf32> to vector<8x512xf32>
    %175 = arith.addf %174, %173 : vector<8x512xf32>
    %176 = vector.extract_strided_slice %175 {offsets = [0, 0], sizes = [8, 128], strides = [1, 1]} : vector<8x512xf32> to vector<8x128xf32>
    %177 = arith.negf %176 : vector<8x128xf32>
    %178 = math.exp %177 : vector<8x128xf32>
    %cst_56 = arith.constant 1.000000e+00 : f32
    %179 = vector.broadcast %cst_56 : f32 to vector<8x128xf32>
    %180 = arith.addf %179, %178 : vector<8x128xf32>
    %181 = arith.divf %179, %180 : vector<8x128xf32>
    %182 = vector.extract_strided_slice %175 {offsets = [0, 128], sizes = [8, 128], strides = [1, 1]} : vector<8x512xf32> to vector<8x128xf32>
    %183 = arith.negf %182 : vector<8x128xf32>
    %184 = math.exp %183 : vector<8x128xf32>
    %cst_57 = arith.constant 1.000000e+00 : f32
    %185 = vector.broadcast %cst_57 : f32 to vector<8x128xf32>
    %186 = arith.addf %185, %184 : vector<8x128xf32>
    %187 = arith.divf %185, %186 : vector<8x128xf32>
    %188 = vector.extract_strided_slice %175 {offsets = [0, 256], sizes = [8, 128], strides = [1, 1]} : vector<8x512xf32> to vector<8x128xf32>
    %189 = math.tanh %188 : vector<8x128xf32>
    %190 = vector.extract_strided_slice %175 {offsets = [0, 384], sizes = [8, 128], strides = [1, 1]} : vector<8x512xf32> to vector<8x128xf32>
    %191 = arith.negf %190 : vector<8x128xf32>
    %192 = math.exp %191 : vector<8x128xf32>
    %cst_58 = arith.constant 1.000000e+00 : f32
    %193 = vector.broadcast %cst_58 : f32 to vector<8x128xf32>
    %194 = arith.addf %193, %192 : vector<8x128xf32>
    %195 = arith.divf %193, %194 : vector<8x128xf32>
    %196 = arith.mulf %187, %8 : vector<8x128xf32>
    %197 = arith.mulf %181, %189 : vector<8x128xf32>
    %198 = arith.addf %196, %197 : vector<8x128xf32>
    %199 = math.tanh %198 : vector<8x128xf32>
    %200 = arith.mulf %195, %199 : vector<8x128xf32>
    %201 = arith.truncf %134 : vector<8x128xf32> to vector<8x128xbf16>
    %202 = arith.truncf %167 : vector<8x128xf32> to vector<8x128xbf16>
    %203 = arith.truncf %200 : vector<8x128xf32> to vector<8x128xbf16>
    %204 = arith.truncf %8 : vector<8x128xf32> to vector<8x128xbf16>
    %c24 = arith.constant 24 : index
    %c0_59 = arith.constant 0 : index
    %205 = vector.load %arg8[%c24, %c0_59] : memref<64x512xf32, #tpu.memory_space<vmem>>, vector<8x512xf32>
    %c0_60 = arith.constant 0 : index
    %c0_61 = arith.constant 0 : index
    %206 = vector.load %arg2[%c0_60, %c0_61] : memref<128x512xbf16, #tpu.memory_space<vmem>>, vector<128x512xbf16>
    %cst_62 = arith.constant dense<0.000000e+00> : vector<8x512xf32>
    %207 = tpu.matmul %201, %206, %cst_62 {dimension_numbers = #tpu.dot_dimension_numbers<[1], [0], [0], [1], [0, 0, 1, 1], [], []>} : vector<8x128xbf16>, vector<128x512xbf16>, vector<8x512xf32> -> vector<8x512xf32>
    %208 = arith.addf %205, %207 : vector<8x512xf32>
    %209 = vector.extract_strided_slice %208 {offsets = [0, 0], sizes = [8, 128], strides = [1, 1]} : vector<8x512xf32> to vector<8x128xf32>
    %210 = arith.negf %209 : vector<8x128xf32>
    %211 = math.exp %210 : vector<8x128xf32>
    %cst_63 = arith.constant 1.000000e+00 : f32
    %212 = vector.broadcast %cst_63 : f32 to vector<8x128xf32>
    %213 = arith.addf %212, %211 : vector<8x128xf32>
    %214 = arith.divf %212, %213 : vector<8x128xf32>
    %215 = vector.extract_strided_slice %208 {offsets = [0, 128], sizes = [8, 128], strides = [1, 1]} : vector<8x512xf32> to vector<8x128xf32>
    %216 = arith.negf %215 : vector<8x128xf32>
    %217 = math.exp %216 : vector<8x128xf32>
    %cst_64 = arith.constant 1.000000e+00 : f32
    %218 = vector.broadcast %cst_64 : f32 to vector<8x128xf32>
    %219 = arith.addf %218, %217 : vector<8x128xf32>
    %220 = arith.divf %218, %219 : vector<8x128xf32>
    %221 = vector.extract_strided_slice %208 {offsets = [0, 256], sizes = [8, 128], strides = [1, 1]} : vector<8x512xf32> to vector<8x128xf32>
    %222 = math.tanh %221 : vector<8x128xf32>
    %223 = vector.extract_strided_slice %208 {offsets = [0, 384], sizes = [8, 128], strides = [1, 1]} : vector<8x512xf32> to vector<8x128xf32>
    %224 = arith.negf %223 : vector<8x128xf32>
    %225 = math.exp %224 : vector<8x128xf32>
    %cst_65 = arith.constant 1.000000e+00 : f32
    %226 = vector.broadcast %cst_65 : f32 to vector<8x128xf32>
    %227 = arith.addf %226, %225 : vector<8x128xf32>
    %228 = arith.divf %226, %227 : vector<8x128xf32>
    %229 = arith.mulf %220, %132 : vector<8x128xf32>
    %230 = arith.mulf %214, %222 : vector<8x128xf32>
    %231 = arith.addf %229, %230 : vector<8x128xf32>
    %232 = math.tanh %231 : vector<8x128xf32>
    %233 = arith.mulf %228, %232 : vector<8x128xf32>
    %234 = tpu.concatenate %201, %202 in 1 : vector<8x128xbf16>, vector<8x128xbf16> -> vector<8x256xbf16>
    %c1_66 = arith.constant 1 : index
    %c0_67 = arith.constant 0 : index
    %c0_68 = arith.constant 0 : index
    %235 = vector.load %arg4[%c1_66, %c0_67, %c0_68] : memref<4x1x512xf32, #tpu.memory_space<vmem>>, vector<1x1x512xf32>
    %236 = vector.shape_cast %235 : vector<1x1x512xf32> to vector<1x512xf32>
    %c0_69 = arith.constant 0 : index
    %c0_70 = arith.constant 0 : index
    %c0_71 = arith.constant 0 : index
    %237 = vector.load %arg3[%c0_69, %c0_70, %c0_71] : memref<3x256x512xbf16, #tpu.memory_space<vmem>>, vector<1x256x512xbf16>
    %238 = vector.shape_cast %237 : vector<1x256x512xbf16> to vector<256x512xbf16>
    %cst_72 = arith.constant dense<0.000000e+00> : vector<8x512xf32>
    %239 = tpu.matmul %234, %238, %cst_72 {dimension_numbers = #tpu.dot_dimension_numbers<[1], [0], [0], [1], [0, 0, 1, 1], [], []>} : vector<8x256xbf16>, vector<256x512xbf16>, vector<8x512xf32> -> vector<8x512xf32>
    %240 = vector.broadcast %236 : vector<1x512xf32> to vector<8x512xf32>
    %241 = arith.addf %240, %239 : vector<8x512xf32>
    %242 = vector.extract_strided_slice %241 {offsets = [0, 0], sizes = [8, 128], strides = [1, 1]} : vector<8x512xf32> to vector<8x128xf32>
    %243 = arith.negf %242 : vector<8x128xf32>
    %244 = math.exp %243 : vector<8x128xf32>
    %cst_73 = arith.constant 1.000000e+00 : f32
    %245 = vector.broadcast %cst_73 : f32 to vector<8x128xf32>
    %246 = arith.addf %245, %244 : vector<8x128xf32>
    %247 = arith.divf %245, %246 : vector<8x128xf32>
    %248 = vector.extract_strided_slice %241 {offsets = [0, 128], sizes = [8, 128], strides = [1, 1]} : vector<8x512xf32> to vector<8x128xf32>
    %249 = arith.negf %248 : vector<8x128xf32>
    %250 = math.exp %249 : vector<8x128xf32>
    %cst_74 = arith.constant 1.000000e+00 : f32
    %251 = vector.broadcast %cst_74 : f32 to vector<8x128xf32>
    %252 = arith.addf %251, %250 : vector<8x128xf32>
    %253 = arith.divf %251, %252 : vector<8x128xf32>
    %254 = vector.extract_strided_slice %241 {offsets = [0, 256], sizes = [8, 128], strides = [1, 1]} : vector<8x512xf32> to vector<8x128xf32>
    %255 = math.tanh %254 : vector<8x128xf32>
    %256 = vector.extract_strided_slice %241 {offsets = [0, 384], sizes = [8, 128], strides = [1, 1]} : vector<8x512xf32> to vector<8x128xf32>
    %257 = arith.negf %256 : vector<8x128xf32>
    %258 = math.exp %257 : vector<8x128xf32>
    %cst_75 = arith.constant 1.000000e+00 : f32
    %259 = vector.broadcast %cst_75 : f32 to vector<8x128xf32>
    %260 = arith.addf %259, %258 : vector<8x128xf32>
    %261 = arith.divf %259, %260 : vector<8x128xf32>
    %262 = arith.mulf %253, %165 : vector<8x128xf32>
    %263 = arith.mulf %247, %255 : vector<8x128xf32>
    %264 = arith.addf %262, %263 : vector<8x128xf32>
    %265 = math.tanh %264 : vector<8x128xf32>
    %266 = arith.mulf %261, %265 : vector<8x128xf32>
    %267 = tpu.concatenate %202, %203 in 1 : vector<8x128xbf16>, vector<8x128xbf16> -> vector<8x256xbf16>
    %c2_76 = arith.constant 2 : index
    %c0_77 = arith.constant 0 : index
    %c0_78 = arith.constant 0 : index
    %268 = vector.load %arg4[%c2_76, %c0_77, %c0_78] : memref<4x1x512xf32, #tpu.memory_space<vmem>>, vector<1x1x512xf32>
    %269 = vector.shape_cast %268 : vector<1x1x512xf32> to vector<1x512xf32>
    %c1_79 = arith.constant 1 : index
    %c0_80 = arith.constant 0 : index
    %c0_81 = arith.constant 0 : index
    %270 = vector.load %arg3[%c1_79, %c0_80, %c0_81] : memref<3x256x512xbf16, #tpu.memory_space<vmem>>, vector<1x256x512xbf16>
    %271 = vector.shape_cast %270 : vector<1x256x512xbf16> to vector<256x512xbf16>
    %cst_82 = arith.constant dense<0.000000e+00> : vector<8x512xf32>
    %272 = tpu.matmul %267, %271, %cst_82 {dimension_numbers = #tpu.dot_dimension_numbers<[1], [0], [0], [1], [0, 0, 1, 1], [], []>} : vector<8x256xbf16>, vector<256x512xbf16>, vector<8x512xf32> -> vector<8x512xf32>
    %273 = vector.broadcast %269 : vector<1x512xf32> to vector<8x512xf32>
    %274 = arith.addf %273, %272 : vector<8x512xf32>
    %275 = vector.extract_strided_slice %274 {offsets = [0, 0], sizes = [8, 128], strides = [1, 1]} : vector<8x512xf32> to vector<8x128xf32>
    %276 = arith.negf %275 : vector<8x128xf32>
    %277 = math.exp %276 : vector<8x128xf32>
    %cst_83 = arith.constant 1.000000e+00 : f32
    %278 = vector.broadcast %cst_83 : f32 to vector<8x128xf32>
    %279 = arith.addf %278, %277 : vector<8x128xf32>
    %280 = arith.divf %278, %279 : vector<8x128xf32>
    %281 = vector.extract_strided_slice %274 {offsets = [0, 128], sizes = [8, 128], strides = [1, 1]} : vector<8x512xf32> to vector<8x128xf32>
    %282 = arith.negf %281 : vector<8x128xf32>
    %283 = math.exp %282 : vector<8x128xf32>
    %cst_84 = arith.constant 1.000000e+00 : f32
    %284 = vector.broadcast %cst_84 : f32 to vector<8x128xf32>
    %285 = arith.addf %284, %283 : vector<8x128xf32>
    %286 = arith.divf %284, %285 : vector<8x128xf32>
    %287 = vector.extract_strided_slice %274 {offsets = [0, 256], sizes = [8, 128], strides = [1, 1]} : vector<8x512xf32> to vector<8x128xf32>
    %288 = math.tanh %287 : vector<8x128xf32>
    %289 = vector.extract_strided_slice %274 {offsets = [0, 384], sizes = [8, 128], strides = [1, 1]} : vector<8x512xf32> to vector<8x128xf32>
    %290 = arith.negf %289 : vector<8x128xf32>
    %291 = math.exp %290 : vector<8x128xf32>
    %cst_85 = arith.constant 1.000000e+00 : f32
    %292 = vector.broadcast %cst_85 : f32 to vector<8x128xf32>
    %293 = arith.addf %292, %291 : vector<8x128xf32>
    %294 = arith.divf %292, %293 : vector<8x128xf32>
    %295 = arith.mulf %286, %198 : vector<8x128xf32>
    %296 = arith.mulf %280, %288 : vector<8x128xf32>
    %297 = arith.addf %295, %296 : vector<8x128xf32>
    %298 = math.tanh %297 : vector<8x128xf32>
    %299 = arith.mulf %294, %298 : vector<8x128xf32>
    %300 = tpu.concatenate %203, %204 in 1 : vector<8x128xbf16>, vector<8x128xbf16> -> vector<8x256xbf16>
    %c3 = arith.constant 3 : index
    %c0_86 = arith.constant 0 : index
    %c0_87 = arith.constant 0 : index
    %301 = vector.load %arg4[%c3, %c0_86, %c0_87] : memref<4x1x512xf32, #tpu.memory_space<vmem>>, vector<1x1x512xf32>
    %302 = vector.shape_cast %301 : vector<1x1x512xf32> to vector<1x512xf32>
    %c2_88 = arith.constant 2 : index
    %c0_89 = arith.constant 0 : index
    %c0_90 = arith.constant 0 : index
    %303 = vector.load %arg3[%c2_88, %c0_89, %c0_90] : memref<3x256x512xbf16, #tpu.memory_space<vmem>>, vector<1x256x512xbf16>
    %304 = vector.shape_cast %303 : vector<1x256x512xbf16> to vector<256x512xbf16>
    %cst_91 = arith.constant dense<0.000000e+00> : vector<8x512xf32>
    %305 = tpu.matmul %300, %304, %cst_91 {dimension_numbers = #tpu.dot_dimension_numbers<[1], [0], [0], [1], [0, 0, 1, 1], [], []>} : vector<8x256xbf16>, vector<256x512xbf16>, vector<8x512xf32> -> vector<8x512xf32>
    %306 = vector.broadcast %302 : vector<1x512xf32> to vector<8x512xf32>
    %307 = arith.addf %306, %305 : vector<8x512xf32>
    %308 = vector.extract_strided_slice %307 {offsets = [0, 0], sizes = [8, 128], strides = [1, 1]} : vector<8x512xf32> to vector<8x128xf32>
    %309 = arith.negf %308 : vector<8x128xf32>
    %310 = math.exp %309 : vector<8x128xf32>
    %cst_92 = arith.constant 1.000000e+00 : f32
    %311 = vector.broadcast %cst_92 : f32 to vector<8x128xf32>
    %312 = arith.addf %311, %310 : vector<8x128xf32>
    %313 = arith.divf %311, %312 : vector<8x128xf32>
    %314 = vector.extract_strided_slice %307 {offsets = [0, 128], sizes = [8, 128], strides = [1, 1]} : vector<8x512xf32> to vector<8x128xf32>
    %315 = arith.negf %314 : vector<8x128xf32>
    %316 = math.exp %315 : vector<8x128xf32>
    %cst_93 = arith.constant 1.000000e+00 : f32
    %317 = vector.broadcast %cst_93 : f32 to vector<8x128xf32>
    %318 = arith.addf %317, %316 : vector<8x128xf32>
    %319 = arith.divf %317, %318 : vector<8x128xf32>
    %320 = vector.extract_strided_slice %307 {offsets = [0, 256], sizes = [8, 128], strides = [1, 1]} : vector<8x512xf32> to vector<8x128xf32>
    %321 = math.tanh %320 : vector<8x128xf32>
    %322 = vector.extract_strided_slice %307 {offsets = [0, 384], sizes = [8, 128], strides = [1, 1]} : vector<8x512xf32> to vector<8x128xf32>
    %323 = arith.negf %322 : vector<8x128xf32>
    %324 = math.exp %323 : vector<8x128xf32>
    %cst_94 = arith.constant 1.000000e+00 : f32
    %325 = vector.broadcast %cst_94 : f32 to vector<8x128xf32>
    %326 = arith.addf %325, %324 : vector<8x128xf32>
    %327 = arith.divf %325, %326 : vector<8x128xf32>
    %328 = arith.mulf %319, %8 : vector<8x128xf32>
    %329 = arith.mulf %313, %321 : vector<8x128xf32>
    %330 = arith.addf %328, %329 : vector<8x128xf32>
    %331 = math.tanh %330 : vector<8x128xf32>
    %332 = arith.mulf %327, %331 : vector<8x128xf32>
    %333 = arith.truncf %233 : vector<8x128xf32> to vector<8x128xbf16>
    %334 = arith.truncf %266 : vector<8x128xf32> to vector<8x128xbf16>
    %335 = arith.truncf %299 : vector<8x128xf32> to vector<8x128xbf16>
    %336 = arith.truncf %332 : vector<8x128xf32> to vector<8x128xbf16>
    %c32 = arith.constant 32 : index
    %c0_95 = arith.constant 0 : index
    %337 = vector.load %arg8[%c32, %c0_95] : memref<64x512xf32, #tpu.memory_space<vmem>>, vector<8x512xf32>
    %c0_96 = arith.constant 0 : index
    %c0_97 = arith.constant 0 : index
    %338 = vector.load %arg2[%c0_96, %c0_97] : memref<128x512xbf16, #tpu.memory_space<vmem>>, vector<128x512xbf16>
    %cst_98 = arith.constant dense<0.000000e+00> : vector<8x512xf32>
    %339 = tpu.matmul %333, %338, %cst_98 {dimension_numbers = #tpu.dot_dimension_numbers<[1], [0], [0], [1], [0, 0, 1, 1], [], []>} : vector<8x128xbf16>, vector<128x512xbf16>, vector<8x512xf32> -> vector<8x512xf32>
    %340 = arith.addf %337, %339 : vector<8x512xf32>
    %341 = vector.extract_strided_slice %340 {offsets = [0, 0], sizes = [8, 128], strides = [1, 1]} : vector<8x512xf32> to vector<8x128xf32>
    %342 = arith.negf %341 : vector<8x128xf32>
    %343 = math.exp %342 : vector<8x128xf32>
    %cst_99 = arith.constant 1.000000e+00 : f32
    %344 = vector.broadcast %cst_99 : f32 to vector<8x128xf32>
    %345 = arith.addf %344, %343 : vector<8x128xf32>
    %346 = arith.divf %344, %345 : vector<8x128xf32>
    %347 = vector.extract_strided_slice %340 {offsets = [0, 128], sizes = [8, 128], strides = [1, 1]} : vector<8x512xf32> to vector<8x128xf32>
    %348 = arith.negf %347 : vector<8x128xf32>
    %349 = math.exp %348 : vector<8x128xf32>
    %cst_100 = arith.constant 1.000000e+00 : f32
    %350 = vector.broadcast %cst_100 : f32 to vector<8x128xf32>
    %351 = arith.addf %350, %349 : vector<8x128xf32>
    %352 = arith.divf %350, %351 : vector<8x128xf32>
    %353 = vector.extract_strided_slice %340 {offsets = [0, 256], sizes = [8, 128], strides = [1, 1]} : vector<8x512xf32> to vector<8x128xf32>
    %354 = math.tanh %353 : vector<8x128xf32>
    %355 = vector.extract_strided_slice %340 {offsets = [0, 384], sizes = [8, 128], strides = [1, 1]} : vector<8x512xf32> to vector<8x128xf32>
    %356 = arith.negf %355 : vector<8x128xf32>
    %357 = math.exp %356 : vector<8x128xf32>
    %cst_101 = arith.constant 1.000000e+00 : f32
    %358 = vector.broadcast %cst_101 : f32 to vector<8x128xf32>
    %359 = arith.addf %358, %357 : vector<8x128xf32>
    %360 = arith.divf %358, %359 : vector<8x128xf32>
    %361 = arith.mulf %352, %231 : vector<8x128xf32>
    %362 = arith.mulf %346, %354 : vector<8x128xf32>
    %363 = arith.addf %361, %362 : vector<8x128xf32>
    %364 = math.tanh %363 : vector<8x128xf32>
    %365 = arith.mulf %360, %364 : vector<8x128xf32>
    %366 = tpu.concatenate %333, %334 in 1 : vector<8x128xbf16>, vector<8x128xbf16> -> vector<8x256xbf16>
    %c1_102 = arith.constant 1 : index
    %c0_103 = arith.constant 0 : index
    %c0_104 = arith.constant 0 : index
    %367 = vector.load %arg4[%c1_102, %c0_103, %c0_104] : memref<4x1x512xf32, #tpu.memory_space<vmem>>, vector<1x1x512xf32>
    %368 = vector.shape_cast %367 : vector<1x1x512xf32> to vector<1x512xf32>
    %c0_105 = arith.constant 0 : index
    %c0_106 = arith.constant 0 : index
    %c0_107 = arith.constant 0 : index
    %369 = vector.load %arg3[%c0_105, %c0_106, %c0_107] : memref<3x256x512xbf16, #tpu.memory_space<vmem>>, vector<1x256x512xbf16>
    %370 = vector.shape_cast %369 : vector<1x256x512xbf16> to vector<256x512xbf16>
    %cst_108 = arith.constant dense<0.000000e+00> : vector<8x512xf32>
    %371 = tpu.matmul %366, %370, %cst_108 {dimension_numbers = #tpu.dot_dimension_numbers<[1], [0], [0], [1], [0, 0, 1, 1], [], []>} : vector<8x256xbf16>, vector<256x512xbf16>, vector<8x512xf32> -> vector<8x512xf32>
    %372 = vector.broadcast %368 : vector<1x512xf32> to vector<8x512xf32>
    %373 = arith.addf %372, %371 : vector<8x512xf32>
    %374 = vector.extract_strided_slice %373 {offsets = [0, 0], sizes = [8, 128], strides = [1, 1]} : vector<8x512xf32> to vector<8x128xf32>
    %375 = arith.negf %374 : vector<8x128xf32>
    %376 = math.exp %375 : vector<8x128xf32>
    %cst_109 = arith.constant 1.000000e+00 : f32
    %377 = vector.broadcast %cst_109 : f32 to vector<8x128xf32>
    %378 = arith.addf %377, %376 : vector<8x128xf32>
    %379 = arith.divf %377, %378 : vector<8x128xf32>
    %380 = vector.extract_strided_slice %373 {offsets = [0, 128], sizes = [8, 128], strides = [1, 1]} : vector<8x512xf32> to vector<8x128xf32>
    %381 = arith.negf %380 : vector<8x128xf32>
    %382 = math.exp %381 : vector<8x128xf32>
    %cst_110 = arith.constant 1.000000e+00 : f32
    %383 = vector.broadcast %cst_110 : f32 to vector<8x128xf32>
    %384 = arith.addf %383, %382 : vector<8x128xf32>
    %385 = arith.divf %383, %384 : vector<8x128xf32>
    %386 = vector.extract_strided_slice %373 {offsets = [0, 256], sizes = [8, 128], strides = [1, 1]} : vector<8x512xf32> to vector<8x128xf32>
    %387 = math.tanh %386 : vector<8x128xf32>
    %388 = vector.extract_strided_slice %373 {offsets = [0, 384], sizes = [8, 128], strides = [1, 1]} : vector<8x512xf32> to vector<8x128xf32>
    %389 = arith.negf %388 : vector<8x128xf32>
    %390 = math.exp %389 : vector<8x128xf32>
    %cst_111 = arith.constant 1.000000e+00 : f32
    %391 = vector.broadcast %cst_111 : f32 to vector<8x128xf32>
    %392 = arith.addf %391, %390 : vector<8x128xf32>
    %393 = arith.divf %391, %392 : vector<8x128xf32>
    %394 = arith.mulf %385, %264 : vector<8x128xf32>
    %395 = arith.mulf %379, %387 : vector<8x128xf32>
    %396 = arith.addf %394, %395 : vector<8x128xf32>
    %397 = math.tanh %396 : vector<8x128xf32>
    %398 = arith.mulf %393, %397 : vector<8x128xf32>
    %399 = tpu.concatenate %334, %335 in 1 : vector<8x128xbf16>, vector<8x128xbf16> -> vector<8x256xbf16>
    %c2_112 = arith.constant 2 : index
    %c0_113 = arith.constant 0 : index
    %c0_114 = arith.constant 0 : index
    %400 = vector.load %arg4[%c2_112, %c0_113, %c0_114] : memref<4x1x512xf32, #tpu.memory_space<vmem>>, vector<1x1x512xf32>
    %401 = vector.shape_cast %400 : vector<1x1x512xf32> to vector<1x512xf32>
    %c1_115 = arith.constant 1 : index
    %c0_116 = arith.constant 0 : index
    %c0_117 = arith.constant 0 : index
    %402 = vector.load %arg3[%c1_115, %c0_116, %c0_117] : memref<3x256x512xbf16, #tpu.memory_space<vmem>>, vector<1x256x512xbf16>
    %403 = vector.shape_cast %402 : vector<1x256x512xbf16> to vector<256x512xbf16>
    %cst_118 = arith.constant dense<0.000000e+00> : vector<8x512xf32>
    %404 = tpu.matmul %399, %403, %cst_118 {dimension_numbers = #tpu.dot_dimension_numbers<[1], [0], [0], [1], [0, 0, 1, 1], [], []>} : vector<8x256xbf16>, vector<256x512xbf16>, vector<8x512xf32> -> vector<8x512xf32>
    %405 = vector.broadcast %401 : vector<1x512xf32> to vector<8x512xf32>
    %406 = arith.addf %405, %404 : vector<8x512xf32>
    %407 = vector.extract_strided_slice %406 {offsets = [0, 0], sizes = [8, 128], strides = [1, 1]} : vector<8x512xf32> to vector<8x128xf32>
    %408 = arith.negf %407 : vector<8x128xf32>
    %409 = math.exp %408 : vector<8x128xf32>
    %cst_119 = arith.constant 1.000000e+00 : f32
    %410 = vector.broadcast %cst_119 : f32 to vector<8x128xf32>
    %411 = arith.addf %410, %409 : vector<8x128xf32>
    %412 = arith.divf %410, %411 : vector<8x128xf32>
    %413 = vector.extract_strided_slice %406 {offsets = [0, 128], sizes = [8, 128], strides = [1, 1]} : vector<8x512xf32> to vector<8x128xf32>
    %414 = arith.negf %413 : vector<8x128xf32>
    %415 = math.exp %414 : vector<8x128xf32>
    %cst_120 = arith.constant 1.000000e+00 : f32
    %416 = vector.broadcast %cst_120 : f32 to vector<8x128xf32>
    %417 = arith.addf %416, %415 : vector<8x128xf32>
    %418 = arith.divf %416, %417 : vector<8x128xf32>
    %419 = vector.extract_strided_slice %406 {offsets = [0, 256], sizes = [8, 128], strides = [1, 1]} : vector<8x512xf32> to vector<8x128xf32>
    %420 = math.tanh %419 : vector<8x128xf32>
    %421 = vector.extract_strided_slice %406 {offsets = [0, 384], sizes = [8, 128], strides = [1, 1]} : vector<8x512xf32> to vector<8x128xf32>
    %422 = arith.negf %421 : vector<8x128xf32>
    %423 = math.exp %422 : vector<8x128xf32>
    %cst_121 = arith.constant 1.000000e+00 : f32
    %424 = vector.broadcast %cst_121 : f32 to vector<8x128xf32>
    %425 = arith.addf %424, %423 : vector<8x128xf32>
    %426 = arith.divf %424, %425 : vector<8x128xf32>
    %427 = arith.mulf %418, %297 : vector<8x128xf32>
    %428 = arith.mulf %412, %420 : vector<8x128xf32>
    %429 = arith.addf %427, %428 : vector<8x128xf32>
    %430 = math.tanh %429 : vector<8x128xf32>
    %431 = arith.mulf %426, %430 : vector<8x128xf32>
    %432 = tpu.concatenate %335, %336 in 1 : vector<8x128xbf16>, vector<8x128xbf16> -> vector<8x256xbf16>
    %c3_122 = arith.constant 3 : index
    %c0_123 = arith.constant 0 : index
    %c0_124 = arith.constant 0 : index
    %433 = vector.load %arg4[%c3_122, %c0_123, %c0_124] : memref<4x1x512xf32, #tpu.memory_space<vmem>>, vector<1x1x512xf32>
    %434 = vector.shape_cast %433 : vector<1x1x512xf32> to vector<1x512xf32>
    %c2_125 = arith.constant 2 : index
    %c0_126 = arith.constant 0 : index
    %c0_127 = arith.constant 0 : index
    %435 = vector.load %arg3[%c2_125, %c0_126, %c0_127] : memref<3x256x512xbf16, #tpu.memory_space<vmem>>, vector<1x256x512xbf16>
    %436 = vector.shape_cast %435 : vector<1x256x512xbf16> to vector<256x512xbf16>
    %cst_128 = arith.constant dense<0.000000e+00> : vector<8x512xf32>
    %437 = tpu.matmul %432, %436, %cst_128 {dimension_numbers = #tpu.dot_dimension_numbers<[1], [0], [0], [1], [0, 0, 1, 1], [], []>} : vector<8x256xbf16>, vector<256x512xbf16>, vector<8x512xf32> -> vector<8x512xf32>
    %438 = vector.broadcast %434 : vector<1x512xf32> to vector<8x512xf32>
    %439 = arith.addf %438, %437 : vector<8x512xf32>
    %440 = vector.extract_strided_slice %439 {offsets = [0, 0], sizes = [8, 128], strides = [1, 1]} : vector<8x512xf32> to vector<8x128xf32>
    %441 = arith.negf %440 : vector<8x128xf32>
    %442 = math.exp %441 : vector<8x128xf32>
    %cst_129 = arith.constant 1.000000e+00 : f32
    %443 = vector.broadcast %cst_129 : f32 to vector<8x128xf32>
    %444 = arith.addf %443, %442 : vector<8x128xf32>
    %445 = arith.divf %443, %444 : vector<8x128xf32>
    %446 = vector.extract_strided_slice %439 {offsets = [0, 128], sizes = [8, 128], strides = [1, 1]} : vector<8x512xf32> to vector<8x128xf32>
    %447 = arith.negf %446 : vector<8x128xf32>
    %448 = math.exp %447 : vector<8x128xf32>
    %cst_130 = arith.constant 1.000000e+00 : f32
    %449 = vector.broadcast %cst_130 : f32 to vector<8x128xf32>
    %450 = arith.addf %449, %448 : vector<8x128xf32>
    %451 = arith.divf %449, %450 : vector<8x128xf32>
    %452 = vector.extract_strided_slice %439 {offsets = [0, 256], sizes = [8, 128], strides = [1, 1]} : vector<8x512xf32> to vector<8x128xf32>
    %453 = math.tanh %452 : vector<8x128xf32>
    %454 = vector.extract_strided_slice %439 {offsets = [0, 384], sizes = [8, 128], strides = [1, 1]} : vector<8x512xf32> to vector<8x128xf32>
    %455 = arith.negf %454 : vector<8x128xf32>
    %456 = math.exp %455 : vector<8x128xf32>
    %cst_131 = arith.constant 1.000000e+00 : f32
    %457 = vector.broadcast %cst_131 : f32 to vector<8x128xf32>
    %458 = arith.addf %457, %456 : vector<8x128xf32>
    %459 = arith.divf %457, %458 : vector<8x128xf32>
    %460 = arith.mulf %451, %330 : vector<8x128xf32>
    %461 = arith.mulf %445, %453 : vector<8x128xf32>
    %462 = arith.addf %460, %461 : vector<8x128xf32>
    %463 = math.tanh %462 : vector<8x128xf32>
    %464 = arith.mulf %459, %463 : vector<8x128xf32>
    %465 = arith.truncf %365 : vector<8x128xf32> to vector<8x128xbf16>
    %466 = arith.truncf %398 : vector<8x128xf32> to vector<8x128xbf16>
    %467 = arith.truncf %431 : vector<8x128xf32> to vector<8x128xbf16>
    %468 = arith.truncf %464 : vector<8x128xf32> to vector<8x128xbf16>
    %c40 = arith.constant 40 : index
    %c0_132 = arith.constant 0 : index
    %469 = vector.load %arg8[%c40, %c0_132] : memref<64x512xf32, #tpu.memory_space<vmem>>, vector<8x512xf32>
    %c0_133 = arith.constant 0 : index
    %c0_134 = arith.constant 0 : index
    %470 = vector.load %arg2[%c0_133, %c0_134] : memref<128x512xbf16, #tpu.memory_space<vmem>>, vector<128x512xbf16>
    %cst_135 = arith.constant dense<0.000000e+00> : vector<8x512xf32>
    %471 = tpu.matmul %465, %470, %cst_135 {dimension_numbers = #tpu.dot_dimension_numbers<[1], [0], [0], [1], [0, 0, 1, 1], [], []>} : vector<8x128xbf16>, vector<128x512xbf16>, vector<8x512xf32> -> vector<8x512xf32>
    %472 = arith.addf %469, %471 : vector<8x512xf32>
    %473 = vector.extract_strided_slice %472 {offsets = [0, 0], sizes = [8, 128], strides = [1, 1]} : vector<8x512xf32> to vector<8x128xf32>
    %474 = arith.negf %473 : vector<8x128xf32>
    %475 = math.exp %474 : vector<8x128xf32>
    %cst_136 = arith.constant 1.000000e+00 : f32
    %476 = vector.broadcast %cst_136 : f32 to vector<8x128xf32>
    %477 = arith.addf %476, %475 : vector<8x128xf32>
    %478 = arith.divf %476, %477 : vector<8x128xf32>
    %479 = vector.extract_strided_slice %472 {offsets = [0, 128], sizes = [8, 128], strides = [1, 1]} : vector<8x512xf32> to vector<8x128xf32>
    %480 = arith.negf %479 : vector<8x128xf32>
    %481 = math.exp %480 : vector<8x128xf32>
    %cst_137 = arith.constant 1.000000e+00 : f32
    %482 = vector.broadcast %cst_137 : f32 to vector<8x128xf32>
    %483 = arith.addf %482, %481 : vector<8x128xf32>
    %484 = arith.divf %482, %483 : vector<8x128xf32>
    %485 = vector.extract_strided_slice %472 {offsets = [0, 256], sizes = [8, 128], strides = [1, 1]} : vector<8x512xf32> to vector<8x128xf32>
    %486 = math.tanh %485 : vector<8x128xf32>
    %487 = vector.extract_strided_slice %472 {offsets = [0, 384], sizes = [8, 128], strides = [1, 1]} : vector<8x512xf32> to vector<8x128xf32>
    %488 = arith.negf %487 : vector<8x128xf32>
    %489 = math.exp %488 : vector<8x128xf32>
    %cst_138 = arith.constant 1.000000e+00 : f32
    %490 = vector.broadcast %cst_138 : f32 to vector<8x128xf32>
    %491 = arith.addf %490, %489 : vector<8x128xf32>
    %492 = arith.divf %490, %491 : vector<8x128xf32>
    %493 = arith.mulf %484, %363 : vector<8x128xf32>
    %494 = arith.mulf %478, %486 : vector<8x128xf32>
    %495 = arith.addf %493, %494 : vector<8x128xf32>
    %496 = math.tanh %495 : vector<8x128xf32>
    %497 = arith.mulf %492, %496 : vector<8x128xf32>
    %498 = tpu.concatenate %465, %466 in 1 : vector<8x128xbf16>, vector<8x128xbf16> -> vector<8x256xbf16>
    %c1_139 = arith.constant 1 : index
    %c0_140 = arith.constant 0 : index
    %c0_141 = arith.constant 0 : index
    %499 = vector.load %arg4[%c1_139, %c0_140, %c0_141] : memref<4x1x512xf32, #tpu.memory_space<vmem>>, vector<1x1x512xf32>
    %500 = vector.shape_cast %499 : vector<1x1x512xf32> to vector<1x512xf32>
    %c0_142 = arith.constant 0 : index
    %c0_143 = arith.constant 0 : index
    %c0_144 = arith.constant 0 : index
    %501 = vector.load %arg3[%c0_142, %c0_143, %c0_144] : memref<3x256x512xbf16, #tpu.memory_space<vmem>>, vector<1x256x512xbf16>
    %502 = vector.shape_cast %501 : vector<1x256x512xbf16> to vector<256x512xbf16>
    %cst_145 = arith.constant dense<0.000000e+00> : vector<8x512xf32>
    %503 = tpu.matmul %498, %502, %cst_145 {dimension_numbers = #tpu.dot_dimension_numbers<[1], [0], [0], [1], [0, 0, 1, 1], [], []>} : vector<8x256xbf16>, vector<256x512xbf16>, vector<8x512xf32> -> vector<8x512xf32>
    %504 = vector.broadcast %500 : vector<1x512xf32> to vector<8x512xf32>
    %505 = arith.addf %504, %503 : vector<8x512xf32>
    %506 = vector.extract_strided_slice %505 {offsets = [0, 0], sizes = [8, 128], strides = [1, 1]} : vector<8x512xf32> to vector<8x128xf32>
    %507 = arith.negf %506 : vector<8x128xf32>
    %508 = math.exp %507 : vector<8x128xf32>
    %cst_146 = arith.constant 1.000000e+00 : f32
    %509 = vector.broadcast %cst_146 : f32 to vector<8x128xf32>
    %510 = arith.addf %509, %508 : vector<8x128xf32>
    %511 = arith.divf %509, %510 : vector<8x128xf32>
    %512 = vector.extract_strided_slice %505 {offsets = [0, 128], sizes = [8, 128], strides = [1, 1]} : vector<8x512xf32> to vector<8x128xf32>
    %513 = arith.negf %512 : vector<8x128xf32>
    %514 = math.exp %513 : vector<8x128xf32>
    %cst_147 = arith.constant 1.000000e+00 : f32
    %515 = vector.broadcast %cst_147 : f32 to vector<8x128xf32>
    %516 = arith.addf %515, %514 : vector<8x128xf32>
    %517 = arith.divf %515, %516 : vector<8x128xf32>
    %518 = vector.extract_strided_slice %505 {offsets = [0, 256], sizes = [8, 128], strides = [1, 1]} : vector<8x512xf32> to vector<8x128xf32>
    %519 = math.tanh %518 : vector<8x128xf32>
    %520 = vector.extract_strided_slice %505 {offsets = [0, 384], sizes = [8, 128], strides = [1, 1]} : vector<8x512xf32> to vector<8x128xf32>
    %521 = arith.negf %520 : vector<8x128xf32>
    %522 = math.exp %521 : vector<8x128xf32>
    %cst_148 = arith.constant 1.000000e+00 : f32
    %523 = vector.broadcast %cst_148 : f32 to vector<8x128xf32>
    %524 = arith.addf %523, %522 : vector<8x128xf32>
    %525 = arith.divf %523, %524 : vector<8x128xf32>
    %526 = arith.mulf %517, %396 : vector<8x128xf32>
    %527 = arith.mulf %511, %519 : vector<8x128xf32>
    %528 = arith.addf %526, %527 : vector<8x128xf32>
    %529 = math.tanh %528 : vector<8x128xf32>
    %530 = arith.mulf %525, %529 : vector<8x128xf32>
    %531 = tpu.concatenate %466, %467 in 1 : vector<8x128xbf16>, vector<8x128xbf16> -> vector<8x256xbf16>
    %c2_149 = arith.constant 2 : index
    %c0_150 = arith.constant 0 : index
    %c0_151 = arith.constant 0 : index
    %532 = vector.load %arg4[%c2_149, %c0_150, %c0_151] : memref<4x1x512xf32, #tpu.memory_space<vmem>>, vector<1x1x512xf32>
    %533 = vector.shape_cast %532 : vector<1x1x512xf32> to vector<1x512xf32>
    %c1_152 = arith.constant 1 : index
    %c0_153 = arith.constant 0 : index
    %c0_154 = arith.constant 0 : index
    %534 = vector.load %arg3[%c1_152, %c0_153, %c0_154] : memref<3x256x512xbf16, #tpu.memory_space<vmem>>, vector<1x256x512xbf16>
    %535 = vector.shape_cast %534 : vector<1x256x512xbf16> to vector<256x512xbf16>
    %cst_155 = arith.constant dense<0.000000e+00> : vector<8x512xf32>
    %536 = tpu.matmul %531, %535, %cst_155 {dimension_numbers = #tpu.dot_dimension_numbers<[1], [0], [0], [1], [0, 0, 1, 1], [], []>} : vector<8x256xbf16>, vector<256x512xbf16>, vector<8x512xf32> -> vector<8x512xf32>
    %537 = vector.broadcast %533 : vector<1x512xf32> to vector<8x512xf32>
    %538 = arith.addf %537, %536 : vector<8x512xf32>
    %539 = vector.extract_strided_slice %538 {offsets = [0, 0], sizes = [8, 128], strides = [1, 1]} : vector<8x512xf32> to vector<8x128xf32>
    %540 = arith.negf %539 : vector<8x128xf32>
    %541 = math.exp %540 : vector<8x128xf32>
    %cst_156 = arith.constant 1.000000e+00 : f32
    %542 = vector.broadcast %cst_156 : f32 to vector<8x128xf32>
    %543 = arith.addf %542, %541 : vector<8x128xf32>
    %544 = arith.divf %542, %543 : vector<8x128xf32>
    %545 = vector.extract_strided_slice %538 {offsets = [0, 128], sizes = [8, 128], strides = [1, 1]} : vector<8x512xf32> to vector<8x128xf32>
    %546 = arith.negf %545 : vector<8x128xf32>
    %547 = math.exp %546 : vector<8x128xf32>
    %cst_157 = arith.constant 1.000000e+00 : f32
    %548 = vector.broadcast %cst_157 : f32 to vector<8x128xf32>
    %549 = arith.addf %548, %547 : vector<8x128xf32>
    %550 = arith.divf %548, %549 : vector<8x128xf32>
    %551 = vector.extract_strided_slice %538 {offsets = [0, 256], sizes = [8, 128], strides = [1, 1]} : vector<8x512xf32> to vector<8x128xf32>
    %552 = math.tanh %551 : vector<8x128xf32>
    %553 = vector.extract_strided_slice %538 {offsets = [0, 384], sizes = [8, 128], strides = [1, 1]} : vector<8x512xf32> to vector<8x128xf32>
    %554 = arith.negf %553 : vector<8x128xf32>
    %555 = math.exp %554 : vector<8x128xf32>
    %cst_158 = arith.constant 1.000000e+00 : f32
    %556 = vector.broadcast %cst_158 : f32 to vector<8x128xf32>
    %557 = arith.addf %556, %555 : vector<8x128xf32>
    %558 = arith.divf %556, %557 : vector<8x128xf32>
    %559 = arith.mulf %550, %429 : vector<8x128xf32>
    %560 = arith.mulf %544, %552 : vector<8x128xf32>
    %561 = arith.addf %559, %560 : vector<8x128xf32>
    %562 = math.tanh %561 : vector<8x128xf32>
    %563 = arith.mulf %558, %562 : vector<8x128xf32>
    %564 = tpu.concatenate %467, %468 in 1 : vector<8x128xbf16>, vector<8x128xbf16> -> vector<8x256xbf16>
    %c3_159 = arith.constant 3 : index
    %c0_160 = arith.constant 0 : index
    %c0_161 = arith.constant 0 : index
    %565 = vector.load %arg4[%c3_159, %c0_160, %c0_161] : memref<4x1x512xf32, #tpu.memory_space<vmem>>, vector<1x1x512xf32>
    %566 = vector.shape_cast %565 : vector<1x1x512xf32> to vector<1x512xf32>
    %c2_162 = arith.constant 2 : index
    %c0_163 = arith.constant 0 : index
    %c0_164 = arith.constant 0 : index
    %567 = vector.load %arg3[%c2_162, %c0_163, %c0_164] : memref<3x256x512xbf16, #tpu.memory_space<vmem>>, vector<1x256x512xbf16>
    %568 = vector.shape_cast %567 : vector<1x256x512xbf16> to vector<256x512xbf16>
    %cst_165 = arith.constant dense<0.000000e+00> : vector<8x512xf32>
    %569 = tpu.matmul %564, %568, %cst_165 {dimension_numbers = #tpu.dot_dimension_numbers<[1], [0], [0], [1], [0, 0, 1, 1], [], []>} : vector<8x256xbf16>, vector<256x512xbf16>, vector<8x512xf32> -> vector<8x512xf32>
    %570 = vector.broadcast %566 : vector<1x512xf32> to vector<8x512xf32>
    %571 = arith.addf %570, %569 : vector<8x512xf32>
    %572 = vector.extract_strided_slice %571 {offsets = [0, 0], sizes = [8, 128], strides = [1, 1]} : vector<8x512xf32> to vector<8x128xf32>
    %573 = arith.negf %572 : vector<8x128xf32>
    %574 = math.exp %573 : vector<8x128xf32>
    %cst_166 = arith.constant 1.000000e+00 : f32
    %575 = vector.broadcast %cst_166 : f32 to vector<8x128xf32>
    %576 = arith.addf %575, %574 : vector<8x128xf32>
    %577 = arith.divf %575, %576 : vector<8x128xf32>
    %578 = vector.extract_strided_slice %571 {offsets = [0, 128], sizes = [8, 128], strides = [1, 1]} : vector<8x512xf32> to vector<8x128xf32>
    %579 = arith.negf %578 : vector<8x128xf32>
    %580 = math.exp %579 : vector<8x128xf32>
    %cst_167 = arith.constant 1.000000e+00 : f32
    %581 = vector.broadcast %cst_167 : f32 to vector<8x128xf32>
    %582 = arith.addf %581, %580 : vector<8x128xf32>
    %583 = arith.divf %581, %582 : vector<8x128xf32>
    %584 = vector.extract_strided_slice %571 {offsets = [0, 256], sizes = [8, 128], strides = [1, 1]} : vector<8x512xf32> to vector<8x128xf32>
    %585 = math.tanh %584 : vector<8x128xf32>
    %586 = vector.extract_strided_slice %571 {offsets = [0, 384], sizes = [8, 128], strides = [1, 1]} : vector<8x512xf32> to vector<8x128xf32>
    %587 = arith.negf %586 : vector<8x128xf32>
    %588 = math.exp %587 : vector<8x128xf32>
    %cst_168 = arith.constant 1.000000e+00 : f32
    %589 = vector.broadcast %cst_168 : f32 to vector<8x128xf32>
    %590 = arith.addf %589, %588 : vector<8x128xf32>
    %591 = arith.divf %589, %590 : vector<8x128xf32>
    %592 = arith.mulf %583, %462 : vector<8x128xf32>
    %593 = arith.mulf %577, %585 : vector<8x128xf32>
    %594 = arith.addf %592, %593 : vector<8x128xf32>
    %595 = math.tanh %594 : vector<8x128xf32>
    %596 = arith.mulf %591, %595 : vector<8x128xf32>
    %597 = arith.truncf %497 : vector<8x128xf32> to vector<8x128xbf16>
    %598 = arith.truncf %530 : vector<8x128xf32> to vector<8x128xbf16>
    %599 = arith.truncf %563 : vector<8x128xf32> to vector<8x128xbf16>
    %600 = arith.truncf %596 : vector<8x128xf32> to vector<8x128xbf16>
    %c48 = arith.constant 48 : index
    %c0_169 = arith.constant 0 : index
    %601 = vector.load %arg8[%c48, %c0_169] : memref<64x512xf32, #tpu.memory_space<vmem>>, vector<8x512xf32>
    %c0_170 = arith.constant 0 : index
    %c0_171 = arith.constant 0 : index
    %602 = vector.load %arg2[%c0_170, %c0_171] : memref<128x512xbf16, #tpu.memory_space<vmem>>, vector<128x512xbf16>
    %cst_172 = arith.constant dense<0.000000e+00> : vector<8x512xf32>
    %603 = tpu.matmul %597, %602, %cst_172 {dimension_numbers = #tpu.dot_dimension_numbers<[1], [0], [0], [1], [0, 0, 1, 1], [], []>} : vector<8x128xbf16>, vector<128x512xbf16>, vector<8x512xf32> -> vector<8x512xf32>
    %604 = arith.addf %601, %603 : vector<8x512xf32>
    %605 = vector.extract_strided_slice %604 {offsets = [0, 0], sizes = [8, 128], strides = [1, 1]} : vector<8x512xf32> to vector<8x128xf32>
    %606 = arith.negf %605 : vector<8x128xf32>
    %607 = math.exp %606 : vector<8x128xf32>
    %cst_173 = arith.constant 1.000000e+00 : f32
    %608 = vector.broadcast %cst_173 : f32 to vector<8x128xf32>
    %609 = arith.addf %608, %607 : vector<8x128xf32>
    %610 = arith.divf %608, %609 : vector<8x128xf32>
    %611 = vector.extract_strided_slice %604 {offsets = [0, 128], sizes = [8, 128], strides = [1, 1]} : vector<8x512xf32> to vector<8x128xf32>
    %612 = arith.negf %611 : vector<8x128xf32>
    %613 = math.exp %612 : vector<8x128xf32>
    %cst_174 = arith.constant 1.000000e+00 : f32
    %614 = vector.broadcast %cst_174 : f32 to vector<8x128xf32>
    %615 = arith.addf %614, %613 : vector<8x128xf32>
    %616 = arith.divf %614, %615 : vector<8x128xf32>
    %617 = vector.extract_strided_slice %604 {offsets = [0, 256], sizes = [8, 128], strides = [1, 1]} : vector<8x512xf32> to vector<8x128xf32>
    %618 = math.tanh %617 : vector<8x128xf32>
    %619 = vector.extract_strided_slice %604 {offsets = [0, 384], sizes = [8, 128], strides = [1, 1]} : vector<8x512xf32> to vector<8x128xf32>
    %620 = arith.negf %619 : vector<8x128xf32>
    %621 = math.exp %620 : vector<8x128xf32>
    %cst_175 = arith.constant 1.000000e+00 : f32
    %622 = vector.broadcast %cst_175 : f32 to vector<8x128xf32>
    %623 = arith.addf %622, %621 : vector<8x128xf32>
    %624 = arith.divf %622, %623 : vector<8x128xf32>
    %625 = arith.mulf %616, %495 : vector<8x128xf32>
    %626 = arith.mulf %610, %618 : vector<8x128xf32>
    %627 = arith.addf %625, %626 : vector<8x128xf32>
    %628 = math.tanh %627 : vector<8x128xf32>
    %629 = arith.mulf %624, %628 : vector<8x128xf32>
    %630 = tpu.concatenate %597, %598 in 1 : vector<8x128xbf16>, vector<8x128xbf16> -> vector<8x256xbf16>
    %c1_176 = arith.constant 1 : index
    %c0_177 = arith.constant 0 : index
    %c0_178 = arith.constant 0 : index
    %631 = vector.load %arg4[%c1_176, %c0_177, %c0_178] : memref<4x1x512xf32, #tpu.memory_space<vmem>>, vector<1x1x512xf32>
    %632 = vector.shape_cast %631 : vector<1x1x512xf32> to vector<1x512xf32>
    %c0_179 = arith.constant 0 : index
    %c0_180 = arith.constant 0 : index
    %c0_181 = arith.constant 0 : index
    %633 = vector.load %arg3[%c0_179, %c0_180, %c0_181] : memref<3x256x512xbf16, #tpu.memory_space<vmem>>, vector<1x256x512xbf16>
    %634 = vector.shape_cast %633 : vector<1x256x512xbf16> to vector<256x512xbf16>
    %cst_182 = arith.constant dense<0.000000e+00> : vector<8x512xf32>
    %635 = tpu.matmul %630, %634, %cst_182 {dimension_numbers = #tpu.dot_dimension_numbers<[1], [0], [0], [1], [0, 0, 1, 1], [], []>} : vector<8x256xbf16>, vector<256x512xbf16>, vector<8x512xf32> -> vector<8x512xf32>
    %636 = vector.broadcast %632 : vector<1x512xf32> to vector<8x512xf32>
    %637 = arith.addf %636, %635 : vector<8x512xf32>
    %638 = vector.extract_strided_slice %637 {offsets = [0, 0], sizes = [8, 128], strides = [1, 1]} : vector<8x512xf32> to vector<8x128xf32>
    %639 = arith.negf %638 : vector<8x128xf32>
    %640 = math.exp %639 : vector<8x128xf32>
    %cst_183 = arith.constant 1.000000e+00 : f32
    %641 = vector.broadcast %cst_183 : f32 to vector<8x128xf32>
    %642 = arith.addf %641, %640 : vector<8x128xf32>
    %643 = arith.divf %641, %642 : vector<8x128xf32>
    %644 = vector.extract_strided_slice %637 {offsets = [0, 128], sizes = [8, 128], strides = [1, 1]} : vector<8x512xf32> to vector<8x128xf32>
    %645 = arith.negf %644 : vector<8x128xf32>
    %646 = math.exp %645 : vector<8x128xf32>
    %cst_184 = arith.constant 1.000000e+00 : f32
    %647 = vector.broadcast %cst_184 : f32 to vector<8x128xf32>
    %648 = arith.addf %647, %646 : vector<8x128xf32>
    %649 = arith.divf %647, %648 : vector<8x128xf32>
    %650 = vector.extract_strided_slice %637 {offsets = [0, 256], sizes = [8, 128], strides = [1, 1]} : vector<8x512xf32> to vector<8x128xf32>
    %651 = math.tanh %650 : vector<8x128xf32>
    %652 = vector.extract_strided_slice %637 {offsets = [0, 384], sizes = [8, 128], strides = [1, 1]} : vector<8x512xf32> to vector<8x128xf32>
    %653 = arith.negf %652 : vector<8x128xf32>
    %654 = math.exp %653 : vector<8x128xf32>
    %cst_185 = arith.constant 1.000000e+00 : f32
    %655 = vector.broadcast %cst_185 : f32 to vector<8x128xf32>
    %656 = arith.addf %655, %654 : vector<8x128xf32>
    %657 = arith.divf %655, %656 : vector<8x128xf32>
    %658 = arith.mulf %649, %528 : vector<8x128xf32>
    %659 = arith.mulf %643, %651 : vector<8x128xf32>
    %660 = arith.addf %658, %659 : vector<8x128xf32>
    %661 = math.tanh %660 : vector<8x128xf32>
    %662 = arith.mulf %657, %661 : vector<8x128xf32>
    %663 = tpu.concatenate %598, %599 in 1 : vector<8x128xbf16>, vector<8x128xbf16> -> vector<8x256xbf16>
    %c2_186 = arith.constant 2 : index
    %c0_187 = arith.constant 0 : index
    %c0_188 = arith.constant 0 : index
    %664 = vector.load %arg4[%c2_186, %c0_187, %c0_188] : memref<4x1x512xf32, #tpu.memory_space<vmem>>, vector<1x1x512xf32>
    %665 = vector.shape_cast %664 : vector<1x1x512xf32> to vector<1x512xf32>
    %c1_189 = arith.constant 1 : index
    %c0_190 = arith.constant 0 : index
    %c0_191 = arith.constant 0 : index
    %666 = vector.load %arg3[%c1_189, %c0_190, %c0_191] : memref<3x256x512xbf16, #tpu.memory_space<vmem>>, vector<1x256x512xbf16>
    %667 = vector.shape_cast %666 : vector<1x256x512xbf16> to vector<256x512xbf16>
    %cst_192 = arith.constant dense<0.000000e+00> : vector<8x512xf32>
    %668 = tpu.matmul %663, %667, %cst_192 {dimension_numbers = #tpu.dot_dimension_numbers<[1], [0], [0], [1], [0, 0, 1, 1], [], []>} : vector<8x256xbf16>, vector<256x512xbf16>, vector<8x512xf32> -> vector<8x512xf32>
    %669 = vector.broadcast %665 : vector<1x512xf32> to vector<8x512xf32>
    %670 = arith.addf %669, %668 : vector<8x512xf32>
    %671 = vector.extract_strided_slice %670 {offsets = [0, 0], sizes = [8, 128], strides = [1, 1]} : vector<8x512xf32> to vector<8x128xf32>
    %672 = arith.negf %671 : vector<8x128xf32>
    %673 = math.exp %672 : vector<8x128xf32>
    %cst_193 = arith.constant 1.000000e+00 : f32
    %674 = vector.broadcast %cst_193 : f32 to vector<8x128xf32>
    %675 = arith.addf %674, %673 : vector<8x128xf32>
    %676 = arith.divf %674, %675 : vector<8x128xf32>
    %677 = vector.extract_strided_slice %670 {offsets = [0, 128], sizes = [8, 128], strides = [1, 1]} : vector<8x512xf32> to vector<8x128xf32>
    %678 = arith.negf %677 : vector<8x128xf32>
    %679 = math.exp %678 : vector<8x128xf32>
    %cst_194 = arith.constant 1.000000e+00 : f32
    %680 = vector.broadcast %cst_194 : f32 to vector<8x128xf32>
    %681 = arith.addf %680, %679 : vector<8x128xf32>
    %682 = arith.divf %680, %681 : vector<8x128xf32>
    %683 = vector.extract_strided_slice %670 {offsets = [0, 256], sizes = [8, 128], strides = [1, 1]} : vector<8x512xf32> to vector<8x128xf32>
    %684 = math.tanh %683 : vector<8x128xf32>
    %685 = vector.extract_strided_slice %670 {offsets = [0, 384], sizes = [8, 128], strides = [1, 1]} : vector<8x512xf32> to vector<8x128xf32>
    %686 = arith.negf %685 : vector<8x128xf32>
    %687 = math.exp %686 : vector<8x128xf32>
    %cst_195 = arith.constant 1.000000e+00 : f32
    %688 = vector.broadcast %cst_195 : f32 to vector<8x128xf32>
    %689 = arith.addf %688, %687 : vector<8x128xf32>
    %690 = arith.divf %688, %689 : vector<8x128xf32>
    %691 = arith.mulf %682, %561 : vector<8x128xf32>
    %692 = arith.mulf %676, %684 : vector<8x128xf32>
    %693 = arith.addf %691, %692 : vector<8x128xf32>
    %694 = math.tanh %693 : vector<8x128xf32>
    %695 = arith.mulf %690, %694 : vector<8x128xf32>
    %696 = tpu.concatenate %599, %600 in 1 : vector<8x128xbf16>, vector<8x128xbf16> -> vector<8x256xbf16>
    %c3_196 = arith.constant 3 : index
    %c0_197 = arith.constant 0 : index
    %c0_198 = arith.constant 0 : index
    %697 = vector.load %arg4[%c3_196, %c0_197, %c0_198] : memref<4x1x512xf32, #tpu.memory_space<vmem>>, vector<1x1x512xf32>
    %698 = vector.shape_cast %697 : vector<1x1x512xf32> to vector<1x512xf32>
    %c2_199 = arith.constant 2 : index
    %c0_200 = arith.constant 0 : index
    %c0_201 = arith.constant 0 : index
    %699 = vector.load %arg3[%c2_199, %c0_200, %c0_201] : memref<3x256x512xbf16, #tpu.memory_space<vmem>>, vector<1x256x512xbf16>
    %700 = vector.shape_cast %699 : vector<1x256x512xbf16> to vector<256x512xbf16>
    %cst_202 = arith.constant dense<0.000000e+00> : vector<8x512xf32>
    %701 = tpu.matmul %696, %700, %cst_202 {dimension_numbers = #tpu.dot_dimension_numbers<[1], [0], [0], [1], [0, 0, 1, 1], [], []>} : vector<8x256xbf16>, vector<256x512xbf16>, vector<8x512xf32> -> vector<8x512xf32>
    %702 = vector.broadcast %698 : vector<1x512xf32> to vector<8x512xf32>
    %703 = arith.addf %702, %701 : vector<8x512xf32>
    %704 = vector.extract_strided_slice %703 {offsets = [0, 0], sizes = [8, 128], strides = [1, 1]} : vector<8x512xf32> to vector<8x128xf32>
    %705 = arith.negf %704 : vector<8x128xf32>
    %706 = math.exp %705 : vector<8x128xf32>
    %cst_203 = arith.constant 1.000000e+00 : f32
    %707 = vector.broadcast %cst_203 : f32 to vector<8x128xf32>
    %708 = arith.addf %707, %706 : vector<8x128xf32>
    %709 = arith.divf %707, %708 : vector<8x128xf32>
    %710 = vector.extract_strided_slice %703 {offsets = [0, 128], sizes = [8, 128], strides = [1, 1]} : vector<8x512xf32> to vector<8x128xf32>
    %711 = arith.negf %710 : vector<8x128xf32>
    %712 = math.exp %711 : vector<8x128xf32>
    %cst_204 = arith.constant 1.000000e+00 : f32
    %713 = vector.broadcast %cst_204 : f32 to vector<8x128xf32>
    %714 = arith.addf %713, %712 : vector<8x128xf32>
    %715 = arith.divf %713, %714 : vector<8x128xf32>
    %716 = vector.extract_strided_slice %703 {offsets = [0, 256], sizes = [8, 128], strides = [1, 1]} : vector<8x512xf32> to vector<8x128xf32>
    %717 = math.tanh %716 : vector<8x128xf32>
    %718 = vector.extract_strided_slice %703 {offsets = [0, 384], sizes = [8, 128], strides = [1, 1]} : vector<8x512xf32> to vector<8x128xf32>
    %719 = arith.negf %718 : vector<8x128xf32>
    %720 = math.exp %719 : vector<8x128xf32>
    %cst_205 = arith.constant 1.000000e+00 : f32
    %721 = vector.broadcast %cst_205 : f32 to vector<8x128xf32>
    %722 = arith.addf %721, %720 : vector<8x128xf32>
    %723 = arith.divf %721, %722 : vector<8x128xf32>
    %724 = arith.mulf %715, %594 : vector<8x128xf32>
    %725 = arith.mulf %709, %717 : vector<8x128xf32>
    %726 = arith.addf %724, %725 : vector<8x128xf32>
    %727 = math.tanh %726 : vector<8x128xf32>
    %728 = arith.mulf %723, %727 : vector<8x128xf32>
    %729 = arith.truncf %629 : vector<8x128xf32> to vector<8x128xbf16>
    %730 = arith.truncf %662 : vector<8x128xf32> to vector<8x128xbf16>
    %731 = arith.truncf %695 : vector<8x128xf32> to vector<8x128xbf16>
    %732 = arith.truncf %728 : vector<8x128xf32> to vector<8x128xbf16>
    %c56 = arith.constant 56 : index
    %c0_206 = arith.constant 0 : index
    %733 = vector.load %arg8[%c56, %c0_206] : memref<64x512xf32, #tpu.memory_space<vmem>>, vector<8x512xf32>
    %c0_207 = arith.constant 0 : index
    %c0_208 = arith.constant 0 : index
    %734 = vector.load %arg2[%c0_207, %c0_208] : memref<128x512xbf16, #tpu.memory_space<vmem>>, vector<128x512xbf16>
    %cst_209 = arith.constant dense<0.000000e+00> : vector<8x512xf32>
    %735 = tpu.matmul %729, %734, %cst_209 {dimension_numbers = #tpu.dot_dimension_numbers<[1], [0], [0], [1], [0, 0, 1, 1], [], []>} : vector<8x128xbf16>, vector<128x512xbf16>, vector<8x512xf32> -> vector<8x512xf32>
    %736 = arith.addf %733, %735 : vector<8x512xf32>
    %737 = vector.extract_strided_slice %736 {offsets = [0, 0], sizes = [8, 128], strides = [1, 1]} : vector<8x512xf32> to vector<8x128xf32>
    %738 = arith.negf %737 : vector<8x128xf32>
    %739 = math.exp %738 : vector<8x128xf32>
    %cst_210 = arith.constant 1.000000e+00 : f32
    %740 = vector.broadcast %cst_210 : f32 to vector<8x128xf32>
    %741 = arith.addf %740, %739 : vector<8x128xf32>
    %742 = arith.divf %740, %741 : vector<8x128xf32>
    %743 = vector.extract_strided_slice %736 {offsets = [0, 128], sizes = [8, 128], strides = [1, 1]} : vector<8x512xf32> to vector<8x128xf32>
    %744 = arith.negf %743 : vector<8x128xf32>
    %745 = math.exp %744 : vector<8x128xf32>
    %cst_211 = arith.constant 1.000000e+00 : f32
    %746 = vector.broadcast %cst_211 : f32 to vector<8x128xf32>
    %747 = arith.addf %746, %745 : vector<8x128xf32>
    %748 = arith.divf %746, %747 : vector<8x128xf32>
    %749 = vector.extract_strided_slice %736 {offsets = [0, 256], sizes = [8, 128], strides = [1, 1]} : vector<8x512xf32> to vector<8x128xf32>
    %750 = math.tanh %749 : vector<8x128xf32>
    %751 = vector.extract_strided_slice %736 {offsets = [0, 384], sizes = [8, 128], strides = [1, 1]} : vector<8x512xf32> to vector<8x128xf32>
    %752 = arith.negf %751 : vector<8x128xf32>
    %753 = math.exp %752 : vector<8x128xf32>
    %cst_212 = arith.constant 1.000000e+00 : f32
    %754 = vector.broadcast %cst_212 : f32 to vector<8x128xf32>
    %755 = arith.addf %754, %753 : vector<8x128xf32>
    %756 = arith.divf %754, %755 : vector<8x128xf32>
    %757 = arith.mulf %748, %627 : vector<8x128xf32>
    %758 = arith.mulf %742, %750 : vector<8x128xf32>
    %759 = arith.addf %757, %758 : vector<8x128xf32>
    %760 = math.tanh %759 : vector<8x128xf32>
    %761 = arith.mulf %756, %760 : vector<8x128xf32>
    %762 = tpu.concatenate %729, %730 in 1 : vector<8x128xbf16>, vector<8x128xbf16> -> vector<8x256xbf16>
    %c1_213 = arith.constant 1 : index
    %c0_214 = arith.constant 0 : index
    %c0_215 = arith.constant 0 : index
    %763 = vector.load %arg4[%c1_213, %c0_214, %c0_215] : memref<4x1x512xf32, #tpu.memory_space<vmem>>, vector<1x1x512xf32>
    %764 = vector.shape_cast %763 : vector<1x1x512xf32> to vector<1x512xf32>
    %c0_216 = arith.constant 0 : index
    %c0_217 = arith.constant 0 : index
    %c0_218 = arith.constant 0 : index
    %765 = vector.load %arg3[%c0_216, %c0_217, %c0_218] : memref<3x256x512xbf16, #tpu.memory_space<vmem>>, vector<1x256x512xbf16>
    %766 = vector.shape_cast %765 : vector<1x256x512xbf16> to vector<256x512xbf16>
    %cst_219 = arith.constant dense<0.000000e+00> : vector<8x512xf32>
    %767 = tpu.matmul %762, %766, %cst_219 {dimension_numbers = #tpu.dot_dimension_numbers<[1], [0], [0], [1], [0, 0, 1, 1], [], []>} : vector<8x256xbf16>, vector<256x512xbf16>, vector<8x512xf32> -> vector<8x512xf32>
    %768 = vector.broadcast %764 : vector<1x512xf32> to vector<8x512xf32>
    %769 = arith.addf %768, %767 : vector<8x512xf32>
    %770 = vector.extract_strided_slice %769 {offsets = [0, 0], sizes = [8, 128], strides = [1, 1]} : vector<8x512xf32> to vector<8x128xf32>
    %771 = arith.negf %770 : vector<8x128xf32>
    %772 = math.exp %771 : vector<8x128xf32>
    %cst_220 = arith.constant 1.000000e+00 : f32
    %773 = vector.broadcast %cst_220 : f32 to vector<8x128xf32>
    %774 = arith.addf %773, %772 : vector<8x128xf32>
    %775 = arith.divf %773, %774 : vector<8x128xf32>
    %776 = vector.extract_strided_slice %769 {offsets = [0, 128], sizes = [8, 128], strides = [1, 1]} : vector<8x512xf32> to vector<8x128xf32>
    %777 = arith.negf %776 : vector<8x128xf32>
    %778 = math.exp %777 : vector<8x128xf32>
    %cst_221 = arith.constant 1.000000e+00 : f32
    %779 = vector.broadcast %cst_221 : f32 to vector<8x128xf32>
    %780 = arith.addf %779, %778 : vector<8x128xf32>
    %781 = arith.divf %779, %780 : vector<8x128xf32>
    %782 = vector.extract_strided_slice %769 {offsets = [0, 256], sizes = [8, 128], strides = [1, 1]} : vector<8x512xf32> to vector<8x128xf32>
    %783 = math.tanh %782 : vector<8x128xf32>
    %784 = vector.extract_strided_slice %769 {offsets = [0, 384], sizes = [8, 128], strides = [1, 1]} : vector<8x512xf32> to vector<8x128xf32>
    %785 = arith.negf %784 : vector<8x128xf32>
    %786 = math.exp %785 : vector<8x128xf32>
    %cst_222 = arith.constant 1.000000e+00 : f32
    %787 = vector.broadcast %cst_222 : f32 to vector<8x128xf32>
    %788 = arith.addf %787, %786 : vector<8x128xf32>
    %789 = arith.divf %787, %788 : vector<8x128xf32>
    %790 = arith.mulf %781, %660 : vector<8x128xf32>
    %791 = arith.mulf %775, %783 : vector<8x128xf32>
    %792 = arith.addf %790, %791 : vector<8x128xf32>
    %793 = math.tanh %792 : vector<8x128xf32>
    %794 = arith.mulf %789, %793 : vector<8x128xf32>
    %795 = tpu.concatenate %730, %731 in 1 : vector<8x128xbf16>, vector<8x128xbf16> -> vector<8x256xbf16>
    %c2_223 = arith.constant 2 : index
    %c0_224 = arith.constant 0 : index
    %c0_225 = arith.constant 0 : index
    %796 = vector.load %arg4[%c2_223, %c0_224, %c0_225] : memref<4x1x512xf32, #tpu.memory_space<vmem>>, vector<1x1x512xf32>
    %797 = vector.shape_cast %796 : vector<1x1x512xf32> to vector<1x512xf32>
    %c1_226 = arith.constant 1 : index
    %c0_227 = arith.constant 0 : index
    %c0_228 = arith.constant 0 : index
    %798 = vector.load %arg3[%c1_226, %c0_227, %c0_228] : memref<3x256x512xbf16, #tpu.memory_space<vmem>>, vector<1x256x512xbf16>
    %799 = vector.shape_cast %798 : vector<1x256x512xbf16> to vector<256x512xbf16>
    %cst_229 = arith.constant dense<0.000000e+00> : vector<8x512xf32>
    %800 = tpu.matmul %795, %799, %cst_229 {dimension_numbers = #tpu.dot_dimension_numbers<[1], [0], [0], [1], [0, 0, 1, 1], [], []>} : vector<8x256xbf16>, vector<256x512xbf16>, vector<8x512xf32> -> vector<8x512xf32>
    %801 = vector.broadcast %797 : vector<1x512xf32> to vector<8x512xf32>
    %802 = arith.addf %801, %800 : vector<8x512xf32>
    %803 = vector.extract_strided_slice %802 {offsets = [0, 0], sizes = [8, 128], strides = [1, 1]} : vector<8x512xf32> to vector<8x128xf32>
    %804 = arith.negf %803 : vector<8x128xf32>
    %805 = math.exp %804 : vector<8x128xf32>
    %cst_230 = arith.constant 1.000000e+00 : f32
    %806 = vector.broadcast %cst_230 : f32 to vector<8x128xf32>
    %807 = arith.addf %806, %805 : vector<8x128xf32>
    %808 = arith.divf %806, %807 : vector<8x128xf32>
    %809 = vector.extract_strided_slice %802 {offsets = [0, 128], sizes = [8, 128], strides = [1, 1]} : vector<8x512xf32> to vector<8x128xf32>
    %810 = arith.negf %809 : vector<8x128xf32>
    %811 = math.exp %810 : vector<8x128xf32>
    %cst_231 = arith.constant 1.000000e+00 : f32
    %812 = vector.broadcast %cst_231 : f32 to vector<8x128xf32>
    %813 = arith.addf %812, %811 : vector<8x128xf32>
    %814 = arith.divf %812, %813 : vector<8x128xf32>
    %815 = vector.extract_strided_slice %802 {offsets = [0, 256], sizes = [8, 128], strides = [1, 1]} : vector<8x512xf32> to vector<8x128xf32>
    %816 = math.tanh %815 : vector<8x128xf32>
    %817 = vector.extract_strided_slice %802 {offsets = [0, 384], sizes = [8, 128], strides = [1, 1]} : vector<8x512xf32> to vector<8x128xf32>
    %818 = arith.negf %817 : vector<8x128xf32>
    %819 = math.exp %818 : vector<8x128xf32>
    %cst_232 = arith.constant 1.000000e+00 : f32
    %820 = vector.broadcast %cst_232 : f32 to vector<8x128xf32>
    %821 = arith.addf %820, %819 : vector<8x128xf32>
    %822 = arith.divf %820, %821 : vector<8x128xf32>
    %823 = arith.mulf %814, %693 : vector<8x128xf32>
    %824 = arith.mulf %808, %816 : vector<8x128xf32>
    %825 = arith.addf %823, %824 : vector<8x128xf32>
    %826 = math.tanh %825 : vector<8x128xf32>
    %827 = arith.mulf %822, %826 : vector<8x128xf32>
    %828 = tpu.concatenate %731, %732 in 1 : vector<8x128xbf16>, vector<8x128xbf16> -> vector<8x256xbf16>
    %c3_233 = arith.constant 3 : index
    %c0_234 = arith.constant 0 : index
    %c0_235 = arith.constant 0 : index
    %829 = vector.load %arg4[%c3_233, %c0_234, %c0_235] : memref<4x1x512xf32, #tpu.memory_space<vmem>>, vector<1x1x512xf32>
    %830 = vector.shape_cast %829 : vector<1x1x512xf32> to vector<1x512xf32>
    %c2_236 = arith.constant 2 : index
    %c0_237 = arith.constant 0 : index
    %c0_238 = arith.constant 0 : index
    %831 = vector.load %arg3[%c2_236, %c0_237, %c0_238] : memref<3x256x512xbf16, #tpu.memory_space<vmem>>, vector<1x256x512xbf16>
    %832 = vector.shape_cast %831 : vector<1x256x512xbf16> to vector<256x512xbf16>
    %cst_239 = arith.constant dense<0.000000e+00> : vector<8x512xf32>
    %833 = tpu.matmul %828, %832, %cst_239 {dimension_numbers = #tpu.dot_dimension_numbers<[1], [0], [0], [1], [0, 0, 1, 1], [], []>} : vector<8x256xbf16>, vector<256x512xbf16>, vector<8x512xf32> -> vector<8x512xf32>
    %834 = vector.broadcast %830 : vector<1x512xf32> to vector<8x512xf32>
    %835 = arith.addf %834, %833 : vector<8x512xf32>
    %836 = vector.extract_strided_slice %835 {offsets = [0, 0], sizes = [8, 128], strides = [1, 1]} : vector<8x512xf32> to vector<8x128xf32>
    %837 = arith.negf %836 : vector<8x128xf32>
    %838 = math.exp %837 : vector<8x128xf32>
    %cst_240 = arith.constant 1.000000e+00 : f32
    %839 = vector.broadcast %cst_240 : f32 to vector<8x128xf32>
    %840 = arith.addf %839, %838 : vector<8x128xf32>
    %841 = arith.divf %839, %840 : vector<8x128xf32>
    %842 = vector.extract_strided_slice %835 {offsets = [0, 128], sizes = [8, 128], strides = [1, 1]} : vector<8x512xf32> to vector<8x128xf32>
    %843 = arith.negf %842 : vector<8x128xf32>
    %844 = math.exp %843 : vector<8x128xf32>
    %cst_241 = arith.constant 1.000000e+00 : f32
    %845 = vector.broadcast %cst_241 : f32 to vector<8x128xf32>
    %846 = arith.addf %845, %844 : vector<8x128xf32>
    %847 = arith.divf %845, %846 : vector<8x128xf32>
    %848 = vector.extract_strided_slice %835 {offsets = [0, 256], sizes = [8, 128], strides = [1, 1]} : vector<8x512xf32> to vector<8x128xf32>
    %849 = math.tanh %848 : vector<8x128xf32>
    %850 = vector.extract_strided_slice %835 {offsets = [0, 384], sizes = [8, 128], strides = [1, 1]} : vector<8x512xf32> to vector<8x128xf32>
    %851 = arith.negf %850 : vector<8x128xf32>
    %852 = math.exp %851 : vector<8x128xf32>
    %cst_242 = arith.constant 1.000000e+00 : f32
    %853 = vector.broadcast %cst_242 : f32 to vector<8x128xf32>
    %854 = arith.addf %853, %852 : vector<8x128xf32>
    %855 = arith.divf %853, %854 : vector<8x128xf32>
    %856 = arith.mulf %847, %726 : vector<8x128xf32>
    %857 = arith.mulf %841, %849 : vector<8x128xf32>
    %858 = arith.addf %856, %857 : vector<8x128xf32>
    %859 = math.tanh %858 : vector<8x128xf32>
    %860 = arith.mulf %855, %859 : vector<8x128xf32>
    %861 = arith.truncf %761 : vector<8x128xf32> to vector<8x128xbf16>
    %862 = arith.truncf %794 : vector<8x128xf32> to vector<8x128xbf16>
    %863 = arith.truncf %827 : vector<8x128xf32> to vector<8x128xbf16>
    %864 = arith.truncf %860 : vector<8x128xf32> to vector<8x128xbf16>
    %865 = tpu.concatenate %861, %862 in 1 : vector<8x128xbf16>, vector<8x128xbf16> -> vector<8x256xbf16>
    %c1_243 = arith.constant 1 : index
    %c0_244 = arith.constant 0 : index
    %c0_245 = arith.constant 0 : index
    %866 = vector.load %arg4[%c1_243, %c0_244, %c0_245] : memref<4x1x512xf32, #tpu.memory_space<vmem>>, vector<1x1x512xf32>
    %867 = vector.shape_cast %866 : vector<1x1x512xf32> to vector<1x512xf32>
    %c0_246 = arith.constant 0 : index
    %c0_247 = arith.constant 0 : index
    %c0_248 = arith.constant 0 : index
    %868 = vector.load %arg3[%c0_246, %c0_247, %c0_248] : memref<3x256x512xbf16, #tpu.memory_space<vmem>>, vector<1x256x512xbf16>
    %869 = vector.shape_cast %868 : vector<1x256x512xbf16> to vector<256x512xbf16>
    %cst_249 = arith.constant dense<0.000000e+00> : vector<8x512xf32>
    %870 = tpu.matmul %865, %869, %cst_249 {dimension_numbers = #tpu.dot_dimension_numbers<[1], [0], [0], [1], [0, 0, 1, 1], [], []>} : vector<8x256xbf16>, vector<256x512xbf16>, vector<8x512xf32> -> vector<8x512xf32>
    %871 = vector.broadcast %867 : vector<1x512xf32> to vector<8x512xf32>
    %872 = arith.addf %871, %870 : vector<8x512xf32>
    %873 = vector.extract_strided_slice %872 {offsets = [0, 0], sizes = [8, 128], strides = [1, 1]} : vector<8x512xf32> to vector<8x128xf32>
    %874 = arith.negf %873 : vector<8x128xf32>
    %875 = math.exp %874 : vector<8x128xf32>
    %cst_250 = arith.constant 1.000000e+00 : f32
    %876 = vector.broadcast %cst_250 : f32 to vector<8x128xf32>
    %877 = arith.addf %876, %875 : vector<8x128xf32>
    %878 = arith.divf %876, %877 : vector<8x128xf32>
    %879 = vector.extract_strided_slice %872 {offsets = [0, 128], sizes = [8, 128], strides = [1, 1]} : vector<8x512xf32> to vector<8x128xf32>
    %880 = arith.negf %879 : vector<8x128xf32>
    %881 = math.exp %880 : vector<8x128xf32>
    %cst_251 = arith.constant 1.000000e+00 : f32
    %882 = vector.broadcast %cst_251 : f32 to vector<8x128xf32>
    %883 = arith.addf %882, %881 : vector<8x128xf32>
    %884 = arith.divf %882, %883 : vector<8x128xf32>
    %885 = vector.extract_strided_slice %872 {offsets = [0, 256], sizes = [8, 128], strides = [1, 1]} : vector<8x512xf32> to vector<8x128xf32>
    %886 = math.tanh %885 : vector<8x128xf32>
    %887 = vector.extract_strided_slice %872 {offsets = [0, 384], sizes = [8, 128], strides = [1, 1]} : vector<8x512xf32> to vector<8x128xf32>
    %888 = arith.negf %887 : vector<8x128xf32>
    %889 = math.exp %888 : vector<8x128xf32>
    %cst_252 = arith.constant 1.000000e+00 : f32
    %890 = vector.broadcast %cst_252 : f32 to vector<8x128xf32>
    %891 = arith.addf %890, %889 : vector<8x128xf32>
    %892 = arith.divf %890, %891 : vector<8x128xf32>
    %893 = arith.mulf %884, %792 : vector<8x128xf32>
    %894 = arith.mulf %878, %886 : vector<8x128xf32>
    %895 = arith.addf %893, %894 : vector<8x128xf32>
    %896 = math.tanh %895 : vector<8x128xf32>
    %897 = arith.mulf %892, %896 : vector<8x128xf32>
    %898 = tpu.concatenate %862, %863 in 1 : vector<8x128xbf16>, vector<8x128xbf16> -> vector<8x256xbf16>
    %c2_253 = arith.constant 2 : index
    %c0_254 = arith.constant 0 : index
    %c0_255 = arith.constant 0 : index
    %899 = vector.load %arg4[%c2_253, %c0_254, %c0_255] : memref<4x1x512xf32, #tpu.memory_space<vmem>>, vector<1x1x512xf32>
    %900 = vector.shape_cast %899 : vector<1x1x512xf32> to vector<1x512xf32>
    %c1_256 = arith.constant 1 : index
    %c0_257 = arith.constant 0 : index
    %c0_258 = arith.constant 0 : index
    %901 = vector.load %arg3[%c1_256, %c0_257, %c0_258] : memref<3x256x512xbf16, #tpu.memory_space<vmem>>, vector<1x256x512xbf16>
    %902 = vector.shape_cast %901 : vector<1x256x512xbf16> to vector<256x512xbf16>
    %cst_259 = arith.constant dense<0.000000e+00> : vector<8x512xf32>
    %903 = tpu.matmul %898, %902, %cst_259 {dimension_numbers = #tpu.dot_dimension_numbers<[1], [0], [0], [1], [0, 0, 1, 1], [], []>} : vector<8x256xbf16>, vector<256x512xbf16>, vector<8x512xf32> -> vector<8x512xf32>
    %904 = vector.broadcast %900 : vector<1x512xf32> to vector<8x512xf32>
    %905 = arith.addf %904, %903 : vector<8x512xf32>
    %906 = vector.extract_strided_slice %905 {offsets = [0, 0], sizes = [8, 128], strides = [1, 1]} : vector<8x512xf32> to vector<8x128xf32>
    %907 = arith.negf %906 : vector<8x128xf32>
    %908 = math.exp %907 : vector<8x128xf32>
    %cst_260 = arith.constant 1.000000e+00 : f32
    %909 = vector.broadcast %cst_260 : f32 to vector<8x128xf32>
    %910 = arith.addf %909, %908 : vector<8x128xf32>
    %911 = arith.divf %909, %910 : vector<8x128xf32>
    %912 = vector.extract_strided_slice %905 {offsets = [0, 128], sizes = [8, 128], strides = [1, 1]} : vector<8x512xf32> to vector<8x128xf32>
    %913 = arith.negf %912 : vector<8x128xf32>
    %914 = math.exp %913 : vector<8x128xf32>
    %cst_261 = arith.constant 1.000000e+00 : f32
    %915 = vector.broadcast %cst_261 : f32 to vector<8x128xf32>
    %916 = arith.addf %915, %914 : vector<8x128xf32>
    %917 = arith.divf %915, %916 : vector<8x128xf32>
    %918 = vector.extract_strided_slice %905 {offsets = [0, 256], sizes = [8, 128], strides = [1, 1]} : vector<8x512xf32> to vector<8x128xf32>
    %919 = math.tanh %918 : vector<8x128xf32>
    %920 = vector.extract_strided_slice %905 {offsets = [0, 384], sizes = [8, 128], strides = [1, 1]} : vector<8x512xf32> to vector<8x128xf32>
    %921 = arith.negf %920 : vector<8x128xf32>
    %922 = math.exp %921 : vector<8x128xf32>
    %cst_262 = arith.constant 1.000000e+00 : f32
    %923 = vector.broadcast %cst_262 : f32 to vector<8x128xf32>
    %924 = arith.addf %923, %922 : vector<8x128xf32>
    %925 = arith.divf %923, %924 : vector<8x128xf32>
    %926 = arith.mulf %917, %825 : vector<8x128xf32>
    %927 = arith.mulf %911, %919 : vector<8x128xf32>
    %928 = arith.addf %926, %927 : vector<8x128xf32>
    %929 = math.tanh %928 : vector<8x128xf32>
    %930 = arith.mulf %925, %929 : vector<8x128xf32>
    %931 = tpu.concatenate %863, %864 in 1 : vector<8x128xbf16>, vector<8x128xbf16> -> vector<8x256xbf16>
    %c3_263 = arith.constant 3 : index
    %c0_264 = arith.constant 0 : index
    %c0_265 = arith.constant 0 : index
    %932 = vector.load %arg4[%c3_263, %c0_264, %c0_265] : memref<4x1x512xf32, #tpu.memory_space<vmem>>, vector<1x1x512xf32>
    %933 = vector.shape_cast %932 : vector<1x1x512xf32> to vector<1x512xf32>
    %c2_266 = arith.constant 2 : index
    %c0_267 = arith.constant 0 : index
    %c0_268 = arith.constant 0 : index
    %934 = vector.load %arg3[%c2_266, %c0_267, %c0_268] : memref<3x256x512xbf16, #tpu.memory_space<vmem>>, vector<1x256x512xbf16>
    %935 = vector.shape_cast %934 : vector<1x256x512xbf16> to vector<256x512xbf16>
    %cst_269 = arith.constant dense<0.000000e+00> : vector<8x512xf32>
    %936 = tpu.matmul %931, %935, %cst_269 {dimension_numbers = #tpu.dot_dimension_numbers<[1], [0], [0], [1], [0, 0, 1, 1], [], []>} : vector<8x256xbf16>, vector<256x512xbf16>, vector<8x512xf32> -> vector<8x512xf32>
    %937 = vector.broadcast %933 : vector<1x512xf32> to vector<8x512xf32>
    %938 = arith.addf %937, %936 : vector<8x512xf32>
    %939 = vector.extract_strided_slice %938 {offsets = [0, 0], sizes = [8, 128], strides = [1, 1]} : vector<8x512xf32> to vector<8x128xf32>
    %940 = arith.negf %939 : vector<8x128xf32>
    %941 = math.exp %940 : vector<8x128xf32>
    %cst_270 = arith.constant 1.000000e+00 : f32
    %942 = vector.broadcast %cst_270 : f32 to vector<8x128xf32>
    %943 = arith.addf %942, %941 : vector<8x128xf32>
    %944 = arith.divf %942, %943 : vector<8x128xf32>
    %945 = vector.extract_strided_slice %938 {offsets = [0, 128], sizes = [8, 128], strides = [1, 1]} : vector<8x512xf32> to vector<8x128xf32>
    %946 = arith.negf %945 : vector<8x128xf32>
    %947 = math.exp %946 : vector<8x128xf32>
    %cst_271 = arith.constant 1.000000e+00 : f32
    %948 = vector.broadcast %cst_271 : f32 to vector<8x128xf32>
    %949 = arith.addf %948, %947 : vector<8x128xf32>
    %950 = arith.divf %948, %949 : vector<8x128xf32>
    %951 = vector.extract_strided_slice %938 {offsets = [0, 256], sizes = [8, 128], strides = [1, 1]} : vector<8x512xf32> to vector<8x128xf32>
    %952 = math.tanh %951 : vector<8x128xf32>
    %953 = vector.extract_strided_slice %938 {offsets = [0, 384], sizes = [8, 128], strides = [1, 1]} : vector<8x512xf32> to vector<8x128xf32>
    %954 = arith.negf %953 : vector<8x128xf32>
    %955 = math.exp %954 : vector<8x128xf32>
    %cst_272 = arith.constant 1.000000e+00 : f32
    %956 = vector.broadcast %cst_272 : f32 to vector<8x128xf32>
    %957 = arith.addf %956, %955 : vector<8x128xf32>
    %958 = arith.divf %956, %957 : vector<8x128xf32>
    %959 = arith.mulf %950, %858 : vector<8x128xf32>
    %960 = arith.mulf %944, %952 : vector<8x128xf32>
    %961 = arith.addf %959, %960 : vector<8x128xf32>
    %962 = math.tanh %961 : vector<8x128xf32>
    %963 = arith.mulf %958, %962 : vector<8x128xf32>
    %964 = arith.truncf %897 : vector<8x128xf32> to vector<8x128xbf16>
    %965 = arith.truncf %930 : vector<8x128xf32> to vector<8x128xbf16>
    %966 = arith.truncf %963 : vector<8x128xf32> to vector<8x128xbf16>
    %967 = tpu.concatenate %964, %965 in 1 : vector<8x128xbf16>, vector<8x128xbf16> -> vector<8x256xbf16>
    %c2_273 = arith.constant 2 : index
    %c0_274 = arith.constant 0 : index
    %c0_275 = arith.constant 0 : index
    %968 = vector.load %arg4[%c2_273, %c0_274, %c0_275] : memref<4x1x512xf32, #tpu.memory_space<vmem>>, vector<1x1x512xf32>
    %969 = vector.shape_cast %968 : vector<1x1x512xf32> to vector<1x512xf32>
    %c1_276 = arith.constant 1 : index
    %c0_277 = arith.constant 0 : index
    %c0_278 = arith.constant 0 : index
    %970 = vector.load %arg3[%c1_276, %c0_277, %c0_278] : memref<3x256x512xbf16, #tpu.memory_space<vmem>>, vector<1x256x512xbf16>
    %971 = vector.shape_cast %970 : vector<1x256x512xbf16> to vector<256x512xbf16>
    %cst_279 = arith.constant dense<0.000000e+00> : vector<8x512xf32>
    %972 = tpu.matmul %967, %971, %cst_279 {dimension_numbers = #tpu.dot_dimension_numbers<[1], [0], [0], [1], [0, 0, 1, 1], [], []>} : vector<8x256xbf16>, vector<256x512xbf16>, vector<8x512xf32> -> vector<8x512xf32>
    %973 = vector.broadcast %969 : vector<1x512xf32> to vector<8x512xf32>
    %974 = arith.addf %973, %972 : vector<8x512xf32>
    %975 = vector.extract_strided_slice %974 {offsets = [0, 0], sizes = [8, 128], strides = [1, 1]} : vector<8x512xf32> to vector<8x128xf32>
    %976 = arith.negf %975 : vector<8x128xf32>
    %977 = math.exp %976 : vector<8x128xf32>
    %cst_280 = arith.constant 1.000000e+00 : f32
    %978 = vector.broadcast %cst_280 : f32 to vector<8x128xf32>
    %979 = arith.addf %978, %977 : vector<8x128xf32>
    %980 = arith.divf %978, %979 : vector<8x128xf32>
    %981 = vector.extract_strided_slice %974 {offsets = [0, 128], sizes = [8, 128], strides = [1, 1]} : vector<8x512xf32> to vector<8x128xf32>
    %982 = arith.negf %981 : vector<8x128xf32>
    %983 = math.exp %982 : vector<8x128xf32>
    %cst_281 = arith.constant 1.000000e+00 : f32
    %984 = vector.broadcast %cst_281 : f32 to vector<8x128xf32>
    %985 = arith.addf %984, %983 : vector<8x128xf32>
    %986 = arith.divf %984, %985 : vector<8x128xf32>
    %987 = vector.extract_strided_slice %974 {offsets = [0, 256], sizes = [8, 128], strides = [1, 1]} : vector<8x512xf32> to vector<8x128xf32>
    %988 = math.tanh %987 : vector<8x128xf32>
    %989 = vector.extract_strided_slice %974 {offsets = [0, 384], sizes = [8, 128], strides = [1, 1]} : vector<8x512xf32> to vector<8x128xf32>
    %990 = arith.negf %989 : vector<8x128xf32>
    %991 = math.exp %990 : vector<8x128xf32>
    %cst_282 = arith.constant 1.000000e+00 : f32
    %992 = vector.broadcast %cst_282 : f32 to vector<8x128xf32>
    %993 = arith.addf %992, %991 : vector<8x128xf32>
    %994 = arith.divf %992, %993 : vector<8x128xf32>
    %995 = arith.mulf %986, %928 : vector<8x128xf32>
    %996 = arith.mulf %980, %988 : vector<8x128xf32>
    %997 = arith.addf %995, %996 : vector<8x128xf32>
    %998 = math.tanh %997 : vector<8x128xf32>
    %999 = arith.mulf %994, %998 : vector<8x128xf32>
    %1000 = tpu.concatenate %965, %966 in 1 : vector<8x128xbf16>, vector<8x128xbf16> -> vector<8x256xbf16>
    %c3_283 = arith.constant 3 : index
    %c0_284 = arith.constant 0 : index
    %c0_285 = arith.constant 0 : index
    %1001 = vector.load %arg4[%c3_283, %c0_284, %c0_285] : memref<4x1x512xf32, #tpu.memory_space<vmem>>, vector<1x1x512xf32>
    %1002 = vector.shape_cast %1001 : vector<1x1x512xf32> to vector<1x512xf32>
    %c2_286 = arith.constant 2 : index
    %c0_287 = arith.constant 0 : index
    %c0_288 = arith.constant 0 : index
    %1003 = vector.load %arg3[%c2_286, %c0_287, %c0_288] : memref<3x256x512xbf16, #tpu.memory_space<vmem>>, vector<1x256x512xbf16>
    %1004 = vector.shape_cast %1003 : vector<1x256x512xbf16> to vector<256x512xbf16>
    %cst_289 = arith.constant dense<0.000000e+00> : vector<8x512xf32>
    %1005 = tpu.matmul %1000, %1004, %cst_289 {dimension_numbers = #tpu.dot_dimension_numbers<[1], [0], [0], [1], [0, 0, 1, 1], [], []>} : vector<8x256xbf16>, vector<256x512xbf16>, vector<8x512xf32> -> vector<8x512xf32>
    %1006 = vector.broadcast %1002 : vector<1x512xf32> to vector<8x512xf32>
    %1007 = arith.addf %1006, %1005 : vector<8x512xf32>
    %1008 = vector.extract_strided_slice %1007 {offsets = [0, 0], sizes = [8, 128], strides = [1, 1]} : vector<8x512xf32> to vector<8x128xf32>
    %1009 = arith.negf %1008 : vector<8x128xf32>
    %1010 = math.exp %1009 : vector<8x128xf32>
    %cst_290 = arith.constant 1.000000e+00 : f32
    %1011 = vector.broadcast %cst_290 : f32 to vector<8x128xf32>
    %1012 = arith.addf %1011, %1010 : vector<8x128xf32>
    %1013 = arith.divf %1011, %1012 : vector<8x128xf32>
    %1014 = vector.extract_strided_slice %1007 {offsets = [0, 128], sizes = [8, 128], strides = [1, 1]} : vector<8x512xf32> to vector<8x128xf32>
    %1015 = arith.negf %1014 : vector<8x128xf32>
    %1016 = math.exp %1015 : vector<8x128xf32>
    %cst_291 = arith.constant 1.000000e+00 : f32
    %1017 = vector.broadcast %cst_291 : f32 to vector<8x128xf32>
    %1018 = arith.addf %1017, %1016 : vector<8x128xf32>
    %1019 = arith.divf %1017, %1018 : vector<8x128xf32>
    %1020 = vector.extract_strided_slice %1007 {offsets = [0, 256], sizes = [8, 128], strides = [1, 1]} : vector<8x512xf32> to vector<8x128xf32>
    %1021 = math.tanh %1020 : vector<8x128xf32>
    %1022 = vector.extract_strided_slice %1007 {offsets = [0, 384], sizes = [8, 128], strides = [1, 1]} : vector<8x512xf32> to vector<8x128xf32>
    %1023 = arith.negf %1022 : vector<8x128xf32>
    %1024 = math.exp %1023 : vector<8x128xf32>
    %cst_292 = arith.constant 1.000000e+00 : f32
    %1025 = vector.broadcast %cst_292 : f32 to vector<8x128xf32>
    %1026 = arith.addf %1025, %1024 : vector<8x128xf32>
    %1027 = arith.divf %1025, %1026 : vector<8x128xf32>
    %1028 = arith.mulf %1019, %961 : vector<8x128xf32>
    %1029 = arith.mulf %1013, %1021 : vector<8x128xf32>
    %1030 = arith.addf %1028, %1029 : vector<8x128xf32>
    %1031 = math.tanh %1030 : vector<8x128xf32>
    %1032 = arith.mulf %1027, %1031 : vector<8x128xf32>
    %1033 = arith.truncf %999 : vector<8x128xf32> to vector<8x128xbf16>
    %1034 = arith.truncf %1032 : vector<8x128xf32> to vector<8x128xbf16>
    %1035 = tpu.concatenate %1033, %1034 in 1 : vector<8x128xbf16>, vector<8x128xbf16> -> vector<8x256xbf16>
    %c3_293 = arith.constant 3 : index
    %c0_294 = arith.constant 0 : index
    %c0_295 = arith.constant 0 : index
    %1036 = vector.load %arg4[%c3_293, %c0_294, %c0_295] : memref<4x1x512xf32, #tpu.memory_space<vmem>>, vector<1x1x512xf32>
    %1037 = vector.shape_cast %1036 : vector<1x1x512xf32> to vector<1x512xf32>
    %c2_296 = arith.constant 2 : index
    %c0_297 = arith.constant 0 : index
    %c0_298 = arith.constant 0 : index
    %1038 = vector.load %arg3[%c2_296, %c0_297, %c0_298] : memref<3x256x512xbf16, #tpu.memory_space<vmem>>, vector<1x256x512xbf16>
    %1039 = vector.shape_cast %1038 : vector<1x256x512xbf16> to vector<256x512xbf16>
    %cst_299 = arith.constant dense<0.000000e+00> : vector<8x512xf32>
    %1040 = tpu.matmul %1035, %1039, %cst_299 {dimension_numbers = #tpu.dot_dimension_numbers<[1], [0], [0], [1], [0, 0, 1, 1], [], []>} : vector<8x256xbf16>, vector<256x512xbf16>, vector<8x512xf32> -> vector<8x512xf32>
    %1041 = vector.broadcast %1037 : vector<1x512xf32> to vector<8x512xf32>
    %1042 = arith.addf %1041, %1040 : vector<8x512xf32>
    %1043 = vector.extract_strided_slice %1042 {offsets = [0, 0], sizes = [8, 128], strides = [1, 1]} : vector<8x512xf32> to vector<8x128xf32>
    %1044 = arith.negf %1043 : vector<8x128xf32>
    %1045 = math.exp %1044 : vector<8x128xf32>
    %cst_300 = arith.constant 1.000000e+00 : f32
    %1046 = vector.broadcast %cst_300 : f32 to vector<8x128xf32>
    %1047 = arith.addf %1046, %1045 : vector<8x128xf32>
    %1048 = arith.divf %1046, %1047 : vector<8x128xf32>
    %1049 = vector.extract_strided_slice %1042 {offsets = [0, 128], sizes = [8, 128], strides = [1, 1]} : vector<8x512xf32> to vector<8x128xf32>
    %1050 = arith.negf %1049 : vector<8x128xf32>
    %1051 = math.exp %1050 : vector<8x128xf32>
    %cst_301 = arith.constant 1.000000e+00 : f32
    %1052 = vector.broadcast %cst_301 : f32 to vector<8x128xf32>
    %1053 = arith.addf %1052, %1051 : vector<8x128xf32>
    %1054 = arith.divf %1052, %1053 : vector<8x128xf32>
    %1055 = vector.extract_strided_slice %1042 {offsets = [0, 256], sizes = [8, 128], strides = [1, 1]} : vector<8x512xf32> to vector<8x128xf32>
    %1056 = math.tanh %1055 : vector<8x128xf32>
    %1057 = vector.extract_strided_slice %1042 {offsets = [0, 384], sizes = [8, 128], strides = [1, 1]} : vector<8x512xf32> to vector<8x128xf32>
    %1058 = arith.negf %1057 : vector<8x128xf32>
    %1059 = math.exp %1058 : vector<8x128xf32>
    %cst_302 = arith.constant 1.000000e+00 : f32
    %1060 = vector.broadcast %cst_302 : f32 to vector<8x128xf32>
    %1061 = arith.addf %1060, %1059 : vector<8x128xf32>
    %1062 = arith.divf %1060, %1061 : vector<8x128xf32>
    %1063 = arith.mulf %1054, %1030 : vector<8x128xf32>
    %1064 = arith.mulf %1048, %1056 : vector<8x128xf32>
    %1065 = arith.addf %1063, %1064 : vector<8x128xf32>
    %1066 = math.tanh %1065 : vector<8x128xf32>
    %1067 = arith.mulf %1062, %1066 : vector<8x128xf32>
    %1068 = arith.truncf %1067 : vector<8x128xf32> to vector<8x128xbf16>
    %c0_303 = arith.constant 0 : index
    %c0_304 = arith.constant 0 : index
    %1069 = vector.load %arg5[%c0_303, %c0_304] : memref<128x128xbf16, #tpu.memory_space<vmem>>, vector<128x128xbf16>
    %cst_305 = arith.constant dense<0.000000e+00> : vector<8x128xf32>
    %1070 = tpu.matmul %1068, %1069, %cst_305 {dimension_numbers = #tpu.dot_dimension_numbers<[1], [0], [0], [1], [0, 0, 1, 1], [], []>} : vector<8x128xbf16>, vector<128x128xbf16>, vector<8x128xf32> -> vector<8x128xf32>
    %c0_306 = arith.constant 0 : index
    %c0_307 = arith.constant 0 : index
    %1071 = vector.load %arg6[%c0_306, %c0_307] : memref<1x128xf32, #tpu.memory_space<vmem>>, vector<1x128xf32>
    %1072 = vector.broadcast %1071 : vector<1x128xf32> to vector<8x128xf32>
    %1073 = arith.addf %1070, %1072 : vector<8x128xf32>
    %c0_308 = arith.constant 0 : index
    %c0_309 = arith.constant 0 : index
    %1074 = vector.load %arg7[%c0_308, %c0_309] : memref<8x128xf32, #tpu.memory_space<vmem>>, vector<8x128xf32>
    tpu.vector_store %arg7[%c0_308, %c0_309], %1073 {strides = array<i32>} : memref<8x128xf32, #tpu.memory_space<vmem>>, vector<8x128xf32>,
    return
  }
}

</mosaic_0001>

<llo_original>
// kernel: stock_lstm_forward.1
$region0: #{stock_lstm_forward.1}
  #allocation0 [shape = 'u32[]', space=smem, size = 0x4, offset = 0x4, fixed_abs, tag = 'smem constant byte address 0x4 - core index']
  #allocation1 [shape = 'u32[144,128]{1,0:T(1,128)}', space=vmem, size = 0x12000, scoped, tag = 'internal scratch']
  #allocation2 [shape = 'f32[64,512]{1,0:T(8,128)}', space=vmem, size = 0x20000, scoped, tag = 'scratch operand']
  %s0 = inlined_call_operand.vmem [shape: bf16[64,16], index: 0, kind: input, shape index: {}]
  %s1 = inlined_call_operand.hbm [shape: bf16[16,512], index: 1, kind: input, shape index: {}]
  %s2 = inlined_call_operand.hbm [shape: bf16[128,512], index: 2, kind: input, shape index: {}]
  %s3 = inlined_call_operand.hbm [shape: bf16[3,256,512], index: 3, kind: input, shape index: {}]
  %s4 = inlined_call_operand.hbm [shape: f32[4,1,512], index: 4, kind: input, shape index: {}]
  %s5 = inlined_call_operand.vmem [shape: bf16[128,128], index: 5, kind: input, shape index: {}]
  %s6 = inlined_call_operand.vmem [shape: f32[1,128], index: 6, kind: input, shape index: {}]
  %s7 = inlined_call_operand.vmem [shape: f32[8,128], index: 7, kind: output, shape index: {}]
  %s8 = sld [smem:[#allocation0]]
  $region54: #{stock_lstm_forward.1} parent=0
    _
  %s10 = ssub.s32 1, %s8
  %s11 = scalar_select 0, %s10, %s8
  $region1: #{stock_lstm_forward.1} parent=0
    #allocation3 [shape = 'u8[16384]{0}', space=vmem, size = 0x4000, scoped, tag = 'input window, operand 1, single buffered']
    #allocation4 [shape = 's32[1]{0}', space=sflag, size = 0x4, scoped, tag = 'scoped memory for stock_lstm_forward.1']
    #allocation5 [shape = 'u8[131072]{0}', space=vmem, size = 0x20000, scoped, tag = 'input window, operand 2, single buffered']
    #allocation6 [shape = 's32[1]{0}', space=sflag, size = 0x4, scoped, tag = 'scoped memory for stock_lstm_forward.1']
    #allocation7 [shape = 'u8[786432]{0}', space=vmem, size = 0xc0000, scoped, tag = 'input window, operand 3, single buffered']
    #allocation8 [shape = 'u8[8192]{0}', space=vmem, size = 0x2000, scoped, tag = 'input window, operand 4, single buffered']
    #allocation9 [shape = 's32[1]{0}', space=sflag, size = 0x4, scoped, tag = 'scoped memory for stock_lstm_forward.1']
    %12 = vsyncpa [#allocation4], 0
    %13 = vsyncpa [#allocation6], 0
    %14 = vsyncpa [#allocation9], 0
    // Predicated region
    $region2: #{stock_lstm_forward.1} parent=1 // pred_check
      _
    $region3: #{stock_lstm_forward.1} parent=1 // pred_check_branch
      %16 = sbr.rel (0) target = $region5
    $region4: #{stock_lstm_forward.1} parent=1 // pred_region
      _
    $region5: #{stock_lstm_forward.1} parent=1 // pred_fallthru
      _
    // Predicated region
    $region6: #{stock_lstm_forward.1} parent=1 // pred_check
      _
    $region7: #{stock_lstm_forward.1} parent=1 // pred_check_branch
      %18 = sbr.rel (0) target = $region9
    $region8: #{stock_lstm_forward.1} parent=1 // pred_region
      %s20 = ssub.s32 512, 512
      %21 = vsyncadd [#allocation4], %s20
      %s22 = sshll.u32 [#allocation3], 4
      %s23 = int_to_ptr.vmem [resolvable:$true] %s22
      %28 = dma.hbm_to_vmem [thread:$0]  %s1, 512, %s23, [#allocation4], 256, 256, 16
    $region9: #{stock_lstm_forward.1} parent=1 // pred_fallthru
      _
    // Predicated region
    $region10: #{stock_lstm_forward.1} parent=1 // pred_check
      _
    $region11: #{stock_lstm_forward.1} parent=1 // pred_check_branch
      %30 = sbr.rel (0) target = $region13
    $region12: #{stock_lstm_forward.1} parent=1 // pred_region
      %s32 = ssub.s32 4096, 4096
      %33 = vsyncadd [#allocation6], %s32
      %s34 = sshll.u32 [#allocation5], 4
      %s35 = int_to_ptr.vmem [resolvable:$true] %s34
      %40 = dma.hbm_to_vmem [thread:$0]  %s2, 4096, %s35, [#allocation6], 256, 256, 16
    $region13: #{stock_lstm_forward.1} parent=1 // pred_fallthru
      _
    // Predicated region
    $region14: #{stock_lstm_forward.1} parent=1 // pred_check
      _
    $region15: #{stock_lstm_forward.1} parent=1 // pred_check_branch
      %42 = sbr.rel (0) target = $region17
    $region16: #{stock_lstm_forward.1} parent=1 // pred_region
      %s44 = ssub.s32 24576, 24576
      %45 = vsyncadd [#allocation6], %s44
      %s46 = sshll.u32 [#allocation7], 4
      %s47 = int_to_ptr.vmem [resolvable:$true] %s46
      %52 = dma.hbm_to_vmem [thread:$0]  %s3, 24576, %s47, [#allocation6], 256, 256, 16
    $region17: #{stock_lstm_forward.1} parent=1 // pred_fallthru
      _
    // Predicated region
    $region18: #{stock_lstm_forward.1} parent=1 // pred_check
      _
    $region19: #{stock_lstm_forward.1} parent=1 // pred_check_branch
      %54 = sbr.rel (0) target = $region21
    $region20: #{stock_lstm_forward.1} parent=1 // pred_region
      %s56 = ssub.s32 256, 256
      %57 = vsyncadd [#allocation9], %s56
      %s58 = sshll.u32 [#allocation8], 4
      %s59 = int_to_ptr.vmem [resolvable:$true] %s58
      %64 = dma.hbm_to_vmem [thread:$0]  %s4, 256, %s59, [#allocation9], 64, 64, 4
    $region21: #{stock_lstm_forward.1} parent=1 // pred_fallthru
      _
    // Predicated region
    $region22: #{stock_lstm_forward.1} parent=1 // pred_check
      _
    $region23: #{stock_lstm_forward.1} parent=1 // pred_check_branch
      %66 = sbr.rel (0) target = $region25
    $region24: #{stock_lstm_forward.1} parent=1 // pred_region
      _
    $region25: #{stock_lstm_forward.1} parent=1 // pred_fallthru
      _
    // Predicated region
    $region26: #{stock_lstm_forward.1} parent=1 // pred_check
      _
    $region27: #{stock_lstm_forward.1} parent=1 // pred_check_branch
      %68 = sbr.rel (0) target = $region29
    $region28: #{stock_lstm_forward.1} parent=1 // pred_region
      _
    $region29: #{stock_lstm_forward.1} parent=1 // pred_fallthru
      _
    // Predicated region
    $region30: #{stock_lstm_forward.1} parent=1 // pred_check
      _
    $region31: #{stock_lstm_forward.1} parent=1 // pred_check_branch
      %70 = sbr.rel (0) target = $region33
    $region32: #{stock_lstm_forward.1} parent=1 // pred_region
      %71 = dma.done [#allocation4], 512
    $region33: #{stock_lstm_forward.1} parent=1 // pred_fallthru
      _
    // Predicated region
    $region34: #{stock_lstm_forward.1} parent=1 // pred_check
      _
    $region35: #{stock_lstm_forward.1} parent=1 // pred_check_branch
      %73 = sbr.rel (0) target = $region37
    $region36: #{stock_lstm_forward.1} parent=1 // pred_region
      %74 = dma.done [#allocation6], 4096
    $region37: #{stock_lstm_forward.1} parent=1 // pred_fallthru
      _
    // Predicated region
    $region38: #{stock_lstm_forward.1} parent=1 // pred_check
      _
    $region39: #{stock_lstm_forward.1} parent=1 // pred_check_branch
      %76 = sbr.rel (0) target = $region41
    $region40: #{stock_lstm_forward.1} parent=1 // pred_region
      %77 = dma.done [#allocation6], 24576
    $region41: #{stock_lstm_forward.1} parent=1 // pred_fallthru
      _
    // Predicated region
    $region42: #{stock_lstm_forward.1} parent=1 // pred_check
      _
    $region43: #{stock_lstm_forward.1} parent=1 // pred_check_branch
      %79 = sbr.rel (0) target = $region45
    $region44: #{stock_lstm_forward.1} parent=1 // pred_region
      %80 = dma.done [#allocation9], 256
    $region45: #{stock_lstm_forward.1} parent=1 // pred_fallthru
      _
    %v82 = vld [vmem:[%s0] sm:$0xf]
    %v83 = vld [vmem:[%s0 + $0x4] sm:$0xf]
    %v84 = vld [vmem:[%s0 + $0x8] sm:$0xf]
    %v85 = vld [vmem:[%s0 + $0xc] sm:$0xf]
    %v86 = vld [vmem:[%s0 + $0x10] sm:$0xf]
    %v87 = vld [vmem:[%s0 + $0x14] sm:$0xf]
    %v88 = vld [vmem:[%s0 + $0x18] sm:$0xf]
    %v89 = vld [vmem:[%s0 + $0x1c] sm:$0xf]
    %v90 = vld [vmem:[#allocation3] sm:$0xff]
    %v91 = vld [vmem:[#allocation3 + $0x8] sm:$0xff]
    %v92 = vld [vmem:[#allocation3 + $0x10] sm:$0xff]
    %v93 = vld [vmem:[#allocation3 + $0x18] sm:$0xff]
    %v94 = vld [vmem:[#allocation8] sm:$0xf]
    %v96 = vlaneseq
    %v97 = vshrl.u32 %v96, 7
    %v98 = vsub.s32 0, %v97
    %v99 = vrot.slane %v94, %v98
    %v100 = vlaneseq
    %v101 = vshrl.u32 %v100, 7
    %v102 = vsub.s32 1, %v101
    %v103 = vrot.slane %v94, %v102
    %v104 = vlaneseq
    %v105 = vshrl.u32 %v104, 7
    %v106 = vsub.s32 2, %v105
    %v107 = vrot.slane %v94, %v106
    %v108 = vlaneseq
    %v109 = vshrl.u32 %v108, 7
    %v110 = vsub.s32 3, %v109
    %v111 = vrot.slane %v94, %v110
    %v124 = vunpack.c.l.b16 %v82
    %v125 = vunpack.c.l.b16 %v83
    %v126 = vunpack.c.l.b16 %v84
    %v127 = vunpack.c.l.b16 %v85
    %v128 = vunpack.c.l.b16 %v86
    %v129 = vunpack.c.l.b16 %v87
    %v130 = vunpack.c.l.b16 %v88
    %v131 = vunpack.c.l.b16 %v89
    %v132 = vpack.c.b16 %v125, %v124
    %v133 = vpack.c.b16 %v127, %v126
    %v134 = vpack.c.b16 %v129, %v128
    %v135 = vpack.c.b16 %v131, %v130
    %v140 = vunpack.c.l.b16 %v90
    %v141 = vunpack.c.h.b16 %v90
    %v142 = vunpack.c.l.b16 %v91
    %v143 = vunpack.c.h.b16 %v91
    %v144 = vunpack.c.l.b16 %v92
    %v145 = vunpack.c.h.b16 %v92
    %v146 = vunpack.c.l.b16 %v93
    %v147 = vunpack.c.h.b16 %v93
    %v148 = vpack.c.b16 %v144, %v140
    %v149 = vpack.c.b16 %v145, %v141
    %v150 = vpack.c.b16 %v146, %v142
    %v151 = vpack.c.b16 %v147, %v143
    %vm156 = vcmask 130048
    %v158 = vsel %vm156, %v132, 0
    %v161 = vsel %vm156, %v133, 0
    %v164 = vsel %vm156, %v134, 0
    %v167 = vsel %vm156, %v135, 0
    %169 = vmatprep.subr.bf16.mxu0 0
    %170 = vmatpush1.bf16.msra.mxu0 0
    %171 = vmatprep.subr.bf16.mxu0 0
    %172 = vmatpush1.bf16.msra.mxu0 0
    %173 = vmatprep.subr.bf16.mxu0 0
    %174 = vmatpush1.bf16.msra.mxu0 0
    %175 = vmatprep.subr.bf16.mxu0 0
    %176 = vmatpush1.bf16.msra.mxu0 0
    %177 = vmatprep.subr.bf16.mxu0 0
    %178 = vmatpush1.bf16.msra.mxu0 0
    %179 = vmatprep.subr.bf16.mxu0 0
    %180 = vmatpush1.bf16.msra.mxu0 0
    %181 = vmatprep.subr.bf16.mxu0 0
    %182 = vmatpush1.bf16.msra.mxu0 0
    %183 = vmatprep.subr.bf16.mxu0 %v149
    %184 = vmatpush1.bf16.msra.mxu0 %v148
    %185 = vmatprep.subr.bf16.mxu0 0
    %186 = vmatpush2.bf16.msra.mxu0 0
    %187 = vmatprep.subr.bf16.mxu0 0
    %188 = vmatpush2.bf16.msra.mxu0 0
    %189 = vmatprep.subr.bf16.mxu0 0
    %190 = vmatpush2.bf16.msra.mxu0 0
    %191 = vmatprep.subr.bf16.mxu0 0
    %192 = vmatpush2.bf16.msra.mxu0 0
    %193 = vmatprep.subr.bf16.mxu0 0
    %194 = vmatpush2.bf16.msra.mxu0 0
    %195 = vmatprep.subr.bf16.mxu0 0
    %196 = vmatpush2.bf16.msra.mxu0 0
    %197 = vmatprep.subr.bf16.mxu0 0
    %198 = vmatpush2.bf16.msra.mxu0 0
    %199 = vmatprep.subr.bf16.mxu0 0
    %200 = vmatpush2.bf16.msra.mxu0 0
    %201 = vmatprep.mubr.bf16.mxu0 0
    %202 = vmatmul.mubr.bf16.gmra.mxu0 %v158
    %v203 = vpop.f32.mrf.mxu0
    %v204 = vadd.f32 %v99, %v203
    %v205 = vpop.f32.mrf.mxu0
    %v206 = vadd.f32 %v103, %v205
    %v207 = vpop.f32.mrf.mxu0
    %v208 = vadd.f32 %v99, %v207
    %v209 = vpop.f32.mrf.mxu0
    %v210 = vadd.f32 %v103, %v209
    %211 = vmatprep.mubr.bf16.mxu0 0
    %212 = vmatmul.mubr.bf16.gmra.mxu0 %v161
    %v213 = vpop.f32.mrf.mxu0
    %v214 = vadd.f32 %v99, %v213
    %v215 = vpop.f32.mrf.mxu0
    %v216 = vadd.f32 %v103, %v215
    %v217 = vpop.f32.mrf.mxu0
    %v218 = vadd.f32 %v99, %v217
    %v219 = vpop.f32.mrf.mxu0
    %v220 = vadd.f32 %v103, %v219
    %221 = vmatprep.mubr.bf16.mxu0 0
    %222 = vmatmul.mubr.bf16.gmra.mxu0 %v164
    %v223 = vpop.f32.mrf.mxu0
    %v224 = vadd.f32 %v99, %v223
    %v225 = vpop.f32.mrf.mxu0
    %v226 = vadd.f32 %v103, %v225
    %v227 = vpop.f32.mrf.mxu0
    %v228 = vadd.f32 %v99, %v227
    %v229 = vpop.f32.mrf.mxu0
    %v230 = vadd.f32 %v103, %v229
    %231 = vmatprep.mubr.bf16.mxu0 0
    %232 = vmatmul.mubr.bf16.gmra.mxu0 %v167
    %v233 = vpop.f32.mrf.mxu0
    %v234 = vadd.f32 %v99, %v233
    %v235 = vpop.f32.mrf.mxu0
    %v236 = vadd.f32 %v103, %v235
    %v237 = vpop.f32.mrf.mxu0
    %v238 = vadd.f32 %v99, %v237
    %v239 = vpop.f32.mrf.mxu0
    %v240 = vadd.f32 %v103, %v239
    %241 = vdwg.mxu0
    %242 = vmatprep.subr.bf16.mxu0 0
    %243 = vmatpush1.bf16.msra.mxu0 0
    %244 = vmatprep.subr.bf16.mxu0 0
    %245 = vmatpush1.bf16.msra.mxu0 0
    %246 = vmatprep.subr.bf16.mxu0 0
    %247 = vmatpush1.bf16.msra.mxu0 0
    %248 = vmatprep.subr.bf16.mxu0 0
    %249 = vmatpush1.bf16.msra.mxu0 0
    %250 = vmatprep.subr.bf16.mxu0 0
    %251 = vmatpush1.bf16.msra.mxu0 0
    %252 = vmatprep.subr.bf16.mxu0 0
    %253 = vmatpush1.bf16.msra.mxu0 0
    %254 = vmatprep.subr.bf16.mxu0 0
    %255 = vmatpush1.bf16.msra.mxu0 0
    %256 = vmatprep.subr.bf16.mxu0 %v151
    %257 = vmatpush1.bf16.msra.mxu0 %v150
    %258 = vmatprep.subr.bf16.mxu0 0
    %259 = vmatpush2.bf16.msra.mxu0 0
    %260 = vmatprep.subr.bf16.mxu0 0
    %261 = vmatpush2.bf16.msra.mxu0 0
    %262 = vmatprep.subr.bf16.mxu0 0
    %263 = vmatpush2.bf16.msra.mxu0 0
    %264 = vmatprep.subr.bf16.mxu0 0
    %265 = vmatpush2.bf16.msra.mxu0 0
    %266 = vmatprep.subr.bf16.mxu0 0
    %267 = vmatpush2.bf16.msra.mxu0 0
    %268 = vmatprep.subr.bf16.mxu0 0
    %269 = vmatpush2.bf16.msra.mxu0 0
    %270 = vmatprep.subr.bf16.mxu0 0
    %271 = vmatpush2.bf16.msra.mxu0 0
    %272 = vmatprep.subr.bf16.mxu0 0
    %273 = vmatpush2.bf16.msra.mxu0 0
    %274 = vmatprep.mubr.bf16.mxu0 0
    %275 = vmatmul.mubr.bf16.gmra.mxu0 %v158
    %v276 = vpop.f32.mrf.mxu0
    %v277 = vadd.f32 %v107, %v276
    %v278 = vpop.f32.mrf.mxu0
    %v279 = vadd.f32 %v111, %v278
    %v280 = vpop.f32.mrf.mxu0
    %v281 = vadd.f32 %v107, %v280
    %v282 = vpop.f32.mrf.mxu0
    %v283 = vadd.f32 %v111, %v282
    %284 = vmatprep.mubr.bf16.mxu0 0
    %285 = vmatmul.mubr.bf16.gmra.mxu0 %v161
    %v286 = vpop.f32.mrf.mxu0
    %v287 = vadd.f32 %v107, %v286
    %v288 = vpop.f32.mrf.mxu0
    %v289 = vadd.f32 %v111, %v288
    %v290 = vpop.f32.mrf.mxu0
    %v291 = vadd.f32 %v107, %v290
    %v292 = vpop.f32.mrf.mxu0
    %v293 = vadd.f32 %v111, %v292
    %294 = vmatprep.mubr.bf16.mxu0 0
    %295 = vmatmul.mubr.bf16.gmra.mxu0 %v164
    %v296 = vpop.f32.mrf.mxu0
    %v297 = vadd.f32 %v107, %v296
    %v298 = vpop.f32.mrf.mxu0
    %v299 = vadd.f32 %v111, %v298
    %v300 = vpop.f32.mrf.mxu0
    %v301 = vadd.f32 %v107, %v300
    %v302 = vpop.f32.mrf.mxu0
    %v303 = vadd.f32 %v111, %v302
    %304 = vmatprep.mubr.bf16.mxu0 0
    %305 = vmatmul.mubr.bf16.gmra.mxu0 %v167
    %v306 = vpop.f32.mrf.mxu0
    %v307 = vadd.f32 %v107, %v306
    %v308 = vpop.f32.mrf.mxu0
    %v309 = vadd.f32 %v111, %v308
    %v310 = vpop.f32.mrf.mxu0
    %v311 = vadd.f32 %v107, %v310
    %v312 = vpop.f32.mrf.mxu0
    %v313 = vadd.f32 %v111, %v312
    %314 = vdwg.mxu0
    %315 = vst [vmem:[#allocation2] sm:$0xff] %v204
    %316 = vst [vmem:[#allocation2 + $0x8] sm:$0xff] %v206
    %317 = vst [vmem:[#allocation2 + $0x10] sm:$0xff] %v277
    %318 = vst [vmem:[#allocation2 + $0x18] sm:$0xff] %v279
    %319 = vst [vmem:[#allocation2 + $0x20] sm:$0xff] %v208
    %320 = vst [vmem:[#allocation2 + $0x28] sm:$0xff] %v210
    %321 = vst [vmem:[#allocation2 + $0x30] sm:$0xff] %v281
    %322 = vst [vmem:[#allocation2 + $0x38] sm:$0xff] %v283
    %323 = vst [vmem:[#allocation2 + $0x40] sm:$0xff] %v214
    %324 = vst [vmem:[#allocation2 + $0x48] sm:$0xff] %v216
    %325 = vst [vmem:[#allocation2 + $0x50] sm:$0xff] %v287
    %326 = vst [vmem:[#allocation2 + $0x58] sm:$0xff] %v289
    %327 = vst [vmem:[#allocation2 + $0x60] sm:$0xff] %v218
    %328 = vst [vmem:[#allocation2 + $0x68] sm:$0xff] %v220
    %329 = vst [vmem:[#allocation2 + $0x70] sm:$0xff] %v291
    %330 = vst [vmem:[#allocation2 + $0x78] sm:$0xff] %v293
    %331 = vst [vmem:[#allocation2 + $0x80] sm:$0xff] %v224
    %332 = vst [vmem:[#allocation2 + $0x88] sm:$0xff] %v226
    %333 = vst [vmem:[#allocation2 + $0x90] sm:$0xff] %v297
    %334 = vst [vmem:[#allocation2 + $0x98] sm:$0xff] %v299
    %335 = vst [vmem:[#allocation2 + $0xa0] sm:$0xff] %v228
    %336 = vst [vmem:[#allocation2 + $0xa8] sm:$0xff] %v230
    %337 = vst [vmem:[#allocation2 + $0xb0] sm:$0xff] %v301
    %338 = vst [vmem:[#allocation2 + $0xb8] sm:$0xff] %v303
    %339 = vst [vmem:[#allocation2 + $0xc0] sm:$0xff] %v234
    %340 = vst [vmem:[#allocation2 + $0xc8] sm:$0xff] %v236
    %341 = vst [vmem:[#allocation2 + $0xd0] sm:$0xff] %v307
    %342 = vst [vmem:[#allocation2 + $0xd8] sm:$0xff] %v309
    %343 = vst [vmem:[#allocation2 + $0xe0] sm:$0xff] %v238
    %344 = vst [vmem:[#allocation2 + $0xe8] sm:$0xff] %v240
    %345 = vst [vmem:[#allocation2 + $0xf0] sm:$0xff] %v311
    %346 = vst [vmem:[#allocation2 + $0xf8] sm:$0xff] %v313
    %v347 = vld [vmem:[#allocation2] sm:$0xff]
    %v348 = vld [vmem:[#allocation2 + $0x8] sm:$0xff]
    %v349 = vld [vmem:[#allocation2 + $0x10] sm:$0xff]
    %v350 = vld [vmem:[#allocation2 + $0x18] sm:$0xff]
    %v351 = vld [vmem:[#allocation5] sm:$0xff]
    %v352 = vld [vmem:[#allocation5 + $0x8] sm:$0xff]
    %v353 = vld [vmem:[#allocation5 + $0x10] sm:$0xff]
    %v354 = vld [vmem:[#allocation5 + $0x18] sm:$0xff]
    %v355 = vld [vmem:[#allocation5 + $0x20] sm:$0xff]
    %v356 = vld [vmem:[#allocation5 + $0x28] sm:$0xff]
    %v357 = vld [vmem:[#allocation5 + $0x30] sm:$0xff]
    %v358 = vld [vmem:[#allocation5 + $0x38] sm:$0xff]
    %v359 = vld [vmem:[#allocation5 + $0x40] sm:$0xff]
    %v360 = vld [vmem:[#allocation5 + $0x48] sm:$0xff]
    %v361 = vld [vmem:[#allocation5 + $0x50] sm:$0xff]
    %v362 = vld [vmem:[#allocation5 + $0x58] sm:$0xff]
    %v363 = vld [vmem:[#allocation5 + $0x60] sm:$0xff]
    %v364 = vld [vmem:[#allocation5 + $0x68] sm:$0xff]
    %v365 = vld [vmem:[#allocation5 + $0x70] sm:$0xff]
    %v366 = vld [vmem:[#allocation5 + $0x78] sm:$0xff]
    %v367 = vld [vmem:[#allocation5 + $0x80] sm:$0xff]
    %v368 = vld [vmem:[#allocation5 + $0x88] sm:$0xff]
    %v369 = vld [vmem:[#allocation5 + $0x90] sm:$0xff]
    %v370 = vld [vmem:[#allocation5 + $0x98] sm:$0xff]
    %v371 = vld [vmem:[#allocation5 + $0xa0] sm:$0xff]
    %v372 = vld [vmem:[#allocation5 + $0xa8] sm:$0xff]
    %v373 = vld [vmem:[#allocation5 + $0xb0] sm:$0xff]
    %v374 = vld [vmem:[#allocation5 + $0xb8] sm:$0xff]
    %v375 = vld [vmem:[#allocation5 + $0xc0] sm:$0xff]
    %v376 = vld [vmem:[#allocation5 + $0xc8] sm:$0xff]
    %v377 = vld [vmem:[#allocation5 + $0xd0] sm:$0xff]
    %v378 = vld [vmem:[#allocation5 + $0xd8] sm:$0xff]
    %v379 = vld [vmem:[#allocation5 + $0xe0] sm:$0xff]
    %v380 = vld [vmem:[#allocation5 + $0xe8] sm:$0xff]
    %v381 = vld [vmem:[#allocation5 + $0xf0] sm:$0xff]
    %v382 = vld [vmem:[#allocation5 + $0xf8] sm:$0xff]
    %v415 = vunpack.c.l.b16 %v351
    %v416 = vunpack.c.h.b16 %v351
    %v417 = vunpack.c.l.b16 %v352
    %v418 = vunpack.c.h.b16 %v352
    %v419 = vunpack.c.l.b16 %v353
    %v420 = vunpack.c.h.b16 %v353
    %v421 = vunpack.c.l.b16 %v354
    %v422 = vunpack.c.h.b16 %v354
    %v423 = vunpack.c.l.b16 %v355
    %v424 = vunpack.c.h.b16 %v355
    %v425 = vunpack.c.l.b16 %v356
    %v426 = vunpack.c.h.b16 %v356
    %v427 = vunpack.c.l.b16 %v357
    %v428 = vunpack.c.h.b16 %v357
    %v429 = vunpack.c.l.b16 %v358
    %v430 = vunpack.c.h.b16 %v358
    %v431 = vunpack.c.l.b16 %v359
    %v432 = vunpack.c.h.b16 %v359
    %v433 = vunpack.c.l.b16 %v360
    %v434 = vunpack.c.h.b16 %v360
    %v435 = vunpack.c.l.b16 %v361
    %v436 = vunpack.c.h.b16 %v361
    %v437 = vunpack.c.l.b16 %v362
    %v438 = vunpack.c.h.b16 %v362
    %v439 = vunpack.c.l.b16 %v363
    %v440 = vunpack.c.h.b16 %v363
    %v441 = vunpack.c.l.b16 %v364
    %v442 = vunpack.c.h.b16 %v364
    %v443 = vunpack.c.l.b16 %v365
    %v444 = vunpack.c.h.b16 %v365
    %v445 = vunpack.c.l.b16 %v366
    %v446 = vunpack.c.h.b16 %v366
    %v447 = vunpack.c.l.b16 %v367
    %v448 = vunpack.c.h.b16 %v367
    %v449 = vunpack.c.l.b16 %v368
    %v450 = vunpack.c.h.b16 %v368
    %v451 = vunpack.c.l.b16 %v369
    %v452 = vunpack.c.h.b16 %v369
    %v453 = vunpack.c.l.b16 %v370
    %v454 = vunpack.c.h.b16 %v370
    %v455 = vunpack.c.l.b16 %v371
    %v456 = vunpack.c.h.b16 %v371
    %v457 = vunpack.c.l.b16 %v372
    %v458 = vunpack.c.h.b16 %v372
    %v459 = vunpack.c.l.b16 %v373
    %v460 = vunpack.c.h.b16 %v373
    %v461 = vunpack.c.l.b16 %v374
    %v462 = vunpack.c.h.b16 %v374
    %v463 = vunpack.c.l.b16 %v375
    %v464 = vunpack.c.h.b16 %v375
    %v465 = vunpack.c.l.b16 %v376
    %v466 = vunpack.c.h.b16 %v376
    %v467 = vunpack.c.l.b16 %v377
    %v468 = vunpack.c.h.b16 %v377
    %v469 = vunpack.c.l.b16 %v378
    %v470 = vunpack.c.h.b16 %v378
    %v471 = vunpack.c.l.b16 %v379
    %v472 = vunpack.c.h.b16 %v379
    %v473 = vunpack.c.l.b16 %v380
    %v474 = vunpack.c.h.b16 %v380
    %v475 = vunpack.c.l.b16 %v381
    %v476 = vunpack.c.h.b16 %v381
    %v477 = vunpack.c.l.b16 %v382
    %v478 = vunpack.c.h.b16 %v382
    %v479 = vpack.c.b16 %v419, %v415
    %v480 = vpack.c.b16 %v420, %v416
    %v481 = vpack.c.b16 %v421, %v417
    %v482 = vpack.c.b16 %v422, %v418
    %v483 = vpack.c.b16 %v427, %v423
    %v484 = vpack.c.b16 %v428, %v424
    %v485 = vpack.c.b16 %v429, %v425
    %v486 = vpack.c.b16 %v430, %v426
    %v487 = vpack.c.b16 %v435, %v431
    %v488 = vpack.c.b16 %v436, %v432
    %v489 = vpack.c.b16 %v437, %v433
    %v490 = vpack.c.b16 %v438, %v434
    %v491 = vpack.c.b16 %v443, %v439
    %v492 = vpack.c.b16 %v444, %v440
    %v493 = vpack.c.b16 %v445, %v441
    %v494 = vpack.c.b16 %v446, %v442
    %v495 = vpack.c.b16 %v451, %v447
    %v496 = vpack.c.b16 %v452, %v448
    %v497 = vpack.c.b16 %v453, %v449
    %v498 = vpack.c.b16 %v454, %v450
    %v499 = vpack.c.b16 %v459, %v455
    %v500 = vpack.c.b16 %v460, %v456
    %v501 = vpack.c.b16 %v461, %v457
    %v502 = vpack.c.b16 %v462, %v458
    %v503 = vpack.c.b16 %v467, %v463
    %v504 = vpack.c.b16 %v468, %v464
    %v505 = vpack.c.b16 %v469, %v465
    %v506 = vpack.c.b16 %v470, %v466
    %v507 = vpack.c.b16 %v475, %v471
    %v508 = vpack.c.b16 %v476, %v472
    %v509 = vpack.c.b16 %v477, %v473
    %v510 = vpack.c.b16 %v478, %v474
    %543 = vmatprep.subr.bf16.mxu0 %v508
    %544 = vmatpush1.bf16.msra.mxu0 %v507
    %545 = vmatprep.subr.bf16.mxu0 %v504
    %546 = vmatpush1.bf16.msra.mxu0 %v503
    %547 = vmatprep.subr.bf16.mxu0 %v500
    %548 = vmatpush1.bf16.msra.mxu0 %v499
    %549 = vmatprep.subr.bf16.mxu0 %v496
    %550 = vmatpush1.bf16.msra.mxu0 %v495
    %551 = vmatprep.subr.bf16.mxu0 %v492
    %552 = vmatpush1.bf16.msra.mxu0 %v491
    %553 = vmatprep.subr.bf16.mxu0 %v488
    %554 = vmatpush1.bf16.msra.mxu0 %v487
    %555 = vmatprep.subr.bf16.mxu0 %v484
    %556 = vmatpush1.bf16.msra.mxu0 %v483
    %557 = vmatprep.subr.bf16.mxu0 %v480
    %558 = vmatpush1.bf16.msra.mxu0 %v479
    %559 = vmatprep.subr.bf16.mxu0 0
    %560 = vmatpush2.bf16.msra.mxu0 0
    %561 = vmatprep.subr.bf16.mxu0 0
    %562 = vmatpush2.bf16.msra.mxu0 0
    %563 = vmatprep.subr.bf16.mxu0 0
    %564 = vmatpush2.bf16.msra.mxu0 0
    %565 = vmatprep.subr.bf16.mxu0 0
    %566 = vmatpush2.bf16.msra.mxu0 0
    %567 = vmatprep.subr.bf16.mxu0 0
    %568 = vmatpush2.bf16.msra.mxu0 0
    %569 = vmatprep.subr.bf16.mxu0 0
    %570 = vmatpush2.bf16.msra.mxu0 0
    %571 = vmatprep.subr.bf16.mxu0 0
    %572 = vmatpush2.bf16.msra.mxu0 0
    %573 = vmatprep.subr.bf16.mxu0 0
    %574 = vmatpush2.bf16.msra.mxu0 0
    %575 = vmatprep.mubr.bf16.mxu0 0
    %576 = vmatmul.mubr.bf16.gmra.mxu0 0
    %v577 = vpop.f32.mrf.mxu0
    %v578 = vadd.f32 0.0, %v577
    %v579 = vpop.f32.mrf.mxu0
    %v580 = vadd.f32 0.0, %v579
    %v581 = vpop.f32.mrf.mxu0
    %v582 = vpop.f32.mrf.mxu0
    %583 = vdwg.mxu0
    %584 = vmatprep.subr.bf16.mxu0 %v510
    %585 = vmatpush1.bf16.msra.mxu0 %v509
    %586 = vmatprep.subr.bf16.mxu0 %v506
    %587 = vmatpush1.bf16.msra.mxu0 %v505
    %588 = vmatprep.subr.bf16.mxu0 %v502
    %589 = vmatpush1.bf16.msra.mxu0 %v501
    %590 = vmatprep.subr.bf16.mxu0 %v498
    %591 = vmatpush1.bf16.msra.mxu0 %v497
    %592 = vmatprep.subr.bf16.mxu0 %v494
    %593 = vmatpush1.bf16.msra.mxu0 %v493
    %594 = vmatprep.subr.bf16.mxu0 %v490
    %595 = vmatpush1.bf16.msra.mxu0 %v489
    %596 = vmatprep.subr.bf16.mxu0 %v486
    %597 = vmatpush1.bf16.msra.mxu0 %v485
    %598 = vmatprep.subr.bf16.mxu0 %v482
    %599 = vmatpush1.bf16.msra.mxu0 %v481
    %600 = vmatprep.subr.bf16.mxu0 0
    %601 = vmatpush2.bf16.msra.mxu0 0
    %602 = vmatprep.subr.bf16.mxu0 0
    %603 = vmatpush2.bf16.msra.mxu0 0
    %604 = vmatprep.subr.bf16.mxu0 0
    %605 = vmatpush2.bf16.msra.mxu0 0
    %606 = vmatprep.subr.bf16.mxu0 0
    %607 = vmatpush2.bf16.msra.mxu0 0
    %608 = vmatprep.subr.bf16.mxu0 0
    %609 = vmatpush2.bf16.msra.mxu0 0
    %610 = vmatprep.subr.bf16.mxu0 0
    %611 = vmatpush2.bf16.msra.mxu0 0
    %612 = vmatprep.subr.bf16.mxu0 0
    %613 = vmatpush2.bf16.msra.mxu0 0
    %614 = vmatprep.subr.bf16.mxu0 0
    %615 = vmatpush2.bf16.msra.mxu0 0
    %616 = vmatprep.mubr.bf16.mxu0 0
    %617 = vmatmul.mubr.bf16.gmra.mxu0 0
    %v618 = vpop.f32.mrf.mxu0
    %v619 = vadd.f32 0.0, %v618
    %v620 = vpop.f32.mrf.mxu0
    %v621 = vadd.f32 0.0, %v620
    %v622 = vpop.f32.mrf.mxu0
    %v623 = vpop.f32.mrf.mxu0
    %624 = vdwg.mxu0
    %v625 = vadd.f32 %v347, %v578
    %v626 = vadd.f32 %v348, %v580
    %v627 = vadd.f32 %v349, %v619
    %v628 = vadd.f32 %v350, %v621
    %v629 = vxor.u32 %v625, 2147483648
    %v630 = vmul.f32 %v629, 1.442695
    %v631 = vpow.pop %v630
    %v632 = vadd.f32 %v631, 1.0
    %v633 = vrcp.pop %v632
    %v634 = vmul.f32 1.0, %v633
    %v635 = vxor.u32 %v626, 2147483648
    %v636 = vmul.f32 %v635, 1.442695
    %v637 = vpow.pop %v636
    %v638 = vadd.f32 %v637, 1.0
    %v639 = vrcp.pop %v638
    %v640 = vmul.f32 1.0, %v639
    %v641 = vtanh.pop %v627
    %v642 = vxor.u32 %v628, 2147483648
    %v643 = vmul.f32 %v642, 1.442695
    %v644 = vpow.pop %v643
    %v645 = vadd.f32 %v644, 1.0
    %v646 = vrcp.pop %v645
    %v647 = vmul.f32 1.0, %v646
    %v648 = vmul.f32 %v640, 0.0
    %v649 = vmul.f32 %v634, %v641
    %v650 = vadd.f32 %v648, %v649
    %v651 = vtanh.pop %v650
    %v652 = vmul.f32 %v647, %v651
    %v653 = vpack.c.bf16 %v652, %v652
    %v654 = vld [vmem:[#allocation2 + $0x20] sm:$0xff]
    %v655 = vld [vmem:[#allocation2 + $0x28] sm:$0xff]
    %v656 = vld [vmem:[#allocation2 + $0x30] sm:$0xff]
    %v657 = vld [vmem:[#allocation2 + $0x38] sm:$0xff]
    %658 = vmatprep.subr.bf16.mxu0 %v508
    %659 = vmatpush1.bf16.msra.mxu0 %v507
    %660 = vmatprep.subr.bf16.mxu0 %v504
    %661 = vmatpush1.bf16.msra.mxu0 %v503
    %662 = vmatprep.subr.bf16.mxu0 %v500
    %663 = vmatpush1.bf16.msra.mxu0 %v499
    %664 = vmatprep.subr.bf16.mxu0 %v496
    %665 = vmatpush1.bf16.msra.mxu0 %v495
    %666 = vmatprep.subr.bf16.mxu0 %v492
    %667 = vmatpush1.bf16.msra.mxu0 %v491
    %668 = vmatprep.subr.bf16.mxu0 %v488
    %669 = vmatpush1.bf16.msra.mxu0 %v487
    %670 = vmatprep.subr.bf16.mxu0 %v484
    %671 = vmatpush1.bf16.msra.mxu0 %v483
    %672 = vmatprep.subr.bf16.mxu0 %v480
    %673 = vmatpush1.bf16.msra.mxu0 %v479
    %674 = vmatprep.subr.bf16.mxu0 0
    %675 = vmatpush2.bf16.msra.mxu0 0
    %676 = vmatprep.subr.bf16.mxu0 0
    %677 = vmatpush2.bf16.msra.mxu0 0
    %678 = vmatprep.subr.bf16.mxu0 0
    %679 = vmatpush2.bf16.msra.mxu0 0
    %680 = vmatprep.subr.bf16.mxu0 0
    %681 = vmatpush2.bf16.msra.mxu0 0
    %682 = vmatprep.subr.bf16.mxu0 0
    %683 = vmatpush2.bf16.msra.mxu0 0
    %684 = vmatprep.subr.bf16.mxu0 0
    %685 = vmatpush2.bf16.msra.mxu0 0
    %686 = vmatprep.subr.bf16.mxu0 0
    %687 = vmatpush2.bf16.msra.mxu0 0
    %688 = vmatprep.subr.bf16.mxu0 0
    %689 = vmatpush2.bf16.msra.mxu0 0
    %690 = vmatprep.mubr.bf16.mxu0 0
    %691 = vmatmul.mubr.bf16.gmra.mxu0 %v653
    %v692 = vpop.f32.mrf.mxu0
    %v693 = vadd.f32 0.0, %v692
    %v694 = vpop.f32.mrf.mxu0
    %v695 = vadd.f32 0.0, %v694
    %v696 = vpop.f32.mrf.mxu0
    %v697 = vpop.f32.mrf.mxu0
    %698 = vdwg.mxu0
    %699 = vmatprep.subr.bf16.mxu0 %v510
    %700 = vmatpush1.bf16.msra.mxu0 %v509
    %701 = vmatprep.subr.bf16.mxu0 %v506
    %702 = vmatpush1.bf16.msra.mxu0 %v505
    %703 = vmatprep.subr.bf16.mxu0 %v502
    %704 = vmatpush1.bf16.msra.mxu0 %v501
    %705 = vmatprep.subr.bf16.mxu0 %v498
    %706 = vmatpush1.bf16.msra.mxu0 %v497
    %707 = vmatprep.subr.bf16.mxu0 %v494
    %708 = vmatpush1.bf16.msra.mxu0 %v493
    %709 = vmatprep.subr.bf16.mxu0 %v490
    %710 = vmatpush1.bf16.msra.mxu0 %v489
    %711 = vmatprep.subr.bf16.mxu0 %v486
    %712 = vmatpush1.bf16.msra.mxu0 %v485
    %713 = vmatprep.subr.bf16.mxu0 %v482
    %714 = vmatpush1.bf16.msra.mxu0 %v481
    %715 = vmatprep.subr.bf16.mxu0 0
    %716 = vmatpush2.bf16.msra.mxu0 0
    %717 = vmatprep.subr.bf16.mxu0 0
    %718 = vmatpush2.bf16.msra.mxu0 0
    %719 = vmatprep.subr.bf16.mxu0 0
    %720 = vmatpush2.bf16.msra.mxu0 0
    %721 = vmatprep.subr.bf16.mxu0 0
    %722 = vmatpush2.bf16.msra.mxu0 0
    %723 = vmatprep.subr.bf16.mxu0 0
    %724 = vmatpush2.bf16.msra.mxu0 0
    %725 = vmatprep.subr.bf16.mxu0 0
    %726 = vmatpush2.bf16.msra.mxu0 0
    %727 = vmatprep.subr.bf16.mxu0 0
    %728 = vmatpush2.bf16.msra.mxu0 0
    %729 = vmatprep.subr.bf16.mxu0 0
    %730 = vmatpush2.bf16.msra.mxu0 0
    %731 = vmatprep.mubr.bf16.mxu0 0
    %732 = vmatmul.mubr.bf16.gmra.mxu0 %v653
    %v733 = vpop.f32.mrf.mxu0
    %v734 = vadd.f32 0.0, %v733
    %v735 = vpop.f32.mrf.mxu0
    %v736 = vadd.f32 0.0, %v735
    %v737 = vpop.f32.mrf.mxu0
    %v738 = vpop.f32.mrf.mxu0
    %739 = vdwg.mxu0
    %v740 = vadd.f32 %v654, %v693
    %v741 = vadd.f32 %v655, %v695
    %v742 = vadd.f32 %v656, %v734
    %v743 = vadd.f32 %v657, %v736
    %v744 = vxor.u32 %v740, 2147483648
    %v745 = vmul.f32 %v744, 1.442695
    %v746 = vpow.pop %v745
    %v747 = vadd.f32 %v746, 1.0
    %v748 = vrcp.pop %v747
    %v749 = vmul.f32 1.0, %v748
    %v750 = vxor.u32 %v741, 2147483648
    %v751 = vmul.f32 %v750, 1.442695
    %v752 = vpow.pop %v751
    %v753 = vadd.f32 %v752, 1.0
    %v754 = vrcp.pop %v753
    %v755 = vmul.f32 1.0, %v754
    %v756 = vtanh.pop %v742
    %v757 = vxor.u32 %v743, 2147483648
    %v758 = vmul.f32 %v757, 1.442695
    %v759 = vpow.pop %v758
    %v760 = vadd.f32 %v759, 1.0
    %v761 = vrcp.pop %v760
    %v762 = vmul.f32 1.0, %v761
    %v763 = vmul.f32 %v755, %v650
    %v764 = vmul.f32 %v749, %v756
    %v765 = vadd.f32 %v763, %v764
    %v766 = vtanh.pop %v765
    %v767 = vmul.f32 %v762, %v766
    %s768 = scalar_lea.vmem [#allocation8], 4
    %v769 = vld [vmem:[%s768] sm:$0xf]
    %v770 = vld [vmem:[#allocation7] sm:$0xff]
    %v771 = vld [vmem:[#allocation7 + $0x8] sm:$0xff]
    %v772 = vld [vmem:[#allocation7 + $0x10] sm:$0xff]
    %v773 = vld [vmem:[#allocation7 + $0x18] sm:$0xff]
    %v774 = vld [vmem:[#allocation7 + $0x20] sm:$0xff]
    %v775 = vld [vmem:[#allocation7 + $0x28] sm:$0xff]
    %v776 = vld [vmem:[#allocation7 + $0x30] sm:$0xff]
    %v777 = vld [vmem:[#allocation7 + $0x38] sm:$0xff]
    %v778 = vld [vmem:[#allocation7 + $0x40] sm:$0xff]
    %v779 = vld [vmem:[#allocation7 + $0x48] sm:$0xff]
    %v780 = vld [vmem:[#allocation7 + $0x50] sm:$0xff]
    %v781 = vld [vmem:[#allocation7 + $0x58] sm:$0xff]
    %v782 = vld [vmem:[#allocation7 + $0x60] sm:$0xff]
    %v783 = vld [vmem:[#allocation7 + $0x68] sm:$0xff]
    %v784 = vld [vmem:[#allocation7 + $0x70] sm:$0xff]
    %v785 = vld [vmem:[#allocation7 + $0x78] sm:$0xff]
    %v786 = vld [vmem:[#allocation7 + $0x80] sm:$0xff]
    %v787 = vld [vmem:[#allocation7 + $0x88] sm:$0xff]
    %v788 = vld [vmem:[#allocation7 + $0x90] sm:$0xff]
    %v789 = vld [vmem:[#allocation7 + $0x98] sm:$0xff]
    %v790 = vld [vmem:[#allocation7 + $0xa0] sm:$0xff]
    %v791 = vld [vmem:[#allocation7 + $0xa8] sm:$0xff]
    %v792 = vld [vmem:[#allocation7 + $0xb0] sm:$0xff]
    %v793 = vld [vmem:[#allocation7 + $0xb8] sm:$0xff]
    %v794 = vld [vmem:[#allocation7 + $0xc0] sm:$0xff]
    %v795 = vld [vmem:[#allocation7 + $0xc8] sm:$0xff]
    %v796 = vld [vmem:[#allocation7 + $0xd0] sm:$0xff]
    %v797 = vld [vmem:[#allocation7 + $0xd8] sm:$0xff]
    %v798 = vld [vmem:[#allocation7 + $0xe0] sm:$0xff]
    %v799 = vld [vmem:[#allocation7 + $0xe8] sm:$0xff]
    %v800 = vld [vmem:[#allocation7 + $0xf0] sm:$0xff]
    %v801 = vld [vmem:[#allocation7 + $0xf8] sm:$0xff]
    %v802 = vld [vmem:[#allocation7 + $0x100] sm:$0xff]
    %v803 = vld [vmem:[#allocation7 + $0x108] sm:$0xff]
    %v804 = vld [vmem:[#allocation7 + $0x110] sm:$0xff]
    %v805 = vld [vmem:[#allocation7 + $0x118] sm:$0xff]
    %v806 = vld [vmem:[#allocation7 + $0x120] sm:$0xff]
    %v807 = vld [vmem:[#allocation7 + $0x128] sm:$0xff]
    %v808 = vld [vmem:[#allocation7 + $0x130] sm:$0xff]
    %v809 = vld [vmem:[#allocation7 + $0x138] sm:$0xff]
    %v810 = vld [vmem:[#allocation7 + $0x140] sm:$0xff]
    %v811 = vld [vmem:[#allocation7 + $0x148] sm:$0xff]
    %v812 = vld [vmem:[#allocation7 + $0x150] sm:$0xff]
    %v813 = vld [vmem:[#allocation7 + $0x158] sm:$0xff]
    %v814 = vld [vmem:[#allocation7 + $0x160] sm:$0xff]
    %v815 = vld [vmem:[#allocation7 + $0x168] sm:$0xff]
    %v816 = vld [vmem:[#allocation7 + $0x170] sm:$0xff]
    %v817 = vld [vmem:[#allocation7 + $0x178] sm:$0xff]
    %v818 = vld [vmem:[#allocation7 + $0x180] sm:$0xff]
    %v819 = vld [vmem:[#allocation7 + $0x188] sm:$0xff]
    %v820 = vld [vmem:[#allocation7 + $0x190] sm:$0xff]
    %v821 = vld [vmem:[#allocation7 + $0x198] sm:$0xff]
    %v822 = vld [vmem:[#allocation7 + $0x1a0] sm:$0xff]
    %v823 = vld [vmem:[#allocation7 + $0x1a8] sm:$0xff]
    %v824 = vld [vmem:[#allocation7 + $0x1b0] sm:$0xff]
    %v825 = vld [vmem:[#allocation7 + $0x1b8] sm:$0xff]
    %v826 = vld [vmem:[#allocation7 + $0x1c0] sm:$0xff]
    %v827 = vld [vmem:[#allocation7 + $0x1c8] sm:$0xff]
    %v828 = vld [vmem:[#allocation7 + $0x1d0] sm:$0xff]
    %v829 = vld [vmem:[#allocation7 + $0x1d8] sm:$0xff]
    %v830 = vld [vmem:[#allocation7 + $0x1e0] sm:$0xff]
    %v831 = vld [vmem:[#allocation7 + $0x1e8] sm:$0xff]
    %v832 = vld [vmem:[#allocation7 + $0x1f0] sm:$0xff]
    %v833 = vld [vmem:[#allocation7 + $0x1f8] sm:$0xff]
    %v898 = vunpack.c.l.b16 %v770
    %v899 = vunpack.c.h.b16 %v770
    %v900 = vunpack.c.l.b16 %v771
    %v901 = vunpack.c.h.b16 %v771
    %v902 = vunpack.c.l.b16 %v772
    %v903 = vunpack.c.h.b16 %v772
    %v904 = vunpack.c.l.b16 %v773
    %v905 = vunpack.c.h.b16 %v773
    %v906 = vunpack.c.l.b16 %v774
    %v907 = vunpack.c.h.b16 %v774
    %v908 = vunpack.c.l.b16 %v775
    %v909 = vunpack.c.h.b16 %v775
    %v910 = vunpack.c.l.b16 %v776
    %v911 = vunpack.c.h.b16 %v776
    %v912 = vunpack.c.l.b16 %v777
    %v913 = vunpack.c.h.b16 %v777
    %v914 = vunpack.c.l.b16 %v778
    %v915 = vunpack.c.h.b16 %v778
    %v916 = vunpack.c.l.b16 %v779
    %v917 = vunpack.c.h.b16 %v779
    %v918 = vunpack.c.l.b16 %v780
    %v919 = vunpack.c.h.b16 %v780
    %v920 = vunpack.c.l.b16 %v781
    %v921 = vunpack.c.h.b16 %v781
    %v922 = vunpack.c.l.b16 %v782
    %v923 = vunpack.c.h.b16 %v782
    %v924 = vunpack.c.l.b16 %v783
    %v925 = vunpack.c.h.b16 %v783
    %v926 = vunpack.c.l.b16 %v784
    %v927 = vunpack.c.h.b16 %v784
    %v928 = vunpack.c.l.b16 %v785
    %v929 = vunpack.c.h.b16 %v785
    %v930 = vunpack.c.l.b16 %v786
    %v931 = vunpack.c.h.b16 %v786
    %v932 = vunpack.c.l.b16 %v787
    %v933 = vunpack.c.h.b16 %v787
    %v934 = vunpack.c.l.b16 %v788
    %v935 = vunpack.c.h.b16 %v788
    %v936 = vunpack.c.l.b16 %v789
    %v937 = vunpack.c.h.b16 %v789
    %v938 = vunpack.c.l.b16 %v790
    %v939 = vunpack.c.h.b16 %v790
    %v940 = vunpack.c.l.b16 %v791
    %v941 = vunpack.c.h.b16 %v791
    %v942 = vunpack.c.l.b16 %v792
    %v943 = vunpack.c.h.b16 %v792
    %v944 = vunpack.c.l.b16 %v793
    %v945 = vunpack.c.h.b16 %v793
    %v946 = vunpack.c.l.b16 %v794
    %v947 = vunpack.c.h.b16 %v794
    %v948 = vunpack.c.l.b16 %v795
    %v949 = vunpack.c.h.b16 %v795
    %v950 = vunpack.c.l.b16 %v796
    %v951 = vunpack.c.h.b16 %v796
    %v952 = vunpack.c.l.b16 %v797
    %v953 = vunpack.c.h.b16 %v797
    %v954 = vunpack.c.l.b16 %v798
    %v955 = vunpack.c.h.b16 %v798
    %v956 = vunpack.c.l.b16 %v799
    %v957 = vunpack.c.h.b16 %v799
    %v958 = vunpack.c.l.b16 %v800
    %v959 = vunpack.c.h.b16 %v800
    %v960 = vunpack.c.l.b16 %v801
    %v961 = vunpack.c.h.b16 %v801
    %v962 = vunpack.c.l.b16 %v802
    %v963 = vunpack.c.h.b16 %v802
    %v964 = vunpack.c.l.b16 %v803
    %v965 = vunpack.c.h.b16 %v803
    %v966 = vunpack.c.l.b16 %v804
    %v967 = vunpack.c.h.b16 %v804
    %v968 = vunpack.c.l.b16 %v805
    %v969 = vunpack.c.h.b16 %v805
    %v970 = vunpack.c.l.b16 %v806
    %v971 = vunpack.c.h.b16 %v806
    %v972 = vunpack.c.l.b16 %v807
    %v973 = vunpack.c.h.b16 %v807
    %v974 = vunpack.c.l.b16 %v808
    %v975 = vunpack.c.h.b16 %v808
    %v976 = vunpack.c.l.b16 %v809
    %v977 = vunpack.c.h.b16 %v809
    %v978 = vunpack.c.l.b16 %v810
    %v979 = vunpack.c.h.b16 %v810
    %v980 = vunpack.c.l.b16 %v811
    %v981 = vunpack.c.h.b16 %v811
    %v982 = vunpack.c.l.b16 %v812
    %v983 = vunpack.c.h.b16 %v812
    %v984 = vunpack.c.l.b16 %v813
    %v985 = vunpack.c.h.b16 %v813
    %v986 = vunpack.c.l.b16 %v814
    %v987 = vunpack.c.h.b16 %v814
    %v988 = vunpack.c.l.b16 %v815
    %v989 = vunpack.c.h.b16 %v815
    %v990 = vunpack.c.l.b16 %v816
    %v991 = vunpack.c.h.b16 %v816
    %v992 = vunpack.c.l.b16 %v817
    %v993 = vunpack.c.h.b16 %v817
    %v994 = vunpack.c.l.b16 %v818
    %v995 = vunpack.c.h.b16 %v818
    %v996 = vunpack.c.l.b16 %v819
    %v997 = vunpack.c.h.b16 %v819
    %v998 = vunpack.c.l.b16 %v820
    %v999 = vunpack.c.h.b16 %v820
    %v1000 = vunpack.c.l.b16 %v821
    %v1001 = vunpack.c.h.b16 %v821
    %v1002 = vunpack.c.l.b16 %v822
    %v1003 = vunpack.c.h.b16 %v822
    %v1004 = vunpack.c.l.b16 %v823
    %v1005 = vunpack.c.h.b16 %v823
    %v1006 = vunpack.c.l.b16 %v824
    %v1007 = vunpack.c.h.b16 %v824
    %v1008 = vunpack.c.l.b16 %v825
    %v1009 = vunpack.c.h.b16 %v825
    %v1010 = vunpack.c.l.b16 %v826
    %v1011 = vunpack.c.h.b16 %v826
    %v1012 = vunpack.c.l.b16 %v827
    %v1013 = vunpack.c.h.b16 %v827
    %v1014 = vunpack.c.l.b16 %v828
    %v1015 = vunpack.c.h.b16 %v828
    %v1016 = vunpack.c.l.b16 %v829
    %v1017 = vunpack.c.h.b16 %v829
    %v1018 = vunpack.c.l.b16 %v830
    %v1019 = vunpack.c.h.b16 %v830
    %v1020 = vunpack.c.l.b16 %v831
    %v1021 = vunpack.c.h.b16 %v831
    %v1022 = vunpack.c.l.b16 %v832
    %v1023 = vunpack.c.h.b16 %v832
    %v1024 = vunpack.c.l.b16 %v833
    %v1025 = vunpack.c.h.b16 %v833
    %v1026 = vpack.c.b16 %v902, %v898
    %v1027 = vpack.c.b16 %v903, %v899
    %v1028 = vpack.c.b16 %v904, %v900
    %v1029 = vpack.c.b16 %v905, %v901
    %v1030 = vpack.c.b16 %v910, %v906
    %v1031 = vpack.c.b16 %v911, %v907
    %v1032 = vpack.c.b16 %v912, %v908
    %v1033 = vpack.c.b16 %v913, %v909
    %v1034 = vpack.c.b16 %v918, %v914
    %v1035 = vpack.c.b16 %v919, %v915
    %v1036 = vpack.c.b16 %v920, %v916
    %v1037 = vpack.c.b16 %v921, %v917
    %v1038 = vpack.c.b16 %v926, %v922
    %v1039 = vpack.c.b16 %v927, %v923
    %v1040 = vpack.c.b16 %v928, %v924
    %v1041 = vpack.c.b16 %v929, %v925
    %v1042 = vpack.c.b16 %v934, %v930
    %v1043 = vpack.c.b16 %v935, %v931
    %v1044 = vpack.c.b16 %v936, %v932
    %v1045 = vpack.c.b16 %v937, %v933
    %v1046 = vpack.c.b16 %v942, %v938
    %v1047 = vpack.c.b16 %v943, %v939
    %v1048 = vpack.c.b16 %v944, %v940
    %v1049 = vpack.c.b16 %v945, %v941
    %v1050 = vpack.c.b16 %v950, %v946
    %v1051 = vpack.c.b16 %v951, %v947
    %v1052 = vpack.c.b16 %v952, %v948
    %v1053 = vpack.c.b16 %v953, %v949
    %v1054 = vpack.c.b16 %v958, %v954
    %v1055 = vpack.c.b16 %v959, %v955
    %v1056 = vpack.c.b16 %v960, %v956
    %v1057 = vpack.c.b16 %v961, %v957
    %v1058 = vpack.c.b16 %v966, %v962
    %v1059 = vpack.c.b16 %v967, %v963
    %v1060 = vpack.c.b16 %v968, %v964
    %v1061 = vpack.c.b16 %v969, %v965
    %v1062 = vpack.c.b16 %v974, %v970
    %v1063 = vpack.c.b16 %v975, %v971
    %v1064 = vpack.c.b16 %v976, %v972
    %v1065 = vpack.c.b16 %v977, %v973
    %v1066 = vpack.c.b16 %v982, %v978
    %v1067 = vpack.c.b16 %v983, %v979
    %v1068 = vpack.c.b16 %v984, %v980
    %v1069 = vpack.c.b16 %v985, %v981
    %v1070 = vpack.c.b16 %v990, %v986
    %v1071 = vpack.c.b16 %v991, %v987
    %v1072 = vpack.c.b16 %v992, %v988
    %v1073 = vpack.c.b16 %v993, %v989
    %v1074 = vpack.c.b16 %v998, %v994
    %v1075 = vpack.c.b16 %v999, %v995
    %v1076 = vpack.c.b16 %v1000, %v996
    %v1077 = vpack.c.b16 %v1001, %v997
    %v1078 = vpack.c.b16 %v1006, %v1002
    %v1079 = vpack.c.b16 %v1007, %v1003
    %v1080 = vpack.c.b16 %v1008, %v1004
    %v1081 = vpack.c.b16 %v1009, %v1005
    %v1082 = vpack.c.b16 %v1014, %v1010
    %v1083 = vpack.c.b16 %v1015, %v1011
    %v1084 = vpack.c.b16 %v1016, %v1012
    %v1085 = vpack.c.b16 %v1017, %v1013
    %v1086 = vpack.c.b16 %v1022, %v1018
    %v1087 = vpack.c.b16 %v1023, %v1019
    %v1088 = vpack.c.b16 %v1024, %v1020
    %v1089 = vpack.c.b16 %v1025, %v1021
    %1154 = vmatprep.subr.bf16.mxu0 %v1055
    %1155 = vmatpush1.bf16.msra.mxu0 %v1054
    %1156 = vmatprep.subr.bf16.mxu0 %v1051
    %1157 = vmatpush1.bf16.msra.mxu0 %v1050
    %1158 = vmatprep.subr.bf16.mxu0 %v1047
    %1159 = vmatpush1.bf16.msra.mxu0 %v1046
    %1160 = vmatprep.subr.bf16.mxu0 %v1043
    %1161 = vmatpush1.bf16.msra.mxu0 %v1042
    %1162 = vmatprep.subr.bf16.mxu0 %v1039
    %1163 = vmatpush1.bf16.msra.mxu0 %v1038
    %1164 = vmatprep.subr.bf16.mxu0 %v1035
    %1165 = vmatpush1.bf16.msra.mxu0 %v1034
    %1166 = vmatprep.subr.bf16.mxu0 %v1031
    %1167 = vmatpush1.bf16.msra.mxu0 %v1030
    %1168 = vmatprep.subr.bf16.mxu0 %v1027
    %1169 = vmatpush1.bf16.msra.mxu0 %v1026
    %1170 = vmatprep.subr.bf16.mxu0 %v1087
    %1171 = vmatpush2.bf16.msra.mxu0 %v1086
    %1172 = vmatprep.subr.bf16.mxu0 %v1083
    %1173 = vmatpush2.bf16.msra.mxu0 %v1082
    %1174 = vmatprep.subr.bf16.mxu0 %v1079
    %1175 = vmatpush2.bf16.msra.mxu0 %v1078
    %1176 = vmatprep.subr.bf16.mxu0 %v1075
    %1177 = vmatpush2.bf16.msra.mxu0 %v1074
    %1178 = vmatprep.subr.bf16.mxu0 %v1071
    %1179 = vmatpush2.bf16.msra.mxu0 %v1070
    %1180 = vmatprep.subr.bf16.mxu0 %v1067
    %1181 = vmatpush2.bf16.msra.mxu0 %v1066
    %1182 = vmatprep.subr.bf16.mxu0 %v1063
    %1183 = vmatpush2.bf16.msra.mxu0 %v1062
    %1184 = vmatprep.subr.bf16.mxu0 %v1059
    %1185 = vmatpush2.bf16.msra.mxu0 %v1058
    %1186 = vmatprep.mubr.bf16.mxu0 0
    %1187 = vmatmul.mubr.bf16.gmra.mxu0 %v653
    %v1188 = vpop.f32.mrf.mxu0
    %v1189 = vadd.f32 0.0, %v1188
    %v1190 = vpop.f32.mrf.mxu0
    %v1191 = vadd.f32 0.0, %v1190
    %v1192 = vpop.f32.mrf.mxu0
    %v1193 = vpop.f32.mrf.mxu0
    %1194 = vdwg.mxu0
    %1195 = vmatprep.subr.bf16.mxu0 %v1057
    %1196 = vmatpush1.bf16.msra.mxu0 %v1056
    %1197 = vmatprep.subr.bf16.mxu0 %v1053
    %1198 = vmatpush1.bf16.msra.mxu0 %v1052
    %1199 = vmatprep.subr.bf16.mxu0 %v1049
    %1200 = vmatpush1.bf16.msra.mxu0 %v1048
    %1201 = vmatprep.subr.bf16.mxu0 %v1045
    %1202 = vmatpush1.bf16.msra.mxu0 %v1044
    %1203 = vmatprep.subr.bf16.mxu0 %v1041
    %1204 = vmatpush1.bf16.msra.mxu0 %v1040
    %1205 = vmatprep.subr.bf16.mxu0 %v1037
    %1206 = vmatpush1.bf16.msra.mxu0 %v1036
    %1207 = vmatprep.subr.bf16.mxu0 %v1033
    %1208 = vmatpush1.bf16.msra.mxu0 %v1032
    %1209 = vmatprep.subr.bf16.mxu0 %v1029
    %1210 = vmatpush1.bf16.msra.mxu0 %v1028
    %1211 = vmatprep.subr.bf16.mxu0 %v1089
    %1212 = vmatpush2.bf16.msra.mxu0 %v1088
    %1213 = vmatprep.subr.bf16.mxu0 %v1085
    %1214 = vmatpush2.bf16.msra.mxu0 %v1084
    %1215 = vmatprep.subr.bf16.mxu0 %v1081
    %1216 = vmatpush2.bf16.msra.mxu0 %v1080
    %1217 = vmatprep.subr.bf16.mxu0 %v1077
    %1218 = vmatpush2.bf16.msra.mxu0 %v1076
    %1219 = vmatprep.subr.bf16.mxu0 %v1073
    %1220 = vmatpush2.bf16.msra.mxu0 %v1072
    %1221 = vmatprep.subr.bf16.mxu0 %v1069
    %1222 = vmatpush2.bf16.msra.mxu0 %v1068
    %1223 = vmatprep.subr.bf16.mxu0 %v1065
    %1224 = vmatpush2.bf16.msra.mxu0 %v1064
    %1225 = vmatprep.subr.bf16.mxu0 %v1061
    %1226 = vmatpush2.bf16.msra.mxu0 %v1060
    %1227 = vmatprep.mubr.bf16.mxu0 0
    %1228 = vmatmul.mubr.bf16.gmra.mxu0 %v653
    %v1229 = vpop.f32.mrf.mxu0
    %v1230 = vadd.f32 0.0, %v1229
    %v1231 = vpop.f32.mrf.mxu0
    %v1232 = vadd.f32 0.0, %v1231
    %v1233 = vpop.f32.mrf.mxu0
    %v1234 = vpop.f32.mrf.mxu0
    %1235 = vdwg.mxu0
    %v1237 = vlaneseq
    %v1238 = vshrl.u32 %v1237, 7
    %v1239 = vsub.s32 0, %v1238
    %v1240 = vrot.slane %v769, %v1239
    %v1241 = vlaneseq
    %v1242 = vshrl.u32 %v1241, 7
    %v1243 = vsub.s32 1, %v1242
    %v1244 = vrot.slane %v769, %v1243
    %v1245 = vlaneseq
    %v1246 = vshrl.u32 %v1245, 7
    %v1247 = vsub.s32 2, %v1246
    %v1248 = vrot.slane %v769, %v1247
    %v1249 = vlaneseq
    %v1250 = vshrl.u32 %v1249, 7
    %v1251 = vsub.s32 3, %v1250
    %v1252 = vrot.slane %v769, %v1251
    %v1257 = vadd.f32 %v1240, %v1189
    %v1258 = vadd.f32 %v1244, %v1191
    %v1259 = vadd.f32 %v1248, %v1230
    %v1260 = vadd.f32 %v1252, %v1232
    %v1261 = vxor.u32 %v1257, 2147483648
    %v1262 = vmul.f32 %v1261, 1.442695
    %v1263 = vpow.pop %v1262
    %v1264 = vadd.f32 %v1263, 1.0
    %v1265 = vrcp.pop %v1264
    %v1266 = vmul.f32 1.0, %v1265
    %v1267 = vxor.u32 %v1258, 2147483648
    %v1268 = vmul.f32 %v1267, 1.442695
    %v1269 = vpow.pop %v1268
    %v1270 = vadd.f32 %v1269, 1.0
    %v1271 = vrcp.pop %v1270
    %v1272 = vmul.f32 1.0, %v1271
    %v1273 = vtanh.pop %v1259
    %v1274 = vxor.u32 %v1260, 2147483648
    %v1275 = vmul.f32 %v1274, 1.442695
    %v1276 = vpow.pop %v1275
    %v1277 = vadd.f32 %v1276, 1.0
    %v1278 = vrcp.pop %v1277
    %v1279 = vmul.f32 1.0, %v1278
    %v1280 = vmul.f32 %v1272, 0.0
    %v1281 = vmul.f32 %v1266, %v1273
    %v1282 = vadd.f32 %v1280, %v1281
    %v1283 = vtanh.pop %v1282
    %v1284 = vmul.f32 %v1279, %v1283
    %v1285 = vpack.c.bf16 %v767, %v767
    %v1286 = vpack.c.bf16 %v1284, %v1284
    %v1287 = vld [vmem:[#allocation2 + $0x40] sm:$0xff]
    %v1288 = vld [vmem:[#allocation2 + $0x48] sm:$0xff]
    %v1289 = vld [vmem:[#allocation2 + $0x50] sm:$0xff]
    %v1290 = vld [vmem:[#allocation2 + $0x58] sm:$0xff]
    %1291 = vmatprep.subr.bf16.mxu0 %v508
    %1292 = vmatpush1.bf16.msra.mxu0 %v507
    %1293 = vmatprep.subr.bf16.mxu0 %v504
    %1294 = vmatpush1.bf16.msra.mxu0 %v503
    %1295 = vmatprep.subr.bf16.mxu0 %v500
    %1296 = vmatpush1.bf16.msra.mxu0 %v499
    %1297 = vmatprep.subr.bf16.mxu0 %v496
    %1298 = vmatpush1.bf16.msra.mxu0 %v495
    %1299 = vmatprep.subr.bf16.mxu0 %v492
    %1300 = vmatpush1.bf16.msra.mxu0 %v491
    %1301 = vmatprep.subr.bf16.mxu0 %v488
    %1302 = vmatpush1.bf16.msra.mxu0 %v487
    %1303 = vmatprep.subr.bf16.mxu0 %v484
    %1304 = vmatpush1.bf16.msra.mxu0 %v483
    %1305 = vmatprep.subr.bf16.mxu0 %v480
    %1306 = vmatpush1.bf16.msra.mxu0 %v479
    %1307 = vmatprep.subr.bf16.mxu0 0
    %1308 = vmatpush2.bf16.msra.mxu0 0
    %1309 = vmatprep.subr.bf16.mxu0 0
    %1310 = vmatpush2.bf16.msra.mxu0 0
    %1311 = vmatprep.subr.bf16.mxu0 0
    %1312 = vmatpush2.bf16.msra.mxu0 0
    %1313 = vmatprep.subr.bf16.mxu0 0
    %1314 = vmatpush2.bf16.msra.mxu0 0
    %1315 = vmatprep.subr.bf16.mxu0 0
    %1316 = vmatpush2.bf16.msra.mxu0 0
    %1317 = vmatprep.subr.bf16.mxu0 0
    %1318 = vmatpush2.bf16.msra.mxu0 0
    %1319 = vmatprep.subr.bf16.mxu0 0
    %1320 = vmatpush2.bf16.msra.mxu0 0
    %1321 = vmatprep.subr.bf16.mxu0 0
    %1322 = vmatpush2.bf16.msra.mxu0 0
    %1323 = vmatprep.mubr.bf16.mxu0 0
    %1324 = vmatmul.mubr.bf16.gmra.mxu0 %v1285
    %v1325 = vpop.f32.mrf.mxu0
    %v1326 = vadd.f32 0.0, %v1325
    %v1327 = vpop.f32.mrf.mxu0
    %v1328 = vadd.f32 0.0, %v1327
    %v1329 = vpop.f32.mrf.mxu0
    %v1330 = vpop.f32.mrf.mxu0
    %1331 = vdwg.mxu0
    %1332 = vmatprep.subr.bf16.mxu0 %v510
    %1333 = vmatpush1.bf16.msra.mxu0 %v509
    %1334 = vmatprep.subr.bf16.mxu0 %v506
    %1335 = vmatpush1.bf16.msra.mxu0 %v505
    %1336 = vmatprep.subr.bf16.mxu0 %v502
    %1337 = vmatpush1.bf16.msra.mxu0 %v501
    %1338 = vmatprep.subr.bf16.mxu0 %v498
    %1339 = vmatpush1.bf16.msra.mxu0 %v497
    %1340 = vmatprep.subr.bf16.mxu0 %v494
    %1341 = vmatpush1.bf16.msra.mxu0 %v493
    %1342 = vmatprep.subr.bf16.mxu0 %v490
    %1343 = vmatpush1.bf16.msra.mxu0 %v489
    %1344 = vmatprep.subr.bf16.mxu0 %v486
    %1345 = vmatpush1.bf16.msra.mxu0 %v485
    %1346 = vmatprep.subr.bf16.mxu0 %v482
    %1347 = vmatpush1.bf16.msra.mxu0 %v481
    %1348 = vmatprep.subr.bf16.mxu0 0
    %1349 = vmatpush2.bf16.msra.mxu0 0
    %1350 = vmatprep.subr.bf16.mxu0 0
    %1351 = vmatpush2.bf16.msra.mxu0 0
    %1352 = vmatprep.subr.bf16.mxu0 0
    %1353 = vmatpush2.bf16.msra.mxu0 0
    %1354 = vmatprep.subr.bf16.mxu0 0
    %1355 = vmatpush2.bf16.msra.mxu0 0
    %1356 = vmatprep.subr.bf16.mxu0 0
    %1357 = vmatpush2.bf16.msra.mxu0 0
    %1358 = vmatprep.subr.bf16.mxu0 0
    %1359 = vmatpush2.bf16.msra.mxu0 0
    %1360 = vmatprep.subr.bf16.mxu0 0
    %1361 = vmatpush2.bf16.msra.mxu0 0
    %1362 = vmatprep.subr.bf16.mxu0 0
    %1363 = vmatpush2.bf16.msra.mxu0 0
    %1364 = vmatprep.mubr.bf16.mxu0 0
    %1365 = vmatmul.mubr.bf16.gmra.mxu0 %v1285
    %v1366 = vpop.f32.mrf.mxu0
    %v1367 = vadd.f32 0.0, %v1366
    %v1368 = vpop.f32.mrf.mxu0
    %v1369 = vadd.f32 0.0, %v1368
    %v1370 = vpop.f32.mrf.mxu0
    %v1371 = vpop.f32.mrf.mxu0
    %1372 = vdwg.mxu0
    %v1373 = vadd.f32 %v1287, %v1326
    %v1374 = vadd.f32 %v1288, %v1328
    %v1375 = vadd.f32 %v1289, %v1367
    %v1376 = vadd.f32 %v1290, %v1369
    %v1377 = vxor.u32 %v1373, 2147483648
    %v1378 = vmul.f32 %v1377, 1.442695
    %v1379 = vpow.pop %v1378
    %v1380 = vadd.f32 %v1379, 1.0
    %v1381 = vrcp.pop %v1380
    %v1382 = vmul.f32 1.0, %v1381
    %v1383 = vxor.u32 %v1374, 2147483648
    %v1384 = vmul.f32 %v1383, 1.442695
    %v1385 = vpow.pop %v1384
    %v1386 = vadd.f32 %v1385, 1.0
    %v1387 = vrcp.pop %v1386
    %v1388 = vmul.f32 1.0, %v1387
    %v1389 = vtanh.pop %v1375
    %v1390 = vxor.u32 %v1376, 2147483648
    %v1391 = vmul.f32 %v1390, 1.442695
    %v1392 = vpow.pop %v1391
    %v1393 = vadd.f32 %v1392, 1.0
    %v1394 = vrcp.pop %v1393
    %v1395 = vmul.f32 1.0, %v1394
    %v1396 = vmul.f32 %v1388, %v765
    %v1397 = vmul.f32 %v1382, %v1389
    %v1398 = vadd.f32 %v1396, %v1397
    %v1399 = vtanh.pop %v1398
    %v1400 = vmul.f32 %v1395, %v1399
    %1401 = vmatprep.subr.bf16.mxu0 %v1055
    %1402 = vmatpush1.bf16.msra.mxu0 %v1054
    %1403 = vmatprep.subr.bf16.mxu0 %v1051
    %1404 = vmatpush1.bf16.msra.mxu0 %v1050
    %1405 = vmatprep.subr.bf16.mxu0 %v1047
    %1406 = vmatpush1.bf16.msra.mxu0 %v1046
    %1407 = vmatprep.subr.bf16.mxu0 %v1043
    %1408 = vmatpush1.bf16.msra.mxu0 %v1042
    %1409 = vmatprep.subr.bf16.mxu0 %v1039
    %1410 = vmatpush1.bf16.msra.mxu0 %v1038
    %1411 = vmatprep.subr.bf16.mxu0 %v1035
    %1412 = vmatpush1.bf16.msra.mxu0 %v1034
    %1413 = vmatprep.subr.bf16.mxu0 %v1031
    %1414 = vmatpush1.bf16.msra.mxu0 %v1030
    %1415 = vmatprep.subr.bf16.mxu0 %v1027
    %1416 = vmatpush1.bf16.msra.mxu0 %v1026
    %1417 = vmatprep.subr.bf16.mxu0 %v1087
    %1418 = vmatpush2.bf16.msra.mxu0 %v1086
    %1419 = vmatprep.subr.bf16.mxu0 %v1083
    %1420 = vmatpush2.bf16.msra.mxu0 %v1082
    %1421 = vmatprep.subr.bf16.mxu0 %v1079
    %1422 = vmatpush2.bf16.msra.mxu0 %v1078
    %1423 = vmatprep.subr.bf16.mxu0 %v1075
    %1424 = vmatpush2.bf16.msra.mxu0 %v1074
    %1425 = vmatprep.subr.bf16.mxu0 %v1071
    %1426 = vmatpush2.bf16.msra.mxu0 %v1070
    %1427 = vmatprep.subr.bf16.mxu0 %v1067
    %1428 = vmatpush2.bf16.msra.mxu0 %v1066
    %1429 = vmatprep.subr.bf16.mxu0 %v1063
    %1430 = vmatpush2.bf16.msra.mxu0 %v1062
    %1431 = vmatprep.subr.bf16.mxu0 %v1059
    %1432 = vmatpush2.bf16.msra.mxu0 %v1058
    %1433 = vmatprep.mubr.bf16.mxu0 %v1286
    %1434 = vmatmul.mubr.bf16.gmra.mxu0 %v1285
    %v1435 = vpop.f32.mrf.mxu0
    %v1436 = vadd.f32 0.0, %v1435
    %v1437 = vpop.f32.mrf.mxu0
    %v1438 = vadd.f32 0.0, %v1437
    %v1439 = vpop.f32.mrf.mxu0
    %v1440 = vpop.f32.mrf.mxu0
    %1441 = vdwg.mxu0
    %1442 = vmatprep.subr.bf16.mxu0 %v1057
    %1443 = vmatpush1.bf16.msra.mxu0 %v1056
    %1444 = vmatprep.subr.bf16.mxu0 %v1053
    %1445 = vmatpush1.bf16.msra.mxu0 %v1052
    %1446 = vmatprep.subr.bf16.mxu0 %v1049
    %1447 = vmatpush1.bf16.msra.mxu0 %v1048
    %1448 = vmatprep.subr.bf16.mxu0 %v1045
    %1449 = vmatpush1.bf16.msra.mxu0 %v1044
    %1450 = vmatprep.subr.bf16.mxu0 %v1041
    %1451 = vmatpush1.bf16.msra.mxu0 %v1040
    %1452 = vmatprep.subr.bf16.mxu0 %v1037
    %1453 = vmatpush1.bf16.msra.mxu0 %v1036
    %1454 = vmatprep.subr.bf16.mxu0 %v1033
    %1455 = vmatpush1.bf16.msra.mxu0 %v1032
    %1456 = vmatprep.subr.bf16.mxu0 %v1029
    %1457 = vmatpush1.bf16.msra.mxu0 %v1028
    %1458 = vmatprep.subr.bf16.mxu0 %v1089
    %1459 = vmatpush2.bf16.msra.mxu0 %v1088
    %1460 = vmatprep.subr.bf16.mxu0 %v1085
    %1461 = vmatpush2.bf16.msra.mxu0 %v1084
    %1462 = vmatprep.subr.bf16.mxu0 %v1081
    %1463 = vmatpush2.bf16.msra.mxu0 %v1080
    %1464 = vmatprep.subr.bf16.mxu0 %v1077
    %1465 = vmatpush2.bf16.msra.mxu0 %v1076
    %1466 = vmatprep.subr.bf16.mxu0 %v1073
    %1467 = vmatpush2.bf16.msra.mxu0 %v1072
    %1468 = vmatprep.subr.bf16.mxu0 %v1069
    %1469 = vmatpush2.bf16.msra.mxu0 %v1068
    %1470 = vmatprep.subr.bf16.mxu0 %v1065
    %1471 = vmatpush2.bf16.msra.mxu0 %v1064
    %1472 = vmatprep.subr.bf16.mxu0 %v1061
    %1473 = vmatpush2.bf16.msra.mxu0 %v1060
    %1474 = vmatprep.mubr.bf16.mxu0 %v1286
    %1475 = vmatmul.mubr.bf16.gmra.mxu0 %v1285
    %v1476 = vpop.f32.mrf.mxu0
    %v1477 = vadd.f32 0.0, %v1476
    %v1478 = vpop.f32.mrf.mxu0
    %v1479 = vadd.f32 0.0, %v1478
    %v1480 = vpop.f32.mrf.mxu0
    %v1481 = vpop.f32.mrf.mxu0
    %1482 = vdwg.mxu0
    %v1483 = vadd.f32 %v1240, %v1436
    %v1484 = vadd.f32 %v1244, %v1438
    %v1485 = vadd.f32 %v1248, %v1477
    %v1486 = vadd.f32 %v1252, %v1479
    %v1487 = vxor.u32 %v1483, 2147483648
    %v1488 = vmul.f32 %v1487, 1.442695
    %v1489 = vpow.pop %v1488
    %v1490 = vadd.f32 %v1489, 1.0
    %v1491 = vrcp.pop %v1490
    %v1492 = vmul.f32 1.0, %v1491
    %v1493 = vxor.u32 %v1484, 2147483648
    %v1494 = vmul.f32 %v1493, 1.442695
    %v1495 = vpow.pop %v1494
    %v1496 = vadd.f32 %v1495, 1.0
    %v1497 = vrcp.pop %v1496
    %v1498 = vmul.f32 1.0, %v1497
    %v1499 = vtanh.pop %v1485
    %v1500 = vxor.u32 %v1486, 2147483648
    %v1501 = vmul.f32 %v1500, 1.442695
    %v1502 = vpow.pop %v1501
    %v1503 = vadd.f32 %v1502, 1.0
    %v1504 = vrcp.pop %v1503
    %v1505 = vmul.f32 1.0, %v1504
    %v1506 = vmul.f32 %v1498, %v1282
    %v1507 = vmul.f32 %v1492, %v1499
    %v1508 = vadd.f32 %v1506, %v1507
    %v1509 = vtanh.pop %v1508
    %v1510 = vmul.f32 %v1505, %v1509
    %s1511 = scalar_lea.vmem [#allocation8], 8
    %v1512 = vld [vmem:[%s1511] sm:$0xf]
    %s1513 = scalar_lea.vmem [#allocation7], 512
    %v1514 = vld [vmem:[%s1513] sm:$0xff]
    %v1515 = vld [vmem:[%s1513 + $0x8] sm:$0xff]
    %v1516 = vld [vmem:[%s1513 + $0x10] sm:$0xff]
    %v1517 = vld [vmem:[%s1513 + $0x18] sm:$0xff]
    %v1518 = vld [vmem:[%s1513 + $0x20] sm:$0xff]
    %v1519 = vld [vmem:[%s1513 + $0x28] sm:$0xff]
    %v1520 = vld [vmem:[%s1513 + $0x30] sm:$0xff]
    %v1521 = vld [vmem:[%s1513 + $0x38] sm:$0xff]
    %v1522 = vld [vmem:[%s1513 + $0x40] sm:$0xff]
    %v1523 = vld [vmem:[%s1513 + $0x48] sm:$0xff]
    %v1524 = vld [vmem:[%s1513 + $0x50] sm:$0xff]
    %v1525 = vld [vmem:[%s1513 + $0x58] sm:$0xff]
    %v1526 = vld [vmem:[%s1513 + $0x60] sm:$0xff]
    %v1527 = vld [vmem:[%s1513 + $0x68] sm:$0xff]
    %v1528 = vld [vmem:[%s1513 + $0x70] sm:$0xff]
    %v1529 = vld [vmem:[%s1513 + $0x78] sm:$0xff]
    %v1530 = vld [vmem:[%s1513 + $0x80] sm:$0xff]
    %v1531 = vld [vmem:[%s1513 + $0x88] sm:$0xff]
    %v1532 = vld [vmem:[%s1513 + $0x90] sm:$0xff]
    %v1533 = vld [vmem:[%s1513 + $0x98] sm:$0xff]
    %v1534 = vld [vmem:[%s1513 + $0xa0] sm:$0xff]
    %v1535 = vld [vmem:[%s1513 + $0xa8] sm:$0xff]
    %v1536 = vld [vmem:[%s1513 + $0xb0] sm:$0xff]
    %v1537 = vld [vmem:[%s1513 + $0xb8] sm:$0xff]
    %v1538 = vld [vmem:[%s1513 + $0xc0] sm:$0xff]
    %v1539 = vld [vmem:[%s1513 + $0xc8] sm:$0xff]
    %v1540 = vld [vmem:[%s1513 + $0xd0] sm:$0xff]
    %v1541 = vld [vmem:[%s1513 + $0xd8] sm:$0xff]
    %v1542 = vld [vmem:[%s1513 + $0xe0] sm:$0xff]
    %v1543 = vld [vmem:[%s1513 + $0xe8] sm:$0xff]
    %v1544 = vld [vmem:[%s1513 + $0xf0] sm:$0xff]
    %v1545 = vld [vmem:[%s1513 + $0xf8] sm:$0xff]
    %v1546 = vld [vmem:[%s1513 + $0x100] sm:$0xff]
    %v1547 = vld [vmem:[%s1513 + $0x108] sm:$0xff]
    %v1548 = vld [vmem:[%s1513 + $0x110] sm:$0xff]
    %v1549 = vld [vmem:[%s1513 + $0x118] sm:$0xff]
    %v1550 = vld [vmem:[%s1513 + $0x120] sm:$0xff]
    %v1551 = vld [vmem:[%s1513 + $0x128] sm:$0xff]
    %v1552 = vld [vmem:[%s1513 + $0x130] sm:$0xff]
    %v1553 = vld [vmem:[%s1513 + $0x138] sm:$0xff]
    %v1554 = vld [vmem:[%s1513 + $0x140] sm:$0xff]
    %v1555 = vld [vmem:[%s1513 + $0x148] sm:$0xff]
    %v1556 = vld [vmem:[%s1513 + $0x150] sm:$0xff]
    %v1557 = vld [vmem:[%s1513 + $0x158] sm:$0xff]
    %v1558 = vld [vmem:[%s1513 + $0x160] sm:$0xff]
    %v1559 = vld [vmem:[%s1513 + $0x168] sm:$0xff]
    %v1560 = vld [vmem:[%s1513 + $0x170] sm:$0xff]
    %v1561 = vld [vmem:[%s1513 + $0x178] sm:$0xff]
    %v1562 = vld [vmem:[%s1513 + $0x180] sm:$0xff]
    %v1563 = vld [vmem:[%s1513 + $0x188] sm:$0xff]
    %v1564 = vld [vmem:[%s1513 + $0x190] sm:$0xff]
    %v1565 = vld [vmem:[%s1513 + $0x198] sm:$0xff]
    %v1566 = vld [vmem:[%s1513 + $0x1a0] sm:$0xff]
    %v1567 = vld [vmem:[%s1513 + $0x1a8] sm:$0xff]
    %v1568 = vld [vmem:[%s1513 + $0x1b0] sm:$0xff]
    %v1569 = vld [vmem:[%s1513 + $0x1b8] sm:$0xff]
    %v1570 = vld [vmem:[%s1513 + $0x1c0] sm:$0xff]
    %v1571 = vld [vmem:[%s1513 + $0x1c8] sm:$0xff]
    %v1572 = vld [vmem:[%s1513 + $0x1d0] sm:$0xff]
    %v1573 = vld [vmem:[%s1513 + $0x1d8] sm:$0xff]
    %v1574 = vld [vmem:[%s1513 + $0x1e0] sm:$0xff]
    %v1575 = vld [vmem:[%s1513 + $0x1e8] sm:$0xff]
    %v1576 = vld [vmem:[%s1513 + $0x1f0] sm:$0xff]
    %v1577 = vld [vmem:[%s1513 + $0x1f8] sm:$0xff]
    %v1642 = vunpack.c.l.b16 %v1514
    %v1643 = vunpack.c.h.b16 %v1514
    %v1644 = vunpack.c.l.b16 %v1515
    %v1645 = vunpack.c.h.b16 %v1515
    %v1646 = vunpack.c.l.b16 %v1516
    %v1647 = vunpack.c.h.b16 %v1516
    %v1648 = vunpack.c.l.b16 %v1517
    %v1649 = vunpack.c.h.b16 %v1517
    %v1650 = vunpack.c.l.b16 %v1518
    %v1651 = vunpack.c.h.b16 %v1518
    %v1652 = vunpack.c.l.b16 %v1519
    %v1653 = vunpack.c.h.b16 %v1519
    %v1654 = vunpack.c.l.b16 %v1520
    %v1655 = vunpack.c.h.b16 %v1520
    %v1656 = vunpack.c.l.b16 %v1521
    %v1657 = vunpack.c.h.b16 %v1521
    %v1658 = vunpack.c.l.b16 %v1522
    %v1659 = vunpack.c.h.b16 %v1522
    %v1660 = vunpack.c.l.b16 %v1523
    %v1661 = vunpack.c.h.b16 %v1523
    %v1662 = vunpack.c.l.b16 %v1524
    %v1663 = vunpack.c.h.b16 %v1524
    %v1664 = vunpack.c.l.b16 %v1525
    %v1665 = vunpack.c.h.b16 %v1525
    %v1666 = vunpack.c.l.b16 %v1526
    %v1667 = vunpack.c.h.b16 %v1526
    %v1668 = vunpack.c.l.b16 %v1527
    %v1669 = vunpack.c.h.b16 %v1527
    %v1670 = vunpack.c.l.b16 %v1528
    %v1671 = vunpack.c.h.b16 %v1528
    %v1672 = vunpack.c.l.b16 %v1529
    %v1673 = vunpack.c.h.b16 %v1529
    %v1674 = vunpack.c.l.b16 %v1530
    %v1675 = vunpack.c.h.b16 %v1530
    %v1676 = vunpack.c.l.b16 %v1531
    %v1677 = vunpack.c.h.b16 %v1531
    %v1678 = vunpack.c.l.b16 %v1532
    %v1679 = vunpack.c.h.b16 %v1532
    %v1680 = vunpack.c.l.b16 %v1533
    %v1681 = vunpack.c.h.b16 %v1533
    %v1682 = vunpack.c.l.b16 %v1534
    %v1683 = vunpack.c.h.b16 %v1534
    %v1684 = vunpack.c.l.b16 %v1535
    %v1685 = vunpack.c.h.b16 %v1535
    %v1686 = vunpack.c.l.b16 %v1536
    %v1687 = vunpack.c.h.b16 %v1536
    %v1688 = vunpack.c.l.b16 %v1537
    %v1689 = vunpack.c.h.b16 %v1537
    %v1690 = vunpack.c.l.b16 %v1538
    %v1691 = vunpack.c.h.b16 %v1538
    %v1692 = vunpack.c.l.b16 %v1539
    %v1693 = vunpack.c.h.b16 %v1539
    %v1694 = vunpack.c.l.b16 %v1540
    %v1695 = vunpack.c.h.b16 %v1540
    %v1696 = vunpack.c.l.b16 %v1541
    %v1697 = vunpack.c.h.b16 %v1541
    %v1698 = vunpack.c.l.b16 %v1542
    %v1699 = vunpack.c.h.b16 %v1542
    %v1700 = vunpack.c.l.b16 %v1543
    %v1701 = vunpack.c.h.b16 %v1543
    %v1702 = vunpack.c.l.b16 %v1544
    %v1703 = vunpack.c.h.b16 %v1544
    %v1704 = vunpack.c.l.b16 %v1545
    %v1705 = vunpack.c.h.b16 %v1545
    %v1706 = vunpack.c.l.b16 %v1546
    %v1707 = vunpack.c.h.b16 %v1546
    %v1708 = vunpack.c.l.b16 %v1547
    %v1709 = vunpack.c.h.b16 %v1547
    %v1710 = vunpack.c.l.b16 %v1548
    %v1711 = vunpack.c.h.b16 %v1548
    %v1712 = vunpack.c.l.b16 %v1549
    %v1713 = vunpack.c.h.b16 %v1549
    %v1714 = vunpack.c.l.b16 %v1550
    %v1715 = vunpack.c.h.b16 %v1550
    %v1716 = vunpack.c.l.b16 %v1551
    %v1717 = vunpack.c.h.b16 %v1551
    %v1718 = vunpack.c.l.b16 %v1552
    %v1719 = vunpack.c.h.b16 %v1552
    %v1720 = vunpack.c.l.b16 %v1553
    %v1721 = vunpack.c.h.b16 %v1553
    %v1722 = vunpack.c.l.b16 %v1554
    %v1723 = vunpack.c.h.b16 %v1554
    %v1724 = vunpack.c.l.b16 %v1555
    %v1725 = vunpack.c.h.b16 %v1555
    %v1726 = vunpack.c.l.b16 %v1556
    %v1727 = vunpack.c.h.b16 %v1556
    %v1728 = vunpack.c.l.b16 %v1557
    %v1729 = vunpack.c.h.b16 %v1557
    %v1730 = vunpack.c.l.b16 %v1558
    %v1731 = vunpack.c.h.b16 %v1558
    %v1732 = vunpack.c.l.b16 %v1559
    %v1733 = vunpack.c.h.b16 %v1559
    %v1734 = vunpack.c.l.b16 %v1560
    %v1735 = vunpack.c.h.b16 %v1560
    %v1736 = vunpack.c.l.b16 %v1561
    %v1737 = vunpack.c.h.b16 %v1561
    %v1738 = vunpack.c.l.b16 %v1562
    %v1739 = vunpack.c.h.b16 %v1562
    %v1740 = vunpack.c.l.b16 %v1563
    %v1741 = vunpack.c.h.b16 %v1563
    %v1742 = vunpack.c.l.b16 %v1564
    %v1743 = vunpack.c.h.b16 %v1564
    %v1744 = vunpack.c.l.b16 %v1565
    %v1745 = vunpack.c.h.b16 %v1565
    %v1746 = vunpack.c.l.b16 %v1566
    %v1747 = vunpack.c.h.b16 %v1566
    %v1748 = vunpack.c.l.b16 %v1567
    %v1749 = vunpack.c.h.b16 %v1567
    %v1750 = vunpack.c.l.b16 %v1568
    %v1751 = vunpack.c.h.b16 %v1568
    %v1752 = vunpack.c.l.b16 %v1569
    %v1753 = vunpack.c.h.b16 %v1569
    %v1754 = vunpack.c.l.b16 %v1570
    %v1755 = vunpack.c.h.b16 %v1570
    %v1756 = vunpack.c.l.b16 %v1571
    %v1757 = vunpack.c.h.b16 %v1571
    %v1758 = vunpack.c.l.b16 %v1572
    %v1759 = vunpack.c.h.b16 %v1572
    %v1760 = vunpack.c.l.b16 %v1573
    %v1761 = vunpack.c.h.b16 %v1573
    %v1762 = vunpack.c.l.b16 %v1574
    %v1763 = vunpack.c.h.b16 %v1574
    %v1764 = vunpack.c.l.b16 %v1575
    %v1765 = vunpack.c.h.b16 %v1575
    %v1766 = vunpack.c.l.b16 %v1576
    %v1767 = vunpack.c.h.b16 %v1576
    %v1768 = vunpack.c.l.b16 %v1577
    %v1769 = vunpack.c.h.b16 %v1577
    %v1770 = vpack.c.b16 %v1646, %v1642
    %v1771 = vpack.c.b16 %v1647, %v1643
    %v1772 = vpack.c.b16 %v1648, %v1644
    %v1773 = vpack.c.b16 %v1649, %v1645
    %v1774 = vpack.c.b16 %v1654, %v1650
    %v1775 = vpack.c.b16 %v1655, %v1651
    %v1776 = vpack.c.b16 %v1656, %v1652
    %v1777 = vpack.c.b16 %v1657, %v1653
    %v1778 = vpack.c.b16 %v1662, %v1658
    %v1779 = vpack.c.b16 %v1663, %v1659
    %v1780 = vpack.c.b16 %v1664, %v1660
    %v1781 = vpack.c.b16 %v1665, %v1661
    %v1782 = vpack.c.b16 %v1670, %v1666
    %v1783 = vpack.c.b16 %v1671, %v1667
    %v1784 = vpack.c.b16 %v1672, %v1668
    %v1785 = vpack.c.b16 %v1673, %v1669
    %v1786 = vpack.c.b16 %v1678, %v1674
    %v1787 = vpack.c.b16 %v1679, %v1675
    %v1788 = vpack.c.b16 %v1680, %v1676
    %v1789 = vpack.c.b16 %v1681, %v1677
    %v1790 = vpack.c.b16 %v1686, %v1682
    %v1791 = vpack.c.b16 %v1687, %v1683
    %v1792 = vpack.c.b16 %v1688, %v1684
    %v1793 = vpack.c.b16 %v1689, %v1685
    %v1794 = vpack.c.b16 %v1694, %v1690
    %v1795 = vpack.c.b16 %v1695, %v1691
    %v1796 = vpack.c.b16 %v1696, %v1692
    %v1797 = vpack.c.b16 %v1697, %v1693
    %v1798 = vpack.c.b16 %v1702, %v1698
    %v1799 = vpack.c.b16 %v1703, %v1699
    %v1800 = vpack.c.b16 %v1704, %v1700
    %v1801 = vpack.c.b16 %v1705, %v1701
    %v1802 = vpack.c.b16 %v1710, %v1706
    %v1803 = vpack.c.b16 %v1711, %v1707
    %v1804 = vpack.c.b16 %v1712, %v1708
    %v1805 = vpack.c.b16 %v1713, %v1709
    %v1806 = vpack.c.b16 %v1718, %v1714
    %v1807 = vpack.c.b16 %v1719, %v1715
    %v1808 = vpack.c.b16 %v1720, %v1716
    %v1809 = vpack.c.b16 %v1721, %v1717
    %v1810 = vpack.c.b16 %v1726, %v1722
    %v1811 = vpack.c.b16 %v1727, %v1723
    %v1812 = vpack.c.b16 %v1728, %v1724
    %v1813 = vpack.c.b16 %v1729, %v1725
    %v1814 = vpack.c.b16 %v1734, %v1730
    %v1815 = vpack.c.b16 %v1735, %v1731
    %v1816 = vpack.c.b16 %v1736, %v1732
    %v1817 = vpack.c.b16 %v1737, %v1733
    %v1818 = vpack.c.b16 %v1742, %v1738
    %v1819 = vpack.c.b16 %v1743, %v1739
    %v1820 = vpack.c.b16 %v1744, %v1740
    %v1821 = vpack.c.b16 %v1745, %v1741
    %v1822 = vpack.c.b16 %v1750, %v1746
    %v1823 = vpack.c.b16 %v1751, %v1747
    %v1824 = vpack.c.b16 %v1752, %v1748
    %v1825 = vpack.c.b16 %v1753, %v1749
    %v1826 = vpack.c.b16 %v1758, %v1754
    %v1827 = vpack.c.b16 %v1759, %v1755
    %v1828 = vpack.c.b16 %v1760, %v1756
    %v1829 = vpack.c.b16 %v1761, %v1757
    %v1830 = vpack.c.b16 %v1766, %v1762
    %v1831 = vpack.c.b16 %v1767, %v1763
    %v1832 = vpack.c.b16 %v1768, %v1764
    %v1833 = vpack.c.b16 %v1769, %v1765
    %1898 = vmatprep.subr.bf16.mxu0 %v1799
    %1899 = vmatpush1.bf16.msra.mxu0 %v1798
    %1900 = vmatprep.subr.bf16.mxu0 %v1795
    %1901 = vmatpush1.bf16.msra.mxu0 %v1794
    %1902 = vmatprep.subr.bf16.mxu0 %v1791
    %1903 = vmatpush1.bf16.msra.mxu0 %v1790
    %1904 = vmatprep.subr.bf16.mxu0 %v1787
    %1905 = vmatpush1.bf16.msra.mxu0 %v1786
    %1906 = vmatprep.subr.bf16.mxu0 %v1783
    %1907 = vmatpush1.bf16.msra.mxu0 %v1782
    %1908 = vmatprep.subr.bf16.mxu0 %v1779
    %1909 = vmatpush1.bf16.msra.mxu0 %v1778
    %1910 = vmatprep.subr.bf16.mxu0 %v1775
    %1911 = vmatpush1.bf16.msra.mxu0 %v1774
    %1912 = vmatprep.subr.bf16.mxu0 %v1771
    %1913 = vmatpush1.bf16.msra.mxu0 %v1770
    %1914 = vmatprep.subr.bf16.mxu0 %v1831
    %1915 = vmatpush2.bf16.msra.mxu0 %v1830
    %1916 = vmatprep.subr.bf16.mxu0 %v1827
    %1917 = vmatpush2.bf16.msra.mxu0 %v1826
    %1918 = vmatprep.subr.bf16.mxu0 %v1823
    %1919 = vmatpush2.bf16.msra.mxu0 %v1822
    %1920 = vmatprep.subr.bf16.mxu0 %v1819
    %1921 = vmatpush2.bf16.msra.mxu0 %v1818
    %1922 = vmatprep.subr.bf16.mxu0 %v1815
    %1923 = vmatpush2.bf16.msra.mxu0 %v1814
    %1924 = vmatprep.subr.bf16.mxu0 %v1811
    %1925 = vmatpush2.bf16.msra.mxu0 %v1810
    %1926 = vmatprep.subr.bf16.mxu0 %v1807
    %1927 = vmatpush2.bf16.msra.mxu0 %v1806
    %1928 = vmatprep.subr.bf16.mxu0 %v1803
    %1929 = vmatpush2.bf16.msra.mxu0 %v1802
    %1930 = vmatprep.mubr.bf16.mxu0 0
    %1931 = vmatmul.mubr.bf16.gmra.mxu0 %v1286
    %v1932 = vpop.f32.mrf.mxu0
    %v1933 = vadd.f32 0.0, %v1932
    %v1934 = vpop.f32.mrf.mxu0
    %v1935 = vadd.f32 0.0, %v1934
    %v1936 = vpop.f32.mrf.mxu0
    %v1937 = vpop.f32.mrf.mxu0
    %1938 = vdwg.mxu0
    %1939 = vmatprep.subr.bf16.mxu0 %v1801
    %1940 = vmatpush1.bf16.msra.mxu0 %v1800
    %1941 = vmatprep.subr.bf16.mxu0 %v1797
    %1942 = vmatpush1.bf16.msra.mxu0 %v1796
    %1943 = vmatprep.subr.bf16.mxu0 %v1793
    %1944 = vmatpush1.bf16.msra.mxu0 %v1792
    %1945 = vmatprep.subr.bf16.mxu0 %v1789
    %1946 = vmatpush1.bf16.msra.mxu0 %v1788
    %1947 = vmatprep.subr.bf16.mxu0 %v1785
    %1948 = vmatpush1.bf16.msra.mxu0 %v1784
    %1949 = vmatprep.subr.bf16.mxu0 %v1781
    %1950 = vmatpush1.bf16.msra.mxu0 %v1780
    %1951 = vmatprep.subr.bf16.mxu0 %v1777
    %1952 = vmatpush1.bf16.msra.mxu0 %v1776
    %1953 = vmatprep.subr.bf16.mxu0 %v1773
    %1954 = vmatpush1.bf16.msra.mxu0 %v1772
    %1955 = vmatprep.subr.bf16.mxu0 %v1833
    %1956 = vmatpush2.bf16.msra.mxu0 %v1832
    %1957 = vmatprep.subr.bf16.mxu0 %v1829
    %1958 = vmatpush2.bf16.msra.mxu0 %v1828
    %1959 = vmatprep.subr.bf16.mxu0 %v1825
    %1960 = vmatpush2.bf16.msra.mxu0 %v1824
    %1961 = vmatprep.subr.bf16.mxu0 %v1821
    %1962 = vmatpush2.bf16.msra.mxu0 %v1820
    %1963 = vmatprep.subr.bf16.mxu0 %v1817
    %1964 = vmatpush2.bf16.msra.mxu0 %v1816
    %1965 = vmatprep.subr.bf16.mxu0 %v1813
    %1966 = vmatpush2.bf16.msra.mxu0 %v1812
    %1967 = vmatprep.subr.bf16.mxu0 %v1809
    %1968 = vmatpush2.bf16.msra.mxu0 %v1808
    %1969 = vmatprep.subr.bf16.mxu0 %v1805
    %1970 = vmatpush2.bf16.msra.mxu0 %v1804
    %1971 = vmatprep.mubr.bf16.mxu0 0
    %1972 = vmatmul.mubr.bf16.gmra.mxu0 %v1286
    %v1973 = vpop.f32.mrf.mxu0
    %v1974 = vadd.f32 0.0, %v1973
    %v1975 = vpop.f32.mrf.mxu0
    %v1976 = vadd.f32 0.0, %v1975
    %v1977 = vpop.f32.mrf.mxu0
    %v1978 = vpop.f32.mrf.mxu0
    %1979 = vdwg.mxu0
    %v1981 = vlaneseq
    %v1982 = vshrl.u32 %v1981, 7
    %v1983 = vsub.s32 0, %v1982
    %v1984 = vrot.slane %v1512, %v1983
    %v1985 = vlaneseq
    %v1986 = vshrl.u32 %v1985, 7
    %v1987 = vsub.s32 1, %v1986
    %v1988 = vrot.slane %v1512, %v1987
    %v1989 = vlaneseq
    %v1990 = vshrl.u32 %v1989, 7
    %v1991 = vsub.s32 2, %v1990
    %v1992 = vrot.slane %v1512, %v1991
    %v1993 = vlaneseq
    %v1994 = vshrl.u32 %v1993, 7
    %v1995 = vsub.s32 3, %v1994
    %v1996 = vrot.slane %v1512, %v1995
    %v2001 = vadd.f32 %v1984, %v1933
    %v2002 = vadd.f32 %v1988, %v1935
    %v2003 = vadd.f32 %v1992, %v1974
    %v2004 = vadd.f32 %v1996, %v1976
    %v2005 = vxor.u32 %v2001, 2147483648
    %v2006 = vmul.f32 %v2005, 1.442695
    %v2007 = vpow.pop %v2006
    %v2008 = vadd.f32 %v2007, 1.0
    %v2009 = vrcp.pop %v2008
    %v2010 = vmul.f32 1.0, %v2009
    %v2011 = vxor.u32 %v2002, 2147483648
    %v2012 = vmul.f32 %v2011, 1.442695
    %v2013 = vpow.pop %v2012
    %v2014 = vadd.f32 %v2013, 1.0
    %v2015 = vrcp.pop %v2014
    %v2016 = vmul.f32 1.0, %v2015
    %v2017 = vtanh.pop %v2003
    %v2018 = vxor.u32 %v2004, 2147483648
    %v2019 = vmul.f32 %v2018, 1.442695
    %v2020 = vpow.pop %v2019
    %v2021 = vadd.f32 %v2020, 1.0
    %v2022 = vrcp.pop %v2021
    %v2023 = vmul.f32 1.0, %v2022
    %v2024 = vmul.f32 %v2016, 0.0
    %v2025 = vmul.f32 %v2010, %v2017
    %v2026 = vadd.f32 %v2024, %v2025
    %v2027 = vtanh.pop %v2026
    %v2028 = vmul.f32 %v2023, %v2027
    %v2029 = vpack.c.bf16 %v1400, %v1400
    %v2030 = vpack.c.bf16 %v1510, %v1510
    %v2031 = vpack.c.bf16 %v2028, %v2028
    %v2032 = vld [vmem:[#allocation2 + $0x60] sm:$0xff]
    %v2033 = vld [vmem:[#allocation2 + $0x68] sm:$0xff]
    %v2034 = vld [vmem:[#allocation2 + $0x70] sm:$0xff]
    %v2035 = vld [vmem:[#allocation2 + $0x78] sm:$0xff]
    %2036 = vmatprep.subr.bf16.mxu0 %v508
    %2037 = vmatpush1.bf16.msra.mxu0 %v507
    %2038 = vmatprep.subr.bf16.mxu0 %v504
    %2039 = vmatpush1.bf16.msra.mxu0 %v503
    %2040 = vmatprep.subr.bf16.mxu0 %v500
    %2041 = vmatpush1.bf16.msra.mxu0 %v499
    %2042 = vmatprep.subr.bf16.mxu0 %v496
    %2043 = vmatpush1.bf16.msra.mxu0 %v495
    %2044 = vmatprep.subr.bf16.mxu0 %v492
    %2045 = vmatpush1.bf16.msra.mxu0 %v491
    %2046 = vmatprep.subr.bf16.mxu0 %v488
    %2047 = vmatpush1.bf16.msra.mxu0 %v487
    %2048 = vmatprep.subr.bf16.mxu0 %v484
    %2049 = vmatpush1.bf16.msra.mxu0 %v483
    %2050 = vmatprep.subr.bf16.mxu0 %v480
    %2051 = vmatpush1.bf16.msra.mxu0 %v479
    %2052 = vmatprep.subr.bf16.mxu0 0
    %2053 = vmatpush2.bf16.msra.mxu0 0
    %2054 = vmatprep.subr.bf16.mxu0 0
    %2055 = vmatpush2.bf16.msra.mxu0 0
    %2056 = vmatprep.subr.bf16.mxu0 0
    %2057 = vmatpush2.bf16.msra.mxu0 0
    %2058 = vmatprep.subr.bf16.mxu0 0
    %2059 = vmatpush2.bf16.msra.mxu0 0
    %2060 = vmatprep.subr.bf16.mxu0 0
    %2061 = vmatpush2.bf16.msra.mxu0 0
    %2062 = vmatprep.subr.bf16.mxu0 0
    %2063 = vmatpush2.bf16.msra.mxu0 0
    %2064 = vmatprep.subr.bf16.mxu0 0
    %2065 = vmatpush2.bf16.msra.mxu0 0
    %2066 = vmatprep.subr.bf16.mxu0 0
    %2067 = vmatpush2.bf16.msra.mxu0 0
    %2068 = vmatprep.mubr.bf16.mxu0 0
    %2069 = vmatmul.mubr.bf16.gmra.mxu0 %v2029
    %v2070 = vpop.f32.mrf.mxu0
    %v2071 = vadd.f32 0.0, %v2070
    %v2072 = vpop.f32.mrf.mxu0
    %v2073 = vadd.f32 0.0, %v2072
    %v2074 = vpop.f32.mrf.mxu0
    %v2075 = vpop.f32.mrf.mxu0
    %2076 = vdwg.mxu0
    %2077 = vmatprep.subr.bf16.mxu0 %v510
    %2078 = vmatpush1.bf16.msra.mxu0 %v509
    %2079 = vmatprep.subr.bf16.mxu0 %v506
    %2080 = vmatpush1.bf16.msra.mxu0 %v505
    %2081 = vmatprep.subr.bf16.mxu0 %v502
    %2082 = vmatpush1.bf16.msra.mxu0 %v501
    %2083 = vmatprep.subr.bf16.mxu0 %v498
    %2084 = vmatpush1.bf16.msra.mxu0 %v497
    %2085 = vmatprep.subr.bf16.mxu0 %v494
    %2086 = vmatpush1.bf16.msra.mxu0 %v493
    %2087 = vmatprep.subr.bf16.mxu0 %v490
    %2088 = vmatpush1.bf16.msra.mxu0 %v489
    %2089 = vmatprep.subr.bf16.mxu0 %v486
    %2090 = vmatpush1.bf16.msra.mxu0 %v485
    %2091 = vmatprep.subr.bf16.mxu0 %v482
    %2092 = vmatpush1.bf16.msra.mxu0 %v481
    %2093 = vmatprep.subr.bf16.mxu0 0
    %2094 = vmatpush2.bf16.msra.mxu0 0
    %2095 = vmatprep.subr.bf16.mxu0 0
    %2096 = vmatpush2.bf16.msra.mxu0 0
    %2097 = vmatprep.subr.bf16.mxu0 0
    %2098 = vmatpush2.bf16.msra.mxu0 0
    %2099 = vmatprep.subr.bf16.mxu0 0
    %2100 = vmatpush2.bf16.msra.mxu0 0
    %2101 = vmatprep.subr.bf16.mxu0 0
    %2102 = vmatpush2.bf16.msra.mxu0 0
    %2103 = vmatprep.subr.bf16.mxu0 0
    %2104 = vmatpush2.bf16.msra.mxu0 0
    %2105 = vmatprep.subr.bf16.mxu0 0
    %2106 = vmatpush2.bf16.msra.mxu0 0
    %2107 = vmatprep.subr.bf16.mxu0 0
    %2108 = vmatpush2.bf16.msra.mxu0 0
    %2109 = vmatprep.mubr.bf16.mxu0 0
    %2110 = vmatmul.mubr.bf16.gmra.mxu0 %v2029
    %v2111 = vpop.f32.mrf.mxu0
    %v2112 = vadd.f32 0.0, %v2111
    %v2113 = vpop.f32.mrf.mxu0
    %v2114 = vadd.f32 0.0, %v2113
    %v2115 = vpop.f32.mrf.mxu0
    %v2116 = vpop.f32.mrf.mxu0
    %2117 = vdwg.mxu0
    %v2118 = vadd.f32 %v2032, %v2071
    %v2119 = vadd.f32 %v2033, %v2073
    %v2120 = vadd.f32 %v2034, %v2112
    %v2121 = vadd.f32 %v2035, %v2114
    %v2122 = vxor.u32 %v2118, 2147483648
    %v2123 = vmul.f32 %v2122, 1.442695
    %v2124 = vpow.pop %v2123
    %v2125 = vadd.f32 %v2124, 1.0
    %v2126 = vrcp.pop %v2125
    %v2127 = vmul.f32 1.0, %v2126
    %v2128 = vxor.u32 %v2119, 2147483648
    %v2129 = vmul.f32 %v2128, 1.442695
    %v2130 = vpow.pop %v2129
    %v2131 = vadd.f32 %v2130, 1.0
    %v2132 = vrcp.pop %v2131
    %v2133 = vmul.f32 1.0, %v2132
    %v2134 = vtanh.pop %v2120
    %v2135 = vxor.u32 %v2121, 2147483648
    %v2136 = vmul.f32 %v2135, 1.442695
    %v2137 = vpow.pop %v2136
    %v2138 = vadd.f32 %v2137, 1.0
    %v2139 = vrcp.pop %v2138
    %v2140 = vmul.f32 1.0, %v2139
    %v2141 = vmul.f32 %v2133, %v1398
    %v2142 = vmul.f32 %v2127, %v2134
    %v2143 = vadd.f32 %v2141, %v2142
    %v2144 = vtanh.pop %v2143
    %v2145 = vmul.f32 %v2140, %v2144
    %2146 = vmatprep.subr.bf16.mxu0 %v1055
    %2147 = vmatpush1.bf16.msra.mxu0 %v1054
    %2148 = vmatprep.subr.bf16.mxu0 %v1051
    %2149 = vmatpush1.bf16.msra.mxu0 %v1050
    %2150 = vmatprep.subr.bf16.mxu0 %v1047
    %2151 = vmatpush1.bf16.msra.mxu0 %v1046
    %2152 = vmatprep.subr.bf16.mxu0 %v1043
    %2153 = vmatpush1.bf16.msra.mxu0 %v1042
    %2154 = vmatprep.subr.bf16.mxu0 %v1039
    %2155 = vmatpush1.bf16.msra.mxu0 %v1038
    %2156 = vmatprep.subr.bf16.mxu0 %v1035
    %2157 = vmatpush1.bf16.msra.mxu0 %v1034
    %2158 = vmatprep.subr.bf16.mxu0 %v1031
    %2159 = vmatpush1.bf16.msra.mxu0 %v1030
    %2160 = vmatprep.subr.bf16.mxu0 %v1027
    %2161 = vmatpush1.bf16.msra.mxu0 %v1026
    %2162 = vmatprep.subr.bf16.mxu0 %v1087
    %2163 = vmatpush2.bf16.msra.mxu0 %v1086
    %2164 = vmatprep.subr.bf16.mxu0 %v1083
    %2165 = vmatpush2.bf16.msra.mxu0 %v1082
    %2166 = vmatprep.subr.bf16.mxu0 %v1079
    %2167 = vmatpush2.bf16.msra.mxu0 %v1078
    %2168 = vmatprep.subr.bf16.mxu0 %v1075
    %2169 = vmatpush2.bf16.msra.mxu0 %v1074
    %2170 = vmatprep.subr.bf16.mxu0 %v1071
    %2171 = vmatpush2.bf16.msra.mxu0 %v1070
    %2172 = vmatprep.subr.bf16.mxu0 %v1067
    %2173 = vmatpush2.bf16.msra.mxu0 %v1066
    %2174 = vmatprep.subr.bf16.mxu0 %v1063
    %2175 = vmatpush2.bf16.msra.mxu0 %v1062
    %2176 = vmatprep.subr.bf16.mxu0 %v1059
    %2177 = vmatpush2.bf16.msra.mxu0 %v1058
    %2178 = vmatprep.mubr.bf16.mxu0 %v2030
    %2179 = vmatmul.mubr.bf16.gmra.mxu0 %v2029
    %v2180 = vpop.f32.mrf.mxu0
    %v2181 = vadd.f32 0.0, %v2180
    %v2182 = vpop.f32.mrf.mxu0
    %v2183 = vadd.f32 0.0, %v2182
    %v2184 = vpop.f32.mrf.mxu0
    %v2185 = vpop.f32.mrf.mxu0
    %2186 = vdwg.mxu0
    %2187 = vmatprep.subr.bf16.mxu0 %v1057
    %2188 = vmatpush1.bf16.msra.mxu0 %v1056
    %2189 = vmatprep.subr.bf16.mxu0 %v1053
    %2190 = vmatpush1.bf16.msra.mxu0 %v1052
    %2191 = vmatprep.subr.bf16.mxu0 %v1049
    %2192 = vmatpush1.bf16.msra.mxu0 %v1048
    %2193 = vmatprep.subr.bf16.mxu0 %v1045
    %2194 = vmatpush1.bf16.msra.mxu0 %v1044
    %2195 = vmatprep.subr.bf16.mxu0 %v1041
    %2196 = vmatpush1.bf16.msra.mxu0 %v1040
    %2197 = vmatprep.subr.bf16.mxu0 %v1037
    %2198 = vmatpush1.bf16.msra.mxu0 %v1036
    %2199 = vmatprep.subr.bf16.mxu0 %v1033
    %2200 = vmatpush1.bf16.msra.mxu0 %v1032
    %2201 = vmatprep.subr.bf16.mxu0 %v1029
    %2202 = vmatpush1.bf16.msra.mxu0 %v1028
    %2203 = vmatprep.subr.bf16.mxu0 %v1089
    %2204 = vmatpush2.bf16.msra.mxu0 %v1088
    %2205 = vmatprep.subr.bf16.mxu0 %v1085
    %2206 = vmatpush2.bf16.msra.mxu0 %v1084
    %2207 = vmatprep.subr.bf16.mxu0 %v1081
    %2208 = vmatpush2.bf16.msra.mxu0 %v1080
    %2209 = vmatprep.subr.bf16.mxu0 %v1077
    %2210 = vmatpush2.bf16.msra.mxu0 %v1076
    %2211 = vmatprep.subr.bf16.mxu0 %v1073
    %2212 = vmatpush2.bf16.msra.mxu0 %v1072
    %2213 = vmatprep.subr.bf16.mxu0 %v1069
    %2214 = vmatpush2.bf16.msra.mxu0 %v1068
    %2215 = vmatprep.subr.bf16.mxu0 %v1065
    %2216 = vmatpush2.bf16.msra.mxu0 %v1064
    %2217 = vmatprep.subr.bf16.mxu0 %v1061
    %2218 = vmatpush2.bf16.msra.mxu0 %v1060
    %2219 = vmatprep.mubr.bf16.mxu0 %v2030
    %2220 = vmatmul.mubr.bf16.gmra.mxu0 %v2029
    %v2221 = vpop.f32.mrf.mxu0
    %v2222 = vadd.f32 0.0, %v2221
    %v2223 = vpop.f32.mrf.mxu0
    %v2224 = vadd.f32 0.0, %v2223
    %v2225 = vpop.f32.mrf.mxu0
    %v2226 = vpop.f32.mrf.mxu0
    %2227 = vdwg.mxu0
    %v2228 = vadd.f32 %v1240, %v2181
    %v2229 = vadd.f32 %v1244, %v2183
    %v2230 = vadd.f32 %v1248, %v2222
    %v2231 = vadd.f32 %v1252, %v2224
    %v2232 = vxor.u32 %v2228, 2147483648
    %v2233 = vmul.f32 %v2232, 1.442695
    %v2234 = vpow.pop %v2233
    %v2235 = vadd.f32 %v2234, 1.0
    %v2236 = vrcp.pop %v2235
    %v2237 = vmul.f32 1.0, %v2236
    %v2238 = vxor.u32 %v2229, 2147483648
    %v2239 = vmul.f32 %v2238, 1.442695
    %v2240 = vpow.pop %v2239
    %v2241 = vadd.f32 %v2240, 1.0
    %v2242 = vrcp.pop %v2241
    %v2243 = vmul.f32 1.0, %v2242
    %v2244 = vtanh.pop %v2230
    %v2245 = vxor.u32 %v2231, 2147483648
    %v2246 = vmul.f32 %v2245, 1.442695
    %v2247 = vpow.pop %v2246
    %v2248 = vadd.f32 %v2247, 1.0
    %v2249 = vrcp.pop %v2248
    %v2250 = vmul.f32 1.0, %v2249
    %v2251 = vmul.f32 %v2243, %v1508
    %v2252 = vmul.f32 %v2237, %v2244
    %v2253 = vadd.f32 %v2251, %v2252
    %v2254 = vtanh.pop %v2253
    %v2255 = vmul.f32 %v2250, %v2254
    %2256 = vmatprep.subr.bf16.mxu0 %v1799
    %2257 = vmatpush1.bf16.msra.mxu0 %v1798
    %2258 = vmatprep.subr.bf16.mxu0 %v1795
    %2259 = vmatpush1.bf16.msra.mxu0 %v1794
    %2260 = vmatprep.subr.bf16.mxu0 %v1791
    %2261 = vmatpush1.bf16.msra.mxu0 %v1790
    %2262 = vmatprep.subr.bf16.mxu0 %v1787
    %2263 = vmatpush1.bf16.msra.mxu0 %v1786
    %2264 = vmatprep.subr.bf16.mxu0 %v1783
    %2265 = vmatpush1.bf16.msra.mxu0 %v1782
    %2266 = vmatprep.subr.bf16.mxu0 %v1779
    %2267 = vmatpush1.bf16.msra.mxu0 %v1778
    %2268 = vmatprep.subr.bf16.mxu0 %v1775
    %2269 = vmatpush1.bf16.msra.mxu0 %v1774
    %2270 = vmatprep.subr.bf16.mxu0 %v1771
    %2271 = vmatpush1.bf16.msra.mxu0 %v1770
    %2272 = vmatprep.subr.bf16.mxu0 %v1831
    %2273 = vmatpush2.bf16.msra.mxu0 %v1830
    %2274 = vmatprep.subr.bf16.mxu0 %v1827
    %2275 = vmatpush2.bf16.msra.mxu0 %v1826
    %2276 = vmatprep.subr.bf16.mxu0 %v1823
    %2277 = vmatpush2.bf16.msra.mxu0 %v1822
    %2278 = vmatprep.subr.bf16.mxu0 %v1819
    %2279 = vmatpush2.bf16.msra.mxu0 %v1818
    %2280 = vmatprep.subr.bf16.mxu0 %v1815
    %2281 = vmatpush2.bf16.msra.mxu0 %v1814
    %2282 = vmatprep.subr.bf16.mxu0 %v1811
    %2283 = vmatpush2.bf16.msra.mxu0 %v1810
    %2284 = vmatprep.subr.bf16.mxu0 %v1807
    %2285 = vmatpush2.bf16.msra.mxu0 %v1806
    %2286 = vmatprep.subr.bf16.mxu0 %v1803
    %2287 = vmatpush2.bf16.msra.mxu0 %v1802
    %2288 = vmatprep.mubr.bf16.mxu0 %v2031
    %2289 = vmatmul.mubr.bf16.gmra.mxu0 %v2030
    %v2290 = vpop.f32.mrf.mxu0
    %v2291 = vadd.f32 0.0, %v2290
    %v2292 = vpop.f32.mrf.mxu0
    %v2293 = vadd.f32 0.0, %v2292
    %v2294 = vpop.f32.mrf.mxu0
    %v2295 = vpop.f32.mrf.mxu0
    %2296 = vdwg.mxu0
    %2297 = vmatprep.subr.bf16.mxu0 %v1801
    %2298 = vmatpush1.bf16.msra.mxu0 %v1800
    %2299 = vmatprep.subr.bf16.mxu0 %v1797
    %2300 = vmatpush1.bf16.msra.mxu0 %v1796
    %2301 = vmatprep.subr.bf16.mxu0 %v1793
    %2302 = vmatpush1.bf16.msra.mxu0 %v1792
    %2303 = vmatprep.subr.bf16.mxu0 %v1789
    %2304 = vmatpush1.bf16.msra.mxu0 %v1788
    %2305 = vmatprep.subr.bf16.mxu0 %v1785
    %2306 = vmatpush1.bf16.msra.mxu0 %v1784
    %2307 = vmatprep.subr.bf16.mxu0 %v1781
    %2308 = vmatpush1.bf16.msra.mxu0 %v1780
    %2309 = vmatprep.subr.bf16.mxu0 %v1777
    %2310 = vmatpush1.bf16.msra.mxu0 %v1776
    %2311 = vmatprep.subr.bf16.mxu0 %v1773
    %2312 = vmatpush1.bf16.msra.mxu0 %v1772
    %2313 = vmatprep.subr.bf16.mxu0 %v1833
    %2314 = vmatpush2.bf16.msra.mxu0 %v1832
    %2315 = vmatprep.subr.bf16.mxu0 %v1829
    %2316 = vmatpush2.bf16.msra.mxu0 %v1828
    %2317 = vmatprep.subr.bf16.mxu0 %v1825
    %2318 = vmatpush2.bf16.msra.mxu0 %v1824
    %2319 = vmatprep.subr.bf16.mxu0 %v1821
    %2320 = vmatpush2.bf16.msra.mxu0 %v1820
    %2321 = vmatprep.subr.bf16.mxu0 %v1817
    %2322 = vmatpush2.bf16.msra.mxu0 %v1816
    %2323 = vmatprep.subr.bf16.mxu0 %v1813
    %2324 = vmatpush2.bf16.msra.mxu0 %v1812
    %2325 = vmatprep.subr.bf16.mxu0 %v1809
    %2326 = vmatpush2.bf16.msra.mxu0 %v1808
    %2327 = vmatprep.subr.bf16.mxu0 %v1805
    %2328 = vmatpush2.bf16.msra.mxu0 %v1804
    %2329 = vmatprep.mubr.bf16.mxu0 %v2031
    %2330 = vmatmul.mubr.bf16.gmra.mxu0 %v2030
    %v2331 = vpop.f32.mrf.mxu0
    %v2332 = vadd.f32 0.0, %v2331
    %v2333 = vpop.f32.mrf.mxu0
    %v2334 = vadd.f32 0.0, %v2333
    %v2335 = vpop.f32.mrf.mxu0
    %v2336 = vpop.f32.mrf.mxu0
    %2337 = vdwg.mxu0
    %v2338 = vadd.f32 %v1984, %v2291
    %v2339 = vadd.f32 %v1988, %v2293
    %v2340 = vadd.f32 %v1992, %v2332
    %v2341 = vadd.f32 %v1996, %v2334
    %v2342 = vxor.u32 %v2338, 2147483648
    %v2343 = vmul.f32 %v2342, 1.442695
    %v2344 = vpow.pop %v2343
    %v2345 = vadd.f32 %v2344, 1.0
    %v2346 = vrcp.pop %v2345
    %v2347 = vmul.f32 1.0, %v2346
    %v2348 = vxor.u32 %v2339, 2147483648
    %v2349 = vmul.f32 %v2348, 1.442695
    %v2350 = vpow.pop %v2349
    %v2351 = vadd.f32 %v2350, 1.0
    %v2352 = vrcp.pop %v2351
    %v2353 = vmul.f32 1.0, %v2352
    %v2354 = vtanh.pop %v2340
    %v2355 = vxor.u32 %v2341, 2147483648
    %v2356 = vmul.f32 %v2355, 1.442695
    %v2357 = vpow.pop %v2356
    %v2358 = vadd.f32 %v2357, 1.0
    %v2359 = vrcp.pop %v2358
    %v2360 = vmul.f32 1.0, %v2359
    %v2361 = vmul.f32 %v2353, %v2026
    %v2362 = vmul.f32 %v2347, %v2354
    %v2363 = vadd.f32 %v2361, %v2362
    %v2364 = vtanh.pop %v2363
    %v2365 = vmul.f32 %v2360, %v2364
    %s2366 = scalar_lea.vmem [#allocation8], 12
    %v2367 = vld [vmem:[%s2366] sm:$0xf]
    %s2368 = scalar_lea.vmem [#allocation7], 1024
    %v2369 = vld [vmem:[%s2368] sm:$0xff]
    %v2370 = vld [vmem:[%s2368 + $0x8] sm:$0xff]
    %v2371 = vld [vmem:[%s2368 + $0x10] sm:$0xff]
    %v2372 = vld [vmem:[%s2368 + $0x18] sm:$0xff]
    %v2373 = vld [vmem:[%s2368 + $0x20] sm:$0xff]
    %v2374 = vld [vmem:[%s2368 + $0x28] sm:$0xff]
    %v2375 = vld [vmem:[%s2368 + $0x30] sm:$0xff]
    %v2376 = vld [vmem:[%s2368 + $0x38] sm:$0xff]
    %v2377 = vld [vmem:[%s2368 + $0x40] sm:$0xff]
    %v2378 = vld [vmem:[%s2368 + $0x48] sm:$0xff]
    %v2379 = vld [vmem:[%s2368 + $0x50] sm:$0xff]
    %v2380 = vld [vmem:[%s2368 + $0x58] sm:$0xff]
    %v2381 = vld [vmem:[%s2368 + $0x60] sm:$0xff]
    %v2382 = vld [vmem:[%s2368 + $0x68] sm:$0xff]
    %v2383 = vld [vmem:[%s2368 + $0x70] sm:$0xff]
    %v2384 = vld [vmem:[%s2368 + $0x78] sm:$0xff]
    %v2385 = vld [vmem:[%s2368 + $0x80] sm:$0xff]
    %v2386 = vld [vmem:[%s2368 + $0x88] sm:$0xff]
    %v2387 = vld [vmem:[%s2368 + $0x90] sm:$0xff]
    %v2388 = vld [vmem:[%s2368 + $0x98] sm:$0xff]
    %v2389 = vld [vmem:[%s2368 + $0xa0] sm:$0xff]
    %v2390 = vld [vmem:[%s2368 + $0xa8] sm:$0xff]
    %v2391 = vld [vmem:[%s2368 + $0xb0] sm:$0xff]
    %v2392 = vld [vmem:[%s2368 + $0xb8] sm:$0xff]
    %v2393 = vld [vmem:[%s2368 + $0xc0] sm:$0xff]
    %v2394 = vld [vmem:[%s2368 + $0xc8] sm:$0xff]
    %v2395 = vld [vmem:[%s2368 + $0xd0] sm:$0xff]
    %v2396 = vld [vmem:[%s2368 + $0xd8] sm:$0xff]
    %v2397 = vld [vmem:[%s2368 + $0xe0] sm:$0xff]
    %v2398 = vld [vmem:[%s2368 + $0xe8] sm:$0xff]
    %v2399 = vld [vmem:[%s2368 + $0xf0] sm:$0xff]
    %v2400 = vld [vmem:[%s2368 + $0xf8] sm:$0xff]
    %v2401 = vld [vmem:[%s2368 + $0x100] sm:$0xff]
    %v2402 = vld [vmem:[%s2368 + $0x108] sm:$0xff]
    %v2403 = vld [vmem:[%s2368 + $0x110] sm:$0xff]
    %v2404 = vld [vmem:[%s2368 + $0x118] sm:$0xff]
    %v2405 = vld [vmem:[%s2368 + $0x120] sm:$0xff]
    %v2406 = vld [vmem:[%s2368 + $0x128] sm:$0xff]
    %v2407 = vld [vmem:[%s2368 + $0x130] sm:$0xff]
    %v2408 = vld [vmem:[%s2368 + $0x138] sm:$0xff]
    %v2409 = vld [vmem:[%s2368 + $0x140] sm:$0xff]
    %v2410 = vld [vmem:[%s2368 + $0x148] sm:$0xff]
    %v2411 = vld [vmem:[%s2368 + $0x150] sm:$0xff]
    %v2412 = vld [vmem:[%s2368 + $0x158] sm:$0xff]
    %v2413 = vld [vmem:[%s2368 + $0x160] sm:$0xff]
    %v2414 = vld [vmem:[%s2368 + $0x168] sm:$0xff]
    %v2415 = vld [vmem:[%s2368 + $0x170] sm:$0xff]
    %v2416 = vld [vmem:[%s2368 + $0x178] sm:$0xff]
    %v2417 = vld [vmem:[%s2368 + $0x180] sm:$0xff]
    %v2418 = vld [vmem:[%s2368 + $0x188] sm:$0xff]
    %v2419 = vld [vmem:[%s2368 + $0x190] sm:$0xff]
    %v2420 = vld [vmem:[%s2368 + $0x198] sm:$0xff]
    %v2421 = vld [vmem:[%s2368 + $0x1a0] sm:$0xff]
    %v2422 = vld [vmem:[%s2368 + $0x1a8] sm:$0xff]
    %v2423 = vld [vmem:[%s2368 + $0x1b0] sm:$0xff]
    %v2424 = vld [vmem:[%s2368 + $0x1b8] sm:$0xff]
    %v2425 = vld [vmem:[%s2368 + $0x1c0] sm:$0xff]
    %v2426 = vld [vmem:[%s2368 + $0x1c8] sm:$0xff]
    %v2427 = vld [vmem:[%s2368 + $0x1d0] sm:$0xff]
    %v2428 = vld [vmem:[%s2368 + $0x1d8] sm:$0xff]
    %v2429 = vld [vmem:[%s2368 + $0x1e0] sm:$0xff]
    %v2430 = vld [vmem:[%s2368 + $0x1e8] sm:$0xff]
    %v2431 = vld [vmem:[%s2368 + $0x1f0] sm:$0xff]
    %v2432 = vld [vmem:[%s2368 + $0x1f8] sm:$0xff]
    %v2497 = vunpack.c.l.b16 %v2369
    %v2498 = vunpack.c.h.b16 %v2369
    %v2499 = vunpack.c.l.b16 %v2370
    %v2500 = vunpack.c.h.b16 %v2370
    %v2501 = vunpack.c.l.b16 %v2371
    %v2502 = vunpack.c.h.b16 %v2371
    %v2503 = vunpack.c.l.b16 %v2372
    %v2504 = vunpack.c.h.b16 %v2372
    %v2505 = vunpack.c.l.b16 %v2373
    %v2506 = vunpack.c.h.b16 %v2373
    %v2507 = vunpack.c.l.b16 %v2374
    %v2508 = vunpack.c.h.b16 %v2374
    %v2509 = vunpack.c.l.b16 %v2375
    %v2510 = vunpack.c.h.b16 %v2375
    %v2511 = vunpack.c.l.b16 %v2376
    %v2512 = vunpack.c.h.b16 %v2376
    %v2513 = vunpack.c.l.b16 %v2377
    %v2514 = vunpack.c.h.b16 %v2377
    %v2515 = vunpack.c.l.b16 %v2378
    %v2516 = vunpack.c.h.b16 %v2378
    %v2517 = vunpack.c.l.b16 %v2379
    %v2518 = vunpack.c.h.b16 %v2379
    %v2519 = vunpack.c.l.b16 %v2380
    %v2520 = vunpack.c.h.b16 %v2380
    %v2521 = vunpack.c.l.b16 %v2381
    %v2522 = vunpack.c.h.b16 %v2381
    %v2523 = vunpack.c.l.b16 %v2382
    %v2524 = vunpack.c.h.b16 %v2382
    %v2525 = vunpack.c.l.b16 %v2383
    %v2526 = vunpack.c.h.b16 %v2383
    %v2527 = vunpack.c.l.b16 %v2384
    %v2528 = vunpack.c.h.b16 %v2384
    %v2529 = vunpack.c.l.b16 %v2385
    %v2530 = vunpack.c.h.b16 %v2385
    %v2531 = vunpack.c.l.b16 %v2386
    %v2532 = vunpack.c.h.b16 %v2386
    %v2533 = vunpack.c.l.b16 %v2387
    %v2534 = vunpack.c.h.b16 %v2387
    %v2535 = vunpack.c.l.b16 %v2388
    %v2536 = vunpack.c.h.b16 %v2388
    %v2537 = vunpack.c.l.b16 %v2389
    %v2538 = vunpack.c.h.b16 %v2389
    %v2539 = vunpack.c.l.b16 %v2390
    %v2540 = vunpack.c.h.b16 %v2390
    %v2541 = vunpack.c.l.b16 %v2391
    %v2542 = vunpack.c.h.b16 %v2391
    %v2543 = vunpack.c.l.b16 %v2392
    %v2544 = vunpack.c.h.b16 %v2392
    %v2545 = vunpack.c.l.b16 %v2393
    %v2546 = vunpack.c.h.b16 %v2393
    %v2547 = vunpack.c.l.b16 %v2394
    %v2548 = vunpack.c.h.b16 %v2394
    %v2549 = vunpack.c.l.b16 %v2395
    %v2550 = vunpack.c.h.b16 %v2395
    %v2551 = vunpack.c.l.b16 %v2396
    %v2552 = vunpack.c.h.b16 %v2396
    %v2553 = vunpack.c.l.b16 %v2397
    %v2554 = vunpack.c.h.b16 %v2397
    %v2555 = vunpack.c.l.b16 %v2398
    %v2556 = vunpack.c.h.b16 %v2398
    %v2557 = vunpack.c.l.b16 %v2399
    %v2558 = vunpack.c.h.b16 %v2399
    %v2559 = vunpack.c.l.b16 %v2400
    %v2560 = vunpack.c.h.b16 %v2400
    %v2561 = vunpack.c.l.b16 %v2401
    %v2562 = vunpack.c.h.b16 %v2401
    %v2563 = vunpack.c.l.b16 %v2402
    %v2564 = vunpack.c.h.b16 %v2402
    %v2565 = vunpack.c.l.b16 %v2403
    %v2566 = vunpack.c.h.b16 %v2403
    %v2567 = vunpack.c.l.b16 %v2404
    %v2568 = vunpack.c.h.b16 %v2404
    %v2569 = vunpack.c.l.b16 %v2405
    %v2570 = vunpack.c.h.b16 %v2405
    %v2571 = vunpack.c.l.b16 %v2406
    %v2572 = vunpack.c.h.b16 %v2406
    %v2573 = vunpack.c.l.b16 %v2407
    %v2574 = vunpack.c.h.b16 %v2407
    %v2575 = vunpack.c.l.b16 %v2408
    %v2576 = vunpack.c.h.b16 %v2408
    %v2577 = vunpack.c.l.b16 %v2409
    %v2578 = vunpack.c.h.b16 %v2409
    %v2579 = vunpack.c.l.b16 %v2410
    %v2580 = vunpack.c.h.b16 %v2410
    %v2581 = vunpack.c.l.b16 %v2411
    %v2582 = vunpack.c.h.b16 %v2411
    %v2583 = vunpack.c.l.b16 %v2412
    %v2584 = vunpack.c.h.b16 %v2412
    %v2585 = vunpack.c.l.b16 %v2413
    %v2586 = vunpack.c.h.b16 %v2413
    %v2587 = vunpack.c.l.b16 %v2414
    %v2588 = vunpack.c.h.b16 %v2414
    %v2589 = vunpack.c.l.b16 %v2415
    %v2590 = vunpack.c.h.b16 %v2415
    %v2591 = vunpack.c.l.b16 %v2416
    %v2592 = vunpack.c.h.b16 %v2416
    %v2593 = vunpack.c.l.b16 %v2417
    %v2594 = vunpack.c.h.b16 %v2417
    %v2595 = vunpack.c.l.b16 %v2418
    %v2596 = vunpack.c.h.b16 %v2418
    %v2597 = vunpack.c.l.b16 %v2419
    %v2598 = vunpack.c.h.b16 %v2419
    %v2599 = vunpack.c.l.b16 %v2420
    %v2600 = vunpack.c.h.b16 %v2420
    %v2601 = vunpack.c.l.b16 %v2421
    %v2602 = vunpack.c.h.b16 %v2421
    %v2603 = vunpack.c.l.b16 %v2422
    %v2604 = vunpack.c.h.b16 %v2422
    %v2605 = vunpack.c.l.b16 %v2423
    %v2606 = vunpack.c.h.b16 %v2423
    %v2607 = vunpack.c.l.b16 %v2424
    %v2608 = vunpack.c.h.b16 %v2424
    %v2609 = vunpack.c.l.b16 %v2425
    %v2610 = vunpack.c.h.b16 %v2425
    %v2611 = vunpack.c.l.b16 %v2426
    %v2612 = vunpack.c.h.b16 %v2426
    %v2613 = vunpack.c.l.b16 %v2427
    %v2614 = vunpack.c.h.b16 %v2427
    %v2615 = vunpack.c.l.b16 %v2428
    %v2616 = vunpack.c.h.b16 %v2428
    %v2617 = vunpack.c.l.b16 %v2429
    %v2618 = vunpack.c.h.b16 %v2429
    %v2619 = vunpack.c.l.b16 %v2430
    %v2620 = vunpack.c.h.b16 %v2430
    %v2621 = vunpack.c.l.b16 %v2431
    %v2622 = vunpack.c.h.b16 %v2431
    %v2623 = vunpack.c.l.b16 %v2432
    %v2624 = vunpack.c.h.b16 %v2432
    %v2625 = vpack.c.b16 %v2501, %v2497
    %v2626 = vpack.c.b16 %v2502, %v2498
    %v2627 = vpack.c.b16 %v2503, %v2499
    %v2628 = vpack.c.b16 %v2504, %v2500
    %v2629 = vpack.c.b16 %v2509, %v2505
    %v2630 = vpack.c.b16 %v2510, %v2506
    %v2631 = vpack.c.b16 %v2511, %v2507
    %v2632 = vpack.c.b16 %v2512, %v2508
    %v2633 = vpack.c.b16 %v2517, %v2513
    %v2634 = vpack.c.b16 %v2518, %v2514
    %v2635 = vpack.c.b16 %v2519, %v2515
    %v2636 = vpack.c.b16 %v2520, %v2516
    %v2637 = vpack.c.b16 %v2525, %v2521
    %v2638 = vpack.c.b16 %v2526, %v2522
    %v2639 = vpack.c.b16 %v2527, %v2523
    %v2640 = vpack.c.b16 %v2528, %v2524
    %v2641 = vpack.c.b16 %v2533, %v2529
    %v2642 = vpack.c.b16 %v2534, %v2530
    %v2643 = vpack.c.b16 %v2535, %v2531
    %v2644 = vpack.c.b16 %v2536, %v2532
    %v2645 = vpack.c.b16 %v2541, %v2537
    %v2646 = vpack.c.b16 %v2542, %v2538
    %v2647 = vpack.c.b16 %v2543, %v2539
    %v2648 = vpack.c.b16 %v2544, %v2540
    %v2649 = vpack.c.b16 %v2549, %v2545
    %v2650 = vpack.c.b16 %v2550, %v2546
    %v2651 = vpack.c.b16 %v2551, %v2547
    %v2652 = vpack.c.b16 %v2552, %v2548
    %v2653 = vpack.c.b16 %v2557, %v2553
    %v2654 = vpack.c.b16 %v2558, %v2554
    %v2655 = vpack.c.b16 %v2559, %v2555
    %v2656 = vpack.c.b16 %v2560, %v2556
    %v2657 = vpack.c.b16 %v2565, %v2561
    %v2658 = vpack.c.b16 %v2566, %v2562
    %v2659 = vpack.c.b16 %v2567, %v2563
    %v2660 = vpack.c.b16 %v2568, %v2564
    %v2661 = vpack.c.b16 %v2573, %v2569
    %v2662 = vpack.c.b16 %v2574, %v2570
    %v2663 = vpack.c.b16 %v2575, %v2571
    %v2664 = vpack.c.b16 %v2576, %v2572
    %v2665 = vpack.c.b16 %v2581, %v2577
    %v2666 = vpack.c.b16 %v2582, %v2578
    %v2667 = vpack.c.b16 %v2583, %v2579
    %v2668 = vpack.c.b16 %v2584, %v2580
    %v2669 = vpack.c.b16 %v2589, %v2585
    %v2670 = vpack.c.b16 %v2590, %v2586
    %v2671 = vpack.c.b16 %v2591, %v2587
    %v2672 = vpack.c.b16 %v2592, %v2588
    %v2673 = vpack.c.b16 %v2597, %v2593
    %v2674 = vpack.c.b16 %v2598, %v2594
    %v2675 = vpack.c.b16 %v2599, %v2595
    %v2676 = vpack.c.b16 %v2600, %v2596
    %v2677 = vpack.c.b16 %v2605, %v2601
    %v2678 = vpack.c.b16 %v2606, %v2602
    %v2679 = vpack.c.b16 %v2607, %v2603
    %v2680 = vpack.c.b16 %v2608, %v2604
    %v2681 = vpack.c.b16 %v2613, %v2609
    %v2682 = vpack.c.b16 %v2614, %v2610
    %v2683 = vpack.c.b16 %v2615, %v2611
    %v2684 = vpack.c.b16 %v2616, %v2612
    %v2685 = vpack.c.b16 %v2621, %v2617
    %v2686 = vpack.c.b16 %v2622, %v2618
    %v2687 = vpack.c.b16 %v2623, %v2619
    %v2688 = vpack.c.b16 %v2624, %v2620
    %2753 = vmatprep.subr.bf16.mxu0 %v2654
    %2754 = vmatpush1.bf16.msra.mxu0 %v2653
    %2755 = vmatprep.subr.bf16.mxu0 %v2650
    %2756 = vmatpush1.bf16.msra.mxu0 %v2649
    %2757 = vmatprep.subr.bf16.mxu0 %v2646
    %2758 = vmatpush1.bf16.msra.mxu0 %v2645
    %2759 = vmatprep.subr.bf16.mxu0 %v2642
    %2760 = vmatpush1.bf16.msra.mxu0 %v2641
    %2761 = vmatprep.subr.bf16.mxu0 %v2638
    %2762 = vmatpush1.bf16.msra.mxu0 %v2637
    %2763 = vmatprep.subr.bf16.mxu0 %v2634
    %2764 = vmatpush1.bf16.msra.mxu0 %v2633
    %2765 = vmatprep.subr.bf16.mxu0 %v2630
    %2766 = vmatpush1.bf16.msra.mxu0 %v2629
    %2767 = vmatprep.subr.bf16.mxu0 %v2626
    %2768 = vmatpush1.bf16.msra.mxu0 %v2625
    %2769 = vmatprep.subr.bf16.mxu0 %v2686
    %2770 = vmatpush2.bf16.msra.mxu0 %v2685
    %2771 = vmatprep.subr.bf16.mxu0 %v2682
    %2772 = vmatpush2.bf16.msra.mxu0 %v2681
    %2773 = vmatprep.subr.bf16.mxu0 %v2678
    %2774 = vmatpush2.bf16.msra.mxu0 %v2677
    %2775 = vmatprep.subr.bf16.mxu0 %v2674
    %2776 = vmatpush2.bf16.msra.mxu0 %v2673
    %2777 = vmatprep.subr.bf16.mxu0 %v2670
    %2778 = vmatpush2.bf16.msra.mxu0 %v2669
    %2779 = vmatprep.subr.bf16.mxu0 %v2666
    %2780 = vmatpush2.bf16.msra.mxu0 %v2665
    %2781 = vmatprep.subr.bf16.mxu0 %v2662
    %2782 = vmatpush2.bf16.msra.mxu0 %v2661
    %2783 = vmatprep.subr.bf16.mxu0 %v2658
    %2784 = vmatpush2.bf16.msra.mxu0 %v2657
    %2785 = vmatprep.mubr.bf16.mxu0 0
    %2786 = vmatmul.mubr.bf16.gmra.mxu0 %v2031
    %v2787 = vpop.f32.mrf.mxu0
    %v2788 = vadd.f32 0.0, %v2787
    %v2789 = vpop.f32.mrf.mxu0
    %v2790 = vadd.f32 0.0, %v2789
    %v2791 = vpop.f32.mrf.mxu0
    %v2792 = vpop.f32.mrf.mxu0
    %2793 = vdwg.mxu0
    %2794 = vmatprep.subr.bf16.mxu0 %v2656
    %2795 = vmatpush1.bf16.msra.mxu0 %v2655
    %2796 = vmatprep.subr.bf16.mxu0 %v2652
    %2797 = vmatpush1.bf16.msra.mxu0 %v2651
    %2798 = vmatprep.subr.bf16.mxu0 %v2648
    %2799 = vmatpush1.bf16.msra.mxu0 %v2647
    %2800 = vmatprep.subr.bf16.mxu0 %v2644
    %2801 = vmatpush1.bf16.msra.mxu0 %v2643
    %2802 = vmatprep.subr.bf16.mxu0 %v2640
    %2803 = vmatpush1.bf16.msra.mxu0 %v2639
    %2804 = vmatprep.subr.bf16.mxu0 %v2636
    %2805 = vmatpush1.bf16.msra.mxu0 %v2635
    %2806 = vmatprep.subr.bf16.mxu0 %v2632
    %2807 = vmatpush1.bf16.msra.mxu0 %v2631
    %2808 = vmatprep.subr.bf16.mxu0 %v2628
    %2809 = vmatpush1.bf16.msra.mxu0 %v2627
    %2810 = vmatprep.subr.bf16.mxu0 %v2688
    %2811 = vmatpush2.bf16.msra.mxu0 %v2687
    %2812 = vmatprep.subr.bf16.mxu0 %v2684
    %2813 = vmatpush2.bf16.msra.mxu0 %v2683
    %2814 = vmatprep.subr.bf16.mxu0 %v2680
    %2815 = vmatpush2.bf16.msra.mxu0 %v2679
    %2816 = vmatprep.subr.bf16.mxu0 %v2676
    %2817 = vmatpush2.bf16.msra.mxu0 %v2675
    %2818 = vmatprep.subr.bf16.mxu0 %v2672
    %2819 = vmatpush2.bf16.msra.mxu0 %v2671
    %2820 = vmatprep.subr.bf16.mxu0 %v2668
    %2821 = vmatpush2.bf16.msra.mxu0 %v2667
    %2822 = vmatprep.subr.bf16.mxu0 %v2664
    %2823 = vmatpush2.bf16.msra.mxu0 %v2663
    %2824 = vmatprep.subr.bf16.mxu0 %v2660
    %2825 = vmatpush2.bf16.msra.mxu0 %v2659
    %2826 = vmatprep.mubr.bf16.mxu0 0
    %2827 = vmatmul.mubr.bf16.gmra.mxu0 %v2031
    %v2828 = vpop.f32.mrf.mxu0
    %v2829 = vadd.f32 0.0, %v2828
    %v2830 = vpop.f32.mrf.mxu0
    %v2831 = vadd.f32 0.0, %v2830
    %v2832 = vpop.f32.mrf.mxu0
    %v2833 = vpop.f32.mrf.mxu0
    %2834 = vdwg.mxu0
    %v2836 = vlaneseq
    %v2837 = vshrl.u32 %v2836, 7
    %v2838 = vsub.s32 0, %v2837
    %v2839 = vrot.slane %v2367, %v2838
    %v2840 = vlaneseq
    %v2841 = vshrl.u32 %v2840, 7
    %v2842 = vsub.s32 1, %v2841
    %v2843 = vrot.slane %v2367, %v2842
    %v2844 = vlaneseq
    %v2845 = vshrl.u32 %v2844, 7
    %v2846 = vsub.s32 2, %v2845
    %v2847 = vrot.slane %v2367, %v2846
    %v2848 = vlaneseq
    %v2849 = vshrl.u32 %v2848, 7
    %v2850 = vsub.s32 3, %v2849
    %v2851 = vrot.slane %v2367, %v2850
    %v2856 = vadd.f32 %v2839, %v2788
    %v2857 = vadd.f32 %v2843, %v2790
    %v2858 = vadd.f32 %v2847, %v2829
    %v2859 = vadd.f32 %v2851, %v2831
    %v2860 = vxor.u32 %v2856, 2147483648
    %v2861 = vmul.f32 %v2860, 1.442695
    %v2862 = vpow.pop %v2861
    %v2863 = vadd.f32 %v2862, 1.0
    %v2864 = vrcp.pop %v2863
    %v2865 = vmul.f32 1.0, %v2864
    %v2866 = vxor.u32 %v2857, 2147483648
    %v2867 = vmul.f32 %v2866, 1.442695
    %v2868 = vpow.pop %v2867
    %v2869 = vadd.f32 %v2868, 1.0
    %v2870 = vrcp.pop %v2869
    %v2871 = vmul.f32 1.0, %v2870
    %v2872 = vtanh.pop %v2858
    %v2873 = vxor.u32 %v2859, 2147483648
    %v2874 = vmul.f32 %v2873, 1.442695
    %v2875 = vpow.pop %v2874
    %v2876 = vadd.f32 %v2875, 1.0
    %v2877 = vrcp.pop %v2876
    %v2878 = vmul.f32 1.0, %v2877
    %v2879 = vmul.f32 %v2871, 0.0
    %v2880 = vmul.f32 %v2865, %v2872
    %v2881 = vadd.f32 %v2879, %v2880
    %v2882 = vtanh.pop %v2881
    %v2883 = vmul.f32 %v2878, %v2882
    %v2884 = vpack.c.bf16 %v2145, %v2145
    %v2885 = vpack.c.bf16 %v2255, %v2255
    %v2886 = vpack.c.bf16 %v2365, %v2365
    %v2887 = vpack.c.bf16 %v2883, %v2883
    %v2888 = vld [vmem:[#allocation2 + $0x80] sm:$0xff]
    %v2889 = vld [vmem:[#allocation2 + $0x88] sm:$0xff]
    %v2890 = vld [vmem:[#allocation2 + $0x90] sm:$0xff]
    %v2891 = vld [vmem:[#allocation2 + $0x98] sm:$0xff]
    %2892 = vmatprep.subr.bf16.mxu0 %v508
    %2893 = vmatpush1.bf16.msra.mxu0 %v507
    %2894 = vmatprep.subr.bf16.mxu0 %v504
    %2895 = vmatpush1.bf16.msra.mxu0 %v503
    %2896 = vmatprep.subr.bf16.mxu0 %v500
    %2897 = vmatpush1.bf16.msra.mxu0 %v499
    %2898 = vmatprep.subr.bf16.mxu0 %v496
    %2899 = vmatpush1.bf16.msra.mxu0 %v495
    %2900 = vmatprep.subr.bf16.mxu0 %v492
    %2901 = vmatpush1.bf16.msra.mxu0 %v491
    %2902 = vmatprep.subr.bf16.mxu0 %v488
    %2903 = vmatpush1.bf16.msra.mxu0 %v487
    %2904 = vmatprep.subr.bf16.mxu0 %v484
    %2905 = vmatpush1.bf16.msra.mxu0 %v483
    %2906 = vmatprep.subr.bf16.mxu0 %v480
    %2907 = vmatpush1.bf16.msra.mxu0 %v479
    %2908 = vmatprep.subr.bf16.mxu0 0
    %2909 = vmatpush2.bf16.msra.mxu0 0
    %2910 = vmatprep.subr.bf16.mxu0 0
    %2911 = vmatpush2.bf16.msra.mxu0 0
    %2912 = vmatprep.subr.bf16.mxu0 0
    %2913 = vmatpush2.bf16.msra.mxu0 0
    %2914 = vmatprep.subr.bf16.mxu0 0
    %2915 = vmatpush2.bf16.msra.mxu0 0
    %2916 = vmatprep.subr.bf16.mxu0 0
    %2917 = vmatpush2.bf16.msra.mxu0 0
    %2918 = vmatprep.subr.bf16.mxu0 0
    %2919 = vmatpush2.bf16.msra.mxu0 0
    %2920 = vmatprep.subr.bf16.mxu0 0
    %2921 = vmatpush2.bf16.msra.mxu0 0
    %2922 = vmatprep.subr.bf16.mxu0 0
    %2923 = vmatpush2.bf16.msra.mxu0 0
    %2924 = vmatprep.mubr.bf16.mxu0 0
    %2925 = vmatmul.mubr.bf16.gmra.mxu0 %v2884
    %v2926 = vpop.f32.mrf.mxu0
    %v2927 = vadd.f32 0.0, %v2926
    %v2928 = vpop.f32.mrf.mxu0
    %v2929 = vadd.f32 0.0, %v2928
    %v2930 = vpop.f32.mrf.mxu0
    %v2931 = vpop.f32.mrf.mxu0
    %2932 = vdwg.mxu0
    %2933 = vmatprep.subr.bf16.mxu0 %v510
    %2934 = vmatpush1.bf16.msra.mxu0 %v509
    %2935 = vmatprep.subr.bf16.mxu0 %v506
    %2936 = vmatpush1.bf16.msra.mxu0 %v505
    %2937 = vmatprep.subr.bf16.mxu0 %v502
    %2938 = vmatpush1.bf16.msra.mxu0 %v501
    %2939 = vmatprep.subr.bf16.mxu0 %v498
    %2940 = vmatpush1.bf16.msra.mxu0 %v497
    %2941 = vmatprep.subr.bf16.mxu0 %v494
    %2942 = vmatpush1.bf16.msra.mxu0 %v493
    %2943 = vmatprep.subr.bf16.mxu0 %v490
    %2944 = vmatpush1.bf16.msra.mxu0 %v489
    %2945 = vmatprep.subr.bf16.mxu0 %v486
    %2946 = vmatpush1.bf16.msra.mxu0 %v485
    %2947 = vmatprep.subr.bf16.mxu0 %v482
    %2948 = vmatpush1.bf16.msra.mxu0 %v481
    %2949 = vmatprep.subr.bf16.mxu0 0
    %2950 = vmatpush2.bf16.msra.mxu0 0
    %2951 = vmatprep.subr.bf16.mxu0 0
    %2952 = vmatpush2.bf16.msra.mxu0 0
    %2953 = vmatprep.subr.bf16.mxu0 0
    %2954 = vmatpush2.bf16.msra.mxu0 0
    %2955 = vmatprep.subr.bf16.mxu0 0
    %2956 = vmatpush2.bf16.msra.mxu0 0
    %2957 = vmatprep.subr.bf16.mxu0 0
    %2958 = vmatpush2.bf16.msra.mxu0 0
    %2959 = vmatprep.subr.bf16.mxu0 0
    %2960 = vmatpush2.bf16.msra.mxu0 0
    %2961 = vmatprep.subr.bf16.mxu0 0
    %2962 = vmatpush2.bf16.msra.mxu0 0
    %2963 = vmatprep.subr.bf16.mxu0 0
    %2964 = vmatpush2.bf16.msra.mxu0 0
    %2965 = vmatprep.mubr.bf16.mxu0 0
    %2966 = vmatmul.mubr.bf16.gmra.mxu0 %v2884
    %v2967 = vpop.f32.mrf.mxu0
    %v2968 = vadd.f32 0.0, %v2967
    %v2969 = vpop.f32.mrf.mxu0
    %v2970 = vadd.f32 0.0, %v2969
    %v2971 = vpop.f32.mrf.mxu0
    %v2972 = vpop.f32.mrf.mxu0
    %2973 = vdwg.mxu0
    %v2974 = vadd.f32 %v2888, %v2927
    %v2975 = vadd.f32 %v2889, %v2929
    %v2976 = vadd.f32 %v2890, %v2968
    %v2977 = vadd.f32 %v2891, %v2970
    %v2978 = vxor.u32 %v2974, 2147483648
    %v2979 = vmul.f32 %v2978, 1.442695
    %v2980 = vpow.pop %v2979
    %v2981 = vadd.f32 %v2980, 1.0
    %v2982 = vrcp.pop %v2981
    %v2983 = vmul.f32 1.0, %v2982
    %v2984 = vxor.u32 %v2975, 2147483648
    %v2985 = vmul.f32 %v2984, 1.442695
    %v2986 = vpow.pop %v2985
    %v2987 = vadd.f32 %v2986, 1.0
    %v2988 = vrcp.pop %v2987
    %v2989 = vmul.f32 1.0, %v2988
    %v2990 = vtanh.pop %v2976
    %v2991 = vxor.u32 %v2977, 2147483648
    %v2992 = vmul.f32 %v2991, 1.442695
    %v2993 = vpow.pop %v2992
    %v2994 = vadd.f32 %v2993, 1.0
    %v2995 = vrcp.pop %v2994
    %v2996 = vmul.f32 1.0, %v2995
    %v2997 = vmul.f32 %v2989, %v2143
    %v2998 = vmul.f32 %v2983, %v2990
    %v2999 = vadd.f32 %v2997, %v2998
    %v3000 = vtanh.pop %v2999
    %v3001 = vmul.f32 %v2996, %v3000
    %3002 = vmatprep.subr.bf16.mxu0 %v1055
    %3003 = vmatpush1.bf16.msra.mxu0 %v1054
    %3004 = vmatprep.subr.bf16.mxu0 %v1051
    %3005 = vmatpush1.bf16.msra.mxu0 %v1050
    %3006 = vmatprep.subr.bf16.mxu0 %v1047
    %3007 = vmatpush1.bf16.msra.mxu0 %v1046
    %3008 = vmatprep.subr.bf16.mxu0 %v1043
    %3009 = vmatpush1.bf16.msra.mxu0 %v1042
    %3010 = vmatprep.subr.bf16.mxu0 %v1039
    %3011 = vmatpush1.bf16.msra.mxu0 %v1038
    %3012 = vmatprep.subr.bf16.mxu0 %v1035
    %3013 = vmatpush1.bf16.msra.mxu0 %v1034
    %3014 = vmatprep.subr.bf16.mxu0 %v1031
    %3015 = vmatpush1.bf16.msra.mxu0 %v1030
    %3016 = vmatprep.subr.bf16.mxu0 %v1027
    %3017 = vmatpush1.bf16.msra.mxu0 %v1026
    %3018 = vmatprep.subr.bf16.mxu0 %v1087
    %3019 = vmatpush2.bf16.msra.mxu0 %v1086
    %3020 = vmatprep.subr.bf16.mxu0 %v1083
    %3021 = vmatpush2.bf16.msra.mxu0 %v1082
    %3022 = vmatprep.subr.bf16.mxu0 %v1079
    %3023 = vmatpush2.bf16.msra.mxu0 %v1078
    %3024 = vmatprep.subr.bf16.mxu0 %v1075
    %3025 = vmatpush2.bf16.msra.mxu0 %v1074
    %3026 = vmatprep.subr.bf16.mxu0 %v1071
    %3027 = vmatpush2.bf16.msra.mxu0 %v1070
    %3028 = vmatprep.subr.bf16.mxu0 %v1067
    %3029 = vmatpush2.bf16.msra.mxu0 %v1066
    %3030 = vmatprep.subr.bf16.mxu0 %v1063
    %3031 = vmatpush2.bf16.msra.mxu0 %v1062
    %3032 = vmatprep.subr.bf16.mxu0 %v1059
    %3033 = vmatpush2.bf16.msra.mxu0 %v1058
    %3034 = vmatprep.mubr.bf16.mxu0 %v2885
    %3035 = vmatmul.mubr.bf16.gmra.mxu0 %v2884
    %v3036 = vpop.f32.mrf.mxu0
    %v3037 = vadd.f32 0.0, %v3036
    %v3038 = vpop.f32.mrf.mxu0
    %v3039 = vadd.f32 0.0, %v3038
    %v3040 = vpop.f32.mrf.mxu0
    %v3041 = vpop.f32.mrf.mxu0
    %3042 = vdwg.mxu0
    %3043 = vmatprep.subr.bf16.mxu0 %v1057
    %3044 = vmatpush1.bf16.msra.mxu0 %v1056
    %3045 = vmatprep.subr.bf16.mxu0 %v1053
    %3046 = vmatpush1.bf16.msra.mxu0 %v1052
    %3047 = vmatprep.subr.bf16.mxu0 %v1049
    %3048 = vmatpush1.bf16.msra.mxu0 %v1048
    %3049 = vmatprep.subr.bf16.mxu0 %v1045
    %3050 = vmatpush1.bf16.msra.mxu0 %v1044
    %3051 = vmatprep.subr.bf16.mxu0 %v1041
    %3052 = vmatpush1.bf16.msra.mxu0 %v1040
    %3053 = vmatprep.subr.bf16.mxu0 %v1037
    %3054 = vmatpush1.bf16.msra.mxu0 %v1036
    %3055 = vmatprep.subr.bf16.mxu0 %v1033
    %3056 = vmatpush1.bf16.msra.mxu0 %v1032
    %3057 = vmatprep.subr.bf16.mxu0 %v1029
    %3058 = vmatpush1.bf16.msra.mxu0 %v1028
    %3059 = vmatprep.subr.bf16.mxu0 %v1089
    %3060 = vmatpush2.bf16.msra.mxu0 %v1088
    %3061 = vmatprep.subr.bf16.mxu0 %v1085
    %3062 = vmatpush2.bf16.msra.mxu0 %v1084
    %3063 = vmatprep.subr.bf16.mxu0 %v1081
    %3064 = vmatpush2.bf16.msra.mxu0 %v1080
    %3065 = vmatprep.subr.bf16.mxu0 %v1077
    %3066 = vmatpush2.bf16.msra.mxu0 %v1076
    %3067 = vmatprep.subr.bf16.mxu0 %v1073
    %3068 = vmatpush2.bf16.msra.mxu0 %v1072
    %3069 = vmatprep.subr.bf16.mxu0 %v1069
    %3070 = vmatpush2.bf16.msra.mxu0 %v1068
    %3071 = vmatprep.subr.bf16.mxu0 %v1065
    %3072 = vmatpush2.bf16.msra.mxu0 %v1064
    %3073 = vmatprep.subr.bf16.mxu0 %v1061
    %3074 = vmatpush2.bf16.msra.mxu0 %v1060
    %3075 = vmatprep.mubr.bf16.mxu0 %v2885
    %3076 = vmatmul.mubr.bf16.gmra.mxu0 %v2884
    %v3077 = vpop.f32.mrf.mxu0
    %v3078 = vadd.f32 0.0, %v3077
    %v3079 = vpop.f32.mrf.mxu0
    %v3080 = vadd.f32 0.0, %v3079
    %v3081 = vpop.f32.mrf.mxu0
    %v3082 = vpop.f32.mrf.mxu0
    %3083 = vdwg.mxu0
    %v3084 = vadd.f32 %v1240, %v3037
    %v3085 = vadd.f32 %v1244, %v3039
    %v3086 = vadd.f32 %v1248, %v3078
    %v3087 = vadd.f32 %v1252, %v3080
    %v3088 = vxor.u32 %v3084, 2147483648
    %v3089 = vmul.f32 %v3088, 1.442695
    %v3090 = vpow.pop %v3089
    %v3091 = vadd.f32 %v3090, 1.0
    %v3092 = vrcp.pop %v3091
    %v3093 = vmul.f32 1.0, %v3092
    %v3094 = vxor.u32 %v3085, 2147483648
    %v3095 = vmul.f32 %v3094, 1.442695
    %v3096 = vpow.pop %v3095
    %v3097 = vadd.f32 %v3096, 1.0
    %v3098 = vrcp.pop %v3097
    %v3099 = vmul.f32 1.0, %v3098
    %v3100 = vtanh.pop %v3086
    %v3101 = vxor.u32 %v3087, 2147483648
    %v3102 = vmul.f32 %v3101, 1.442695
    %v3103 = vpow.pop %v3102
    %v3104 = vadd.f32 %v3103, 1.0
    %v3105 = vrcp.pop %v3104
    %v3106 = vmul.f32 1.0, %v3105
    %v3107 = vmul.f32 %v3099, %v2253
    %v3108 = vmul.f32 %v3093, %v3100
    %v3109 = vadd.f32 %v3107, %v3108
    %v3110 = vtanh.pop %v3109
    %v3111 = vmul.f32 %v3106, %v3110
    %3112 = vmatprep.subr.bf16.mxu0 %v1799
    %3113 = vmatpush1.bf16.msra.mxu0 %v1798
    %3114 = vmatprep.subr.bf16.mxu0 %v1795
    %3115 = vmatpush1.bf16.msra.mxu0 %v1794
    %3116 = vmatprep.subr.bf16.mxu0 %v1791
    %3117 = vmatpush1.bf16.msra.mxu0 %v1790
    %3118 = vmatprep.subr.bf16.mxu0 %v1787
    %3119 = vmatpush1.bf16.msra.mxu0 %v1786
    %3120 = vmatprep.subr.bf16.mxu0 %v1783
    %3121 = vmatpush1.bf16.msra.mxu0 %v1782
    %3122 = vmatprep.subr.bf16.mxu0 %v1779
    %3123 = vmatpush1.bf16.msra.mxu0 %v1778
    %3124 = vmatprep.subr.bf16.mxu0 %v1775
    %3125 = vmatpush1.bf16.msra.mxu0 %v1774
    %3126 = vmatprep.subr.bf16.mxu0 %v1771
    %3127 = vmatpush1.bf16.msra.mxu0 %v1770
    %3128 = vmatprep.subr.bf16.mxu0 %v1831
    %3129 = vmatpush2.bf16.msra.mxu0 %v1830
    %3130 = vmatprep.subr.bf16.mxu0 %v1827
    %3131 = vmatpush2.bf16.msra.mxu0 %v1826
    %3132 = vmatprep.subr.bf16.mxu0 %v1823
    %3133 = vmatpush2.bf16.msra.mxu0 %v1822
    %3134 = vmatprep.subr.bf16.mxu0 %v1819
    %3135 = vmatpush2.bf16.msra.mxu0 %v1818
    %3136 = vmatprep.subr.bf16.mxu0 %v1815
    %3137 = vmatpush2.bf16.msra.mxu0 %v1814
    %3138 = vmatprep.subr.bf16.mxu0 %v1811
    %3139 = vmatpush2.bf16.msra.mxu0 %v1810
    %3140 = vmatprep.subr.bf16.mxu0 %v1807
    %3141 = vmatpush2.bf16.msra.mxu0 %v1806
    %3142 = vmatprep.subr.bf16.mxu0 %v1803
    %3143 = vmatpush2.bf16.msra.mxu0 %v1802
    %3144 = vmatprep.mubr.bf16.mxu0 %v2886
    %3145 = vmatmul.mubr.bf16.gmra.mxu0 %v2885
    %v3146 = vpop.f32.mrf.mxu0
    %v3147 = vadd.f32 0.0, %v3146
    %v3148 = vpop.f32.mrf.mxu0
    %v3149 = vadd.f32 0.0, %v3148
    %v3150 = vpop.f32.mrf.mxu0
    %v3151 = vpop.f32.mrf.mxu0
    %3152 = vdwg.mxu0
    %3153 = vmatprep.subr.bf16.mxu0 %v1801
    %3154 = vmatpush1.bf16.msra.mxu0 %v1800
    %3155 = vmatprep.subr.bf16.mxu0 %v1797
    %3156 = vmatpush1.bf16.msra.mxu0 %v1796
    %3157 = vmatprep.subr.bf16.mxu0 %v1793
    %3158 = vmatpush1.bf16.msra.mxu0 %v1792
    %3159 = vmatprep.subr.bf16.mxu0 %v1789
    %3160 = vmatpush1.bf16.msra.mxu0 %v1788
    %3161 = vmatprep.subr.bf16.mxu0 %v1785
    %3162 = vmatpush1.bf16.msra.mxu0 %v1784
    %3163 = vmatprep.subr.bf16.mxu0 %v1781
    %3164 = vmatpush1.bf16.msra.mxu0 %v1780
    %3165 = vmatprep.subr.bf16.mxu0 %v1777
    %3166 = vmatpush1.bf16.msra.mxu0 %v1776
    %3167 = vmatprep.subr.bf16.mxu0 %v1773
    %3168 = vmatpush1.bf16.msra.mxu0 %v1772
    %3169 = vmatprep.subr.bf16.mxu0 %v1833
    %3170 = vmatpush2.bf16.msra.mxu0 %v1832
    %3171 = vmatprep.subr.bf16.mxu0 %v1829
    %3172 = vmatpush2.bf16.msra.mxu0 %v1828
    %3173 = vmatprep.subr.bf16.mxu0 %v1825
    %3174 = vmatpush2.bf16.msra.mxu0 %v1824
    %3175 = vmatprep.subr.bf16.mxu0 %v1821
    %3176 = vmatpush2.bf16.msra.mxu0 %v1820
    %3177 = vmatprep.subr.bf16.mxu0 %v1817
    %3178 = vmatpush2.bf16.msra.mxu0 %v1816
    %3179 = vmatprep.subr.bf16.mxu0 %v1813
    %3180 = vmatpush2.bf16.msra.mxu0 %v1812
    %3181 = vmatprep.subr.bf16.mxu0 %v1809
    %3182 = vmatpush2.bf16.msra.mxu0 %v1808
    %3183 = vmatprep.subr.bf16.mxu0 %v1805
    %3184 = vmatpush2.bf16.msra.mxu0 %v1804
    %3185 = vmatprep.mubr.bf16.mxu0 %v2886
    %3186 = vmatmul.mubr.bf16.gmra.mxu0 %v2885
    %v3187 = vpop.f32.mrf.mxu0
    %v3188 = vadd.f32 0.0, %v3187
    %v3189 = vpop.f32.mrf.mxu0
    %v3190 = vadd.f32 0.0, %v3189
    %v3191 = vpop.f32.mrf.mxu0
    %v3192 = vpop.f32.mrf.mxu0
    %3193 = vdwg.mxu0
    %v3194 = vadd.f32 %v1984, %v3147
    %v3195 = vadd.f32 %v1988, %v3149
    %v3196 = vadd.f32 %v1992, %v3188
    %v3197 = vadd.f32 %v1996, %v3190
    %v3198 = vxor.u32 %v3194, 2147483648
    %v3199 = vmul.f32 %v3198, 1.442695
    %v3200 = vpow.pop %v3199
    %v3201 = vadd.f32 %v3200, 1.0
    %v3202 = vrcp.pop %v3201
    %v3203 = vmul.f32 1.0, %v3202
    %v3204 = vxor.u32 %v3195, 2147483648
    %v3205 = vmul.f32 %v3204, 1.442695
    %v3206 = vpow.pop %v3205
    %v3207 = vadd.f32 %v3206, 1.0
    %v3208 = vrcp.pop %v3207
    %v3209 = vmul.f32 1.0, %v3208
    %v3210 = vtanh.pop %v3196
    %v3211 = vxor.u32 %v3197, 2147483648
    %v3212 = vmul.f32 %v3211, 1.442695
    %v3213 = vpow.pop %v3212
    %v3214 = vadd.f32 %v3213, 1.0
    %v3215 = vrcp.pop %v3214
    %v3216 = vmul.f32 1.0, %v3215
    %v3217 = vmul.f32 %v3209, %v2363
    %v3218 = vmul.f32 %v3203, %v3210
    %v3219 = vadd.f32 %v3217, %v3218
    %v3220 = vtanh.pop %v3219
    %v3221 = vmul.f32 %v3216, %v3220
    %3222 = vmatprep.subr.bf16.mxu0 %v2654
    %3223 = vmatpush1.bf16.msra.mxu0 %v2653
    %3224 = vmatprep.subr.bf16.mxu0 %v2650
    %3225 = vmatpush1.bf16.msra.mxu0 %v2649
    %3226 = vmatprep.subr.bf16.mxu0 %v2646
    %3227 = vmatpush1.bf16.msra.mxu0 %v2645
    %3228 = vmatprep.subr.bf16.mxu0 %v2642
    %3229 = vmatpush1.bf16.msra.mxu0 %v2641
    %3230 = vmatprep.subr.bf16.mxu0 %v2638
    %3231 = vmatpush1.bf16.msra.mxu0 %v2637
    %3232 = vmatprep.subr.bf16.mxu0 %v2634
    %3233 = vmatpush1.bf16.msra.mxu0 %v2633
    %3234 = vmatprep.subr.bf16.mxu0 %v2630
    %3235 = vmatpush1.bf16.msra.mxu0 %v2629
    %3236 = vmatprep.subr.bf16.mxu0 %v2626
    %3237 = vmatpush1.bf16.msra.mxu0 %v2625
    %3238 = vmatprep.subr.bf16.mxu0 %v2686
    %3239 = vmatpush2.bf16.msra.mxu0 %v2685
    %3240 = vmatprep.subr.bf16.mxu0 %v2682
    %3241 = vmatpush2.bf16.msra.mxu0 %v2681
    %3242 = vmatprep.subr.bf16.mxu0 %v2678
    %3243 = vmatpush2.bf16.msra.mxu0 %v2677
    %3244 = vmatprep.subr.bf16.mxu0 %v2674
    %3245 = vmatpush2.bf16.msra.mxu0 %v2673
    %3246 = vmatprep.subr.bf16.mxu0 %v2670
    %3247 = vmatpush2.bf16.msra.mxu0 %v2669
    %3248 = vmatprep.subr.bf16.mxu0 %v2666
    %3249 = vmatpush2.bf16.msra.mxu0 %v2665
    %3250 = vmatprep.subr.bf16.mxu0 %v2662
    %3251 = vmatpush2.bf16.msra.mxu0 %v2661
    %3252 = vmatprep.subr.bf16.mxu0 %v2658
    %3253 = vmatpush2.bf16.msra.mxu0 %v2657
    %3254 = vmatprep.mubr.bf16.mxu0 %v2887
    %3255 = vmatmul.mubr.bf16.gmra.mxu0 %v2886
    %v3256 = vpop.f32.mrf.mxu0
    %v3257 = vadd.f32 0.0, %v3256
    %v3258 = vpop.f32.mrf.mxu0
    %v3259 = vadd.f32 0.0, %v3258
    %v3260 = vpop.f32.mrf.mxu0
    %v3261 = vpop.f32.mrf.mxu0
    %3262 = vdwg.mxu0
    %3263 = vmatprep.subr.bf16.mxu0 %v2656
    %3264 = vmatpush1.bf16.msra.mxu0 %v2655
    %3265 = vmatprep.subr.bf16.mxu0 %v2652
    %3266 = vmatpush1.bf16.msra.mxu0 %v2651
    %3267 = vmatprep.subr.bf16.mxu0 %v2648
    %3268 = vmatpush1.bf16.msra.mxu0 %v2647
    %3269 = vmatprep.subr.bf16.mxu0 %v2644
    %3270 = vmatpush1.bf16.msra.mxu0 %v2643
    %3271 = vmatprep.subr.bf16.mxu0 %v2640
    %3272 = vmatpush1.bf16.msra.mxu0 %v2639
    %3273 = vmatprep.subr.bf16.mxu0 %v2636
    %3274 = vmatpush1.bf16.msra.mxu0 %v2635
    %3275 = vmatprep.subr.bf16.mxu0 %v2632
    %3276 = vmatpush1.bf16.msra.mxu0 %v2631
    %3277 = vmatprep.subr.bf16.mxu0 %v2628
    %3278 = vmatpush1.bf16.msra.mxu0 %v2627
    %3279 = vmatprep.subr.bf16.mxu0 %v2688
    %3280 = vmatpush2.bf16.msra.mxu0 %v2687
    %3281 = vmatprep.subr.bf16.mxu0 %v2684
    %3282 = vmatpush2.bf16.msra.mxu0 %v2683
    %3283 = vmatprep.subr.bf16.mxu0 %v2680
    %3284 = vmatpush2.bf16.msra.mxu0 %v2679
    %3285 = vmatprep.subr.bf16.mxu0 %v2676
    %3286 = vmatpush2.bf16.msra.mxu0 %v2675
    %3287 = vmatprep.subr.bf16.mxu0 %v2672
    %3288 = vmatpush2.bf16.msra.mxu0 %v2671
    %3289 = vmatprep.subr.bf16.mxu0 %v2668
    %3290 = vmatpush2.bf16.msra.mxu0 %v2667
    %3291 = vmatprep.subr.bf16.mxu0 %v2664
    %3292 = vmatpush2.bf16.msra.mxu0 %v2663
    %3293 = vmatprep.subr.bf16.mxu0 %v2660
    %3294 = vmatpush2.bf16.msra.mxu0 %v2659
    %3295 = vmatprep.mubr.bf16.mxu0 %v2887
    %3296 = vmatmul.mubr.bf16.gmra.mxu0 %v2886
    %v3297 = vpop.f32.mrf.mxu0
    %v3298 = vadd.f32 0.0, %v3297
    %v3299 = vpop.f32.mrf.mxu0
    %v3300 = vadd.f32 0.0, %v3299
    %v3301 = vpop.f32.mrf.mxu0
    %v3302 = vpop.f32.mrf.mxu0
    %3303 = vdwg.mxu0
    %v3304 = vadd.f32 %v2839, %v3257
    %v3305 = vadd.f32 %v2843, %v3259
    %v3306 = vadd.f32 %v2847, %v3298
    %v3307 = vadd.f32 %v2851, %v3300
    %v3308 = vxor.u32 %v3304, 2147483648
    %v3309 = vmul.f32 %v3308, 1.442695
    %v3310 = vpow.pop %v3309
    %v3311 = vadd.f32 %v3310, 1.0
    %v3312 = vrcp.pop %v3311
    %v3313 = vmul.f32 1.0, %v3312
    %v3314 = vxor.u32 %v3305, 2147483648
    %v3315 = vmul.f32 %v3314, 1.442695
    %v3316 = vpow.pop %v3315
    %v3317 = vadd.f32 %v3316, 1.0
    %v3318 = vrcp.pop %v3317
    %v3319 = vmul.f32 1.0, %v3318
    %v3320 = vtanh.pop %v3306
    %v3321 = vxor.u32 %v3307, 2147483648
    %v3322 = vmul.f32 %v3321, 1.442695
    %v3323 = vpow.pop %v3322
    %v3324 = vadd.f32 %v3323, 1.0
    %v3325 = vrcp.pop %v3324
    %v3326 = vmul.f32 1.0, %v3325
    %v3327 = vmul.f32 %v3319, %v2881
    %v3328 = vmul.f32 %v3313, %v3320
    %v3329 = vadd.f32 %v3327, %v3328
    %v3330 = vtanh.pop %v3329
    %v3331 = vmul.f32 %v3326, %v3330
    %v3332 = vpack.c.bf16 %v3001, %v3001
    %v3333 = vpack.c.bf16 %v3111, %v3111
    %v3334 = vpack.c.bf16 %v3221, %v3221
    %v3335 = vpack.c.bf16 %v3331, %v3331
    %v3336 = vld [vmem:[#allocation2 + $0xa0] sm:$0xff]
    %v3337 = vld [vmem:[#allocation2 + $0xa8] sm:$0xff]
    %v3338 = vld [vmem:[#allocation2 + $0xb0] sm:$0xff]
    %v3339 = vld [vmem:[#allocation2 + $0xb8] sm:$0xff]
    %3340 = vmatprep.subr.bf16.mxu0 %v508
    %3341 = vmatpush1.bf16.msra.mxu0 %v507
    %3342 = vmatprep.subr.bf16.mxu0 %v504
    %3343 = vmatpush1.bf16.msra.mxu0 %v503
    %3344 = vmatprep.subr.bf16.mxu0 %v500
    %3345 = vmatpush1.bf16.msra.mxu0 %v499
    %3346 = vmatprep.subr.bf16.mxu0 %v496
    %3347 = vmatpush1.bf16.msra.mxu0 %v495
    %3348 = vmatprep.subr.bf16.mxu0 %v492
    %3349 = vmatpush1.bf16.msra.mxu0 %v491
    %3350 = vmatprep.subr.bf16.mxu0 %v488
    %3351 = vmatpush1.bf16.msra.mxu0 %v487
    %3352 = vmatprep.subr.bf16.mxu0 %v484
    %3353 = vmatpush1.bf16.msra.mxu0 %v483
    %3354 = vmatprep.subr.bf16.mxu0 %v480
    %3355 = vmatpush1.bf16.msra.mxu0 %v479
    %3356 = vmatprep.subr.bf16.mxu0 0
    %3357 = vmatpush2.bf16.msra.mxu0 0
    %3358 = vmatprep.subr.bf16.mxu0 0
    %3359 = vmatpush2.bf16.msra.mxu0 0
    %3360 = vmatprep.subr.bf16.mxu0 0
    %3361 = vmatpush2.bf16.msra.mxu0 0
    %3362 = vmatprep.subr.bf16.mxu0 0
    %3363 = vmatpush2.bf16.msra.mxu0 0
    %3364 = vmatprep.subr.bf16.mxu0 0
    %3365 = vmatpush2.bf16.msra.mxu0 0
    %3366 = vmatprep.subr.bf16.mxu0 0
    %3367 = vmatpush2.bf16.msra.mxu0 0
    %3368 = vmatprep.subr.bf16.mxu0 0
    %3369 = vmatpush2.bf16.msra.mxu0 0
    %3370 = vmatprep.subr.bf16.mxu0 0
    %3371 = vmatpush2.bf16.msra.mxu0 0
    %3372 = vmatprep.mubr.bf16.mxu0 0
    %3373 = vmatmul.mubr.bf16.gmra.mxu0 %v3332
    %v3374 = vpop.f32.mrf.mxu0
    %v3375 = vadd.f32 0.0, %v3374
    %v3376 = vpop.f32.mrf.mxu0
    %v3377 = vadd.f32 0.0, %v3376
    %v3378 = vpop.f32.mrf.mxu0
    %v3379 = vpop.f32.mrf.mxu0
    %3380 = vdwg.mxu0
    %3381 = vmatprep.subr.bf16.mxu0 %v510
    %3382 = vmatpush1.bf16.msra.mxu0 %v509
    %3383 = vmatprep.subr.bf16.mxu0 %v506
    %3384 = vmatpush1.bf16.msra.mxu0 %v505
    %3385 = vmatprep.subr.bf16.mxu0 %v502
    %3386 = vmatpush1.bf16.msra.mxu0 %v501
    %3387 = vmatprep.subr.bf16.mxu0 %v498
    %3388 = vmatpush1.bf16.msra.mxu0 %v497
    %3389 = vmatprep.subr.bf16.mxu0 %v494
    %3390 = vmatpush1.bf16.msra.mxu0 %v493
    %3391 = vmatprep.subr.bf16.mxu0 %v490
    %3392 = vmatpush1.bf16.msra.mxu0 %v489
    %3393 = vmatprep.subr.bf16.mxu0 %v486
    %3394 = vmatpush1.bf16.msra.mxu0 %v485
    %3395 = vmatprep.subr.bf16.mxu0 %v482
    %3396 = vmatpush1.bf16.msra.mxu0 %v481
    %3397 = vmatprep.subr.bf16.mxu0 0
    %3398 = vmatpush2.bf16.msra.mxu0 0
    %3399 = vmatprep.subr.bf16.mxu0 0
    %3400 = vmatpush2.bf16.msra.mxu0 0
    %3401 = vmatprep.subr.bf16.mxu0 0
    %3402 = vmatpush2.bf16.msra.mxu0 0
    %3403 = vmatprep.subr.bf16.mxu0 0
    %3404 = vmatpush2.bf16.msra.mxu0 0
    %3405 = vmatprep.subr.bf16.mxu0 0
    %3406 = vmatpush2.bf16.msra.mxu0 0
    %3407 = vmatprep.subr.bf16.mxu0 0
    %3408 = vmatpush2.bf16.msra.mxu0 0
    %3409 = vmatprep.subr.bf16.mxu0 0
    %3410 = vmatpush2.bf16.msra.mxu0 0
    %3411 = vmatprep.subr.bf16.mxu0 0
    %3412 = vmatpush2.bf16.msra.mxu0 0
    %3413 = vmatprep.mubr.bf16.mxu0 0
    %3414 = vmatmul.mubr.bf16.gmra.mxu0 %v3332
    %v3415 = vpop.f32.mrf.mxu0
    %v3416 = vadd.f32 0.0, %v3415
    %v3417 = vpop.f32.mrf.mxu0
    %v3418 = vadd.f32 0.0, %v3417
    %v3419 = vpop.f32.mrf.mxu0
    %v3420 = vpop.f32.mrf.mxu0
    %3421 = vdwg.mxu0
    %v3422 = vadd.f32 %v3336, %v3375
    %v3423 = vadd.f32 %v3337, %v3377
    %v3424 = vadd.f32 %v3338, %v3416
    %v3425 = vadd.f32 %v3339, %v3418
    %v3426 = vxor.u32 %v3422, 2147483648
    %v3427 = vmul.f32 %v3426, 1.442695
    %v3428 = vpow.pop %v3427
    %v3429 = vadd.f32 %v3428, 1.0
    %v3430 = vrcp.pop %v3429
    %v3431 = vmul.f32 1.0, %v3430
    %v3432 = vxor.u32 %v3423, 2147483648
    %v3433 = vmul.f32 %v3432, 1.442695
    %v3434 = vpow.pop %v3433
    %v3435 = vadd.f32 %v3434, 1.0
    %v3436 = vrcp.pop %v3435
    %v3437 = vmul.f32 1.0, %v3436
    %v3438 = vtanh.pop %v3424
    %v3439 = vxor.u32 %v3425, 2147483648
    %v3440 = vmul.f32 %v3439, 1.442695
    %v3441 = vpow.pop %v3440
    %v3442 = vadd.f32 %v3441, 1.0
    %v3443 = vrcp.pop %v3442
    %v3444 = vmul.f32 1.0, %v3443
    %v3445 = vmul.f32 %v3437, %v2999
    %v3446 = vmul.f32 %v3431, %v3438
    %v3447 = vadd.f32 %v3445, %v3446
    %v3448 = vtanh.pop %v3447
    %v3449 = vmul.f32 %v3444, %v3448
    %3450 = vmatprep.subr.bf16.mxu0 %v1055
    %3451 = vmatpush1.bf16.msra.mxu0 %v1054
    %3452 = vmatprep.subr.bf16.mxu0 %v1051
    %3453 = vmatpush1.bf16.msra.mxu0 %v1050
    %3454 = vmatprep.subr.bf16.mxu0 %v1047
    %3455 = vmatpush1.bf16.msra.mxu0 %v1046
    %3456 = vmatprep.subr.bf16.mxu0 %v1043
    %3457 = vmatpush1.bf16.msra.mxu0 %v1042
    %3458 = vmatprep.subr.bf16.mxu0 %v1039
    %3459 = vmatpush1.bf16.msra.mxu0 %v1038
    %3460 = vmatprep.subr.bf16.mxu0 %v1035
    %3461 = vmatpush1.bf16.msra.mxu0 %v1034
    %3462 = vmatprep.subr.bf16.mxu0 %v1031
    %3463 = vmatpush1.bf16.msra.mxu0 %v1030
    %3464 = vmatprep.subr.bf16.mxu0 %v1027
    %3465 = vmatpush1.bf16.msra.mxu0 %v1026
    %3466 = vmatprep.subr.bf16.mxu0 %v1087
    %3467 = vmatpush2.bf16.msra.mxu0 %v1086
    %3468 = vmatprep.subr.bf16.mxu0 %v1083
    %3469 = vmatpush2.bf16.msra.mxu0 %v1082
    %3470 = vmatprep.subr.bf16.mxu0 %v1079
    %3471 = vmatpush2.bf16.msra.mxu0 %v1078
    %3472 = vmatprep.subr.bf16.mxu0 %v1075
    %3473 = vmatpush2.bf16.msra.mxu0 %v1074
    %3474 = vmatprep.subr.bf16.mxu0 %v1071
    %3475 = vmatpush2.bf16.msra.mxu0 %v1070
    %3476 = vmatprep.subr.bf16.mxu0 %v1067
    %3477 = vmatpush2.bf16.msra.mxu0 %v1066
    %3478 = vmatprep.subr.bf16.mxu0 %v1063
    %3479 = vmatpush2.bf16.msra.mxu0 %v1062
    %3480 = vmatprep.subr.bf16.mxu0 %v1059
    %3481 = vmatpush2.bf16.msra.mxu0 %v1058
    %3482 = vmatprep.mubr.bf16.mxu0 %v3333
    %3483 = vmatmul.mubr.bf16.gmra.mxu0 %v3332
    %v3484 = vpop.f32.mrf.mxu0
    %v3485 = vadd.f32 0.0, %v3484
    %v3486 = vpop.f32.mrf.mxu0
    %v3487 = vadd.f32 0.0, %v3486
    %v3488 = vpop.f32.mrf.mxu0
    %v3489 = vpop.f32.mrf.mxu0
    %3490 = vdwg.mxu0
    %3491 = vmatprep.subr.bf16.mxu0 %v1057
    %3492 = vmatpush1.bf16.msra.mxu0 %v1056
    %3493 = vmatprep.subr.bf16.mxu0 %v1053
    %3494 = vmatpush1.bf16.msra.mxu0 %v1052
    %3495 = vmatprep.subr.bf16.mxu0 %v1049
    %3496 = vmatpush1.bf16.msra.mxu0 %v1048
    %3497 = vmatprep.subr.bf16.mxu0 %v1045
    %3498 = vmatpush1.bf16.msra.mxu0 %v1044
    %3499 = vmatprep.subr.bf16.mxu0 %v1041
    %3500 = vmatpush1.bf16.msra.mxu0 %v1040
    %3501 = vmatprep.subr.bf16.mxu0 %v1037
    %3502 = vmatpush1.bf16.msra.mxu0 %v1036
    %3503 = vmatprep.subr.bf16.mxu0 %v1033
    %3504 = vmatpush1.bf16.msra.mxu0 %v1032
    %3505 = vmatprep.subr.bf16.mxu0 %v1029
    %3506 = vmatpush1.bf16.msra.mxu0 %v1028
    %3507 = vmatprep.subr.bf16.mxu0 %v1089
    %3508 = vmatpush2.bf16.msra.mxu0 %v1088
    %3509 = vmatprep.subr.bf16.mxu0 %v1085
    %3510 = vmatpush2.bf16.msra.mxu0 %v1084
    %3511 = vmatprep.subr.bf16.mxu0 %v1081
    %3512 = vmatpush2.bf16.msra.mxu0 %v1080
    %3513 = vmatprep.subr.bf16.mxu0 %v1077
    %3514 = vmatpush2.bf16.msra.mxu0 %v1076
    %3515 = vmatprep.subr.bf16.mxu0 %v1073
    %3516 = vmatpush2.bf16.msra.mxu0 %v1072
    %3517 = vmatprep.subr.bf16.mxu0 %v1069
    %3518 = vmatpush2.bf16.msra.mxu0 %v1068
    %3519 = vmatprep.subr.bf16.mxu0 %v1065
    %3520 = vmatpush2.bf16.msra.mxu0 %v1064
    %3521 = vmatprep.subr.bf16.mxu0 %v1061
    %3522 = vmatpush2.bf16.msra.mxu0 %v1060
    %3523 = vmatprep.mubr.bf16.mxu0 %v3333
    %3524 = vmatmul.mubr.bf16.gmra.mxu0 %v3332
    %v3525 = vpop.f32.mrf.mxu0
    %v3526 = vadd.f32 0.0, %v3525
    %v3527 = vpop.f32.mrf.mxu0
    %v3528 = vadd.f32 0.0, %v3527
    %v3529 = vpop.f32.mrf.mxu0
    %v3530 = vpop.f32.mrf.mxu0
    %3531 = vdwg.mxu0
    %v3532 = vadd.f32 %v1240, %v3485
    %v3533 = vadd.f32 %v1244, %v3487
    %v3534 = vadd.f32 %v1248, %v3526
    %v3535 = vadd.f32 %v1252, %v3528
    %v3536 = vxor.u32 %v3532, 2147483648
    %v3537 = vmul.f32 %v3536, 1.442695
    %v3538 = vpow.pop %v3537
    %v3539 = vadd.f32 %v3538, 1.0
    %v3540 = vrcp.pop %v3539
    %v3541 = vmul.f32 1.0, %v3540
    %v3542 = vxor.u32 %v3533, 2147483648
    %v3543 = vmul.f32 %v3542, 1.442695
    %v3544 = vpow.pop %v3543
    %v3545 = vadd.f32 %v3544, 1.0
    %v3546 = vrcp.pop %v3545
    %v3547 = vmul.f32 1.0, %v3546
    %v3548 = vtanh.pop %v3534
    %v3549 = vxor.u32 %v3535, 2147483648
    %v3550 = vmul.f32 %v3549, 1.442695
    %v3551 = vpow.pop %v3550
    %v3552 = vadd.f32 %v3551, 1.0
    %v3553 = vrcp.pop %v3552
    %v3554 = vmul.f32 1.0, %v3553
    %v3555 = vmul.f32 %v3547, %v3109
    %v3556 = vmul.f32 %v3541, %v3548
    %v3557 = vadd.f32 %v3555, %v3556
    %v3558 = vtanh.pop %v3557
    %v3559 = vmul.f32 %v3554, %v3558
    %3560 = vmatprep.subr.bf16.mxu0 %v1799
    %3561 = vmatpush1.bf16.msra.mxu0 %v1798
    %3562 = vmatprep.subr.bf16.mxu0 %v1795
    %3563 = vmatpush1.bf16.msra.mxu0 %v1794
    %3564 = vmatprep.subr.bf16.mxu0 %v1791
    %3565 = vmatpush1.bf16.msra.mxu0 %v1790
    %3566 = vmatprep.subr.bf16.mxu0 %v1787
    %3567 = vmatpush1.bf16.msra.mxu0 %v1786
    %3568 = vmatprep.subr.bf16.mxu0 %v1783
    %3569 = vmatpush1.bf16.msra.mxu0 %v1782
    %3570 = vmatprep.subr.bf16.mxu0 %v1779
    %3571 = vmatpush1.bf16.msra.mxu0 %v1778
    %3572 = vmatprep.subr.bf16.mxu0 %v1775
    %3573 = vmatpush1.bf16.msra.mxu0 %v1774
    %3574 = vmatprep.subr.bf16.mxu0 %v1771
    %3575 = vmatpush1.bf16.msra.mxu0 %v1770
    %3576 = vmatprep.subr.bf16.mxu0 %v1831
    %3577 = vmatpush2.bf16.msra.mxu0 %v1830
    %3578 = vmatprep.subr.bf16.mxu0 %v1827
    %3579 = vmatpush2.bf16.msra.mxu0 %v1826
    %3580 = vmatprep.subr.bf16.mxu0 %v1823
    %3581 = vmatpush2.bf16.msra.mxu0 %v1822
    %3582 = vmatprep.subr.bf16.mxu0 %v1819
    %3583 = vmatpush2.bf16.msra.mxu0 %v1818
    %3584 = vmatprep.subr.bf16.mxu0 %v1815
    %3585 = vmatpush2.bf16.msra.mxu0 %v1814
    %3586 = vmatprep.subr.bf16.mxu0 %v1811
    %3587 = vmatpush2.bf16.msra.mxu0 %v1810
    %3588 = vmatprep.subr.bf16.mxu0 %v1807
    %3589 = vmatpush2.bf16.msra.mxu0 %v1806
    %3590 = vmatprep.subr.bf16.mxu0 %v1803
    %3591 = vmatpush2.bf16.msra.mxu0 %v1802
    %3592 = vmatprep.mubr.bf16.mxu0 %v3334
    %3593 = vmatmul.mubr.bf16.gmra.mxu0 %v3333
    %v3594 = vpop.f32.mrf.mxu0
    %v3595 = vadd.f32 0.0, %v3594
    %v3596 = vpop.f32.mrf.mxu0
    %v3597 = vadd.f32 0.0, %v3596
    %v3598 = vpop.f32.mrf.mxu0
    %v3599 = vpop.f32.mrf.mxu0
    %3600 = vdwg.mxu0
    %3601 = vmatprep.subr.bf16.mxu0 %v1801
    %3602 = vmatpush1.bf16.msra.mxu0 %v1800
    %3603 = vmatprep.subr.bf16.mxu0 %v1797
    %3604 = vmatpush1.bf16.msra.mxu0 %v1796
    %3605 = vmatprep.subr.bf16.mxu0 %v1793
    %3606 = vmatpush1.bf16.msra.mxu0 %v1792
    %3607 = vmatprep.subr.bf16.mxu0 %v1789
    %3608 = vmatpush1.bf16.msra.mxu0 %v1788
    %3609 = vmatprep.subr.bf16.mxu0 %v1785
    %3610 = vmatpush1.bf16.msra.mxu0 %v1784
    %3611 = vmatprep.subr.bf16.mxu0 %v1781
    %3612 = vmatpush1.bf16.msra.mxu0 %v1780
    %3613 = vmatprep.subr.bf16.mxu0 %v1777
    %3614 = vmatpush1.bf16.msra.mxu0 %v1776
    %3615 = vmatprep.subr.bf16.mxu0 %v1773
    %3616 = vmatpush1.bf16.msra.mxu0 %v1772
    %3617 = vmatprep.subr.bf16.mxu0 %v1833
    %3618 = vmatpush2.bf16.msra.mxu0 %v1832
    %3619 = vmatprep.subr.bf16.mxu0 %v1829
    %3620 = vmatpush2.bf16.msra.mxu0 %v1828
    %3621 = vmatprep.subr.bf16.mxu0 %v1825
    %3622 = vmatpush2.bf16.msra.mxu0 %v1824
    %3623 = vmatprep.subr.bf16.mxu0 %v1821
    %3624 = vmatpush2.bf16.msra.mxu0 %v1820
    %3625 = vmatprep.subr.bf16.mxu0 %v1817
    %3626 = vmatpush2.bf16.msra.mxu0 %v1816
    %3627 = vmatprep.subr.bf16.mxu0 %v1813
    %3628 = vmatpush2.bf16.msra.mxu0 %v1812
    %3629 = vmatprep.subr.bf16.mxu0 %v1809
    %3630 = vmatpush2.bf16.msra.mxu0 %v1808
    %3631 = vmatprep.subr.bf16.mxu0 %v1805
    %3632 = vmatpush2.bf16.msra.mxu0 %v1804
    %3633 = vmatprep.mubr.bf16.mxu0 %v3334
    %3634 = vmatmul.mubr.bf16.gmra.mxu0 %v3333
    %v3635 = vpop.f32.mrf.mxu0
    %v3636 = vadd.f32 0.0, %v3635
    %v3637 = vpop.f32.mrf.mxu0
    %v3638 = vadd.f32 0.0, %v3637
    %v3639 = vpop.f32.mrf.mxu0
    %v3640 = vpop.f32.mrf.mxu0
    %3641 = vdwg.mxu0
    %v3642 = vadd.f32 %v1984, %v3595
    %v3643 = vadd.f32 %v1988, %v3597
    %v3644 = vadd.f32 %v1992, %v3636
    %v3645 = vadd.f32 %v1996, %v3638
    %v3646 = vxor.u32 %v3642, 2147483648
    %v3647 = vmul.f32 %v3646, 1.442695
    %v3648 = vpow.pop %v3647
    %v3649 = vadd.f32 %v3648, 1.0
    %v3650 = vrcp.pop %v3649
    %v3651 = vmul.f32 1.0, %v3650
    %v3652 = vxor.u32 %v3643, 2147483648
    %v3653 = vmul.f32 %v3652, 1.442695
    %v3654 = vpow.pop %v3653
    %v3655 = vadd.f32 %v3654, 1.0
    %v3656 = vrcp.pop %v3655
    %v3657 = vmul.f32 1.0, %v3656
    %v3658 = vtanh.pop %v3644
    %v3659 = vxor.u32 %v3645, 2147483648
    %v3660 = vmul.f32 %v3659, 1.442695
    %v3661 = vpow.pop %v3660
    %v3662 = vadd.f32 %v3661, 1.0
    %v3663 = vrcp.pop %v3662
    %v3664 = vmul.f32 1.0, %v3663
    %v3665 = vmul.f32 %v3657, %v3219
    %v3666 = vmul.f32 %v3651, %v3658
    %v3667 = vadd.f32 %v3665, %v3666
    %v3668 = vtanh.pop %v3667
    %v3669 = vmul.f32 %v3664, %v3668
    %3670 = vmatprep.subr.bf16.mxu0 %v2654
    %3671 = vmatpush1.bf16.msra.mxu0 %v2653
    %3672 = vmatprep.subr.bf16.mxu0 %v2650
    %3673 = vmatpush1.bf16.msra.mxu0 %v2649
    %3674 = vmatprep.subr.bf16.mxu0 %v2646
    %3675 = vmatpush1.bf16.msra.mxu0 %v2645
    %3676 = vmatprep.subr.bf16.mxu0 %v2642
    %3677 = vmatpush1.bf16.msra.mxu0 %v2641
    %3678 = vmatprep.subr.bf16.mxu0 %v2638
    %3679 = vmatpush1.bf16.msra.mxu0 %v2637
    %3680 = vmatprep.subr.bf16.mxu0 %v2634
    %3681 = vmatpush1.bf16.msra.mxu0 %v2633
    %3682 = vmatprep.subr.bf16.mxu0 %v2630
    %3683 = vmatpush1.bf16.msra.mxu0 %v2629
    %3684 = vmatprep.subr.bf16.mxu0 %v2626
    %3685 = vmatpush1.bf16.msra.mxu0 %v2625
    %3686 = vmatprep.subr.bf16.mxu0 %v2686
    %3687 = vmatpush2.bf16.msra.mxu0 %v2685
    %3688 = vmatprep.subr.bf16.mxu0 %v2682
    %3689 = vmatpush2.bf16.msra.mxu0 %v2681
    %3690 = vmatprep.subr.bf16.mxu0 %v2678
    %3691 = vmatpush2.bf16.msra.mxu0 %v2677
    %3692 = vmatprep.subr.bf16.mxu0 %v2674
    %3693 = vmatpush2.bf16.msra.mxu0 %v2673
    %3694 = vmatprep.subr.bf16.mxu0 %v2670
    %3695 = vmatpush2.bf16.msra.mxu0 %v2669
    %3696 = vmatprep.subr.bf16.mxu0 %v2666
    %3697 = vmatpush2.bf16.msra.mxu0 %v2665
    %3698 = vmatprep.subr.bf16.mxu0 %v2662
    %3699 = vmatpush2.bf16.msra.mxu0 %v2661
    %3700 = vmatprep.subr.bf16.mxu0 %v2658
    %3701 = vmatpush2.bf16.msra.mxu0 %v2657
    %3702 = vmatprep.mubr.bf16.mxu0 %v3335
    %3703 = vmatmul.mubr.bf16.gmra.mxu0 %v3334
    %v3704 = vpop.f32.mrf.mxu0
    %v3705 = vadd.f32 0.0, %v3704
    %v3706 = vpop.f32.mrf.mxu0
    %v3707 = vadd.f32 0.0, %v3706
    %v3708 = vpop.f32.mrf.mxu0
    %v3709 = vpop.f32.mrf.mxu0
    %3710 = vdwg.mxu0
    %3711 = vmatprep.subr.bf16.mxu0 %v2656
    %3712 = vmatpush1.bf16.msra.mxu0 %v2655
    %3713 = vmatprep.subr.bf16.mxu0 %v2652
    %3714 = vmatpush1.bf16.msra.mxu0 %v2651
    %3715 = vmatprep.subr.bf16.mxu0 %v2648
    %3716 = vmatpush1.bf16.msra.mxu0 %v2647
    %3717 = vmatprep.subr.bf16.mxu0 %v2644
    %3718 = vmatpush1.bf16.msra.mxu0 %v2643
    %3719 = vmatprep.subr.bf16.mxu0 %v2640
    %3720 = vmatpush1.bf16.msra.mxu0 %v2639
    %3721 = vmatprep.subr.bf16.mxu0 %v2636
    %3722 = vmatpush1.bf16.msra.mxu0 %v2635
    %3723 = vmatprep.subr.bf16.mxu0 %v2632
    %3724 = vmatpush1.bf16.msra.mxu0 %v2631
    %3725 = vmatprep.subr.bf16.mxu0 %v2628
    %3726 = vmatpush1.bf16.msra.mxu0 %v2627
    %3727 = vmatprep.subr.bf16.mxu0 %v2688
    %3728 = vmatpush2.bf16.msra.mxu0 %v2687
    %3729 = vmatprep.subr.bf16.mxu0 %v2684
    %3730 = vmatpush2.bf16.msra.mxu0 %v2683
    %3731 = vmatprep.subr.bf16.mxu0 %v2680
    %3732 = vmatpush2.bf16.msra.mxu0 %v2679
    %3733 = vmatprep.subr.bf16.mxu0 %v2676
    %3734 = vmatpush2.bf16.msra.mxu0 %v2675
    %3735 = vmatprep.subr.bf16.mxu0 %v2672
    %3736 = vmatpush2.bf16.msra.mxu0 %v2671
    %3737 = vmatprep.subr.bf16.mxu0 %v2668
    %3738 = vmatpush2.bf16.msra.mxu0 %v2667
    %3739 = vmatprep.subr.bf16.mxu0 %v2664
    %3740 = vmatpush2.bf16.msra.mxu0 %v2663
    %3741 = vmatprep.subr.bf16.mxu0 %v2660
    %3742 = vmatpush2.bf16.msra.mxu0 %v2659
    %3743 = vmatprep.mubr.bf16.mxu0 %v3335
    %3744 = vmatmul.mubr.bf16.gmra.mxu0 %v3334
    %v3745 = vpop.f32.mrf.mxu0
    %v3746 = vadd.f32 0.0, %v3745
    %v3747 = vpop.f32.mrf.mxu0
    %v3748 = vadd.f32 0.0, %v3747
    %v3749 = vpop.f32.mrf.mxu0
    %v3750 = vpop.f32.mrf.mxu0
    %3751 = vdwg.mxu0
    %v3752 = vadd.f32 %v2839, %v3705
    %v3753 = vadd.f32 %v2843, %v3707
    %v3754 = vadd.f32 %v2847, %v3746
    %v3755 = vadd.f32 %v2851, %v3748
    %v3756 = vxor.u32 %v3752, 2147483648
    %v3757 = vmul.f32 %v3756, 1.442695
    %v3758 = vpow.pop %v3757
    %v3759 = vadd.f32 %v3758, 1.0
    %v3760 = vrcp.pop %v3759
    %v3761 = vmul.f32 1.0, %v3760
    %v3762 = vxor.u32 %v3753, 2147483648
    %v3763 = vmul.f32 %v3762, 1.442695
    %v3764 = vpow.pop %v3763
    %v3765 = vadd.f32 %v3764, 1.0
    %v3766 = vrcp.pop %v3765
    %v3767 = vmul.f32 1.0, %v3766
    %v3768 = vtanh.pop %v3754
    %v3769 = vxor.u32 %v3755, 2147483648
    %v3770 = vmul.f32 %v3769, 1.442695
    %v3771 = vpow.pop %v3770
    %v3772 = vadd.f32 %v3771, 1.0
    %v3773 = vrcp.pop %v3772
    %v3774 = vmul.f32 1.0, %v3773
    %v3775 = vmul.f32 %v3767, %v3329
    %v3776 = vmul.f32 %v3761, %v3768
    %v3777 = vadd.f32 %v3775, %v3776
    %v3778 = vtanh.pop %v3777
    %v3779 = vmul.f32 %v3774, %v3778
    %v3780 = vpack.c.bf16 %v3449, %v3449
    %v3781 = vpack.c.bf16 %v3559, %v3559
    %v3782 = vpack.c.bf16 %v3669, %v3669
    %v3783 = vpack.c.bf16 %v3779, %v3779
    %v3784 = vld [vmem:[#allocation2 + $0xc0] sm:$0xff]
    %v3785 = vld [vmem:[#allocation2 + $0xc8] sm:$0xff]
    %v3786 = vld [vmem:[#allocation2 + $0xd0] sm:$0xff]
    %v3787 = vld [vmem:[#allocation2 + $0xd8] sm:$0xff]
    %3788 = vmatprep.subr.bf16.mxu0 %v508
    %3789 = vmatpush1.bf16.msra.mxu0 %v507
    %3790 = vmatprep.subr.bf16.mxu0 %v504
    %3791 = vmatpush1.bf16.msra.mxu0 %v503
    %3792 = vmatprep.subr.bf16.mxu0 %v500
    %3793 = vmatpush1.bf16.msra.mxu0 %v499
    %3794 = vmatprep.subr.bf16.mxu0 %v496
    %3795 = vmatpush1.bf16.msra.mxu0 %v495
    %3796 = vmatprep.subr.bf16.mxu0 %v492
    %3797 = vmatpush1.bf16.msra.mxu0 %v491
    %3798 = vmatprep.subr.bf16.mxu0 %v488
    %3799 = vmatpush1.bf16.msra.mxu0 %v487
    %3800 = vmatprep.subr.bf16.mxu0 %v484
    %3801 = vmatpush1.bf16.msra.mxu0 %v483
    %3802 = vmatprep.subr.bf16.mxu0 %v480
    %3803 = vmatpush1.bf16.msra.mxu0 %v479
    %3804 = vmatprep.subr.bf16.mxu0 0
    %3805 = vmatpush2.bf16.msra.mxu0 0
    %3806 = vmatprep.subr.bf16.mxu0 0
    %3807 = vmatpush2.bf16.msra.mxu0 0
    %3808 = vmatprep.subr.bf16.mxu0 0
    %3809 = vmatpush2.bf16.msra.mxu0 0
    %3810 = vmatprep.subr.bf16.mxu0 0
    %3811 = vmatpush2.bf16.msra.mxu0 0
    %3812 = vmatprep.subr.bf16.mxu0 0
    %3813 = vmatpush2.bf16.msra.mxu0 0
    %3814 = vmatprep.subr.bf16.mxu0 0
    %3815 = vmatpush2.bf16.msra.mxu0 0
    %3816 = vmatprep.subr.bf16.mxu0 0
    %3817 = vmatpush2.bf16.msra.mxu0 0
    %3818 = vmatprep.subr.bf16.mxu0 0
    %3819 = vmatpush2.bf16.msra.mxu0 0
    %3820 = vmatprep.mubr.bf16.mxu0 0
    %3821 = vmatmul.mubr.bf16.gmra.mxu0 %v3780
    %v3822 = vpop.f32.mrf.mxu0
    %v3823 = vadd.f32 0.0, %v3822
    %v3824 = vpop.f32.mrf.mxu0
    %v3825 = vadd.f32 0.0, %v3824
    %v3826 = vpop.f32.mrf.mxu0
    %v3827 = vpop.f32.mrf.mxu0
    %3828 = vdwg.mxu0
    %3829 = vmatprep.subr.bf16.mxu0 %v510
    %3830 = vmatpush1.bf16.msra.mxu0 %v509
    %3831 = vmatprep.subr.bf16.mxu0 %v506
    %3832 = vmatpush1.bf16.msra.mxu0 %v505
    %3833 = vmatprep.subr.bf16.mxu0 %v502
    %3834 = vmatpush1.bf16.msra.mxu0 %v501
    %3835 = vmatprep.subr.bf16.mxu0 %v498
    %3836 = vmatpush1.bf16.msra.mxu0 %v497
    %3837 = vmatprep.subr.bf16.mxu0 %v494
    %3838 = vmatpush1.bf16.msra.mxu0 %v493
    %3839 = vmatprep.subr.bf16.mxu0 %v490
    %3840 = vmatpush1.bf16.msra.mxu0 %v489
    %3841 = vmatprep.subr.bf16.mxu0 %v486
    %3842 = vmatpush1.bf16.msra.mxu0 %v485
    %3843 = vmatprep.subr.bf16.mxu0 %v482
    %3844 = vmatpush1.bf16.msra.mxu0 %v481
    %3845 = vmatprep.subr.bf16.mxu0 0
    %3846 = vmatpush2.bf16.msra.mxu0 0
    %3847 = vmatprep.subr.bf16.mxu0 0
    %3848 = vmatpush2.bf16.msra.mxu0 0
    %3849 = vmatprep.subr.bf16.mxu0 0
    %3850 = vmatpush2.bf16.msra.mxu0 0
    %3851 = vmatprep.subr.bf16.mxu0 0
    %3852 = vmatpush2.bf16.msra.mxu0 0
    %3853 = vmatprep.subr.bf16.mxu0 0
    %3854 = vmatpush2.bf16.msra.mxu0 0
    %3855 = vmatprep.subr.bf16.mxu0 0
    %3856 = vmatpush2.bf16.msra.mxu0 0
    %3857 = vmatprep.subr.bf16.mxu0 0
    %3858 = vmatpush2.bf16.msra.mxu0 0
    %3859 = vmatprep.subr.bf16.mxu0 0
    %3860 = vmatpush2.bf16.msra.mxu0 0
    %3861 = vmatprep.mubr.bf16.mxu0 0
    %3862 = vmatmul.mubr.bf16.gmra.mxu0 %v3780
    %v3863 = vpop.f32.mrf.mxu0
    %v3864 = vadd.f32 0.0, %v3863
    %v3865 = vpop.f32.mrf.mxu0
    %v3866 = vadd.f32 0.0, %v3865
    %v3867 = vpop.f32.mrf.mxu0
    %v3868 = vpop.f32.mrf.mxu0
    %3869 = vdwg.mxu0
    %v3870 = vadd.f32 %v3784, %v3823
    %v3871 = vadd.f32 %v3785, %v3825
    %v3872 = vadd.f32 %v3786, %v3864
    %v3873 = vadd.f32 %v3787, %v3866
    %v3874 = vxor.u32 %v3870, 2147483648
    %v3875 = vmul.f32 %v3874, 1.442695
    %v3876 = vpow.pop %v3875
    %v3877 = vadd.f32 %v3876, 1.0
    %v3878 = vrcp.pop %v3877
    %v3879 = vmul.f32 1.0, %v3878
    %v3880 = vxor.u32 %v3871, 2147483648
    %v3881 = vmul.f32 %v3880, 1.442695
    %v3882 = vpow.pop %v3881
    %v3883 = vadd.f32 %v3882, 1.0
    %v3884 = vrcp.pop %v3883
    %v3885 = vmul.f32 1.0, %v3884
    %v3886 = vtanh.pop %v3872
    %v3887 = vxor.u32 %v3873, 2147483648
    %v3888 = vmul.f32 %v3887, 1.442695
    %v3889 = vpow.pop %v3888
    %v3890 = vadd.f32 %v3889, 1.0
    %v3891 = vrcp.pop %v3890
    %v3892 = vmul.f32 1.0, %v3891
    %v3893 = vmul.f32 %v3885, %v3447
    %v3894 = vmul.f32 %v3879, %v3886
    %v3895 = vadd.f32 %v3893, %v3894
    %v3896 = vtanh.pop %v3895
    %v3897 = vmul.f32 %v3892, %v3896
    %3898 = vmatprep.subr.bf16.mxu0 %v1055
    %3899 = vmatpush1.bf16.msra.mxu0 %v1054
    %3900 = vmatprep.subr.bf16.mxu0 %v1051
    %3901 = vmatpush1.bf16.msra.mxu0 %v1050
    %3902 = vmatprep.subr.bf16.mxu0 %v1047
    %3903 = vmatpush1.bf16.msra.mxu0 %v1046
    %3904 = vmatprep.subr.bf16.mxu0 %v1043
    %3905 = vmatpush1.bf16.msra.mxu0 %v1042
    %3906 = vmatprep.subr.bf16.mxu0 %v1039
    %3907 = vmatpush1.bf16.msra.mxu0 %v1038
    %3908 = vmatprep.subr.bf16.mxu0 %v1035
    %3909 = vmatpush1.bf16.msra.mxu0 %v1034
    %3910 = vmatprep.subr.bf16.mxu0 %v1031
    %3911 = vmatpush1.bf16.msra.mxu0 %v1030
    %3912 = vmatprep.subr.bf16.mxu0 %v1027
    %3913 = vmatpush1.bf16.msra.mxu0 %v1026
    %3914 = vmatprep.subr.bf16.mxu0 %v1087
    %3915 = vmatpush2.bf16.msra.mxu0 %v1086
    %3916 = vmatprep.subr.bf16.mxu0 %v1083
    %3917 = vmatpush2.bf16.msra.mxu0 %v1082
    %3918 = vmatprep.subr.bf16.mxu0 %v1079
    %3919 = vmatpush2.bf16.msra.mxu0 %v1078
    %3920 = vmatprep.subr.bf16.mxu0 %v1075
    %3921 = vmatpush2.bf16.msra.mxu0 %v1074
    %3922 = vmatprep.subr.bf16.mxu0 %v1071
    %3923 = vmatpush2.bf16.msra.mxu0 %v1070
    %3924 = vmatprep.subr.bf16.mxu0 %v1067
    %3925 = vmatpush2.bf16.msra.mxu0 %v1066
    %3926 = vmatprep.subr.bf16.mxu0 %v1063
    %3927 = vmatpush2.bf16.msra.mxu0 %v1062
    %3928 = vmatprep.subr.bf16.mxu0 %v1059
    %3929 = vmatpush2.bf16.msra.mxu0 %v1058
    %3930 = vmatprep.mubr.bf16.mxu0 %v3781
    %3931 = vmatmul.mubr.bf16.gmra.mxu0 %v3780
    %v3932 = vpop.f32.mrf.mxu0
    %v3933 = vadd.f32 0.0, %v3932
    %v3934 = vpop.f32.mrf.mxu0
    %v3935 = vadd.f32 0.0, %v3934
    %v3936 = vpop.f32.mrf.mxu0
    %v3937 = vpop.f32.mrf.mxu0
    %3938 = vdwg.mxu0
    %3939 = vmatprep.subr.bf16.mxu0 %v1057
    %3940 = vmatpush1.bf16.msra.mxu0 %v1056
    %3941 = vmatprep.subr.bf16.mxu0 %v1053
    %3942 = vmatpush1.bf16.msra.mxu0 %v1052
    %3943 = vmatprep.subr.bf16.mxu0 %v1049
    %3944 = vmatpush1.bf16.msra.mxu0 %v1048
    %3945 = vmatprep.subr.bf16.mxu0 %v1045
    %3946 = vmatpush1.bf16.msra.mxu0 %v1044
    %3947 = vmatprep.subr.bf16.mxu0 %v1041
    %3948 = vmatpush1.bf16.msra.mxu0 %v1040
    %3949 = vmatprep.subr.bf16.mxu0 %v1037
    %3950 = vmatpush1.bf16.msra.mxu0 %v1036
    %3951 = vmatprep.subr.bf16.mxu0 %v1033
    %3952 = vmatpush1.bf16.msra.mxu0 %v1032
    %3953 = vmatprep.subr.bf16.mxu0 %v1029
    %3954 = vmatpush1.bf16.msra.mxu0 %v1028
    %3955 = vmatprep.subr.bf16.mxu0 %v1089
    %3956 = vmatpush2.bf16.msra.mxu0 %v1088
    %3957 = vmatprep.subr.bf16.mxu0 %v1085
    %3958 = vmatpush2.bf16.msra.mxu0 %v1084
    %3959 = vmatprep.subr.bf16.mxu0 %v1081
    %3960 = vmatpush2.bf16.msra.mxu0 %v1080
    %3961 = vmatprep.subr.bf16.mxu0 %v1077
    %3962 = vmatpush2.bf16.msra.mxu0 %v1076
    %3963 = vmatprep.subr.bf16.mxu0 %v1073
    %3964 = vmatpush2.bf16.msra.mxu0 %v1072
    %3965 = vmatprep.subr.bf16.mxu0 %v1069
    %3966 = vmatpush2.bf16.msra.mxu0 %v1068
    %3967 = vmatprep.subr.bf16.mxu0 %v1065
    %3968 = vmatpush2.bf16.msra.mxu0 %v1064
    %3969 = vmatprep.subr.bf16.mxu0 %v1061
    %3970 = vmatpush2.bf16.msra.mxu0 %v1060
    %3971 = vmatprep.mubr.bf16.mxu0 %v3781
    %3972 = vmatmul.mubr.bf16.gmra.mxu0 %v3780
    %v3973 = vpop.f32.mrf.mxu0
    %v3974 = vadd.f32 0.0, %v3973
    %v3975 = vpop.f32.mrf.mxu0
    %v3976 = vadd.f32 0.0, %v3975
    %v3977 = vpop.f32.mrf.mxu0
    %v3978 = vpop.f32.mrf.mxu0
    %3979 = vdwg.mxu0
    %v3980 = vadd.f32 %v1240, %v3933
    %v3981 = vadd.f32 %v1244, %v3935
    %v3982 = vadd.f32 %v1248, %v3974
    %v3983 = vadd.f32 %v1252, %v3976
    %v3984 = vxor.u32 %v3980, 2147483648
    %v3985 = vmul.f32 %v3984, 1.442695
    %v3986 = vpow.pop %v3985
    %v3987 = vadd.f32 %v3986, 1.0
    %v3988 = vrcp.pop %v3987
    %v3989 = vmul.f32 1.0, %v3988
    %v3990 = vxor.u32 %v3981, 2147483648
    %v3991 = vmul.f32 %v3990, 1.442695
    %v3992 = vpow.pop %v3991
    %v3993 = vadd.f32 %v3992, 1.0
    %v3994 = vrcp.pop %v3993
    %v3995 = vmul.f32 1.0, %v3994
    %v3996 = vtanh.pop %v3982
    %v3997 = vxor.u32 %v3983, 2147483648
    %v3998 = vmul.f32 %v3997, 1.442695
    %v3999 = vpow.pop %v3998
    %v4000 = vadd.f32 %v3999, 1.0
    %v4001 = vrcp.pop %v4000
    %v4002 = vmul.f32 1.0, %v4001
    %v4003 = vmul.f32 %v3995, %v3557
    %v4004 = vmul.f32 %v3989, %v3996
    %v4005 = vadd.f32 %v4003, %v4004
    %v4006 = vtanh.pop %v4005
    %v4007 = vmul.f32 %v4002, %v4006
    %4008 = vmatprep.subr.bf16.mxu0 %v1799
    %4009 = vmatpush1.bf16.msra.mxu0 %v1798
    %4010 = vmatprep.subr.bf16.mxu0 %v1795
    %4011 = vmatpush1.bf16.msra.mxu0 %v1794
    %4012 = vmatprep.subr.bf16.mxu0 %v1791
    %4013 = vmatpush1.bf16.msra.mxu0 %v1790
    %4014 = vmatprep.subr.bf16.mxu0 %v1787
    %4015 = vmatpush1.bf16.msra.mxu0 %v1786
    %4016 = vmatprep.subr.bf16.mxu0 %v1783
    %4017 = vmatpush1.bf16.msra.mxu0 %v1782
    %4018 = vmatprep.subr.bf16.mxu0 %v1779
    %4019 = vmatpush1.bf16.msra.mxu0 %v1778
    %4020 = vmatprep.subr.bf16.mxu0 %v1775
    %4021 = vmatpush1.bf16.msra.mxu0 %v1774
    %4022 = vmatprep.subr.bf16.mxu0 %v1771
    %4023 = vmatpush1.bf16.msra.mxu0 %v1770
    %4024 = vmatprep.subr.bf16.mxu0 %v1831
    %4025 = vmatpush2.bf16.msra.mxu0 %v1830
    %4026 = vmatprep.subr.bf16.mxu0 %v1827
    %4027 = vmatpush2.bf16.msra.mxu0 %v1826
    %4028 = vmatprep.subr.bf16.mxu0 %v1823
    %4029 = vmatpush2.bf16.msra.mxu0 %v1822
    %4030 = vmatprep.subr.bf16.mxu0 %v1819
    %4031 = vmatpush2.bf16.msra.mxu0 %v1818
    %4032 = vmatprep.subr.bf16.mxu0 %v1815
    %4033 = vmatpush2.bf16.msra.mxu0 %v1814
    %4034 = vmatprep.subr.bf16.mxu0 %v1811
    %4035 = vmatpush2.bf16.msra.mxu0 %v1810
    %4036 = vmatprep.subr.bf16.mxu0 %v1807
    %4037 = vmatpush2.bf16.msra.mxu0 %v1806
    %4038 = vmatprep.subr.bf16.mxu0 %v1803
    %4039 = vmatpush2.bf16.msra.mxu0 %v1802
    %4040 = vmatprep.mubr.bf16.mxu0 %v3782
    %4041 = vmatmul.mubr.bf16.gmra.mxu0 %v3781
    %v4042 = vpop.f32.mrf.mxu0
    %v4043 = vadd.f32 0.0, %v4042
    %v4044 = vpop.f32.mrf.mxu0
    %v4045 = vadd.f32 0.0, %v4044
    %v4046 = vpop.f32.mrf.mxu0
    %v4047 = vpop.f32.mrf.mxu0
    %4048 = vdwg.mxu0
    %4049 = vmatprep.subr.bf16.mxu0 %v1801
    %4050 = vmatpush1.bf16.msra.mxu0 %v1800
    %4051 = vmatprep.subr.bf16.mxu0 %v1797
    %4052 = vmatpush1.bf16.msra.mxu0 %v1796
    %4053 = vmatprep.subr.bf16.mxu0 %v1793
    %4054 = vmatpush1.bf16.msra.mxu0 %v1792
    %4055 = vmatprep.subr.bf16.mxu0 %v1789
    %4056 = vmatpush1.bf16.msra.mxu0 %v1788
    %4057 = vmatprep.subr.bf16.mxu0 %v1785
    %4058 = vmatpush1.bf16.msra.mxu0 %v1784
    %4059 = vmatprep.subr.bf16.mxu0 %v1781
    %4060 = vmatpush1.bf16.msra.mxu0 %v1780
    %4061 = vmatprep.subr.bf16.mxu0 %v1777
    %4062 = vmatpush1.bf16.msra.mxu0 %v1776
    %4063 = vmatprep.subr.bf16.mxu0 %v1773
    %4064 = vmatpush1.bf16.msra.mxu0 %v1772
    %4065 = vmatprep.subr.bf16.mxu0 %v1833
    %4066 = vmatpush2.bf16.msra.mxu0 %v1832
    %4067 = vmatprep.subr.bf16.mxu0 %v1829
    %4068 = vmatpush2.bf16.msra.mxu0 %v1828
    %4069 = vmatprep.subr.bf16.mxu0 %v1825
    %4070 = vmatpush2.bf16.msra.mxu0 %v1824
    %4071 = vmatprep.subr.bf16.mxu0 %v1821
    %4072 = vmatpush2.bf16.msra.mxu0 %v1820
    %4073 = vmatprep.subr.bf16.mxu0 %v1817
    %4074 = vmatpush2.bf16.msra.mxu0 %v1816
    %4075 = vmatprep.subr.bf16.mxu0 %v1813
    %4076 = vmatpush2.bf16.msra.mxu0 %v1812
    %4077 = vmatprep.subr.bf16.mxu0 %v1809
    %4078 = vmatpush2.bf16.msra.mxu0 %v1808
    %4079 = vmatprep.subr.bf16.mxu0 %v1805
    %4080 = vmatpush2.bf16.msra.mxu0 %v1804
    %4081 = vmatprep.mubr.bf16.mxu0 %v3782
    %4082 = vmatmul.mubr.bf16.gmra.mxu0 %v3781
    %v4083 = vpop.f32.mrf.mxu0
    %v4084 = vadd.f32 0.0, %v4083
    %v4085 = vpop.f32.mrf.mxu0
    %v4086 = vadd.f32 0.0, %v4085
    %v4087 = vpop.f32.mrf.mxu0
    %v4088 = vpop.f32.mrf.mxu0
    %4089 = vdwg.mxu0
    %v4090 = vadd.f32 %v1984, %v4043
    %v4091 = vadd.f32 %v1988, %v4045
    %v4092 = vadd.f32 %v1992, %v4084
    %v4093 = vadd.f32 %v1996, %v4086
    %v4094 = vxor.u32 %v4090, 2147483648
    %v4095 = vmul.f32 %v4094, 1.442695
    %v4096 = vpow.pop %v4095
    %v4097 = vadd.f32 %v4096, 1.0
    %v4098 = vrcp.pop %v4097
    %v4099 = vmul.f32 1.0, %v4098
    %v4100 = vxor.u32 %v4091, 2147483648
    %v4101 = vmul.f32 %v4100, 1.442695
    %v4102 = vpow.pop %v4101
    %v4103 = vadd.f32 %v4102, 1.0
    %v4104 = vrcp.pop %v4103
    %v4105 = vmul.f32 1.0, %v4104
    %v4106 = vtanh.pop %v4092
    %v4107 = vxor.u32 %v4093, 2147483648
    %v4108 = vmul.f32 %v4107, 1.442695
    %v4109 = vpow.pop %v4108
    %v4110 = vadd.f32 %v4109, 1.0
    %v4111 = vrcp.pop %v4110
    %v4112 = vmul.f32 1.0, %v4111
    %v4113 = vmul.f32 %v4105, %v3667
    %v4114 = vmul.f32 %v4099, %v4106
    %v4115 = vadd.f32 %v4113, %v4114
    %v4116 = vtanh.pop %v4115
    %v4117 = vmul.f32 %v4112, %v4116
    %4118 = vmatprep.subr.bf16.mxu0 %v2654
    %4119 = vmatpush1.bf16.msra.mxu0 %v2653
    %4120 = vmatprep.subr.bf16.mxu0 %v2650
    %4121 = vmatpush1.bf16.msra.mxu0 %v2649
    %4122 = vmatprep.subr.bf16.mxu0 %v2646
    %4123 = vmatpush1.bf16.msra.mxu0 %v2645
    %4124 = vmatprep.subr.bf16.mxu0 %v2642
    %4125 = vmatpush1.bf16.msra.mxu0 %v2641
    %4126 = vmatprep.subr.bf16.mxu0 %v2638
    %4127 = vmatpush1.bf16.msra.mxu0 %v2637
    %4128 = vmatprep.subr.bf16.mxu0 %v2634
    %4129 = vmatpush1.bf16.msra.mxu0 %v2633
    %4130 = vmatprep.subr.bf16.mxu0 %v2630
    %4131 = vmatpush1.bf16.msra.mxu0 %v2629
    %4132 = vmatprep.subr.bf16.mxu0 %v2626
    %4133 = vmatpush1.bf16.msra.mxu0 %v2625
    %4134 = vmatprep.subr.bf16.mxu0 %v2686
    %4135 = vmatpush2.bf16.msra.mxu0 %v2685
    %4136 = vmatprep.subr.bf16.mxu0 %v2682
    %4137 = vmatpush2.bf16.msra.mxu0 %v2681
    %4138 = vmatprep.subr.bf16.mxu0 %v2678
    %4139 = vmatpush2.bf16.msra.mxu0 %v2677
    %4140 = vmatprep.subr.bf16.mxu0 %v2674
    %4141 = vmatpush2.bf16.msra.mxu0 %v2673
    %4142 = vmatprep.subr.bf16.mxu0 %v2670
    %4143 = vmatpush2.bf16.msra.mxu0 %v2669
    %4144 = vmatprep.subr.bf16.mxu0 %v2666
    %4145 = vmatpush2.bf16.msra.mxu0 %v2665
    %4146 = vmatprep.subr.bf16.mxu0 %v2662
    %4147 = vmatpush2.bf16.msra.mxu0 %v2661
    %4148 = vmatprep.subr.bf16.mxu0 %v2658
    %4149 = vmatpush2.bf16.msra.mxu0 %v2657
    %4150 = vmatprep.mubr.bf16.mxu0 %v3783
    %4151 = vmatmul.mubr.bf16.gmra.mxu0 %v3782
    %v4152 = vpop.f32.mrf.mxu0
    %v4153 = vadd.f32 0.0, %v4152
    %v4154 = vpop.f32.mrf.mxu0
    %v4155 = vadd.f32 0.0, %v4154
    %v4156 = vpop.f32.mrf.mxu0
    %v4157 = vpop.f32.mrf.mxu0
    %4158 = vdwg.mxu0
    %4159 = vmatprep.subr.bf16.mxu0 %v2656
    %4160 = vmatpush1.bf16.msra.mxu0 %v2655
    %4161 = vmatprep.subr.bf16.mxu0 %v2652
    %4162 = vmatpush1.bf16.msra.mxu0 %v2651
    %4163 = vmatprep.subr.bf16.mxu0 %v2648
    %4164 = vmatpush1.bf16.msra.mxu0 %v2647
    %4165 = vmatprep.subr.bf16.mxu0 %v2644
    %4166 = vmatpush1.bf16.msra.mxu0 %v2643
    %4167 = vmatprep.subr.bf16.mxu0 %v2640
    %4168 = vmatpush1.bf16.msra.mxu0 %v2639
    %4169 = vmatprep.subr.bf16.mxu0 %v2636
    %4170 = vmatpush1.bf16.msra.mxu0 %v2635
    %4171 = vmatprep.subr.bf16.mxu0 %v2632
    %4172 = vmatpush1.bf16.msra.mxu0 %v2631
    %4173 = vmatprep.subr.bf16.mxu0 %v2628
    %4174 = vmatpush1.bf16.msra.mxu0 %v2627
    %4175 = vmatprep.subr.bf16.mxu0 %v2688
    %4176 = vmatpush2.bf16.msra.mxu0 %v2687
    %4177 = vmatprep.subr.bf16.mxu0 %v2684
    %4178 = vmatpush2.bf16.msra.mxu0 %v2683
    %4179 = vmatprep.subr.bf16.mxu0 %v2680
    %4180 = vmatpush2.bf16.msra.mxu0 %v2679
    %4181 = vmatprep.subr.bf16.mxu0 %v2676
    %4182 = vmatpush2.bf16.msra.mxu0 %v2675
    %4183 = vmatprep.subr.bf16.mxu0 %v2672
    %4184 = vmatpush2.bf16.msra.mxu0 %v2671
    %4185 = vmatprep.subr.bf16.mxu0 %v2668
    %4186 = vmatpush2.bf16.msra.mxu0 %v2667
    %4187 = vmatprep.subr.bf16.mxu0 %v2664
    %4188 = vmatpush2.bf16.msra.mxu0 %v2663
    %4189 = vmatprep.subr.bf16.mxu0 %v2660
    %4190 = vmatpush2.bf16.msra.mxu0 %v2659
    %4191 = vmatprep.mubr.bf16.mxu0 %v3783
    %4192 = vmatmul.mubr.bf16.gmra.mxu0 %v3782
    %v4193 = vpop.f32.mrf.mxu0
    %v4194 = vadd.f32 0.0, %v4193
    %v4195 = vpop.f32.mrf.mxu0
    %v4196 = vadd.f32 0.0, %v4195
    %v4197 = vpop.f32.mrf.mxu0
    %v4198 = vpop.f32.mrf.mxu0
    %4199 = vdwg.mxu0
    %v4200 = vadd.f32 %v2839, %v4153
    %v4201 = vadd.f32 %v2843, %v4155
    %v4202 = vadd.f32 %v2847, %v4194
    %v4203 = vadd.f32 %v2851, %v4196
    %v4204 = vxor.u32 %v4200, 2147483648
    %v4205 = vmul.f32 %v4204, 1.442695
    %v4206 = vpow.pop %v4205
    %v4207 = vadd.f32 %v4206, 1.0
    %v4208 = vrcp.pop %v4207
    %v4209 = vmul.f32 1.0, %v4208
    %v4210 = vxor.u32 %v4201, 2147483648
    %v4211 = vmul.f32 %v4210, 1.442695
    %v4212 = vpow.pop %v4211
    %v4213 = vadd.f32 %v4212, 1.0
    %v4214 = vrcp.pop %v4213
    %v4215 = vmul.f32 1.0, %v4214
    %v4216 = vtanh.pop %v4202
    %v4217 = vxor.u32 %v4203, 2147483648
    %v4218 = vmul.f32 %v4217, 1.442695
    %v4219 = vpow.pop %v4218
    %v4220 = vadd.f32 %v4219, 1.0
    %v4221 = vrcp.pop %v4220
    %v4222 = vmul.f32 1.0, %v4221
    %v4223 = vmul.f32 %v4215, %v3777
    %v4224 = vmul.f32 %v4209, %v4216
    %v4225 = vadd.f32 %v4223, %v4224
    %v4226 = vtanh.pop %v4225
    %v4227 = vmul.f32 %v4222, %v4226
    %v4228 = vpack.c.bf16 %v3897, %v3897
    %v4229 = vpack.c.bf16 %v4007, %v4007
    %v4230 = vpack.c.bf16 %v4117, %v4117
    %v4231 = vpack.c.bf16 %v4227, %v4227
    %v4232 = vld [vmem:[#allocation2 + $0xe0] sm:$0xff]
    %v4233 = vld [vmem:[#allocation2 + $0xe8] sm:$0xff]
    %v4234 = vld [vmem:[#allocation2 + $0xf0] sm:$0xff]
    %v4235 = vld [vmem:[#allocation2 + $0xf8] sm:$0xff]
    %4236 = vmatprep.subr.bf16.mxu0 %v508
    %4237 = vmatpush1.bf16.msra.mxu0 %v507
    %4238 = vmatprep.subr.bf16.mxu0 %v504
    %4239 = vmatpush1.bf16.msra.mxu0 %v503
    %4240 = vmatprep.subr.bf16.mxu0 %v500
    %4241 = vmatpush1.bf16.msra.mxu0 %v499
    %4242 = vmatprep.subr.bf16.mxu0 %v496
    %4243 = vmatpush1.bf16.msra.mxu0 %v495
    %4244 = vmatprep.subr.bf16.mxu0 %v492
    %4245 = vmatpush1.bf16.msra.mxu0 %v491
    %4246 = vmatprep.subr.bf16.mxu0 %v488
    %4247 = vmatpush1.bf16.msra.mxu0 %v487
    %4248 = vmatprep.subr.bf16.mxu0 %v484
    %4249 = vmatpush1.bf16.msra.mxu0 %v483
    %4250 = vmatprep.subr.bf16.mxu0 %v480
    %4251 = vmatpush1.bf16.msra.mxu0 %v479
    %4252 = vmatprep.subr.bf16.mxu0 0
    %4253 = vmatpush2.bf16.msra.mxu0 0
    %4254 = vmatprep.subr.bf16.mxu0 0
    %4255 = vmatpush2.bf16.msra.mxu0 0
    %4256 = vmatprep.subr.bf16.mxu0 0
    %4257 = vmatpush2.bf16.msra.mxu0 0
    %4258 = vmatprep.subr.bf16.mxu0 0
    %4259 = vmatpush2.bf16.msra.mxu0 0
    %4260 = vmatprep.subr.bf16.mxu0 0
    %4261 = vmatpush2.bf16.msra.mxu0 0
    %4262 = vmatprep.subr.bf16.mxu0 0
    %4263 = vmatpush2.bf16.msra.mxu0 0
    %4264 = vmatprep.subr.bf16.mxu0 0
    %4265 = vmatpush2.bf16.msra.mxu0 0
    %4266 = vmatprep.subr.bf16.mxu0 0
    %4267 = vmatpush2.bf16.msra.mxu0 0
    %4268 = vmatprep.mubr.bf16.mxu0 0
    %4269 = vmatmul.mubr.bf16.gmra.mxu0 %v4228
    %v4270 = vpop.f32.mrf.mxu0
    %v4271 = vadd.f32 0.0, %v4270
    %v4272 = vpop.f32.mrf.mxu0
    %v4273 = vadd.f32 0.0, %v4272
    %v4274 = vpop.f32.mrf.mxu0
    %v4275 = vpop.f32.mrf.mxu0
    %4276 = vdwg.mxu0
    %4277 = vmatprep.subr.bf16.mxu0 %v510
    %4278 = vmatpush1.bf16.msra.mxu0 %v509
    %4279 = vmatprep.subr.bf16.mxu0 %v506
    %4280 = vmatpush1.bf16.msra.mxu0 %v505
    %4281 = vmatprep.subr.bf16.mxu0 %v502
    %4282 = vmatpush1.bf16.msra.mxu0 %v501
    %4283 = vmatprep.subr.bf16.mxu0 %v498
    %4284 = vmatpush1.bf16.msra.mxu0 %v497
    %4285 = vmatprep.subr.bf16.mxu0 %v494
    %4286 = vmatpush1.bf16.msra.mxu0 %v493
    %4287 = vmatprep.subr.bf16.mxu0 %v490
    %4288 = vmatpush1.bf16.msra.mxu0 %v489
    %4289 = vmatprep.subr.bf16.mxu0 %v486
    %4290 = vmatpush1.bf16.msra.mxu0 %v485
    %4291 = vmatprep.subr.bf16.mxu0 %v482
    %4292 = vmatpush1.bf16.msra.mxu0 %v481
    %4293 = vmatprep.subr.bf16.mxu0 0
    %4294 = vmatpush2.bf16.msra.mxu0 0
    %4295 = vmatprep.subr.bf16.mxu0 0
    %4296 = vmatpush2.bf16.msra.mxu0 0
    %4297 = vmatprep.subr.bf16.mxu0 0
    %4298 = vmatpush2.bf16.msra.mxu0 0
    %4299 = vmatprep.subr.bf16.mxu0 0
    %4300 = vmatpush2.bf16.msra.mxu0 0
    %4301 = vmatprep.subr.bf16.mxu0 0
    %4302 = vmatpush2.bf16.msra.mxu0 0
    %4303 = vmatprep.subr.bf16.mxu0 0
    %4304 = vmatpush2.bf16.msra.mxu0 0
    %4305 = vmatprep.subr.bf16.mxu0 0
    %4306 = vmatpush2.bf16.msra.mxu0 0
    %4307 = vmatprep.subr.bf16.mxu0 0
    %4308 = vmatpush2.bf16.msra.mxu0 0
    %4309 = vmatprep.mubr.bf16.mxu0 0
    %4310 = vmatmul.mubr.bf16.gmra.mxu0 %v4228
    %v4311 = vpop.f32.mrf.mxu0
    %v4312 = vadd.f32 0.0, %v4311
    %v4313 = vpop.f32.mrf.mxu0
    %v4314 = vadd.f32 0.0, %v4313
    %v4315 = vpop.f32.mrf.mxu0
    %v4316 = vpop.f32.mrf.mxu0
    %4317 = vdwg.mxu0
    %v4318 = vadd.f32 %v4232, %v4271
    %v4319 = vadd.f32 %v4233, %v4273
    %v4320 = vadd.f32 %v4234, %v4312
    %v4321 = vadd.f32 %v4235, %v4314
    %v4322 = vxor.u32 %v4318, 2147483648
    %v4323 = vmul.f32 %v4322, 1.442695
    %v4324 = vpow.pop %v4323
    %v4325 = vadd.f32 %v4324, 1.0
    %v4326 = vrcp.pop %v4325
    %v4327 = vmul.f32 1.0, %v4326
    %v4328 = vxor.u32 %v4319, 2147483648
    %v4329 = vmul.f32 %v4328, 1.442695
    %v4330 = vpow.pop %v4329
    %v4331 = vadd.f32 %v4330, 1.0
    %v4332 = vrcp.pop %v4331
    %v4333 = vmul.f32 1.0, %v4332
    %v4334 = vtanh.pop %v4320
    %v4335 = vxor.u32 %v4321, 2147483648
    %v4336 = vmul.f32 %v4335, 1.442695
    %v4337 = vpow.pop %v4336
    %v4338 = vadd.f32 %v4337, 1.0
    %v4339 = vrcp.pop %v4338
    %v4340 = vmul.f32 1.0, %v4339
    %v4341 = vmul.f32 %v4333, %v3895
    %v4342 = vmul.f32 %v4327, %v4334
    %v4343 = vadd.f32 %v4341, %v4342
    %v4344 = vtanh.pop %v4343
    %v4345 = vmul.f32 %v4340, %v4344
    %4346 = vmatprep.subr.bf16.mxu0 %v1055
    %4347 = vmatpush1.bf16.msra.mxu0 %v1054
    %4348 = vmatprep.subr.bf16.mxu0 %v1051
    %4349 = vmatpush1.bf16.msra.mxu0 %v1050
    %4350 = vmatprep.subr.bf16.mxu0 %v1047
    %4351 = vmatpush1.bf16.msra.mxu0 %v1046
    %4352 = vmatprep.subr.bf16.mxu0 %v1043
    %4353 = vmatpush1.bf16.msra.mxu0 %v1042
    %4354 = vmatprep.subr.bf16.mxu0 %v1039
    %4355 = vmatpush1.bf16.msra.mxu0 %v1038
    %4356 = vmatprep.subr.bf16.mxu0 %v1035
    %4357 = vmatpush1.bf16.msra.mxu0 %v1034
    %4358 = vmatprep.subr.bf16.mxu0 %v1031
    %4359 = vmatpush1.bf16.msra.mxu0 %v1030
    %4360 = vmatprep.subr.bf16.mxu0 %v1027
    %4361 = vmatpush1.bf16.msra.mxu0 %v1026
    %4362 = vmatprep.subr.bf16.mxu0 %v1087
    %4363 = vmatpush2.bf16.msra.mxu0 %v1086
    %4364 = vmatprep.subr.bf16.mxu0 %v1083
    %4365 = vmatpush2.bf16.msra.mxu0 %v1082
    %4366 = vmatprep.subr.bf16.mxu0 %v1079
    %4367 = vmatpush2.bf16.msra.mxu0 %v1078
    %4368 = vmatprep.subr.bf16.mxu0 %v1075
    %4369 = vmatpush2.bf16.msra.mxu0 %v1074
    %4370 = vmatprep.subr.bf16.mxu0 %v1071
    %4371 = vmatpush2.bf16.msra.mxu0 %v1070
    %4372 = vmatprep.subr.bf16.mxu0 %v1067
    %4373 = vmatpush2.bf16.msra.mxu0 %v1066
    %4374 = vmatprep.subr.bf16.mxu0 %v1063
    %4375 = vmatpush2.bf16.msra.mxu0 %v1062
    %4376 = vmatprep.subr.bf16.mxu0 %v1059
    %4377 = vmatpush2.bf16.msra.mxu0 %v1058
    %4378 = vmatprep.mubr.bf16.mxu0 %v4229
    %4379 = vmatmul.mubr.bf16.gmra.mxu0 %v4228
    %v4380 = vpop.f32.mrf.mxu0
    %v4381 = vadd.f32 0.0, %v4380
    %v4382 = vpop.f32.mrf.mxu0
    %v4383 = vadd.f32 0.0, %v4382
    %v4384 = vpop.f32.mrf.mxu0
    %v4385 = vpop.f32.mrf.mxu0
    %4386 = vdwg.mxu0
    %4387 = vmatprep.subr.bf16.mxu0 %v1057
    %4388 = vmatpush1.bf16.msra.mxu0 %v1056
    %4389 = vmatprep.subr.bf16.mxu0 %v1053
    %4390 = vmatpush1.bf16.msra.mxu0 %v1052
    %4391 = vmatprep.subr.bf16.mxu0 %v1049
    %4392 = vmatpush1.bf16.msra.mxu0 %v1048
    %4393 = vmatprep.subr.bf16.mxu0 %v1045
    %4394 = vmatpush1.bf16.msra.mxu0 %v1044
    %4395 = vmatprep.subr.bf16.mxu0 %v1041
    %4396 = vmatpush1.bf16.msra.mxu0 %v1040
    %4397 = vmatprep.subr.bf16.mxu0 %v1037
    %4398 = vmatpush1.bf16.msra.mxu0 %v1036
    %4399 = vmatprep.subr.bf16.mxu0 %v1033
    %4400 = vmatpush1.bf16.msra.mxu0 %v1032
    %4401 = vmatprep.subr.bf16.mxu0 %v1029
    %4402 = vmatpush1.bf16.msra.mxu0 %v1028
    %4403 = vmatprep.subr.bf16.mxu0 %v1089
    %4404 = vmatpush2.bf16.msra.mxu0 %v1088
    %4405 = vmatprep.subr.bf16.mxu0 %v1085
    %4406 = vmatpush2.bf16.msra.mxu0 %v1084
    %4407 = vmatprep.subr.bf16.mxu0 %v1081
    %4408 = vmatpush2.bf16.msra.mxu0 %v1080
    %4409 = vmatprep.subr.bf16.mxu0 %v1077
    %4410 = vmatpush2.bf16.msra.mxu0 %v1076
    %4411 = vmatprep.subr.bf16.mxu0 %v1073
    %4412 = vmatpush2.bf16.msra.mxu0 %v1072
    %4413 = vmatprep.subr.bf16.mxu0 %v1069
    %4414 = vmatpush2.bf16.msra.mxu0 %v1068
    %4415 = vmatprep.subr.bf16.mxu0 %v1065
    %4416 = vmatpush2.bf16.msra.mxu0 %v1064
    %4417 = vmatprep.subr.bf16.mxu0 %v1061
    %4418 = vmatpush2.bf16.msra.mxu0 %v1060
    %4419 = vmatprep.mubr.bf16.mxu0 %v4229
    %4420 = vmatmul.mubr.bf16.gmra.mxu0 %v4228
    %v4421 = vpop.f32.mrf.mxu0
    %v4422 = vadd.f32 0.0, %v4421
    %v4423 = vpop.f32.mrf.mxu0
    %v4424 = vadd.f32 0.0, %v4423
    %v4425 = vpop.f32.mrf.mxu0
    %v4426 = vpop.f32.mrf.mxu0
    %4427 = vdwg.mxu0
    %v4428 = vadd.f32 %v1240, %v4381
    %v4429 = vadd.f32 %v1244, %v4383
    %v4430 = vadd.f32 %v1248, %v4422
    %v4431 = vadd.f32 %v1252, %v4424
    %v4432 = vxor.u32 %v4428, 2147483648
    %v4433 = vmul.f32 %v4432, 1.442695
    %v4434 = vpow.pop %v4433
    %v4435 = vadd.f32 %v4434, 1.0
    %v4436 = vrcp.pop %v4435
    %v4437 = vmul.f32 1.0, %v4436
    %v4438 = vxor.u32 %v4429, 2147483648
    %v4439 = vmul.f32 %v4438, 1.442695
    %v4440 = vpow.pop %v4439
    %v4441 = vadd.f32 %v4440, 1.0
    %v4442 = vrcp.pop %v4441
    %v4443 = vmul.f32 1.0, %v4442
    %v4444 = vtanh.pop %v4430
    %v4445 = vxor.u32 %v4431, 2147483648
    %v4446 = vmul.f32 %v4445, 1.442695
    %v4447 = vpow.pop %v4446
    %v4448 = vadd.f32 %v4447, 1.0
    %v4449 = vrcp.pop %v4448
    %v4450 = vmul.f32 1.0, %v4449
    %v4451 = vmul.f32 %v4443, %v4005
    %v4452 = vmul.f32 %v4437, %v4444
    %v4453 = vadd.f32 %v4451, %v4452
    %v4454 = vtanh.pop %v4453
    %v4455 = vmul.f32 %v4450, %v4454
    %4456 = vmatprep.subr.bf16.mxu0 %v1799
    %4457 = vmatpush1.bf16.msra.mxu0 %v1798
    %4458 = vmatprep.subr.bf16.mxu0 %v1795
    %4459 = vmatpush1.bf16.msra.mxu0 %v1794
    %4460 = vmatprep.subr.bf16.mxu0 %v1791
    %4461 = vmatpush1.bf16.msra.mxu0 %v1790
    %4462 = vmatprep.subr.bf16.mxu0 %v1787
    %4463 = vmatpush1.bf16.msra.mxu0 %v1786
    %4464 = vmatprep.subr.bf16.mxu0 %v1783
    %4465 = vmatpush1.bf16.msra.mxu0 %v1782
    %4466 = vmatprep.subr.bf16.mxu0 %v1779
    %4467 = vmatpush1.bf16.msra.mxu0 %v1778
    %4468 = vmatprep.subr.bf16.mxu0 %v1775
    %4469 = vmatpush1.bf16.msra.mxu0 %v1774
    %4470 = vmatprep.subr.bf16.mxu0 %v1771
    %4471 = vmatpush1.bf16.msra.mxu0 %v1770
    %4472 = vmatprep.subr.bf16.mxu0 %v1831
    %4473 = vmatpush2.bf16.msra.mxu0 %v1830
    %4474 = vmatprep.subr.bf16.mxu0 %v1827
    %4475 = vmatpush2.bf16.msra.mxu0 %v1826
    %4476 = vmatprep.subr.bf16.mxu0 %v1823
    %4477 = vmatpush2.bf16.msra.mxu0 %v1822
    %4478 = vmatprep.subr.bf16.mxu0 %v1819
    %4479 = vmatpush2.bf16.msra.mxu0 %v1818
    %4480 = vmatprep.subr.bf16.mxu0 %v1815
    %4481 = vmatpush2.bf16.msra.mxu0 %v1814
    %4482 = vmatprep.subr.bf16.mxu0 %v1811
    %4483 = vmatpush2.bf16.msra.mxu0 %v1810
    %4484 = vmatprep.subr.bf16.mxu0 %v1807
    %4485 = vmatpush2.bf16.msra.mxu0 %v1806
    %4486 = vmatprep.subr.bf16.mxu0 %v1803
    %4487 = vmatpush2.bf16.msra.mxu0 %v1802
    %4488 = vmatprep.mubr.bf16.mxu0 %v4230
    %4489 = vmatmul.mubr.bf16.gmra.mxu0 %v4229
    %v4490 = vpop.f32.mrf.mxu0
    %v4491 = vadd.f32 0.0, %v4490
    %v4492 = vpop.f32.mrf.mxu0
    %v4493 = vadd.f32 0.0, %v4492
    %v4494 = vpop.f32.mrf.mxu0
    %v4495 = vpop.f32.mrf.mxu0
    %4496 = vdwg.mxu0
    %4497 = vmatprep.subr.bf16.mxu0 %v1801
    %4498 = vmatpush1.bf16.msra.mxu0 %v1800
    %4499 = vmatprep.subr.bf16.mxu0 %v1797
    %4500 = vmatpush1.bf16.msra.mxu0 %v1796
    %4501 = vmatprep.subr.bf16.mxu0 %v1793
    %4502 = vmatpush1.bf16.msra.mxu0 %v1792
    %4503 = vmatprep.subr.bf16.mxu0 %v1789
    %4504 = vmatpush1.bf16.msra.mxu0 %v1788
    %4505 = vmatprep.subr.bf16.mxu0 %v1785
    %4506 = vmatpush1.bf16.msra.mxu0 %v1784
    %4507 = vmatprep.subr.bf16.mxu0 %v1781
    %4508 = vmatpush1.bf16.msra.mxu0 %v1780
    %4509 = vmatprep.subr.bf16.mxu0 %v1777
    %4510 = vmatpush1.bf16.msra.mxu0 %v1776
    %4511 = vmatprep.subr.bf16.mxu0 %v1773
    %4512 = vmatpush1.bf16.msra.mxu0 %v1772
    %4513 = vmatprep.subr.bf16.mxu0 %v1833
    %4514 = vmatpush2.bf16.msra.mxu0 %v1832
    %4515 = vmatprep.subr.bf16.mxu0 %v1829
    %4516 = vmatpush2.bf16.msra.mxu0 %v1828
    %4517 = vmatprep.subr.bf16.mxu0 %v1825
    %4518 = vmatpush2.bf16.msra.mxu0 %v1824
    %4519 = vmatprep.subr.bf16.mxu0 %v1821
    %4520 = vmatpush2.bf16.msra.mxu0 %v1820
    %4521 = vmatprep.subr.bf16.mxu0 %v1817
    %4522 = vmatpush2.bf16.msra.mxu0 %v1816
    %4523 = vmatprep.subr.bf16.mxu0 %v1813
    %4524 = vmatpush2.bf16.msra.mxu0 %v1812
    %4525 = vmatprep.subr.bf16.mxu0 %v1809
    %4526 = vmatpush2.bf16.msra.mxu0 %v1808
    %4527 = vmatprep.subr.bf16.mxu0 %v1805
    %4528 = vmatpush2.bf16.msra.mxu0 %v1804
    %4529 = vmatprep.mubr.bf16.mxu0 %v4230
    %4530 = vmatmul.mubr.bf16.gmra.mxu0 %v4229
    %v4531 = vpop.f32.mrf.mxu0
    %v4532 = vadd.f32 0.0, %v4531
    %v4533 = vpop.f32.mrf.mxu0
    %v4534 = vadd.f32 0.0, %v4533
    %v4535 = vpop.f32.mrf.mxu0
    %v4536 = vpop.f32.mrf.mxu0
    %4537 = vdwg.mxu0
    %v4538 = vadd.f32 %v1984, %v4491
    %v4539 = vadd.f32 %v1988, %v4493
    %v4540 = vadd.f32 %v1992, %v4532
    %v4541 = vadd.f32 %v1996, %v4534
    %v4542 = vxor.u32 %v4538, 2147483648
    %v4543 = vmul.f32 %v4542, 1.442695
    %v4544 = vpow.pop %v4543
    %v4545 = vadd.f32 %v4544, 1.0
    %v4546 = vrcp.pop %v4545
    %v4547 = vmul.f32 1.0, %v4546
    %v4548 = vxor.u32 %v4539, 2147483648
    %v4549 = vmul.f32 %v4548, 1.442695
    %v4550 = vpow.pop %v4549
    %v4551 = vadd.f32 %v4550, 1.0
    %v4552 = vrcp.pop %v4551
    %v4553 = vmul.f32 1.0, %v4552
    %v4554 = vtanh.pop %v4540
    %v4555 = vxor.u32 %v4541, 2147483648
    %v4556 = vmul.f32 %v4555, 1.442695
    %v4557 = vpow.pop %v4556
    %v4558 = vadd.f32 %v4557, 1.0
    %v4559 = vrcp.pop %v4558
    %v4560 = vmul.f32 1.0, %v4559
    %v4561 = vmul.f32 %v4553, %v4115
    %v4562 = vmul.f32 %v4547, %v4554
    %v4563 = vadd.f32 %v4561, %v4562
    %v4564 = vtanh.pop %v4563
    %v4565 = vmul.f32 %v4560, %v4564
    %4566 = vmatprep.subr.bf16.mxu0 %v2654
    %4567 = vmatpush1.bf16.msra.mxu0 %v2653
    %4568 = vmatprep.subr.bf16.mxu0 %v2650
    %4569 = vmatpush1.bf16.msra.mxu0 %v2649
    %4570 = vmatprep.subr.bf16.mxu0 %v2646
    %4571 = vmatpush1.bf16.msra.mxu0 %v2645
    %4572 = vmatprep.subr.bf16.mxu0 %v2642
    %4573 = vmatpush1.bf16.msra.mxu0 %v2641
    %4574 = vmatprep.subr.bf16.mxu0 %v2638
    %4575 = vmatpush1.bf16.msra.mxu0 %v2637
    %4576 = vmatprep.subr.bf16.mxu0 %v2634
    %4577 = vmatpush1.bf16.msra.mxu0 %v2633
    %4578 = vmatprep.subr.bf16.mxu0 %v2630
    %4579 = vmatpush1.bf16.msra.mxu0 %v2629
    %4580 = vmatprep.subr.bf16.mxu0 %v2626
    %4581 = vmatpush1.bf16.msra.mxu0 %v2625
    %4582 = vmatprep.subr.bf16.mxu0 %v2686
    %4583 = vmatpush2.bf16.msra.mxu0 %v2685
    %4584 = vmatprep.subr.bf16.mxu0 %v2682
    %4585 = vmatpush2.bf16.msra.mxu0 %v2681
    %4586 = vmatprep.subr.bf16.mxu0 %v2678
    %4587 = vmatpush2.bf16.msra.mxu0 %v2677
    %4588 = vmatprep.subr.bf16.mxu0 %v2674
    %4589 = vmatpush2.bf16.msra.mxu0 %v2673
    %4590 = vmatprep.subr.bf16.mxu0 %v2670
    %4591 = vmatpush2.bf16.msra.mxu0 %v2669
    %4592 = vmatprep.subr.bf16.mxu0 %v2666
    %4593 = vmatpush2.bf16.msra.mxu0 %v2665
    %4594 = vmatprep.subr.bf16.mxu0 %v2662
    %4595 = vmatpush2.bf16.msra.mxu0 %v2661
    %4596 = vmatprep.subr.bf16.mxu0 %v2658
    %4597 = vmatpush2.bf16.msra.mxu0 %v2657
    %4598 = vmatprep.mubr.bf16.mxu0 %v4231
    %4599 = vmatmul.mubr.bf16.gmra.mxu0 %v4230
    %v4600 = vpop.f32.mrf.mxu0
    %v4601 = vadd.f32 0.0, %v4600
    %v4602 = vpop.f32.mrf.mxu0
    %v4603 = vadd.f32 0.0, %v4602
    %v4604 = vpop.f32.mrf.mxu0
    %v4605 = vpop.f32.mrf.mxu0
    %4606 = vdwg.mxu0
    %4607 = vmatprep.subr.bf16.mxu0 %v2656
    %4608 = vmatpush1.bf16.msra.mxu0 %v2655
    %4609 = vmatprep.subr.bf16.mxu0 %v2652
    %4610 = vmatpush1.bf16.msra.mxu0 %v2651
    %4611 = vmatprep.subr.bf16.mxu0 %v2648
    %4612 = vmatpush1.bf16.msra.mxu0 %v2647
    %4613 = vmatprep.subr.bf16.mxu0 %v2644
    %4614 = vmatpush1.bf16.msra.mxu0 %v2643
    %4615 = vmatprep.subr.bf16.mxu0 %v2640
    %4616 = vmatpush1.bf16.msra.mxu0 %v2639
    %4617 = vmatprep.subr.bf16.mxu0 %v2636
    %4618 = vmatpush1.bf16.msra.mxu0 %v2635
    %4619 = vmatprep.subr.bf16.mxu0 %v2632
    %4620 = vmatpush1.bf16.msra.mxu0 %v2631
    %4621 = vmatprep.subr.bf16.mxu0 %v2628
    %4622 = vmatpush1.bf16.msra.mxu0 %v2627
    %4623 = vmatprep.subr.bf16.mxu0 %v2688
    %4624 = vmatpush2.bf16.msra.mxu0 %v2687
    %4625 = vmatprep.subr.bf16.mxu0 %v2684
    %4626 = vmatpush2.bf16.msra.mxu0 %v2683
    %4627 = vmatprep.subr.bf16.mxu0 %v2680
    %4628 = vmatpush2.bf16.msra.mxu0 %v2679
    %4629 = vmatprep.subr.bf16.mxu0 %v2676
    %4630 = vmatpush2.bf16.msra.mxu0 %v2675
    %4631 = vmatprep.subr.bf16.mxu0 %v2672
    %4632 = vmatpush2.bf16.msra.mxu0 %v2671
    %4633 = vmatprep.subr.bf16.mxu0 %v2668
    %4634 = vmatpush2.bf16.msra.mxu0 %v2667
    %4635 = vmatprep.subr.bf16.mxu0 %v2664
    %4636 = vmatpush2.bf16.msra.mxu0 %v2663
    %4637 = vmatprep.subr.bf16.mxu0 %v2660
    %4638 = vmatpush2.bf16.msra.mxu0 %v2659
    %4639 = vmatprep.mubr.bf16.mxu0 %v4231
    %4640 = vmatmul.mubr.bf16.gmra.mxu0 %v4230
    %v4641 = vpop.f32.mrf.mxu0
    %v4642 = vadd.f32 0.0, %v4641
    %v4643 = vpop.f32.mrf.mxu0
    %v4644 = vadd.f32 0.0, %v4643
    %v4645 = vpop.f32.mrf.mxu0
    %v4646 = vpop.f32.mrf.mxu0
    %4647 = vdwg.mxu0
    %v4648 = vadd.f32 %v2839, %v4601
    %v4649 = vadd.f32 %v2843, %v4603
    %v4650 = vadd.f32 %v2847, %v4642
    %v4651 = vadd.f32 %v2851, %v4644
    %v4652 = vxor.u32 %v4648, 2147483648
    %v4653 = vmul.f32 %v4652, 1.442695
    %v4654 = vpow.pop %v4653
    %v4655 = vadd.f32 %v4654, 1.0
    %v4656 = vrcp.pop %v4655
    %v4657 = vmul.f32 1.0, %v4656
    %v4658 = vxor.u32 %v4649, 2147483648
    %v4659 = vmul.f32 %v4658, 1.442695
    %v4660 = vpow.pop %v4659
    %v4661 = vadd.f32 %v4660, 1.0
    %v4662 = vrcp.pop %v4661
    %v4663 = vmul.f32 1.0, %v4662
    %v4664 = vtanh.pop %v4650
    %v4665 = vxor.u32 %v4651, 2147483648
    %v4666 = vmul.f32 %v4665, 1.442695
    %v4667 = vpow.pop %v4666
    %v4668 = vadd.f32 %v4667, 1.0
    %v4669 = vrcp.pop %v4668
    %v4670 = vmul.f32 1.0, %v4669
    %v4671 = vmul.f32 %v4663, %v4225
    %v4672 = vmul.f32 %v4657, %v4664
    %v4673 = vadd.f32 %v4671, %v4672
    %v4674 = vtanh.pop %v4673
    %v4675 = vmul.f32 %v4670, %v4674
    %v4676 = vpack.c.bf16 %v4345, %v4345
    %v4677 = vpack.c.bf16 %v4455, %v4455
    %v4678 = vpack.c.bf16 %v4565, %v4565
    %v4679 = vpack.c.bf16 %v4675, %v4675
    %4680 = vmatprep.subr.bf16.mxu0 %v1055
    %4681 = vmatpush1.bf16.msra.mxu0 %v1054
    %4682 = vmatprep.subr.bf16.mxu0 %v1051
    %4683 = vmatpush1.bf16.msra.mxu0 %v1050
    %4684 = vmatprep.subr.bf16.mxu0 %v1047
    %4685 = vmatpush1.bf16.msra.mxu0 %v1046
    %4686 = vmatprep.subr.bf16.mxu0 %v1043
    %4687 = vmatpush1.bf16.msra.mxu0 %v1042
    %4688 = vmatprep.subr.bf16.mxu0 %v1039
    %4689 = vmatpush1.bf16.msra.mxu0 %v1038
    %4690 = vmatprep.subr.bf16.mxu0 %v1035
    %4691 = vmatpush1.bf16.msra.mxu0 %v1034
    %4692 = vmatprep.subr.bf16.mxu0 %v1031
    %4693 = vmatpush1.bf16.msra.mxu0 %v1030
    %4694 = vmatprep.subr.bf16.mxu0 %v1027
    %4695 = vmatpush1.bf16.msra.mxu0 %v1026
    %4696 = vmatprep.subr.bf16.mxu0 %v1087
    %4697 = vmatpush2.bf16.msra.mxu0 %v1086
    %4698 = vmatprep.subr.bf16.mxu0 %v1083
    %4699 = vmatpush2.bf16.msra.mxu0 %v1082
    %4700 = vmatprep.subr.bf16.mxu0 %v1079
    %4701 = vmatpush2.bf16.msra.mxu0 %v1078
    %4702 = vmatprep.subr.bf16.mxu0 %v1075
    %4703 = vmatpush2.bf16.msra.mxu0 %v1074
    %4704 = vmatprep.subr.bf16.mxu0 %v1071
    %4705 = vmatpush2.bf16.msra.mxu0 %v1070
    %4706 = vmatprep.subr.bf16.mxu0 %v1067
    %4707 = vmatpush2.bf16.msra.mxu0 %v1066
    %4708 = vmatprep.subr.bf16.mxu0 %v1063
    %4709 = vmatpush2.bf16.msra.mxu0 %v1062
    %4710 = vmatprep.subr.bf16.mxu0 %v1059
    %4711 = vmatpush2.bf16.msra.mxu0 %v1058
    %4712 = vmatprep.mubr.bf16.mxu0 %v4677
    %4713 = vmatmul.mubr.bf16.gmra.mxu0 %v4676
    %v4714 = vpop.f32.mrf.mxu0
    %v4715 = vadd.f32 0.0, %v4714
    %v4716 = vpop.f32.mrf.mxu0
    %v4717 = vadd.f32 0.0, %v4716
    %v4718 = vpop.f32.mrf.mxu0
    %v4719 = vpop.f32.mrf.mxu0
    %4720 = vdwg.mxu0
    %4721 = vmatprep.subr.bf16.mxu0 %v1057
    %4722 = vmatpush1.bf16.msra.mxu0 %v1056
    %4723 = vmatprep.subr.bf16.mxu0 %v1053
    %4724 = vmatpush1.bf16.msra.mxu0 %v1052
    %4725 = vmatprep.subr.bf16.mxu0 %v1049
    %4726 = vmatpush1.bf16.msra.mxu0 %v1048
    %4727 = vmatprep.subr.bf16.mxu0 %v1045
    %4728 = vmatpush1.bf16.msra.mxu0 %v1044
    %4729 = vmatprep.subr.bf16.mxu0 %v1041
    %4730 = vmatpush1.bf16.msra.mxu0 %v1040
    %4731 = vmatprep.subr.bf16.mxu0 %v1037
    %4732 = vmatpush1.bf16.msra.mxu0 %v1036
    %4733 = vmatprep.subr.bf16.mxu0 %v1033
    %4734 = vmatpush1.bf16.msra.mxu0 %v1032
    %4735 = vmatprep.subr.bf16.mxu0 %v1029
    %4736 = vmatpush1.bf16.msra.mxu0 %v1028
    %4737 = vmatprep.subr.bf16.mxu0 %v1089
    %4738 = vmatpush2.bf16.msra.mxu0 %v1088
    %4739 = vmatprep.subr.bf16.mxu0 %v1085
    %4740 = vmatpush2.bf16.msra.mxu0 %v1084
    %4741 = vmatprep.subr.bf16.mxu0 %v1081
    %4742 = vmatpush2.bf16.msra.mxu0 %v1080
    %4743 = vmatprep.subr.bf16.mxu0 %v1077
    %4744 = vmatpush2.bf16.msra.mxu0 %v1076
    %4745 = vmatprep.subr.bf16.mxu0 %v1073
    %4746 = vmatpush2.bf16.msra.mxu0 %v1072
    %4747 = vmatprep.subr.bf16.mxu0 %v1069
    %4748 = vmatpush2.bf16.msra.mxu0 %v1068
    %4749 = vmatprep.subr.bf16.mxu0 %v1065
    %4750 = vmatpush2.bf16.msra.mxu0 %v1064
    %4751 = vmatprep.subr.bf16.mxu0 %v1061
    %4752 = vmatpush2.bf16.msra.mxu0 %v1060
    %4753 = vmatprep.mubr.bf16.mxu0 %v4677
    %4754 = vmatmul.mubr.bf16.gmra.mxu0 %v4676
    %v4755 = vpop.f32.mrf.mxu0
    %v4756 = vadd.f32 0.0, %v4755
    %v4757 = vpop.f32.mrf.mxu0
    %v4758 = vadd.f32 0.0, %v4757
    %v4759 = vpop.f32.mrf.mxu0
    %v4760 = vpop.f32.mrf.mxu0
    %4761 = vdwg.mxu0
    %v4762 = vadd.f32 %v1240, %v4715
    %v4763 = vadd.f32 %v1244, %v4717
    %v4764 = vadd.f32 %v1248, %v4756
    %v4765 = vadd.f32 %v1252, %v4758
    %v4766 = vxor.u32 %v4762, 2147483648
    %v4767 = vmul.f32 %v4766, 1.442695
    %v4768 = vpow.pop %v4767
    %v4769 = vadd.f32 %v4768, 1.0
    %v4770 = vrcp.pop %v4769
    %v4771 = vmul.f32 1.0, %v4770
    %v4772 = vxor.u32 %v4763, 2147483648
    %v4773 = vmul.f32 %v4772, 1.442695
    %v4774 = vpow.pop %v4773
    %v4775 = vadd.f32 %v4774, 1.0
    %v4776 = vrcp.pop %v4775
    %v4777 = vmul.f32 1.0, %v4776
    %v4778 = vtanh.pop %v4764
    %v4779 = vxor.u32 %v4765, 2147483648
    %v4780 = vmul.f32 %v4779, 1.442695
    %v4781 = vpow.pop %v4780
    %v4782 = vadd.f32 %v4781, 1.0
    %v4783 = vrcp.pop %v4782
    %v4784 = vmul.f32 1.0, %v4783
    %v4785 = vmul.f32 %v4777, %v4453
    %v4786 = vmul.f32 %v4771, %v4778
    %v4787 = vadd.f32 %v4785, %v4786
    %v4788 = vtanh.pop %v4787
    %v4789 = vmul.f32 %v4784, %v4788
    %4790 = vmatprep.subr.bf16.mxu0 %v1799
    %4791 = vmatpush1.bf16.msra.mxu0 %v1798
    %4792 = vmatprep.subr.bf16.mxu0 %v1795
    %4793 = vmatpush1.bf16.msra.mxu0 %v1794
    %4794 = vmatprep.subr.bf16.mxu0 %v1791
    %4795 = vmatpush1.bf16.msra.mxu0 %v1790
    %4796 = vmatprep.subr.bf16.mxu0 %v1787
    %4797 = vmatpush1.bf16.msra.mxu0 %v1786
    %4798 = vmatprep.subr.bf16.mxu0 %v1783
    %4799 = vmatpush1.bf16.msra.mxu0 %v1782
    %4800 = vmatprep.subr.bf16.mxu0 %v1779
    %4801 = vmatpush1.bf16.msra.mxu0 %v1778
    %4802 = vmatprep.subr.bf16.mxu0 %v1775
    %4803 = vmatpush1.bf16.msra.mxu0 %v1774
    %4804 = vmatprep.subr.bf16.mxu0 %v1771
    %4805 = vmatpush1.bf16.msra.mxu0 %v1770
    %4806 = vmatprep.subr.bf16.mxu0 %v1831
    %4807 = vmatpush2.bf16.msra.mxu0 %v1830
    %4808 = vmatprep.subr.bf16.mxu0 %v1827
    %4809 = vmatpush2.bf16.msra.mxu0 %v1826
    %4810 = vmatprep.subr.bf16.mxu0 %v1823
    %4811 = vmatpush2.bf16.msra.mxu0 %v1822
    %4812 = vmatprep.subr.bf16.mxu0 %v1819
    %4813 = vmatpush2.bf16.msra.mxu0 %v1818
    %4814 = vmatprep.subr.bf16.mxu0 %v1815
    %4815 = vmatpush2.bf16.msra.mxu0 %v1814
    %4816 = vmatprep.subr.bf16.mxu0 %v1811
    %4817 = vmatpush2.bf16.msra.mxu0 %v1810
    %4818 = vmatprep.subr.bf16.mxu0 %v1807
    %4819 = vmatpush2.bf16.msra.mxu0 %v1806
    %4820 = vmatprep.subr.bf16.mxu0 %v1803
    %4821 = vmatpush2.bf16.msra.mxu0 %v1802
    %4822 = vmatprep.mubr.bf16.mxu0 %v4678
    %4823 = vmatmul.mubr.bf16.gmra.mxu0 %v4677
    %v4824 = vpop.f32.mrf.mxu0
    %v4825 = vadd.f32 0.0, %v4824
    %v4826 = vpop.f32.mrf.mxu0
    %v4827 = vadd.f32 0.0, %v4826
    %v4828 = vpop.f32.mrf.mxu0
    %v4829 = vpop.f32.mrf.mxu0
    %4830 = vdwg.mxu0
    %4831 = vmatprep.subr.bf16.mxu0 %v1801
    %4832 = vmatpush1.bf16.msra.mxu0 %v1800
    %4833 = vmatprep.subr.bf16.mxu0 %v1797
    %4834 = vmatpush1.bf16.msra.mxu0 %v1796
    %4835 = vmatprep.subr.bf16.mxu0 %v1793
    %4836 = vmatpush1.bf16.msra.mxu0 %v1792
    %4837 = vmatprep.subr.bf16.mxu0 %v1789
    %4838 = vmatpush1.bf16.msra.mxu0 %v1788
    %4839 = vmatprep.subr.bf16.mxu0 %v1785
    %4840 = vmatpush1.bf16.msra.mxu0 %v1784
    %4841 = vmatprep.subr.bf16.mxu0 %v1781
    %4842 = vmatpush1.bf16.msra.mxu0 %v1780
    %4843 = vmatprep.subr.bf16.mxu0 %v1777
    %4844 = vmatpush1.bf16.msra.mxu0 %v1776
    %4845 = vmatprep.subr.bf16.mxu0 %v1773
    %4846 = vmatpush1.bf16.msra.mxu0 %v1772
    %4847 = vmatprep.subr.bf16.mxu0 %v1833
    %4848 = vmatpush2.bf16.msra.mxu0 %v1832
    %4849 = vmatprep.subr.bf16.mxu0 %v1829
    %4850 = vmatpush2.bf16.msra.mxu0 %v1828
    %4851 = vmatprep.subr.bf16.mxu0 %v1825
    %4852 = vmatpush2.bf16.msra.mxu0 %v1824
    %4853 = vmatprep.subr.bf16.mxu0 %v1821
    %4854 = vmatpush2.bf16.msra.mxu0 %v1820
    %4855 = vmatprep.subr.bf16.mxu0 %v1817
    %4856 = vmatpush2.bf16.msra.mxu0 %v1816
    %4857 = vmatprep.subr.bf16.mxu0 %v1813
    %4858 = vmatpush2.bf16.msra.mxu0 %v1812
    %4859 = vmatprep.subr.bf16.mxu0 %v1809
    %4860 = vmatpush2.bf16.msra.mxu0 %v1808
    %4861 = vmatprep.subr.bf16.mxu0 %v1805
    %4862 = vmatpush2.bf16.msra.mxu0 %v1804
    %4863 = vmatprep.mubr.bf16.mxu0 %v4678
    %4864 = vmatmul.mubr.bf16.gmra.mxu0 %v4677
    %v4865 = vpop.f32.mrf.mxu0
    %v4866 = vadd.f32 0.0, %v4865
    %v4867 = vpop.f32.mrf.mxu0
    %v4868 = vadd.f32 0.0, %v4867
    %v4869 = vpop.f32.mrf.mxu0
    %v4870 = vpop.f32.mrf.mxu0
    %4871 = vdwg.mxu0
    %v4872 = vadd.f32 %v1984, %v4825
    %v4873 = vadd.f32 %v1988, %v4827
    %v4874 = vadd.f32 %v1992, %v4866
    %v4875 = vadd.f32 %v1996, %v4868
    %v4876 = vxor.u32 %v4872, 2147483648
    %v4877 = vmul.f32 %v4876, 1.442695
    %v4878 = vpow.pop %v4877
    %v4879 = vadd.f32 %v4878, 1.0
    %v4880 = vrcp.pop %v4879
    %v4881 = vmul.f32 1.0, %v4880
    %v4882 = vxor.u32 %v4873, 2147483648
    %v4883 = vmul.f32 %v4882, 1.442695
    %v4884 = vpow.pop %v4883
    %v4885 = vadd.f32 %v4884, 1.0
    %v4886 = vrcp.pop %v4885
    %v4887 = vmul.f32 1.0, %v4886
    %v4888 = vtanh.pop %v4874
    %v4889 = vxor.u32 %v4875, 2147483648
    %v4890 = vmul.f32 %v4889, 1.442695
    %v4891 = vpow.pop %v4890
    %v4892 = vadd.f32 %v4891, 1.0
    %v4893 = vrcp.pop %v4892
    %v4894 = vmul.f32 1.0, %v4893
    %v4895 = vmul.f32 %v4887, %v4563
    %v4896 = vmul.f32 %v4881, %v4888
    %v4897 = vadd.f32 %v4895, %v4896
    %v4898 = vtanh.pop %v4897
    %v4899 = vmul.f32 %v4894, %v4898
    %4900 = vmatprep.subr.bf16.mxu0 %v2654
    %4901 = vmatpush1.bf16.msra.mxu0 %v2653
    %4902 = vmatprep.subr.bf16.mxu0 %v2650
    %4903 = vmatpush1.bf16.msra.mxu0 %v2649
    %4904 = vmatprep.subr.bf16.mxu0 %v2646
    %4905 = vmatpush1.bf16.msra.mxu0 %v2645
    %4906 = vmatprep.subr.bf16.mxu0 %v2642
    %4907 = vmatpush1.bf16.msra.mxu0 %v2641
    %4908 = vmatprep.subr.bf16.mxu0 %v2638
    %4909 = vmatpush1.bf16.msra.mxu0 %v2637
    %4910 = vmatprep.subr.bf16.mxu0 %v2634
    %4911 = vmatpush1.bf16.msra.mxu0 %v2633
    %4912 = vmatprep.subr.bf16.mxu0 %v2630
    %4913 = vmatpush1.bf16.msra.mxu0 %v2629
    %4914 = vmatprep.subr.bf16.mxu0 %v2626
    %4915 = vmatpush1.bf16.msra.mxu0 %v2625
    %4916 = vmatprep.subr.bf16.mxu0 %v2686
    %4917 = vmatpush2.bf16.msra.mxu0 %v2685
    %4918 = vmatprep.subr.bf16.mxu0 %v2682
    %4919 = vmatpush2.bf16.msra.mxu0 %v2681
    %4920 = vmatprep.subr.bf16.mxu0 %v2678
    %4921 = vmatpush2.bf16.msra.mxu0 %v2677
    %4922 = vmatprep.subr.bf16.mxu0 %v2674
    %4923 = vmatpush2.bf16.msra.mxu0 %v2673
    %4924 = vmatprep.subr.bf16.mxu0 %v2670
    %4925 = vmatpush2.bf16.msra.mxu0 %v2669
    %4926 = vmatprep.subr.bf16.mxu0 %v2666
    %4927 = vmatpush2.bf16.msra.mxu0 %v2665
    %4928 = vmatprep.subr.bf16.mxu0 %v2662
    %4929 = vmatpush2.bf16.msra.mxu0 %v2661
    %4930 = vmatprep.subr.bf16.mxu0 %v2658
    %4931 = vmatpush2.bf16.msra.mxu0 %v2657
    %4932 = vmatprep.mubr.bf16.mxu0 %v4679
    %4933 = vmatmul.mubr.bf16.gmra.mxu0 %v4678
    %v4934 = vpop.f32.mrf.mxu0
    %v4935 = vadd.f32 0.0, %v4934
    %v4936 = vpop.f32.mrf.mxu0
    %v4937 = vadd.f32 0.0, %v4936
    %v4938 = vpop.f32.mrf.mxu0
    %v4939 = vpop.f32.mrf.mxu0
    %4940 = vdwg.mxu0
    %4941 = vmatprep.subr.bf16.mxu0 %v2656
    %4942 = vmatpush1.bf16.msra.mxu0 %v2655
    %4943 = vmatprep.subr.bf16.mxu0 %v2652
    %4944 = vmatpush1.bf16.msra.mxu0 %v2651
    %4945 = vmatprep.subr.bf16.mxu0 %v2648
    %4946 = vmatpush1.bf16.msra.mxu0 %v2647
    %4947 = vmatprep.subr.bf16.mxu0 %v2644
    %4948 = vmatpush1.bf16.msra.mxu0 %v2643
    %4949 = vmatprep.subr.bf16.mxu0 %v2640
    %4950 = vmatpush1.bf16.msra.mxu0 %v2639
    %4951 = vmatprep.subr.bf16.mxu0 %v2636
    %4952 = vmatpush1.bf16.msra.mxu0 %v2635
    %4953 = vmatprep.subr.bf16.mxu0 %v2632
    %4954 = vmatpush1.bf16.msra.mxu0 %v2631
    %4955 = vmatprep.subr.bf16.mxu0 %v2628
    %4956 = vmatpush1.bf16.msra.mxu0 %v2627
    %4957 = vmatprep.subr.bf16.mxu0 %v2688
    %4958 = vmatpush2.bf16.msra.mxu0 %v2687
    %4959 = vmatprep.subr.bf16.mxu0 %v2684
    %4960 = vmatpush2.bf16.msra.mxu0 %v2683
    %4961 = vmatprep.subr.bf16.mxu0 %v2680
    %4962 = vmatpush2.bf16.msra.mxu0 %v2679
    %4963 = vmatprep.subr.bf16.mxu0 %v2676
    %4964 = vmatpush2.bf16.msra.mxu0 %v2675
    %4965 = vmatprep.subr.bf16.mxu0 %v2672
    %4966 = vmatpush2.bf16.msra.mxu0 %v2671
    %4967 = vmatprep.subr.bf16.mxu0 %v2668
    %4968 = vmatpush2.bf16.msra.mxu0 %v2667
    %4969 = vmatprep.subr.bf16.mxu0 %v2664
    %4970 = vmatpush2.bf16.msra.mxu0 %v2663
    %4971 = vmatprep.subr.bf16.mxu0 %v2660
    %4972 = vmatpush2.bf16.msra.mxu0 %v2659
    %4973 = vmatprep.mubr.bf16.mxu0 %v4679
    %4974 = vmatmul.mubr.bf16.gmra.mxu0 %v4678
    %v4975 = vpop.f32.mrf.mxu0
    %v4976 = vadd.f32 0.0, %v4975
    %v4977 = vpop.f32.mrf.mxu0
    %v4978 = vadd.f32 0.0, %v4977
    %v4979 = vpop.f32.mrf.mxu0
    %v4980 = vpop.f32.mrf.mxu0
    %4981 = vdwg.mxu0
    %v4982 = vadd.f32 %v2839, %v4935
    %v4983 = vadd.f32 %v2843, %v4937
    %v4984 = vadd.f32 %v2847, %v4976
    %v4985 = vadd.f32 %v2851, %v4978
    %v4986 = vxor.u32 %v4982, 2147483648
    %v4987 = vmul.f32 %v4986, 1.442695
    %v4988 = vpow.pop %v4987
    %v4989 = vadd.f32 %v4988, 1.0
    %v4990 = vrcp.pop %v4989
    %v4991 = vmul.f32 1.0, %v4990
    %v4992 = vxor.u32 %v4983, 2147483648
    %v4993 = vmul.f32 %v4992, 1.442695
    %v4994 = vpow.pop %v4993
    %v4995 = vadd.f32 %v4994, 1.0
    %v4996 = vrcp.pop %v4995
    %v4997 = vmul.f32 1.0, %v4996
    %v4998 = vtanh.pop %v4984
    %v4999 = vxor.u32 %v4985, 2147483648
    %v5000 = vmul.f32 %v4999, 1.442695
    %v5001 = vpow.pop %v5000
    %v5002 = vadd.f32 %v5001, 1.0
    %v5003 = vrcp.pop %v5002
    %v5004 = vmul.f32 1.0, %v5003
    %v5005 = vmul.f32 %v4997, %v4673
    %v5006 = vmul.f32 %v4991, %v4998
    %v5007 = vadd.f32 %v5005, %v5006
    %v5008 = vtanh.pop %v5007
    %v5009 = vmul.f32 %v5004, %v5008
    %v5010 = vpack.c.bf16 %v4789, %v4789
    %v5011 = vpack.c.bf16 %v4899, %v4899
    %v5012 = vpack.c.bf16 %v5009, %v5009
    %5013 = vmatprep.subr.bf16.mxu0 %v1799
    %5014 = vmatpush1.bf16.msra.mxu0 %v1798
    %5015 = vmatprep.subr.bf16.mxu0 %v1795
    %5016 = vmatpush1.bf16.msra.mxu0 %v1794
    %5017 = vmatprep.subr.bf16.mxu0 %v1791
    %5018 = vmatpush1.bf16.msra.mxu0 %v1790
    %5019 = vmatprep.subr.bf16.mxu0 %v1787
    %5020 = vmatpush1.bf16.msra.mxu0 %v1786
    %5021 = vmatprep.subr.bf16.mxu0 %v1783
    %5022 = vmatpush1.bf16.msra.mxu0 %v1782
    %5023 = vmatprep.subr.bf16.mxu0 %v1779
    %5024 = vmatpush1.bf16.msra.mxu0 %v1778
    %5025 = vmatprep.subr.bf16.mxu0 %v1775
    %5026 = vmatpush1.bf16.msra.mxu0 %v1774
    %5027 = vmatprep.subr.bf16.mxu0 %v1771
    %5028 = vmatpush1.bf16.msra.mxu0 %v1770
    %5029 = vmatprep.subr.bf16.mxu0 %v1831
    %5030 = vmatpush2.bf16.msra.mxu0 %v1830
    %5031 = vmatprep.subr.bf16.mxu0 %v1827
    %5032 = vmatpush2.bf16.msra.mxu0 %v1826
    %5033 = vmatprep.subr.bf16.mxu0 %v1823
    %5034 = vmatpush2.bf16.msra.mxu0 %v1822
    %5035 = vmatprep.subr.bf16.mxu0 %v1819
    %5036 = vmatpush2.bf16.msra.mxu0 %v1818
    %5037 = vmatprep.subr.bf16.mxu0 %v1815
    %5038 = vmatpush2.bf16.msra.mxu0 %v1814
    %5039 = vmatprep.subr.bf16.mxu0 %v1811
    %5040 = vmatpush2.bf16.msra.mxu0 %v1810
    %5041 = vmatprep.subr.bf16.mxu0 %v1807
    %5042 = vmatpush2.bf16.msra.mxu0 %v1806
    %5043 = vmatprep.subr.bf16.mxu0 %v1803
    %5044 = vmatpush2.bf16.msra.mxu0 %v1802
    %5045 = vmatprep.mubr.bf16.mxu0 %v5011
    %5046 = vmatmul.mubr.bf16.gmra.mxu0 %v5010
    %v5047 = vpop.f32.mrf.mxu0
    %v5048 = vadd.f32 0.0, %v5047
    %v5049 = vpop.f32.mrf.mxu0
    %v5050 = vadd.f32 0.0, %v5049
    %v5051 = vpop.f32.mrf.mxu0
    %v5052 = vpop.f32.mrf.mxu0
    %5053 = vdwg.mxu0
    %5054 = vmatprep.subr.bf16.mxu0 %v1801
    %5055 = vmatpush1.bf16.msra.mxu0 %v1800
    %5056 = vmatprep.subr.bf16.mxu0 %v1797
    %5057 = vmatpush1.bf16.msra.mxu0 %v1796
    %5058 = vmatprep.subr.bf16.mxu0 %v1793
    %5059 = vmatpush1.bf16.msra.mxu0 %v1792
    %5060 = vmatprep.subr.bf16.mxu0 %v1789
    %5061 = vmatpush1.bf16.msra.mxu0 %v1788
    %5062 = vmatprep.subr.bf16.mxu0 %v1785
    %5063 = vmatpush1.bf16.msra.mxu0 %v1784
    %5064 = vmatprep.subr.bf16.mxu0 %v1781
    %5065 = vmatpush1.bf16.msra.mxu0 %v1780
    %5066 = vmatprep.subr.bf16.mxu0 %v1777
    %5067 = vmatpush1.bf16.msra.mxu0 %v1776
    %5068 = vmatprep.subr.bf16.mxu0 %v1773
    %5069 = vmatpush1.bf16.msra.mxu0 %v1772
    %5070 = vmatprep.subr.bf16.mxu0 %v1833
    %5071 = vmatpush2.bf16.msra.mxu0 %v1832
    %5072 = vmatprep.subr.bf16.mxu0 %v1829
    %5073 = vmatpush2.bf16.msra.mxu0 %v1828
    %5074 = vmatprep.subr.bf16.mxu0 %v1825
    %5075 = vmatpush2.bf16.msra.mxu0 %v1824
    %5076 = vmatprep.subr.bf16.mxu0 %v1821
    %5077 = vmatpush2.bf16.msra.mxu0 %v1820
    %5078 = vmatprep.subr.bf16.mxu0 %v1817
    %5079 = vmatpush2.bf16.msra.mxu0 %v1816
    %5080 = vmatprep.subr.bf16.mxu0 %v1813
    %5081 = vmatpush2.bf16.msra.mxu0 %v1812
    %5082 = vmatprep.subr.bf16.mxu0 %v1809
    %5083 = vmatpush2.bf16.msra.mxu0 %v1808
    %5084 = vmatprep.subr.bf16.mxu0 %v1805
    %5085 = vmatpush2.bf16.msra.mxu0 %v1804
    %5086 = vmatprep.mubr.bf16.mxu0 %v5011
    %5087 = vmatmul.mubr.bf16.gmra.mxu0 %v5010
    %v5088 = vpop.f32.mrf.mxu0
    %v5089 = vadd.f32 0.0, %v5088
    %v5090 = vpop.f32.mrf.mxu0
    %v5091 = vadd.f32 0.0, %v5090
    %v5092 = vpop.f32.mrf.mxu0
    %v5093 = vpop.f32.mrf.mxu0
    %5094 = vdwg.mxu0
    %v5095 = vadd.f32 %v1984, %v5048
    %v5096 = vadd.f32 %v1988, %v5050
    %v5097 = vadd.f32 %v1992, %v5089
    %v5098 = vadd.f32 %v1996, %v5091
    %v5099 = vxor.u32 %v5095, 2147483648
    %v5100 = vmul.f32 %v5099, 1.442695
    %v5101 = vpow.pop %v5100
    %v5102 = vadd.f32 %v5101, 1.0
    %v5103 = vrcp.pop %v5102
    %v5104 = vmul.f32 1.0, %v5103
    %v5105 = vxor.u32 %v5096, 2147483648
    %v5106 = vmul.f32 %v5105, 1.442695
    %v5107 = vpow.pop %v5106
    %v5108 = vadd.f32 %v5107, 1.0
    %v5109 = vrcp.pop %v5108
    %v5110 = vmul.f32 1.0, %v5109
    %v5111 = vtanh.pop %v5097
    %v5112 = vxor.u32 %v5098, 2147483648
    %v5113 = vmul.f32 %v5112, 1.442695
    %v5114 = vpow.pop %v5113
    %v5115 = vadd.f32 %v5114, 1.0
    %v5116 = vrcp.pop %v5115
    %v5117 = vmul.f32 1.0, %v5116
    %v5118 = vmul.f32 %v5110, %v4897
    %v5119 = vmul.f32 %v5104, %v5111
    %v5120 = vadd.f32 %v5118, %v5119
    %v5121 = vtanh.pop %v5120
    %v5122 = vmul.f32 %v5117, %v5121
    %5123 = vmatprep.subr.bf16.mxu0 %v2654
    %5124 = vmatpush1.bf16.msra.mxu0 %v2653
    %5125 = vmatprep.subr.bf16.mxu0 %v2650
    %5126 = vmatpush1.bf16.msra.mxu0 %v2649
    %5127 = vmatprep.subr.bf16.mxu0 %v2646
    %5128 = vmatpush1.bf16.msra.mxu0 %v2645
    %5129 = vmatprep.subr.bf16.mxu0 %v2642
    %5130 = vmatpush1.bf16.msra.mxu0 %v2641
    %5131 = vmatprep.subr.bf16.mxu0 %v2638
    %5132 = vmatpush1.bf16.msra.mxu0 %v2637
    %5133 = vmatprep.subr.bf16.mxu0 %v2634
    %5134 = vmatpush1.bf16.msra.mxu0 %v2633
    %5135 = vmatprep.subr.bf16.mxu0 %v2630
    %5136 = vmatpush1.bf16.msra.mxu0 %v2629
    %5137 = vmatprep.subr.bf16.mxu0 %v2626
    %5138 = vmatpush1.bf16.msra.mxu0 %v2625
    %5139 = vmatprep.subr.bf16.mxu0 %v2686
    %5140 = vmatpush2.bf16.msra.mxu0 %v2685
    %5141 = vmatprep.subr.bf16.mxu0 %v2682
    %5142 = vmatpush2.bf16.msra.mxu0 %v2681
    %5143 = vmatprep.subr.bf16.mxu0 %v2678
    %5144 = vmatpush2.bf16.msra.mxu0 %v2677
    %5145 = vmatprep.subr.bf16.mxu0 %v2674
    %5146 = vmatpush2.bf16.msra.mxu0 %v2673
    %5147 = vmatprep.subr.bf16.mxu0 %v2670
    %5148 = vmatpush2.bf16.msra.mxu0 %v2669
    %5149 = vmatprep.subr.bf16.mxu0 %v2666
    %5150 = vmatpush2.bf16.msra.mxu0 %v2665
    %5151 = vmatprep.subr.bf16.mxu0 %v2662
    %5152 = vmatpush2.bf16.msra.mxu0 %v2661
    %5153 = vmatprep.subr.bf16.mxu0 %v2658
    %5154 = vmatpush2.bf16.msra.mxu0 %v2657
    %5155 = vmatprep.mubr.bf16.mxu0 %v5012
    %5156 = vmatmul.mubr.bf16.gmra.mxu0 %v5011
    %v5157 = vpop.f32.mrf.mxu0
    %v5158 = vadd.f32 0.0, %v5157
    %v5159 = vpop.f32.mrf.mxu0
    %v5160 = vadd.f32 0.0, %v5159
    %v5161 = vpop.f32.mrf.mxu0
    %v5162 = vpop.f32.mrf.mxu0
    %5163 = vdwg.mxu0
    %5164 = vmatprep.subr.bf16.mxu0 %v2656
    %5165 = vmatpush1.bf16.msra.mxu0 %v2655
    %5166 = vmatprep.subr.bf16.mxu0 %v2652
    %5167 = vmatpush1.bf16.msra.mxu0 %v2651
    %5168 = vmatprep.subr.bf16.mxu0 %v2648
    %5169 = vmatpush1.bf16.msra.mxu0 %v2647
    %5170 = vmatprep.subr.bf16.mxu0 %v2644
    %5171 = vmatpush1.bf16.msra.mxu0 %v2643
    %5172 = vmatprep.subr.bf16.mxu0 %v2640
    %5173 = vmatpush1.bf16.msra.mxu0 %v2639
    %5174 = vmatprep.subr.bf16.mxu0 %v2636
    %5175 = vmatpush1.bf16.msra.mxu0 %v2635
    %5176 = vmatprep.subr.bf16.mxu0 %v2632
    %5177 = vmatpush1.bf16.msra.mxu0 %v2631
    %5178 = vmatprep.subr.bf16.mxu0 %v2628
    %5179 = vmatpush1.bf16.msra.mxu0 %v2627
    %5180 = vmatprep.subr.bf16.mxu0 %v2688
    %5181 = vmatpush2.bf16.msra.mxu0 %v2687
    %5182 = vmatprep.subr.bf16.mxu0 %v2684
    %5183 = vmatpush2.bf16.msra.mxu0 %v2683
    %5184 = vmatprep.subr.bf16.mxu0 %v2680
    %5185 = vmatpush2.bf16.msra.mxu0 %v2679
    %5186 = vmatprep.subr.bf16.mxu0 %v2676
    %5187 = vmatpush2.bf16.msra.mxu0 %v2675
    %5188 = vmatprep.subr.bf16.mxu0 %v2672
    %5189 = vmatpush2.bf16.msra.mxu0 %v2671
    %5190 = vmatprep.subr.bf16.mxu0 %v2668
    %5191 = vmatpush2.bf16.msra.mxu0 %v2667
    %5192 = vmatprep.subr.bf16.mxu0 %v2664
    %5193 = vmatpush2.bf16.msra.mxu0 %v2663
    %5194 = vmatprep.subr.bf16.mxu0 %v2660
    %5195 = vmatpush2.bf16.msra.mxu0 %v2659
    %5196 = vmatprep.mubr.bf16.mxu0 %v5012
    %5197 = vmatmul.mubr.bf16.gmra.mxu0 %v5011
    %v5198 = vpop.f32.mrf.mxu0
    %v5199 = vadd.f32 0.0, %v5198
    %v5200 = vpop.f32.mrf.mxu0
    %v5201 = vadd.f32 0.0, %v5200
    %v5202 = vpop.f32.mrf.mxu0
    %v5203 = vpop.f32.mrf.mxu0
    %5204 = vdwg.mxu0
    %v5205 = vadd.f32 %v2839, %v5158
    %v5206 = vadd.f32 %v2843, %v5160
    %v5207 = vadd.f32 %v2847, %v5199
    %v5208 = vadd.f32 %v2851, %v5201
    %v5209 = vxor.u32 %v5205, 2147483648
    %v5210 = vmul.f32 %v5209, 1.442695
    %v5211 = vpow.pop %v5210
    %v5212 = vadd.f32 %v5211, 1.0
    %v5213 = vrcp.pop %v5212
    %v5214 = vmul.f32 1.0, %v5213
    %v5215 = vxor.u32 %v5206, 2147483648
    %v5216 = vmul.f32 %v5215, 1.442695
    %v5217 = vpow.pop %v5216
    %v5218 = vadd.f32 %v5217, 1.0
    %v5219 = vrcp.pop %v5218
    %v5220 = vmul.f32 1.0, %v5219
    %v5221 = vtanh.pop %v5207
    %v5222 = vxor.u32 %v5208, 2147483648
    %v5223 = vmul.f32 %v5222, 1.442695
    %v5224 = vpow.pop %v5223
    %v5225 = vadd.f32 %v5224, 1.0
    %v5226 = vrcp.pop %v5225
    %v5227 = vmul.f32 1.0, %v5226
    %v5228 = vmul.f32 %v5220, %v5007
    %v5229 = vmul.f32 %v5214, %v5221
    %v5230 = vadd.f32 %v5228, %v5229
    %v5231 = vtanh.pop %v5230
    %v5232 = vmul.f32 %v5227, %v5231
    %v5233 = vpack.c.bf16 %v5122, %v5122
    %v5234 = vpack.c.bf16 %v5232, %v5232
    %5235 = vmatprep.subr.bf16.mxu0 %v2654
    %5236 = vmatpush1.bf16.msra.mxu0 %v2653
    %5237 = vmatprep.subr.bf16.mxu0 %v2650
    %5238 = vmatpush1.bf16.msra.mxu0 %v2649
    %5239 = vmatprep.subr.bf16.mxu0 %v2646
    %5240 = vmatpush1.bf16.msra.mxu0 %v2645
    %5241 = vmatprep.subr.bf16.mxu0 %v2642
    %5242 = vmatpush1.bf16.msra.mxu0 %v2641
    %5243 = vmatprep.subr.bf16.mxu0 %v2638
    %5244 = vmatpush1.bf16.msra.mxu0 %v2637
    %5245 = vmatprep.subr.bf16.mxu0 %v2634
    %5246 = vmatpush1.bf16.msra.mxu0 %v2633
    %5247 = vmatprep.subr.bf16.mxu0 %v2630
    %5248 = vmatpush1.bf16.msra.mxu0 %v2629
    %5249 = vmatprep.subr.bf16.mxu0 %v2626
    %5250 = vmatpush1.bf16.msra.mxu0 %v2625
    %5251 = vmatprep.subr.bf16.mxu0 %v2686
    %5252 = vmatpush2.bf16.msra.mxu0 %v2685
    %5253 = vmatprep.subr.bf16.mxu0 %v2682
    %5254 = vmatpush2.bf16.msra.mxu0 %v2681
    %5255 = vmatprep.subr.bf16.mxu0 %v2678
    %5256 = vmatpush2.bf16.msra.mxu0 %v2677
    %5257 = vmatprep.subr.bf16.mxu0 %v2674
    %5258 = vmatpush2.bf16.msra.mxu0 %v2673
    %5259 = vmatprep.subr.bf16.mxu0 %v2670
    %5260 = vmatpush2.bf16.msra.mxu0 %v2669
    %5261 = vmatprep.subr.bf16.mxu0 %v2666
    %5262 = vmatpush2.bf16.msra.mxu0 %v2665
    %5263 = vmatprep.subr.bf16.mxu0 %v2662
    %5264 = vmatpush2.bf16.msra.mxu0 %v2661
    %5265 = vmatprep.subr.bf16.mxu0 %v2658
    %5266 = vmatpush2.bf16.msra.mxu0 %v2657
    %5267 = vmatprep.mubr.bf16.mxu0 %v5234
    %5268 = vmatmul.mubr.bf16.gmra.mxu0 %v5233
    %v5269 = vpop.f32.mrf.mxu0
    %v5270 = vadd.f32 0.0, %v5269
    %v5271 = vpop.f32.mrf.mxu0
    %v5272 = vadd.f32 0.0, %v5271
    %v5273 = vpop.f32.mrf.mxu0
    %v5274 = vpop.f32.mrf.mxu0
    %5275 = vdwg.mxu0
    %5276 = vmatprep.subr.bf16.mxu0 %v2656
    %5277 = vmatpush1.bf16.msra.mxu0 %v2655
    %5278 = vmatprep.subr.bf16.mxu0 %v2652
    %5279 = vmatpush1.bf16.msra.mxu0 %v2651
    %5280 = vmatprep.subr.bf16.mxu0 %v2648
    %5281 = vmatpush1.bf16.msra.mxu0 %v2647
    %5282 = vmatprep.subr.bf16.mxu0 %v2644
    %5283 = vmatpush1.bf16.msra.mxu0 %v2643
    %5284 = vmatprep.subr.bf16.mxu0 %v2640
    %5285 = vmatpush1.bf16.msra.mxu0 %v2639
    %5286 = vmatprep.subr.bf16.mxu0 %v2636
    %5287 = vmatpush1.bf16.msra.mxu0 %v2635
    %5288 = vmatprep.subr.bf16.mxu0 %v2632
    %5289 = vmatpush1.bf16.msra.mxu0 %v2631
    %5290 = vmatprep.subr.bf16.mxu0 %v2628
    %5291 = vmatpush1.bf16.msra.mxu0 %v2627
    %5292 = vmatprep.subr.bf16.mxu0 %v2688
    %5293 = vmatpush2.bf16.msra.mxu0 %v2687
    %5294 = vmatprep.subr.bf16.mxu0 %v2684
    %5295 = vmatpush2.bf16.msra.mxu0 %v2683
    %5296 = vmatprep.subr.bf16.mxu0 %v2680
    %5297 = vmatpush2.bf16.msra.mxu0 %v2679
    %5298 = vmatprep.subr.bf16.mxu0 %v2676
    %5299 = vmatpush2.bf16.msra.mxu0 %v2675
    %5300 = vmatprep.subr.bf16.mxu0 %v2672
    %5301 = vmatpush2.bf16.msra.mxu0 %v2671
    %5302 = vmatprep.subr.bf16.mxu0 %v2668
    %5303 = vmatpush2.bf16.msra.mxu0 %v2667
    %5304 = vmatprep.subr.bf16.mxu0 %v2664
    %5305 = vmatpush2.bf16.msra.mxu0 %v2663
    %5306 = vmatprep.subr.bf16.mxu0 %v2660
    %5307 = vmatpush2.bf16.msra.mxu0 %v2659
    %5308 = vmatprep.mubr.bf16.mxu0 %v5234
    %5309 = vmatmul.mubr.bf16.gmra.mxu0 %v5233
    %v5310 = vpop.f32.mrf.mxu0
    %v5311 = vadd.f32 0.0, %v5310
    %v5312 = vpop.f32.mrf.mxu0
    %v5313 = vadd.f32 0.0, %v5312
    %v5314 = vpop.f32.mrf.mxu0
    %v5315 = vpop.f32.mrf.mxu0
    %5316 = vdwg.mxu0
    %v5317 = vadd.f32 %v2839, %v5270
    %v5318 = vadd.f32 %v2843, %v5272
    %v5319 = vadd.f32 %v2847, %v5311
    %v5320 = vadd.f32 %v2851, %v5313
    %v5321 = vxor.u32 %v5317, 2147483648
    %v5322 = vmul.f32 %v5321, 1.442695
    %v5323 = vpow.pop %v5322
    %v5324 = vadd.f32 %v5323, 1.0
    %v5325 = vrcp.pop %v5324
    %v5326 = vmul.f32 1.0, %v5325
    %v5327 = vxor.u32 %v5318, 2147483648
    %v5328 = vmul.f32 %v5327, 1.442695
    %v5329 = vpow.pop %v5328
    %v5330 = vadd.f32 %v5329, 1.0
    %v5331 = vrcp.pop %v5330
    %v5332 = vmul.f32 1.0, %v5331
    %v5333 = vtanh.pop %v5319
    %v5334 = vxor.u32 %v5320, 2147483648
    %v5335 = vmul.f32 %v5334, 1.442695
    %v5336 = vpow.pop %v5335
    %v5337 = vadd.f32 %v5336, 1.0
    %v5338 = vrcp.pop %v5337
    %v5339 = vmul.f32 1.0, %v5338
    %v5340 = vmul.f32 %v5332, %v5230
    %v5341 = vmul.f32 %v5326, %v5333
    %v5342 = vadd.f32 %v5340, %v5341
    %v5343 = vtanh.pop %v5342
    %v5344 = vmul.f32 %v5339, %v5343
    %v5345 = vpack.c.bf16 %v5344, %v5344
    %v5346 = vld [vmem:[%s5] sm:$0xf]
    %v5347 = vld [vmem:[%s5 + $0x4] sm:$0xf]
    %v5348 = vld [vmem:[%s5 + $0x8] sm:$0xf]
    %v5349 = vld [vmem:[%s5 + $0xc] sm:$0xf]
    %v5350 = vld [vmem:[%s5 + $0x10] sm:$0xf]
    %v5351 = vld [vmem:[%s5 + $0x14] sm:$0xf]
    %v5352 = vld [vmem:[%s5 + $0x18] sm:$0xf]
    %v5353 = vld [vmem:[%s5 + $0x1c] sm:$0xf]
    %v5354 = vld [vmem:[%s5 + $0x20] sm:$0xf]
    %v5355 = vld [vmem:[%s5 + $0x24] sm:$0xf]
    %v5356 = vld [vmem:[%s5 + $0x28] sm:$0xf]
    %v5357 = vld [vmem:[%s5 + $0x2c] sm:$0xf]
    %v5358 = vld [vmem:[%s5 + $0x30] sm:$0xf]
    %v5359 = vld [vmem:[%s5 + $0x34] sm:$0xf]
    %v5360 = vld [vmem:[%s5 + $0x38] sm:$0xf]
    %v5361 = vld [vmem:[%s5 + $0x3c] sm:$0xf]
    %v5362 = vld [vmem:[%s6] sm:$0x1]
    %v5364 = vlaneseq
    %v5365 = vshrl.u32 %v5364, 7
    %v5366 = vsub.s32 0, %v5365
    %v5367 = vrot.slane %v5362, %v5366
    %v5385 = vunpack.c.l.b16 %v5346
    %v5386 = vunpack.c.l.b16 %v5347
    %v5387 = vunpack.c.l.b16 %v5348
    %v5388 = vunpack.c.l.b16 %v5349
    %v5389 = vunpack.c.l.b16 %v5350
    %v5390 = vunpack.c.l.b16 %v5351
    %v5391 = vunpack.c.l.b16 %v5352
    %v5392 = vunpack.c.l.b16 %v5353
    %v5393 = vunpack.c.l.b16 %v5354
    %v5394 = vunpack.c.l.b16 %v5355
    %v5395 = vunpack.c.l.b16 %v5356
    %v5396 = vunpack.c.l.b16 %v5357
    %v5397 = vunpack.c.l.b16 %v5358
    %v5398 = vunpack.c.l.b16 %v5359
    %v5399 = vunpack.c.l.b16 %v5360
    %v5400 = vunpack.c.l.b16 %v5361
    %v5401 = vpack.c.b16 %v5386, %v5385
    %v5402 = vpack.c.b16 %v5388, %v5387
    %v5403 = vpack.c.b16 %v5390, %v5389
    %v5404 = vpack.c.b16 %v5392, %v5391
    %v5405 = vpack.c.b16 %v5394, %v5393
    %v5406 = vpack.c.b16 %v5396, %v5395
    %v5407 = vpack.c.b16 %v5398, %v5397
    %v5408 = vpack.c.b16 %v5400, %v5399
    %5417 = vmatprep.subr.bf16.mxu0 0
    %5418 = vmatpush1.bf16.msra.mxu0 %v5408
    %5419 = vmatprep.subr.bf16.mxu0 0
    %5420 = vmatpush1.bf16.msra.mxu0 %v5407
    %5421 = vmatprep.subr.bf16.mxu0 0
    %5422 = vmatpush1.bf16.msra.mxu0 %v5406
    %5423 = vmatprep.subr.bf16.mxu0 0
    %5424 = vmatpush1.bf16.msra.mxu0 %v5405
    %5425 = vmatprep.subr.bf16.mxu0 0
    %5426 = vmatpush1.bf16.msra.mxu0 %v5404
    %5427 = vmatprep.subr.bf16.mxu0 0
    %5428 = vmatpush1.bf16.msra.mxu0 %v5403
    %5429 = vmatprep.subr.bf16.mxu0 0
    %5430 = vmatpush1.bf16.msra.mxu0 %v5402
    %5431 = vmatprep.subr.bf16.mxu0 0
    %5432 = vmatpush1.bf16.msra.mxu0 %v5401
    %5433 = vmatprep.subr.bf16.mxu0 0
    %5434 = vmatpush2.bf16.msra.mxu0 0
    %5435 = vmatprep.subr.bf16.mxu0 0
    %5436 = vmatpush2.bf16.msra.mxu0 0
    %5437 = vmatprep.subr.bf16.mxu0 0
    %5438 = vmatpush2.bf16.msra.mxu0 0
    %5439 = vmatprep.subr.bf16.mxu0 0
    %5440 = vmatpush2.bf16.msra.mxu0 0
    %5441 = vmatprep.subr.bf16.mxu0 0
    %5442 = vmatpush2.bf16.msra.mxu0 0
    %5443 = vmatprep.subr.bf16.mxu0 0
    %5444 = vmatpush2.bf16.msra.mxu0 0
    %5445 = vmatprep.subr.bf16.mxu0 0
    %5446 = vmatpush2.bf16.msra.mxu0 0
    %5447 = vmatprep.subr.bf16.mxu0 0
    %5448 = vmatpush2.bf16.msra.mxu0 0
    %5449 = vmatprep.mubr.bf16.mxu0 0
    %5450 = vmatmul.mubr.bf16.gmra.mxu0 %v5345
    %v5451 = vpop.f32.mrf.mxu0
    %v5452 = vadd.f32 %v5367, %v5451
    %v5453 = vpop.f32.mrf.mxu0
    %v5454 = vpop.f32.mrf.mxu0
    %v5455 = vpop.f32.mrf.mxu0
    %5456 = vdwg.mxu0
    %5457 = vst [vmem:[%s7] sm:$0xff] %v5452
    // Predicated region
    $region46: #{stock_lstm_forward.1} parent=1 // pred_check
      _
    $region47: #{stock_lstm_forward.1} parent=1 // pred_check_branch
      %5459 = sbr.rel (0) target = $region49
    $region48: #{stock_lstm_forward.1} parent=1 // pred_region
      _
    $region49: #{stock_lstm_forward.1} parent=1 // pred_fallthru
      _
    // Predicated region
    $region50: #{stock_lstm_forward.1} parent=1 // pred_check
      _
    $region51: #{stock_lstm_forward.1} parent=1 // pred_check_branch
      %5461 = sbr.rel (0) target = $region53
    $region52: #{stock_lstm_forward.1} parent=1 // pred_region
      _
    $region53: #{stock_lstm_forward.1} parent=1 // pred_fallthru
      _
    %5462 = vsyncpa [#allocation4], 1
    %5463 = vsyncpa [#allocation6], 1
    %5464 = vsyncpa [#allocation9], 1

</llo_original>
